<compile_context>
chip_gen: v5e
topology: v5e:2x2
jax: 0.10.0
libtpu: 0.0.40
codegen_flags: <defaults>
</compile_context>

<pallas_src>
import functools

import jax
import jax.numpy as jnp
from jax.experimental import pallas as pl
from jax.experimental.pallas import tpu as pltpu

# ---------------- model config (scaled-down SVTR-Tiny-ish) ----------------
D0, D1, D2 = 32, 64, 96          # stage embed dims
HEADS = (2, 4, 6)                # heads per stage (head dim = 16)
PE_MID = 16                      # patch-embed mid channels
LAST_C = 192                     # neck in_channels (as in SequenceEncoder)
NUM_CLASSES = 228                # CTCHead out_channels
NUM_CLASSES_PAD = 256            # lane-dense padded head width (sliced back to 228)
LN_EPS = 1e-6

BLOCK_KEYS = ("ln1_g", "ln1_b", "qkv_w", "qkv_b", "proj_w", "proj_b",
              "ln2_g", "ln2_b", "fc1_w", "fc1_b", "fc2_w", "fc2_b")
SUB_KEYS = ("w", "b", "g", "bt")
EPI_KEYS = ("norm_g", "norm_b", "last_w", "last_b", "head_w", "head_b")


# =========================== in-kernel helpers ===========================

def _dot(a, b):
    """MXU matmul: bf16 operands, f32 accumulate (weights are pre-cast bf16)."""
    return jnp.dot(a.astype(jnp.bfloat16), b.astype(jnp.bfloat16),
                   preferred_element_type=jnp.float32)


def _dot_nt(a, b):
    """a @ b.T without materializing a transpose: contract last dims."""
    return jax.lax.dot_general(
        a.astype(jnp.bfloat16), b.astype(jnp.bfloat16),
        dimension_numbers=(((1,), (1,)), ((), ())),
        preferred_element_type=jnp.float32)


def _ln(x, g, b, eps):
    mu = jnp.mean(x, axis=-1, keepdims=True)
    var = jnp.mean((x - mu) ** 2, axis=-1, keepdims=True)
    return (x - mu) * jax.lax.rsqrt(var + eps) * g + b


def _hardswish(y):
    return y * jnp.clip(y + 3.0, 0.0, 6.0) * (1.0 / 6.0)


def _mix_block(x, mask, ln1g, ln1b, qkvw, qkvb, projw, projb,
               ln2g, ln2b, fc1w, fc1b, fc2w, fc2b, *, heads, eps):
    """Pre-norm SVTR mixing block: x + Proj(MHA(LN(x))); x + MLP(LN(x))."""
    n, d = x.shape
    dh = d // heads
    scale = dh ** -0.5

    # ---- attention branch ----
    hn = _ln(x, ln1g, ln1b, eps)
    qkv = _dot(hn, qkvw) + qkvb                 # (n, 3d): ONE wide MXU matmul
    qkv16 = qkv.astype(jnp.bfloat16)            # cast hoisted out of the head loop
    head_outs = []
    for h in range(heads):
        q = qkv16[:, h * dh:(h + 1) * dh]
        k = qkv16[:, d + h * dh:d + (h + 1) * dh]
        v = qkv16[:, 2 * d + h * dh:2 * d + (h + 1) * dh]
        s = _dot_nt(q, k) * scale               # (n, n)
        if mask is not None:
            s = s + mask
        m = jnp.max(s, axis=-1, keepdims=True)
        e = jnp.exp(s - m)
        # divide on the EUP slot instead of the VPU
        p = e * pl.reciprocal(jnp.sum(e, axis=-1, keepdims=True), approx=True)
        head_outs.append(_dot(p, v))            # (n, dh)
    attn = jnp.concatenate(head_outs, axis=-1)  # head merge -> (n, d)
    x = x + _dot(attn, projw) + projb           # ONE wide output projection

    # ---- MLP branch ----
    hn2 = _ln(x, ln2g, ln2b, eps)
    h1 = _dot(hn2, fc1w) + fc1b
    # TODO(synk): PyTorch nn.GELU default is exact erf; tanh approx used here.
    h1 = jax.nn.gelu(h1, approximate=True)
    return x + _dot(h1, fc2w) + fc2b


def _subsample(x, w, b, g, bt, *, hin, win, eps):
    """SVTR SubSample ('Conv'): 3x3 stride-(2,1) pad-1 conv as 9 shifted-tap
    matmuls on VMEM-resident tokens, fused with the LayerNorm epilogue."""
    d_in = x.shape[-1]
    d_out = w.shape[-1]
    hout = (hin - 1) // 2 + 1
    wout = win
    zrow_full = jnp.zeros((win, d_in), jnp.float32)
    zrow1 = jnp.zeros((1, d_in), jnp.float32)
    acc = jnp.zeros((hout * wout, d_out), jnp.float32)
    for i in range(3):
        for j in range(3):
            if not any(0 <= 2 * r + i - 1 < hin for r in range(hout)):
                continue                        # tap reads only zero-padding rows
            rows = []
            for r in range(hout):
                ir = 2 * r + i - 1
                if 0 <= ir < hin:
                    xr = x[ir * win:(ir + 1) * win, :]        # (win, d_in)
                    if j == 0:      # output col c reads input col c-1
                        xr = jnp.concatenate([zrow1, xr[:-1, :]], axis=0)
                    elif j == 2:    # output col c reads input col c+1
                        xr = jnp.concatenate([xr[1:, :], zrow1], axis=0)
                    rows.append(xr)
                else:
                    rows.append(zrow_full)
            tap = rows[0] if hout == 1 else jnp.concatenate(rows, axis=0)
            acc = acc + _dot(tap, w[3 * i + j])               # per-tap weight slab
    return _ln(acc + b, g, bt, eps)


def _epilogue(x, norm_g, norm_b, last_w, last_b, head_w, head_b, *, h4, w4, eps):
    """Final LN + height-mean + last_conv(hardswish) + CTC linear + softmax."""
    xn = _ln(x, norm_g, norm_b, eps)
    acc = jnp.zeros((w4, x.shape[-1]), jnp.float32)
    for r in range(h4):                          # mean over height (static unroll)
        acc = acc + xn[r * w4:(r + 1) * w4, :]
    pooled = acc * (1.0 / h4)
    feat = _hardswish(_dot(pooled, last_w) + last_b)          # (w4, 192)
    logits = _dot(feat, head_w) + head_b                      # (w4, 256) lane-dense
    m = jnp.max(logits, axis=-1, keepdims=True)
    e = jnp.exp(logits - m)                                   # pads (-1e30 bias) -> 0
    return e / jnp.sum(e, axis=-1, keepdims=True)             # exact divide: rows sum to 1


# =========================== fused backbone kernel ===========================

def _backbone_kernel(*refs, h2, w2, heads, eps):
    it = iter(refs)
    take = lambda n: [next(it) for _ in range(n)]
    tok_ref, mask_ref = take(2)
    blk1, sub1, blk2, sub2, blk3, epi = (take(12), take(4), take(12),
                                         take(4), take(12), take(6))
    (out_ref,) = take(1)
    ld = lambda rs: [r[...] for r in rs]

    h3, w3 = (h2 - 1) // 2 + 1, w2
    h4, w4 = (h3 - 1) // 2 + 1, w3

    x = tok_ref[0]                                            # (h2*w2, D0) f32
    # stage 1: local mixer (precomputed VMEM-resident mask)
    x = _mix_block(x, mask_ref[...], *ld(blk1), heads=heads[0], eps=eps)
    x = _subsample(x, *ld(sub1), hin=h2, win=w2, eps=eps)     # -> (h3*w3, D1)
    # stage 2: global mixer
    x = _mix_block(x, None, *ld(blk2), heads=heads[1], eps=eps)
    x = _subsample(x, *ld(sub2), hin=h3, win=w3, eps=eps)     # -> (h4*w4, D2)
    # stage 3: global mixer
    x = _mix_block(x, None, *ld(blk3), heads=heads[2], eps=eps)
    # neck ('reshape') + CTC head (eval softmax), padded to 256 lanes
    out_ref[0] = _epilogue(x, *ld(epi), h4=h4, w4=w4, eps=eps)


def svtr_backbone(tokens, mask, params, h2, w2):
    """One pallas_call for the whole backbone + neck + head; grid over batch."""
    B, N0, D = tokens.shape
    h3, w3 = (h2 - 1) // 2 + 1, w2
    h4, w4 = (h3 - 1) // 2 + 1, w3

    flat_inputs = [tokens, mask]
    in_specs = [pl.BlockSpec((1, N0, D), lambda i: (i, 0, 0)),
                pl.BlockSpec((N0, N0), lambda i: (0, 0))]

    def add(arr):
        flat_inputs.append(arr)
        in_specs.append(pl.BlockSpec(arr.shape, lambda i, _nd=arr.ndim: (0,) * _nd))

    for k in BLOCK_KEYS: add(params["blk1"][k])
    for k in SUB_KEYS:   add(params["sub1"][k])
    for k in BLOCK_KEYS: add(params["blk2"][k])
    for k in SUB_KEYS:   add(params["sub2"][k])
    for k in BLOCK_KEYS: add(params["blk3"][k])
    for k in EPI_KEYS:   add(params[k])

    kernel = functools.partial(_backbone_kernel, h2=h2, w2=w2,
                               heads=HEADS, eps=LN_EPS)
    return pl.pallas_call(
        kernel,
        out_shape=jax.ShapeDtypeStruct((B, w4, NUM_CLASSES_PAD), jnp.float32),
        grid=(B,),
        in_specs=in_specs,
        out_specs=pl.BlockSpec((1, w4, NUM_CLASSES_PAD), lambda i: (i, 0, 0)),
        # "parallel" lets v7x shard the batch over its 2 TensorCores; on
        # single-TC v5e/v6e this is just a 2-step serial loop (negligible).
        compiler_params=pltpu.CompilerParams(dimension_semantics=("parallel",)),
    )(*flat_inputs)


# ============================ JAX glue (XLA side) =============================

def im2col(x_nhwc, kh, kw, sh, sw, ph, pw):
    """Extract conv patches -> (B*Ho*Wo, kh*kw*C) (row-major spatial, (kh,kw,C) K order)."""
    B, H, W, C = x_nhwc.shape
    xp = jnp.pad(x_nhwc, ((0, 0), (ph, ph), (pw, pw), (0, 0)))
    Ho = (H + 2 * ph - kh) // sh + 1
    Wo = (W + 2 * pw - kw) // sw + 1
    cols = [xp[:, i:i + sh * Ho:sh, j:j + sw * Wo:sw, :]
            for i in range(kh) for j in range(kw)]
    patches = jnp.concatenate(cols, axis=-1)            # (B, Ho, Wo, kh*kw*C)
    return patches.reshape(B * Ho * Wo, kh * kw * C), (B, Ho, Wo)


def affine_grid_sample(img_nhwc, theta):
    """Bilinear sampling of an affine grid (align_corners=True convention)."""
    # TODO(synk): full STN_ON uses a TPS (thin-plate-spline) grid; gather-based
    # bilinear sampling is data-dependent gather and stays in plain JAX.
    B, H, W, C = img_nhwc.shape
    ys = jnp.linspace(-1.0, 1.0, H)
    xs = jnp.linspace(-1.0, 1.0, W)
    gy, gx = jnp.meshgrid(ys, xs, indexing="ij")
    coords = jnp.stack([gx, gy, jnp.ones_like(gx)], axis=-1)     # (H, W, 3)
    src = jnp.einsum("bij,hwj->bhwi", theta, coords)             # (B, H, W, 2) = (x, y)
    sx = (src[..., 0] + 1.0) * (W - 1) * 0.5
    sy = (src[..., 1] + 1.0) * (H - 1) * 0.5
    x0, y0 = jnp.floor(sx), jnp.floor(sy)
    wx, wy = sx - x0, sy - y0
    bidx = jnp.arange(B)[:, None, None]

    def gather(yy, xx):
        yy = jnp.clip(yy, 0, H - 1).astype(jnp.int32)
        xx = jnp.clip(xx, 0, W - 1).astype(jnp.int32)
        return img_nhwc[bidx, yy, xx]

    return (gather(y0, x0) * ((1 - wx) * (1 - wy))[..., None]
            + gather(y0, x0 + 1) * (wx * (1 - wy))[..., None]
            + gather(y0 + 1, x0) * ((1 - wx) * wy)[..., None]
            + gather(y0 + 1, x0 + 1) * (wx * wy)[..., None])


def make_local_mask(hh, ww, kh, kw):
    """Additive local-mixer mask (constant, resident in VMEM across grid steps)."""
    idx = jnp.arange(hh * ww)
    r, c = idx // ww, idx % ww
    ok = ((jnp.abs(r[:, None] - r[None, :]) <= kh // 2)
          & (jnp.abs(c[:, None] - c[None, :]) <= kw // 2))
    return jnp.where(ok, 0.0, -1e9).astype(jnp.float32)


# ============================ forward =============================

def svtr_forward(params, x_nchw):
    # input is NCHW (PyTorch convention); convert to NHWC internally.
    x = jnp.transpose(x_nchw, (0, 2, 3, 1)).astype(jnp.float32)   # (B, H, W, 3)
    B = x.shape[0]

    # ---------------- STN_ON (simplified affine STN, identity-initialized) -----
    pooled = jnp.mean(x, axis=(1, 2))                             # (B, 3)
    theta = pooled @ params["stn_w"] + params["stn_b"]            # (B, 6)
    x = affine_grid_sample(x, theta.reshape(B, 2, 3))             # (B, H, W, 3)

    # ---------------- patch embed (two 3x3 stride-2 convs), plain XLA ----------
    # TODO(synk): ConvBNLayer BatchNorm folded to identity (deterministic init).
    cols, (_, h1, w1) = im2col(x, 3, 3, 2, 2, 1, 1)
    y = jax.nn.gelu(cols @ params["pe_w1"] + params["pe_b1"], approximate=True)
    y = y.reshape(B, h1, w1, PE_MID)
    cols, (_, h2, w2) = im2col(y, 3, 3, 2, 2, 1, 1)
    tok = jax.nn.gelu(cols @ params["pe_w2"] + params["pe_b2"], approximate=True)
    tokens = tok.reshape(B, h2 * w2, D0) + params["pos"]          # learned pos embed

    # ---------------- fused backbone + neck + CTC head (ONE pallas_call) -------
    mask = make_local_mask(h2, w2, 3, 5)                          # local-mixer window
    out_padded = svtr_backbone(tokens, mask, params, h2, w2)      # (B, W/4, 256)
    return out_padded[..., :NUM_CLASSES]                          # (B, T, 228)


# =========================== parameters ===========================

def init_params(seed=0):
    key = jax.random.PRNGKey(seed)
    keys = iter(jax.random.split(key, 64))
    f32, bf16 = jnp.float32, jnp.bfloat16

    def nrm(shape, s=0.02, dtype=jnp.float32):
        return (jax.random.normal(next(keys), shape, jnp.float32) * s).astype(dtype)

    def block_params(d):
        return dict(
            ln1_g=jnp.ones((1, d), f32), ln1_b=jnp.zeros((1, d), f32),
            # fused QKV weight: (D, 3D) = [q | k | v], head-major (dh=16) inside each third
            qkv_w=nrm((d, 3 * d), dtype=bf16), qkv_b=jnp.zeros((1, 3 * d), f32),
            proj_w=nrm((d, d), dtype=bf16), proj_b=jnp.zeros((1, d), f32),
            ln2_g=jnp.ones((1, d), f32), ln2_b=jnp.zeros((1, d), f32),
            fc1_w=nrm((d, 4 * d), dtype=bf16), fc1_b=jnp.zeros((1, 4 * d), f32),
            fc2_w=nrm((4 * d, d), dtype=bf16), fc2_b=jnp.zeros((1, d), f32),
        )

    def sub_params(d_in, d_out):
        return dict(
            w=nrm((9, d_in, d_out), dtype=bf16),   # per-tap (ki,kj) slabs, row-major taps
            b=jnp.zeros((1, d_out), f32),
            g=jnp.ones((1, d_out), f32),
            bt=jnp.zeros((1, d_out), f32),
        )

    # CTC head padded to 256 lanes; padded classes get -1e30 bias -> 0 softmax mass.
    head_w = jnp.zeros((LAST_C, NUM_CLASSES_PAD), f32)
    head_w = head_w.at[:, :NUM_CLASSES].set(nrm((LAST_C, NUM_CLASSES))).astype(bf16)
    head_b = jnp.full((1, NUM_CLASSES_PAD), -1e30, f32)           # keep pad bias in f32
    head_b = head_b.at[:, :NUM_CLASSES].set(0.0)

    return dict(
        # STN localization: zero weights + identity-affine bias (standard STN init)
        stn_w=jnp.zeros((3, 6), f32),
        stn_b=jnp.array([1.0, 0.0, 0.0, 0.0, 1.0, 0.0], f32),
        # patch embed (XLA path; keep f32)
        pe_w1=nrm((3 * 3 * 3, PE_MID)), pe_b1=jnp.zeros((PE_MID,), f32),
        pe_w2=nrm((3 * 3 * PE_MID, D0)), pe_b2=jnp.zeros((D0,), f32),
        # TODO(synk): pos embed hard-coded for 16x32 input ((16//4)*(32//4) tokens).
        pos=nrm((1, (16 // 4) * (32 // 4), D0)),
        # mixing blocks / subsample convs
        blk1=block_params(D0), blk2=block_params(D1), blk3=block_params(D2),
        sub1=sub_params(D0, D1), sub2=sub_params(D1, D2),
        # final norm + last_conv (1x1) + CTC head (padded)
        norm_g=jnp.ones((1, D2), f32), norm_b=jnp.zeros((1, D2), f32),
        last_w=nrm((D2, LAST_C), dtype=bf16), last_b=jnp.zeros((1, LAST_C), f32),
        head_w=head_w, head_b=head_b,
    )


if __name__ == "__main__":
    key = jax.random.PRNGKey(0)
    # small synthetic text-recognition image: B=2, C=3, H=16, W=32  (NCHW)
    x = jax.random.normal(key, (2, 3, 16, 32), jnp.float32)
    params = init_params(0)

    fwd = jax.jit(svtr_forward)
    out = jax.block_until_ready(fwd(params, x))

    assert out.shape == (2, 8, NUM_CLASSES), out.shape
    assert bool(jnp.all(jnp.isfinite(out)))
    # eval-mode CTC head applies softmax -> rows sum to 1 (padded classes carry 0 mass)
    assert bool(jnp.allclose(jnp.sum(out, axis=-1), 1.0, atol=1e-4))
    print("KERNEL_OK")
</pallas_src>

<mosaic_0001>
module attributes {stable_mosaic.version = 11 : i64} {
  func.func @_backbone_kernel(%arg0: i32, %arg1: memref<1x32x32xf32, #tpu.memory_space<vmem>>, %arg2: memref<32x32xf32, #tpu.memory_space<vmem>>, %arg3: memref<1x32xf32, #tpu.memory_space<vmem>>, %arg4: memref<1x32xf32, #tpu.memory_space<vmem>>, %arg5: memref<32x96xbf16, #tpu.memory_space<vmem>>, %arg6: memref<1x96xf32, #tpu.memory_space<vmem>>, %arg7: memref<32x32xbf16, #tpu.memory_space<vmem>>, %arg8: memref<1x32xf32, #tpu.memory_space<vmem>>, %arg9: memref<1x32xf32, #tpu.memory_space<vmem>>, %arg10: memref<1x32xf32, #tpu.memory_space<vmem>>, %arg11: memref<32x128xbf16, #tpu.memory_space<vmem>>, %arg12: memref<1x128xf32, #tpu.memory_space<vmem>>, %arg13: memref<128x32xbf16, #tpu.memory_space<vmem>>, %arg14: memref<1x32xf32, #tpu.memory_space<vmem>>, %arg15: memref<9x32x64xbf16, #tpu.memory_space<vmem>>, %arg16: memref<1x64xf32, #tpu.memory_space<vmem>>, %arg17: memref<1x64xf32, #tpu.memory_space<vmem>>, %arg18: memref<1x64xf32, #tpu.memory_space<vmem>>, %arg19: memref<1x64xf32, #tpu.memory_space<vmem>>, %arg20: memref<1x64xf32, #tpu.memory_space<vmem>>, %arg21: memref<64x192xbf16, #tpu.memory_space<vmem>>, %arg22: memref<1x192xf32, #tpu.memory_space<vmem>>, %arg23: memref<64x64xbf16, #tpu.memory_space<vmem>>, %arg24: memref<1x64xf32, #tpu.memory_space<vmem>>, %arg25: memref<1x64xf32, #tpu.memory_space<vmem>>, %arg26: memref<1x64xf32, #tpu.memory_space<vmem>>, %arg27: memref<64x256xbf16, #tpu.memory_space<vmem>>, %arg28: memref<1x256xf32, #tpu.memory_space<vmem>>, %arg29: memref<256x64xbf16, #tpu.memory_space<vmem>>, %arg30: memref<1x64xf32, #tpu.memory_space<vmem>>, %arg31: memref<9x64x96xbf16, #tpu.memory_space<vmem>>, %arg32: memref<1x96xf32, #tpu.memory_space<vmem>>, %arg33: memref<1x96xf32, #tpu.memory_space<vmem>>, %arg34: memref<1x96xf32, #tpu.memory_space<vmem>>, %arg35: memref<1x96xf32, #tpu.memory_space<vmem>>, %arg36: memref<1x96xf32, #tpu.memory_space<vmem>>, %arg37: memref<96x288xbf16, #tpu.memory_space<vmem>>, %arg38: memref<1x288xf32, #tpu.memory_space<vmem>>, %arg39: memref<96x96xbf16, #tpu.memory_space<vmem>>, %arg40: memref<1x96xf32, #tpu.memory_space<vmem>>, %arg41: memref<1x96xf32, #tpu.memory_space<vmem>>, %arg42: memref<1x96xf32, #tpu.memory_space<vmem>>, %arg43: memref<96x384xbf16, #tpu.memory_space<vmem>>, %arg44: memref<1x384xf32, #tpu.memory_space<vmem>>, %arg45: memref<384x96xbf16, #tpu.memory_space<vmem>>, %arg46: memref<1x96xf32, #tpu.memory_space<vmem>>, %arg47: memref<1x96xf32, #tpu.memory_space<vmem>>, %arg48: memref<1x96xf32, #tpu.memory_space<vmem>>, %arg49: memref<96x192xbf16, #tpu.memory_space<vmem>>, %arg50: memref<1x192xf32, #tpu.memory_space<vmem>>, %arg51: memref<192x256xbf16, #tpu.memory_space<vmem>>, %arg52: memref<1x256xf32, #tpu.memory_space<vmem>>, %arg53: memref<1x8x256xf32, #tpu.memory_space<vmem>>) attributes {dimension_semantics = [#tpu.dimension_semantics<parallel>], iteration_bounds = array<i64: 2>, scalar_prefetch = 0 : i64, scratch_operands = 0 : i64, tpu.core_type = #tpu.core_type<tc>, window_params = [{transform_indices = @transform_0, window_bounds = array<i64: 1, 32, 32>}, {pipeline_mode = #tpu.pipeline_mode<synchronous>, transform_indices = @transform_1, window_bounds = array<i64: 32, 32>}, {pipeline_mode = #tpu.pipeline_mode<synchronous>, transform_indices = @transform_2, window_bounds = array<i64: 1, 32>}, {pipeline_mode = #tpu.pipeline_mode<synchronous>, transform_indices = @transform_3, window_bounds = array<i64: 1, 32>}, {pipeline_mode = #tpu.pipeline_mode<synchronous>, transform_indices = @transform_4, window_bounds = array<i64: 32, 96>}, {pipeline_mode = #tpu.pipeline_mode<synchronous>, transform_indices = @transform_5, window_bounds = array<i64: 1, 96>}, {pipeline_mode = #tpu.pipeline_mode<synchronous>, transform_indices = @transform_6, window_bounds = array<i64: 32, 32>}, {pipeline_mode = #tpu.pipeline_mode<synchronous>, transform_indices = @transform_7, window_bounds = array<i64: 1, 32>}, {pipeline_mode = #tpu.pipeline_mode<synchronous>, transform_indices = @transform_8, window_bounds = array<i64: 1, 32>}, {pipeline_mode = #tpu.pipeline_mode<synchronous>, transform_indices = @transform_9, window_bounds = array<i64: 1, 32>}, {pipeline_mode = #tpu.pipeline_mode<synchronous>, transform_indices = @transform_10, window_bounds = array<i64: 32, 128>}, {pipeline_mode = #tpu.pipeline_mode<synchronous>, transform_indices = @transform_11, window_bounds = array<i64: 1, 128>}, {pipeline_mode = #tpu.pipeline_mode<synchronous>, transform_indices = @transform_12, window_bounds = array<i64: 128, 32>}, {pipeline_mode = #tpu.pipeline_mode<synchronous>, transform_indices = @transform_13, window_bounds = array<i64: 1, 32>}, {pipeline_mode = #tpu.pipeline_mode<synchronous>, transform_indices = @transform_14, window_bounds = array<i64: 9, 32, 64>}, {pipeline_mode = #tpu.pipeline_mode<synchronous>, transform_indices = @transform_15, window_bounds = array<i64: 1, 64>}, {pipeline_mode = #tpu.pipeline_mode<synchronous>, transform_indices = @transform_16, window_bounds = array<i64: 1, 64>}, {pipeline_mode = #tpu.pipeline_mode<synchronous>, transform_indices = @transform_17, window_bounds = array<i64: 1, 64>}, {pipeline_mode = #tpu.pipeline_mode<synchronous>, transform_indices = @transform_18, window_bounds = array<i64: 1, 64>}, {pipeline_mode = #tpu.pipeline_mode<synchronous>, transform_indices = @transform_19, window_bounds = array<i64: 1, 64>}, {pipeline_mode = #tpu.pipeline_mode<synchronous>, transform_indices = @transform_20, window_bounds = array<i64: 64, 192>}, {pipeline_mode = #tpu.pipeline_mode<synchronous>, transform_indices = @transform_21, window_bounds = array<i64: 1, 192>}, {pipeline_mode = #tpu.pipeline_mode<synchronous>, transform_indices = @transform_22, window_bounds = array<i64: 64, 64>}, {pipeline_mode = #tpu.pipeline_mode<synchronous>, transform_indices = @transform_23, window_bounds = array<i64: 1, 64>}, {pipeline_mode = #tpu.pipeline_mode<synchronous>, transform_indices = @transform_24, window_bounds = array<i64: 1, 64>}, {pipeline_mode = #tpu.pipeline_mode<synchronous>, transform_indices = @transform_25, window_bounds = array<i64: 1, 64>}, {pipeline_mode = #tpu.pipeline_mode<synchronous>, transform_indices = @transform_26, window_bounds = array<i64: 64, 256>}, {pipeline_mode = #tpu.pipeline_mode<synchronous>, transform_indices = @transform_27, window_bounds = array<i64: 1, 256>}, {pipeline_mode = #tpu.pipeline_mode<synchronous>, transform_indices = @transform_28, window_bounds = array<i64: 256, 64>}, {pipeline_mode = #tpu.pipeline_mode<synchronous>, transform_indices = @transform_29, window_bounds = array<i64: 1, 64>}, {pipeline_mode = #tpu.pipeline_mode<synchronous>, transform_indices = @transform_30, window_bounds = array<i64: 9, 64, 96>}, {pipeline_mode = #tpu.pipeline_mode<synchronous>, transform_indices = @transform_31, window_bounds = array<i64: 1, 96>}, {pipeline_mode = #tpu.pipeline_mode<synchronous>, transform_indices = @transform_32, window_bounds = array<i64: 1, 96>}, {pipeline_mode = #tpu.pipeline_mode<synchronous>, transform_indices = @transform_33, window_bounds = array<i64: 1, 96>}, {pipeline_mode = #tpu.pipeline_mode<synchronous>, transform_indices = @transform_34, window_bounds = array<i64: 1, 96>}, {pipeline_mode = #tpu.pipeline_mode<synchronous>, transform_indices = @transform_35, window_bounds = array<i64: 1, 96>}, {pipeline_mode = #tpu.pipeline_mode<synchronous>, transform_indices = @transform_36, window_bounds = array<i64: 96, 288>}, {pipeline_mode = #tpu.pipeline_mode<synchronous>, transform_indices = @transform_37, window_bounds = array<i64: 1, 288>}, {pipeline_mode = #tpu.pipeline_mode<synchronous>, transform_indices = @transform_38, window_bounds = array<i64: 96, 96>}, {pipeline_mode = #tpu.pipeline_mode<synchronous>, transform_indices = @transform_39, window_bounds = array<i64: 1, 96>}, {pipeline_mode = #tpu.pipeline_mode<synchronous>, transform_indices = @transform_40, window_bounds = array<i64: 1, 96>}, {pipeline_mode = #tpu.pipeline_mode<synchronous>, transform_indices = @transform_41, window_bounds = array<i64: 1, 96>}, {pipeline_mode = #tpu.pipeline_mode<synchronous>, transform_indices = @transform_42, window_bounds = array<i64: 96, 384>}, {pipeline_mode = #tpu.pipeline_mode<synchronous>, transform_indices = @transform_43, window_bounds = array<i64: 1, 384>}, {pipeline_mode = #tpu.pipeline_mode<synchronous>, transform_indices = @transform_44, window_bounds = array<i64: 384, 96>}, {pipeline_mode = #tpu.pipeline_mode<synchronous>, transform_indices = @transform_45, window_bounds = array<i64: 1, 96>}, {pipeline_mode = #tpu.pipeline_mode<synchronous>, transform_indices = @transform_46, window_bounds = array<i64: 1, 96>}, {pipeline_mode = #tpu.pipeline_mode<synchronous>, transform_indices = @transform_47, window_bounds = array<i64: 1, 96>}, {pipeline_mode = #tpu.pipeline_mode<synchronous>, transform_indices = @transform_48, window_bounds = array<i64: 96, 192>}, {pipeline_mode = #tpu.pipeline_mode<synchronous>, transform_indices = @transform_49, window_bounds = array<i64: 1, 192>}, {pipeline_mode = #tpu.pipeline_mode<synchronous>, transform_indices = @transform_50, window_bounds = array<i64: 192, 256>}, {pipeline_mode = #tpu.pipeline_mode<synchronous>, transform_indices = @transform_51, window_bounds = array<i64: 1, 256>}, {transform_indices = @transform_52, window_bounds = array<i64: 1, 8, 256>}]} {
    %c0 = arith.constant 0 : index
    %c0_0 = arith.constant 0 : index
    %c0_1 = arith.constant 0 : index
    %0 = vector.load %arg1[%c0, %c0_0, %c0_1] : memref<1x32x32xf32, #tpu.memory_space<vmem>>, vector<1x32x32xf32>
    %1 = vector.shape_cast %0 : vector<1x32x32xf32> to vector<32x32xf32>
    %c0_2 = arith.constant 0 : index
    %c0_3 = arith.constant 0 : index
    %2 = vector.load %arg2[%c0_2, %c0_3] : memref<32x32xf32, #tpu.memory_space<vmem>>, vector<32x32xf32>
    %c0_4 = arith.constant 0 : index
    %c0_5 = arith.constant 0 : index
    %3 = vector.load %arg3[%c0_4, %c0_5] : memref<1x32xf32, #tpu.memory_space<vmem>>, vector<1x32xf32>
    %c0_6 = arith.constant 0 : index
    %c0_7 = arith.constant 0 : index
    %4 = vector.load %arg4[%c0_6, %c0_7] : memref<1x32xf32, #tpu.memory_space<vmem>>, vector<1x32xf32>
    %c0_8 = arith.constant 0 : index
    %c0_9 = arith.constant 0 : index
    %5 = vector.load %arg5[%c0_8, %c0_9] : memref<32x96xbf16, #tpu.memory_space<vmem>>, vector<32x96xbf16>
    %c0_10 = arith.constant 0 : index
    %c0_11 = arith.constant 0 : index
    %6 = vector.load %arg6[%c0_10, %c0_11] : memref<1x96xf32, #tpu.memory_space<vmem>>, vector<1x96xf32>
    %c0_12 = arith.constant 0 : index
    %c0_13 = arith.constant 0 : index
    %7 = vector.load %arg7[%c0_12, %c0_13] : memref<32x32xbf16, #tpu.memory_space<vmem>>, vector<32x32xbf16>
    %c0_14 = arith.constant 0 : index
    %c0_15 = arith.constant 0 : index
    %8 = vector.load %arg8[%c0_14, %c0_15] : memref<1x32xf32, #tpu.memory_space<vmem>>, vector<1x32xf32>
    %c0_16 = arith.constant 0 : index
    %c0_17 = arith.constant 0 : index
    %9 = vector.load %arg9[%c0_16, %c0_17] : memref<1x32xf32, #tpu.memory_space<vmem>>, vector<1x32xf32>
    %c0_18 = arith.constant 0 : index
    %c0_19 = arith.constant 0 : index
    %10 = vector.load %arg10[%c0_18, %c0_19] : memref<1x32xf32, #tpu.memory_space<vmem>>, vector<1x32xf32>
    %c0_20 = arith.constant 0 : index
    %c0_21 = arith.constant 0 : index
    %11 = vector.load %arg11[%c0_20, %c0_21] : memref<32x128xbf16, #tpu.memory_space<vmem>>, vector<32x128xbf16>
    %c0_22 = arith.constant 0 : index
    %c0_23 = arith.constant 0 : index
    %12 = vector.load %arg12[%c0_22, %c0_23] : memref<1x128xf32, #tpu.memory_space<vmem>>, vector<1x128xf32>
    %c0_24 = arith.constant 0 : index
    %c0_25 = arith.constant 0 : index
    %13 = vector.load %arg13[%c0_24, %c0_25] : memref<128x32xbf16, #tpu.memory_space<vmem>>, vector<128x32xbf16>
    %c0_26 = arith.constant 0 : index
    %c0_27 = arith.constant 0 : index
    %14 = vector.load %arg14[%c0_26, %c0_27] : memref<1x32xf32, #tpu.memory_space<vmem>>, vector<1x32xf32>
    %cst = arith.constant dense<0.000000e+00> : vector<32xf32>
    %15 = vector.multi_reduction <add>, %1, %cst [1] : vector<32x32xf32> to vector<32xf32>
    %16 = vector.shape_cast %15 : vector<32xf32> to vector<32x1xf32>
    %cst_28 = arith.constant 3.200000e+01 : f32
    %17 = vector.broadcast %cst_28 : f32 to vector<32x1xf32>
    %18 = arith.divf %16, %17 : vector<32x1xf32>
    %19 = vector.broadcast %18 : vector<32x1xf32> to vector<32x32xf32>
    %20 = arith.subf %1, %19 : vector<32x32xf32>
    %21 = arith.mulf %20, %20 : vector<32x32xf32>
    %cst_29 = arith.constant dense<0.000000e+00> : vector<32xf32>
    %22 = vector.multi_reduction <add>, %21, %cst_29 [1] : vector<32x32xf32> to vector<32xf32>
    %23 = vector.shape_cast %22 : vector<32xf32> to vector<32x1xf32>
    %cst_30 = arith.constant 3.200000e+01 : f32
    %24 = vector.broadcast %cst_30 : f32 to vector<32x1xf32>
    %25 = arith.divf %23, %24 : vector<32x1xf32>
    %26 = vector.broadcast %18 : vector<32x1xf32> to vector<32x32xf32>
    %27 = arith.subf %1, %26 : vector<32x32xf32>
    %cst_31 = arith.constant 9.99999997E-7 : f32
    %28 = vector.broadcast %cst_31 : f32 to vector<32x1xf32>
    %29 = arith.addf %25, %28 : vector<32x1xf32>
    %30 = math.rsqrt %29 : vector<32x1xf32>
    %31 = vector.broadcast %30 : vector<32x1xf32> to vector<32x32xf32>
    %32 = arith.mulf %27, %31 : vector<32x32xf32>
    %33 = vector.broadcast %3 : vector<1x32xf32> to vector<32x32xf32>
    %34 = arith.mulf %32, %33 : vector<32x32xf32>
    %35 = vector.broadcast %4 : vector<1x32xf32> to vector<32x32xf32>
    %36 = arith.addf %34, %35 : vector<32x32xf32>
    %37 = arith.truncf %36 : vector<32x32xf32> to vector<32x32xbf16>
    %cst_32 = arith.constant dense<0.000000e+00> : vector<32x96xf32>
    %38 = tpu.matmul %37, %5, %cst_32 {dimension_numbers = #tpu.dot_dimension_numbers<[1], [0], [0], [1], [0, 0, 1, 1], [], []>} : vector<32x32xbf16>, vector<32x96xbf16>, vector<32x96xf32> -> vector<32x96xf32>
    %39 = vector.broadcast %6 : vector<1x96xf32> to vector<32x96xf32>
    %40 = arith.addf %38, %39 : vector<32x96xf32>
    %41 = arith.truncf %40 : vector<32x96xf32> to vector<32x96xbf16>
    %42 = vector.extract_strided_slice %41 {offsets = [0, 0], sizes = [32, 16], strides = [1, 1]} : vector<32x96xbf16> to vector<32x16xbf16>
    %43 = vector.extract_strided_slice %41 {offsets = [0, 32], sizes = [32, 16], strides = [1, 1]} : vector<32x96xbf16> to vector<32x16xbf16>
    %44 = vector.extract_strided_slice %41 {offsets = [0, 64], sizes = [32, 16], strides = [1, 1]} : vector<32x96xbf16> to vector<32x16xbf16>
    %cst_33 = arith.constant dense<0.000000e+00> : vector<32x32xf32>
    %45 = tpu.matmul %42, %43, %cst_33 {dimension_numbers = #tpu.dot_dimension_numbers<[1], [1], [0], [0], [0, 0, 1, 0], [], []>} : vector<32x16xbf16>, vector<32x16xbf16>, vector<32x32xf32> -> vector<32x32xf32>
    %cst_34 = arith.constant 2.500000e-01 : f32
    %46 = vector.broadcast %cst_34 : f32 to vector<32x32xf32>
    %47 = arith.mulf %45, %46 : vector<32x32xf32>
    %48 = arith.addf %47, %2 : vector<32x32xf32>
    %cst_35 = arith.constant dense<0xFF800000> : vector<32xf32>
    %49 = vector.multi_reduction <maximumf>, %48, %cst_35 [1] : vector<32x32xf32> to vector<32xf32>
    %50 = vector.shape_cast %49 : vector<32xf32> to vector<32x1xf32>
    %51 = vector.broadcast %50 : vector<32x1xf32> to vector<32x32xf32>
    %52 = arith.subf %48, %51 : vector<32x32xf32>
    %53 = math.exp %52 : vector<32x32xf32>
    %cst_36 = arith.constant dense<0.000000e+00> : vector<32xf32>
    %54 = vector.multi_reduction <add>, %53, %cst_36 [1] : vector<32x32xf32> to vector<32xf32>
    %55 = vector.shape_cast %54 : vector<32xf32> to vector<32x1xf32>
    %56 = tpu.reciprocal %55 {approx = true} : vector<32x1xf32> -> vector<32x1xf32>
    %57 = vector.broadcast %56 : vector<32x1xf32> to vector<32x32xf32>
    %58 = arith.mulf %53, %57 : vector<32x32xf32>
    %59 = arith.truncf %58 : vector<32x32xf32> to vector<32x32xbf16>
    %cst_37 = arith.constant dense<0.000000e+00> : vector<32x16xf32>
    %60 = tpu.matmul %59, %44, %cst_37 {dimension_numbers = #tpu.dot_dimension_numbers<[1], [0], [0], [1], [0, 0, 1, 1], [], []>} : vector<32x32xbf16>, vector<32x16xbf16>, vector<32x16xf32> -> vector<32x16xf32>
    %61 = vector.extract_strided_slice %41 {offsets = [0, 16], sizes = [32, 16], strides = [1, 1]} : vector<32x96xbf16> to vector<32x16xbf16>
    %62 = vector.extract_strided_slice %41 {offsets = [0, 48], sizes = [32, 16], strides = [1, 1]} : vector<32x96xbf16> to vector<32x16xbf16>
    %63 = vector.extract_strided_slice %41 {offsets = [0, 80], sizes = [32, 16], strides = [1, 1]} : vector<32x96xbf16> to vector<32x16xbf16>
    %cst_38 = arith.constant dense<0.000000e+00> : vector<32x32xf32>
    %64 = tpu.matmul %61, %62, %cst_38 {dimension_numbers = #tpu.dot_dimension_numbers<[1], [1], [0], [0], [0, 0, 1, 0], [], []>} : vector<32x16xbf16>, vector<32x16xbf16>, vector<32x32xf32> -> vector<32x32xf32>
    %cst_39 = arith.constant 2.500000e-01 : f32
    %65 = vector.broadcast %cst_39 : f32 to vector<32x32xf32>
    %66 = arith.mulf %64, %65 : vector<32x32xf32>
    %67 = arith.addf %66, %2 : vector<32x32xf32>
    %cst_40 = arith.constant dense<0xFF800000> : vector<32xf32>
    %68 = vector.multi_reduction <maximumf>, %67, %cst_40 [1] : vector<32x32xf32> to vector<32xf32>
    %69 = vector.shape_cast %68 : vector<32xf32> to vector<32x1xf32>
    %70 = vector.broadcast %69 : vector<32x1xf32> to vector<32x32xf32>
    %71 = arith.subf %67, %70 : vector<32x32xf32>
    %72 = math.exp %71 : vector<32x32xf32>
    %cst_41 = arith.constant dense<0.000000e+00> : vector<32xf32>
    %73 = vector.multi_reduction <add>, %72, %cst_41 [1] : vector<32x32xf32> to vector<32xf32>
    %74 = vector.shape_cast %73 : vector<32xf32> to vector<32x1xf32>
    %75 = tpu.reciprocal %74 {approx = true} : vector<32x1xf32> -> vector<32x1xf32>
    %76 = vector.broadcast %75 : vector<32x1xf32> to vector<32x32xf32>
    %77 = arith.mulf %72, %76 : vector<32x32xf32>
    %78 = arith.truncf %77 : vector<32x32xf32> to vector<32x32xbf16>
    %cst_42 = arith.constant dense<0.000000e+00> : vector<32x16xf32>
    %79 = tpu.matmul %78, %63, %cst_42 {dimension_numbers = #tpu.dot_dimension_numbers<[1], [0], [0], [1], [0, 0, 1, 1], [], []>} : vector<32x32xbf16>, vector<32x16xbf16>, vector<32x16xf32> -> vector<32x16xf32>
    %80 = tpu.concatenate %60, %79 in 1 : vector<32x16xf32>, vector<32x16xf32> -> vector<32x32xf32>
    %81 = arith.truncf %80 : vector<32x32xf32> to vector<32x32xbf16>
    %cst_43 = arith.constant dense<0.000000e+00> : vector<32x32xf32>
    %82 = tpu.matmul %81, %7, %cst_43 {dimension_numbers = #tpu.dot_dimension_numbers<[1], [0], [0], [1], [0, 0, 1, 1], [], []>} : vector<32x32xbf16>, vector<32x32xbf16>, vector<32x32xf32> -> vector<32x32xf32>
    %83 = arith.addf %1, %82 : vector<32x32xf32>
    %84 = vector.broadcast %8 : vector<1x32xf32> to vector<32x32xf32>
    %85 = arith.addf %83, %84 : vector<32x32xf32>
    %cst_44 = arith.constant dense<0.000000e+00> : vector<32xf32>
    %86 = vector.multi_reduction <add>, %85, %cst_44 [1] : vector<32x32xf32> to vector<32xf32>
    %87 = vector.shape_cast %86 : vector<32xf32> to vector<32x1xf32>
    %cst_45 = arith.constant 3.200000e+01 : f32
    %88 = vector.broadcast %cst_45 : f32 to vector<32x1xf32>
    %89 = arith.divf %87, %88 : vector<32x1xf32>
    %90 = vector.broadcast %89 : vector<32x1xf32> to vector<32x32xf32>
    %91 = arith.subf %85, %90 : vector<32x32xf32>
    %92 = arith.mulf %91, %91 : vector<32x32xf32>
    %cst_46 = arith.constant dense<0.000000e+00> : vector<32xf32>
    %93 = vector.multi_reduction <add>, %92, %cst_46 [1] : vector<32x32xf32> to vector<32xf32>
    %94 = vector.shape_cast %93 : vector<32xf32> to vector<32x1xf32>
    %cst_47 = arith.constant 3.200000e+01 : f32
    %95 = vector.broadcast %cst_47 : f32 to vector<32x1xf32>
    %96 = arith.divf %94, %95 : vector<32x1xf32>
    %97 = vector.broadcast %89 : vector<32x1xf32> to vector<32x32xf32>
    %98 = arith.subf %85, %97 : vector<32x32xf32>
    %cst_48 = arith.constant 9.99999997E-7 : f32
    %99 = vector.broadcast %cst_48 : f32 to vector<32x1xf32>
    %100 = arith.addf %96, %99 : vector<32x1xf32>
    %101 = math.rsqrt %100 : vector<32x1xf32>
    %102 = vector.broadcast %101 : vector<32x1xf32> to vector<32x32xf32>
    %103 = arith.mulf %98, %102 : vector<32x32xf32>
    %104 = vector.broadcast %9 : vector<1x32xf32> to vector<32x32xf32>
    %105 = arith.mulf %103, %104 : vector<32x32xf32>
    %106 = vector.broadcast %10 : vector<1x32xf32> to vector<32x32xf32>
    %107 = arith.addf %105, %106 : vector<32x32xf32>
    %108 = arith.truncf %107 : vector<32x32xf32> to vector<32x32xbf16>
    %cst_49 = arith.constant dense<0.000000e+00> : vector<32x128xf32>
    %109 = tpu.matmul %108, %11, %cst_49 {dimension_numbers = #tpu.dot_dimension_numbers<[1], [0], [0], [1], [0, 0, 1, 1], [], []>} : vector<32x32xbf16>, vector<32x128xbf16>, vector<32x128xf32> -> vector<32x128xf32>
    %110 = vector.broadcast %12 : vector<1x128xf32> to vector<32x128xf32>
    %111 = arith.addf %109, %110 : vector<32x128xf32>
    %112 = arith.mulf %111, %111 : vector<32x128xf32>
    %113 = arith.mulf %111, %112 : vector<32x128xf32>
    %cst_50 = arith.constant 4.471500e-02 : f32
    %114 = vector.broadcast %cst_50 : f32 to vector<32x128xf32>
    %115 = arith.mulf %114, %113 : vector<32x128xf32>
    %116 = arith.addf %111, %115 : vector<32x128xf32>
    %cst_51 = arith.constant 0.797884583 : f32
    %117 = vector.broadcast %cst_51 : f32 to vector<32x128xf32>
    %118 = arith.mulf %117, %116 : vector<32x128xf32>
    %119 = math.tanh %118 : vector<32x128xf32>
    %cst_52 = arith.constant 1.000000e+00 : f32
    %120 = vector.broadcast %cst_52 : f32 to vector<32x128xf32>
    %121 = arith.addf %120, %119 : vector<32x128xf32>
    %cst_53 = arith.constant 5.000000e-01 : f32
    %122 = vector.broadcast %cst_53 : f32 to vector<32x128xf32>
    %123 = arith.mulf %122, %121 : vector<32x128xf32>
    %124 = arith.mulf %111, %123 : vector<32x128xf32>
    %125 = arith.truncf %124 : vector<32x128xf32> to vector<32x128xbf16>
    %cst_54 = arith.constant dense<0.000000e+00> : vector<32x32xf32>
    %126 = tpu.matmul %125, %13, %cst_54 {dimension_numbers = #tpu.dot_dimension_numbers<[1], [0], [0], [1], [0, 0, 1, 1], [], []>} : vector<32x128xbf16>, vector<128x32xbf16>, vector<32x32xf32> -> vector<32x32xf32>
    %127 = arith.addf %85, %126 : vector<32x32xf32>
    %128 = vector.broadcast %14 : vector<1x32xf32> to vector<32x32xf32>
    %129 = arith.addf %127, %128 : vector<32x32xf32>
    %c0_55 = arith.constant 0 : index
    %c0_56 = arith.constant 0 : index
    %c0_57 = arith.constant 0 : index
    %130 = vector.load %arg15[%c0_55, %c0_56, %c0_57] : memref<9x32x64xbf16, #tpu.memory_space<vmem>>, vector<9x32x64xbf16>
    %c0_58 = arith.constant 0 : index
    %c0_59 = arith.constant 0 : index
    %131 = vector.load %arg16[%c0_58, %c0_59] : memref<1x64xf32, #tpu.memory_space<vmem>>, vector<1x64xf32>
    %c0_60 = arith.constant 0 : index
    %c0_61 = arith.constant 0 : index
    %132 = vector.load %arg17[%c0_60, %c0_61] : memref<1x64xf32, #tpu.memory_space<vmem>>, vector<1x64xf32>
    %c0_62 = arith.constant 0 : index
    %c0_63 = arith.constant 0 : index
    %133 = vector.load %arg18[%c0_62, %c0_63] : memref<1x64xf32, #tpu.memory_space<vmem>>, vector<1x64xf32>
    %cst_64 = arith.constant 0.000000e+00 : f32
    %134 = vector.broadcast %cst_64 : f32 to vector<8x32xf32>
    %cst_65 = arith.constant 0.000000e+00 : f32
    %135 = vector.broadcast %cst_65 : f32 to vector<1x32xf32>
    %cst_66 = arith.constant 0.000000e+00 : f32
    %136 = vector.broadcast %cst_66 : f32 to vector<16x64xf32>
    %137 = vector.extract_strided_slice %129 {offsets = [8, 0], sizes = [8, 32], strides = [1, 1]} : vector<32x32xf32> to vector<8x32xf32>
    %138 = vector.extract_strided_slice %137 {offsets = [0, 0], sizes = [7, 32], strides = [1, 1]} : vector<8x32xf32> to vector<7x32xf32>
    %139 = tpu.concatenate %135, %138 in 0 : vector<1x32xf32>, vector<7x32xf32> -> vector<8x32xf32>
    %140 = tpu.concatenate %134, %139 in 0 : vector<8x32xf32>, vector<8x32xf32> -> vector<16x32xf32>
    %141 = vector.extract_strided_slice %130 {offsets = [0, 0, 0], sizes = [1, 32, 64], strides = [1, 1, 1]} : vector<9x32x64xbf16> to vector<1x32x64xbf16>
    %142 = vector.shape_cast %141 : vector<1x32x64xbf16> to vector<32x64xbf16>
    %143 = arith.truncf %140 : vector<16x32xf32> to vector<16x32xbf16>
    %cst_67 = arith.constant dense<0.000000e+00> : vector<16x64xf32>
    %144 = tpu.matmul %143, %142, %cst_67 {dimension_numbers = #tpu.dot_dimension_numbers<[1], [0], [0], [1], [0, 0, 1, 1], [], []>} : vector<16x32xbf16>, vector<32x64xbf16>, vector<16x64xf32> -> vector<16x64xf32>
    %145 = arith.addf %136, %144 : vector<16x64xf32>
    %146 = vector.extract_strided_slice %129 {offsets = [8, 0], sizes = [8, 32], strides = [1, 1]} : vector<32x32xf32> to vector<8x32xf32>
    %147 = tpu.concatenate %134, %146 in 0 : vector<8x32xf32>, vector<8x32xf32> -> vector<16x32xf32>
    %148 = vector.extract_strided_slice %130 {offsets = [1, 0, 0], sizes = [1, 32, 64], strides = [1, 1, 1]} : vector<9x32x64xbf16> to vector<1x32x64xbf16>
    %149 = vector.shape_cast %148 : vector<1x32x64xbf16> to vector<32x64xbf16>
    %150 = arith.truncf %147 : vector<16x32xf32> to vector<16x32xbf16>
    %cst_68 = arith.constant dense<0.000000e+00> : vector<16x64xf32>
    %151 = tpu.matmul %150, %149, %cst_68 {dimension_numbers = #tpu.dot_dimension_numbers<[1], [0], [0], [1], [0, 0, 1, 1], [], []>} : vector<16x32xbf16>, vector<32x64xbf16>, vector<16x64xf32> -> vector<16x64xf32>
    %152 = arith.addf %145, %151 : vector<16x64xf32>
    %153 = vector.extract_strided_slice %129 {offsets = [8, 0], sizes = [8, 32], strides = [1, 1]} : vector<32x32xf32> to vector<8x32xf32>
    %154 = vector.extract_strided_slice %153 {offsets = [1, 0], sizes = [7, 32], strides = [1, 1]} : vector<8x32xf32> to vector<7x32xf32>
    %155 = tpu.concatenate %154, %135 in 0 : vector<7x32xf32>, vector<1x32xf32> -> vector<8x32xf32>
    %156 = tpu.concatenate %134, %155 in 0 : vector<8x32xf32>, vector<8x32xf32> -> vector<16x32xf32>
    %157 = vector.extract_strided_slice %130 {offsets = [2, 0, 0], sizes = [1, 32, 64], strides = [1, 1, 1]} : vector<9x32x64xbf16> to vector<1x32x64xbf16>
    %158 = vector.shape_cast %157 : vector<1x32x64xbf16> to vector<32x64xbf16>
    %159 = arith.truncf %156 : vector<16x32xf32> to vector<16x32xbf16>
    %cst_69 = arith.constant dense<0.000000e+00> : vector<16x64xf32>
    %160 = tpu.matmul %159, %158, %cst_69 {dimension_numbers = #tpu.dot_dimension_numbers<[1], [0], [0], [1], [0, 0, 1, 1], [], []>} : vector<16x32xbf16>, vector<32x64xbf16>, vector<16x64xf32> -> vector<16x64xf32>
    %161 = arith.addf %152, %160 : vector<16x64xf32>
    %162 = vector.extract_strided_slice %129 {offsets = [0, 0], sizes = [8, 32], strides = [1, 1]} : vector<32x32xf32> to vector<8x32xf32>
    %163 = vector.extract_strided_slice %162 {offsets = [0, 0], sizes = [7, 32], strides = [1, 1]} : vector<8x32xf32> to vector<7x32xf32>
    %164 = tpu.concatenate %135, %163 in 0 : vector<1x32xf32>, vector<7x32xf32> -> vector<8x32xf32>
    %165 = vector.extract_strided_slice %129 {offsets = [16, 0], sizes = [8, 32], strides = [1, 1]} : vector<32x32xf32> to vector<8x32xf32>
    %166 = vector.extract_strided_slice %165 {offsets = [0, 0], sizes = [7, 32], strides = [1, 1]} : vector<8x32xf32> to vector<7x32xf32>
    %167 = tpu.concatenate %135, %166 in 0 : vector<1x32xf32>, vector<7x32xf32> -> vector<8x32xf32>
    %168 = tpu.concatenate %164, %167 in 0 : vector<8x32xf32>, vector<8x32xf32> -> vector<16x32xf32>
    %169 = vector.extract_strided_slice %130 {offsets = [3, 0, 0], sizes = [1, 32, 64], strides = [1, 1, 1]} : vector<9x32x64xbf16> to vector<1x32x64xbf16>
    %170 = vector.shape_cast %169 : vector<1x32x64xbf16> to vector<32x64xbf16>
    %171 = arith.truncf %168 : vector<16x32xf32> to vector<16x32xbf16>
    %cst_70 = arith.constant dense<0.000000e+00> : vector<16x64xf32>
    %172 = tpu.matmul %171, %170, %cst_70 {dimension_numbers = #tpu.dot_dimension_numbers<[1], [0], [0], [1], [0, 0, 1, 1], [], []>} : vector<16x32xbf16>, vector<32x64xbf16>, vector<16x64xf32> -> vector<16x64xf32>
    %173 = arith.addf %161, %172 : vector<16x64xf32>
    %174 = vector.extract_strided_slice %129 {offsets = [0, 0], sizes = [8, 32], strides = [1, 1]} : vector<32x32xf32> to vector<8x32xf32>
    %175 = vector.extract_strided_slice %129 {offsets = [16, 0], sizes = [8, 32], strides = [1, 1]} : vector<32x32xf32> to vector<8x32xf32>
    %176 = tpu.concatenate %174, %175 in 0 : vector<8x32xf32>, vector<8x32xf32> -> vector<16x32xf32>
    %177 = vector.extract_strided_slice %130 {offsets = [4, 0, 0], sizes = [1, 32, 64], strides = [1, 1, 1]} : vector<9x32x64xbf16> to vector<1x32x64xbf16>
    %178 = vector.shape_cast %177 : vector<1x32x64xbf16> to vector<32x64xbf16>
    %179 = arith.truncf %176 : vector<16x32xf32> to vector<16x32xbf16>
    %cst_71 = arith.constant dense<0.000000e+00> : vector<16x64xf32>
    %180 = tpu.matmul %179, %178, %cst_71 {dimension_numbers = #tpu.dot_dimension_numbers<[1], [0], [0], [1], [0, 0, 1, 1], [], []>} : vector<16x32xbf16>, vector<32x64xbf16>, vector<16x64xf32> -> vector<16x64xf32>
    %181 = arith.addf %173, %180 : vector<16x64xf32>
    %182 = vector.extract_strided_slice %129 {offsets = [0, 0], sizes = [8, 32], strides = [1, 1]} : vector<32x32xf32> to vector<8x32xf32>
    %183 = vector.extract_strided_slice %182 {offsets = [1, 0], sizes = [7, 32], strides = [1, 1]} : vector<8x32xf32> to vector<7x32xf32>
    %184 = tpu.concatenate %183, %135 in 0 : vector<7x32xf32>, vector<1x32xf32> -> vector<8x32xf32>
    %185 = vector.extract_strided_slice %129 {offsets = [16, 0], sizes = [8, 32], strides = [1, 1]} : vector<32x32xf32> to vector<8x32xf32>
    %186 = vector.extract_strided_slice %185 {offsets = [1, 0], sizes = [7, 32], strides = [1, 1]} : vector<8x32xf32> to vector<7x32xf32>
    %187 = tpu.concatenate %186, %135 in 0 : vector<7x32xf32>, vector<1x32xf32> -> vector<8x32xf32>
    %188 = tpu.concatenate %184, %187 in 0 : vector<8x32xf32>, vector<8x32xf32> -> vector<16x32xf32>
    %189 = vector.extract_strided_slice %130 {offsets = [5, 0, 0], sizes = [1, 32, 64], strides = [1, 1, 1]} : vector<9x32x64xbf16> to vector<1x32x64xbf16>
    %190 = vector.shape_cast %189 : vector<1x32x64xbf16> to vector<32x64xbf16>
    %191 = arith.truncf %188 : vector<16x32xf32> to vector<16x32xbf16>
    %cst_72 = arith.constant dense<0.000000e+00> : vector<16x64xf32>
    %192 = tpu.matmul %191, %190, %cst_72 {dimension_numbers = #tpu.dot_dimension_numbers<[1], [0], [0], [1], [0, 0, 1, 1], [], []>} : vector<16x32xbf16>, vector<32x64xbf16>, vector<16x64xf32> -> vector<16x64xf32>
    %193 = arith.addf %181, %192 : vector<16x64xf32>
    %194 = vector.extract_strided_slice %129 {offsets = [8, 0], sizes = [8, 32], strides = [1, 1]} : vector<32x32xf32> to vector<8x32xf32>
    %195 = vector.extract_strided_slice %194 {offsets = [0, 0], sizes = [7, 32], strides = [1, 1]} : vector<8x32xf32> to vector<7x32xf32>
    %196 = tpu.concatenate %135, %195 in 0 : vector<1x32xf32>, vector<7x32xf32> -> vector<8x32xf32>
    %197 = vector.extract_strided_slice %129 {offsets = [24, 0], sizes = [8, 32], strides = [1, 1]} : vector<32x32xf32> to vector<8x32xf32>
    %198 = vector.extract_strided_slice %197 {offsets = [0, 0], sizes = [7, 32], strides = [1, 1]} : vector<8x32xf32> to vector<7x32xf32>
    %199 = tpu.concatenate %135, %198 in 0 : vector<1x32xf32>, vector<7x32xf32> -> vector<8x32xf32>
    %200 = tpu.concatenate %196, %199 in 0 : vector<8x32xf32>, vector<8x32xf32> -> vector<16x32xf32>
    %201 = vector.extract_strided_slice %130 {offsets = [6, 0, 0], sizes = [1, 32, 64], strides = [1, 1, 1]} : vector<9x32x64xbf16> to vector<1x32x64xbf16>
    %202 = vector.shape_cast %201 : vector<1x32x64xbf16> to vector<32x64xbf16>
    %203 = arith.truncf %200 : vector<16x32xf32> to vector<16x32xbf16>
    %cst_73 = arith.constant dense<0.000000e+00> : vector<16x64xf32>
    %204 = tpu.matmul %203, %202, %cst_73 {dimension_numbers = #tpu.dot_dimension_numbers<[1], [0], [0], [1], [0, 0, 1, 1], [], []>} : vector<16x32xbf16>, vector<32x64xbf16>, vector<16x64xf32> -> vector<16x64xf32>
    %205 = arith.addf %193, %204 : vector<16x64xf32>
    %206 = vector.extract_strided_slice %129 {offsets = [8, 0], sizes = [8, 32], strides = [1, 1]} : vector<32x32xf32> to vector<8x32xf32>
    %207 = vector.extract_strided_slice %129 {offsets = [24, 0], sizes = [8, 32], strides = [1, 1]} : vector<32x32xf32> to vector<8x32xf32>
    %208 = tpu.concatenate %206, %207 in 0 : vector<8x32xf32>, vector<8x32xf32> -> vector<16x32xf32>
    %209 = vector.extract_strided_slice %130 {offsets = [7, 0, 0], sizes = [1, 32, 64], strides = [1, 1, 1]} : vector<9x32x64xbf16> to vector<1x32x64xbf16>
    %210 = vector.shape_cast %209 : vector<1x32x64xbf16> to vector<32x64xbf16>
    %211 = arith.truncf %208 : vector<16x32xf32> to vector<16x32xbf16>
    %cst_74 = arith.constant dense<0.000000e+00> : vector<16x64xf32>
    %212 = tpu.matmul %211, %210, %cst_74 {dimension_numbers = #tpu.dot_dimension_numbers<[1], [0], [0], [1], [0, 0, 1, 1], [], []>} : vector<16x32xbf16>, vector<32x64xbf16>, vector<16x64xf32> -> vector<16x64xf32>
    %213 = arith.addf %205, %212 : vector<16x64xf32>
    %214 = vector.extract_strided_slice %129 {offsets = [8, 0], sizes = [8, 32], strides = [1, 1]} : vector<32x32xf32> to vector<8x32xf32>
    %215 = vector.extract_strided_slice %214 {offsets = [1, 0], sizes = [7, 32], strides = [1, 1]} : vector<8x32xf32> to vector<7x32xf32>
    %216 = tpu.concatenate %215, %135 in 0 : vector<7x32xf32>, vector<1x32xf32> -> vector<8x32xf32>
    %217 = vector.extract_strided_slice %129 {offsets = [24, 0], sizes = [8, 32], strides = [1, 1]} : vector<32x32xf32> to vector<8x32xf32>
    %218 = vector.extract_strided_slice %217 {offsets = [1, 0], sizes = [7, 32], strides = [1, 1]} : vector<8x32xf32> to vector<7x32xf32>
    %219 = tpu.concatenate %218, %135 in 0 : vector<7x32xf32>, vector<1x32xf32> -> vector<8x32xf32>
    %220 = tpu.concatenate %216, %219 in 0 : vector<8x32xf32>, vector<8x32xf32> -> vector<16x32xf32>
    %221 = vector.extract_strided_slice %130 {offsets = [8, 0, 0], sizes = [1, 32, 64], strides = [1, 1, 1]} : vector<9x32x64xbf16> to vector<1x32x64xbf16>
    %222 = vector.shape_cast %221 : vector<1x32x64xbf16> to vector<32x64xbf16>
    %223 = arith.truncf %220 : vector<16x32xf32> to vector<16x32xbf16>
    %cst_75 = arith.constant dense<0.000000e+00> : vector<16x64xf32>
    %224 = tpu.matmul %223, %222, %cst_75 {dimension_numbers = #tpu.dot_dimension_numbers<[1], [0], [0], [1], [0, 0, 1, 1], [], []>} : vector<16x32xbf16>, vector<32x64xbf16>, vector<16x64xf32> -> vector<16x64xf32>
    %225 = arith.addf %213, %224 : vector<16x64xf32>
    %226 = vector.broadcast %131 : vector<1x64xf32> to vector<16x64xf32>
    %227 = arith.addf %225, %226 : vector<16x64xf32>
    %cst_76 = arith.constant dense<0.000000e+00> : vector<16xf32>
    %228 = vector.multi_reduction <add>, %227, %cst_76 [1] : vector<16x64xf32> to vector<16xf32>
    %229 = vector.shape_cast %228 : vector<16xf32> to vector<16x1xf32>
    %cst_77 = arith.constant 6.400000e+01 : f32
    %230 = vector.broadcast %cst_77 : f32 to vector<16x1xf32>
    %231 = arith.divf %229, %230 : vector<16x1xf32>
    %232 = vector.broadcast %231 : vector<16x1xf32> to vector<16x64xf32>
    %233 = arith.subf %227, %232 : vector<16x64xf32>
    %234 = arith.mulf %233, %233 : vector<16x64xf32>
    %cst_78 = arith.constant dense<0.000000e+00> : vector<16xf32>
    %235 = vector.multi_reduction <add>, %234, %cst_78 [1] : vector<16x64xf32> to vector<16xf32>
    %236 = vector.shape_cast %235 : vector<16xf32> to vector<16x1xf32>
    %cst_79 = arith.constant 6.400000e+01 : f32
    %237 = vector.broadcast %cst_79 : f32 to vector<16x1xf32>
    %238 = arith.divf %236, %237 : vector<16x1xf32>
    %239 = vector.broadcast %231 : vector<16x1xf32> to vector<16x64xf32>
    %240 = arith.subf %227, %239 : vector<16x64xf32>
    %cst_80 = arith.constant 9.99999997E-7 : f32
    %241 = vector.broadcast %cst_80 : f32 to vector<16x1xf32>
    %242 = arith.addf %238, %241 : vector<16x1xf32>
    %243 = math.rsqrt %242 : vector<16x1xf32>
    %244 = vector.broadcast %243 : vector<16x1xf32> to vector<16x64xf32>
    %245 = arith.mulf %240, %244 : vector<16x64xf32>
    %246 = vector.broadcast %132 : vector<1x64xf32> to vector<16x64xf32>
    %247 = arith.mulf %245, %246 : vector<16x64xf32>
    %248 = vector.broadcast %133 : vector<1x64xf32> to vector<16x64xf32>
    %249 = arith.addf %247, %248 : vector<16x64xf32>
    %c0_81 = arith.constant 0 : index
    %c0_82 = arith.constant 0 : index
    %250 = vector.load %arg19[%c0_81, %c0_82] : memref<1x64xf32, #tpu.memory_space<vmem>>, vector<1x64xf32>
    %c0_83 = arith.constant 0 : index
    %c0_84 = arith.constant 0 : index
    %251 = vector.load %arg20[%c0_83, %c0_84] : memref<1x64xf32, #tpu.memory_space<vmem>>, vector<1x64xf32>
    %c0_85 = arith.constant 0 : index
    %c0_86 = arith.constant 0 : index
    %252 = vector.load %arg21[%c0_85, %c0_86] : memref<64x192xbf16, #tpu.memory_space<vmem>>, vector<64x192xbf16>
    %c0_87 = arith.constant 0 : index
    %c0_88 = arith.constant 0 : index
    %253 = vector.load %arg22[%c0_87, %c0_88] : memref<1x192xf32, #tpu.memory_space<vmem>>, vector<1x192xf32>
    %c0_89 = arith.constant 0 : index
    %c0_90 = arith.constant 0 : index
    %254 = vector.load %arg23[%c0_89, %c0_90] : memref<64x64xbf16, #tpu.memory_space<vmem>>, vector<64x64xbf16>
    %c0_91 = arith.constant 0 : index
    %c0_92 = arith.constant 0 : index
    %255 = vector.load %arg24[%c0_91, %c0_92] : memref<1x64xf32, #tpu.memory_space<vmem>>, vector<1x64xf32>
    %c0_93 = arith.constant 0 : index
    %c0_94 = arith.constant 0 : index
    %256 = vector.load %arg25[%c0_93, %c0_94] : memref<1x64xf32, #tpu.memory_space<vmem>>, vector<1x64xf32>
    %c0_95 = arith.constant 0 : index
    %c0_96 = arith.constant 0 : index
    %257 = vector.load %arg26[%c0_95, %c0_96] : memref<1x64xf32, #tpu.memory_space<vmem>>, vector<1x64xf32>
    %c0_97 = arith.constant 0 : index
    %c0_98 = arith.constant 0 : index
    %258 = vector.load %arg27[%c0_97, %c0_98] : memref<64x256xbf16, #tpu.memory_space<vmem>>, vector<64x256xbf16>
    %c0_99 = arith.constant 0 : index
    %c0_100 = arith.constant 0 : index
    %259 = vector.load %arg28[%c0_99, %c0_100] : memref<1x256xf32, #tpu.memory_space<vmem>>, vector<1x256xf32>
    %c0_101 = arith.constant 0 : index
    %c0_102 = arith.constant 0 : index
    %260 = vector.load %arg29[%c0_101, %c0_102] : memref<256x64xbf16, #tpu.memory_space<vmem>>, vector<256x64xbf16>
    %c0_103 = arith.constant 0 : index
    %c0_104 = arith.constant 0 : index
    %261 = vector.load %arg30[%c0_103, %c0_104] : memref<1x64xf32, #tpu.memory_space<vmem>>, vector<1x64xf32>
    %cst_105 = arith.constant dense<0.000000e+00> : vector<16xf32>
    %262 = vector.multi_reduction <add>, %249, %cst_105 [1] : vector<16x64xf32> to vector<16xf32>
    %263 = vector.shape_cast %262 : vector<16xf32> to vector<16x1xf32>
    %cst_106 = arith.constant 6.400000e+01 : f32
    %264 = vector.broadcast %cst_106 : f32 to vector<16x1xf32>
    %265 = arith.divf %263, %264 : vector<16x1xf32>
    %266 = vector.broadcast %265 : vector<16x1xf32> to vector<16x64xf32>
    %267 = arith.subf %249, %266 : vector<16x64xf32>
    %268 = arith.mulf %267, %267 : vector<16x64xf32>
    %cst_107 = arith.constant dense<0.000000e+00> : vector<16xf32>
    %269 = vector.multi_reduction <add>, %268, %cst_107 [1] : vector<16x64xf32> to vector<16xf32>
    %270 = vector.shape_cast %269 : vector<16xf32> to vector<16x1xf32>
    %cst_108 = arith.constant 6.400000e+01 : f32
    %271 = vector.broadcast %cst_108 : f32 to vector<16x1xf32>
    %272 = arith.divf %270, %271 : vector<16x1xf32>
    %273 = vector.broadcast %265 : vector<16x1xf32> to vector<16x64xf32>
    %274 = arith.subf %249, %273 : vector<16x64xf32>
    %cst_109 = arith.constant 9.99999997E-7 : f32
    %275 = vector.broadcast %cst_109 : f32 to vector<16x1xf32>
    %276 = arith.addf %272, %275 : vector<16x1xf32>
    %277 = math.rsqrt %276 : vector<16x1xf32>
    %278 = vector.broadcast %277 : vector<16x1xf32> to vector<16x64xf32>
    %279 = arith.mulf %274, %278 : vector<16x64xf32>
    %280 = vector.broadcast %250 : vector<1x64xf32> to vector<16x64xf32>
    %281 = arith.mulf %279, %280 : vector<16x64xf32>
    %282 = vector.broadcast %251 : vector<1x64xf32> to vector<16x64xf32>
    %283 = arith.addf %281, %282 : vector<16x64xf32>
    %284 = arith.truncf %283 : vector<16x64xf32> to vector<16x64xbf16>
    %cst_110 = arith.constant dense<0.000000e+00> : vector<16x192xf32>
    %285 = tpu.matmul %284, %252, %cst_110 {dimension_numbers = #tpu.dot_dimension_numbers<[1], [0], [0], [1], [0, 0, 1, 1], [], []>} : vector<16x64xbf16>, vector<64x192xbf16>, vector<16x192xf32> -> vector<16x192xf32>
    %286 = vector.broadcast %253 : vector<1x192xf32> to vector<16x192xf32>
    %287 = arith.addf %285, %286 : vector<16x192xf32>
    %288 = arith.truncf %287 : vector<16x192xf32> to vector<16x192xbf16>
    %289 = vector.extract_strided_slice %288 {offsets = [0, 0], sizes = [16, 16], strides = [1, 1]} : vector<16x192xbf16> to vector<16x16xbf16>
    %290 = vector.extract_strided_slice %288 {offsets = [0, 64], sizes = [16, 16], strides = [1, 1]} : vector<16x192xbf16> to vector<16x16xbf16>
    %291 = vector.extract_strided_slice %288 {offsets = [0, 128], sizes = [16, 16], strides = [1, 1]} : vector<16x192xbf16> to vector<16x16xbf16>
    %cst_111 = arith.constant dense<0.000000e+00> : vector<16x16xf32>
    %292 = tpu.matmul %289, %290, %cst_111 {dimension_numbers = #tpu.dot_dimension_numbers<[1], [1], [0], [0], [0, 0, 1, 0], [], []>} : vector<16x16xbf16>, vector<16x16xbf16>, vector<16x16xf32> -> vector<16x16xf32>
    %cst_112 = arith.constant 2.500000e-01 : f32
    %293 = vector.broadcast %cst_112 : f32 to vector<16x16xf32>
    %294 = arith.mulf %292, %293 : vector<16x16xf32>
    %cst_113 = arith.constant dense<0xFF800000> : vector<16xf32>
    %295 = vector.multi_reduction <maximumf>, %294, %cst_113 [1] : vector<16x16xf32> to vector<16xf32>
    %296 = vector.shape_cast %295 : vector<16xf32> to vector<16x1xf32>
    %297 = vector.broadcast %296 : vector<16x1xf32> to vector<16x16xf32>
    %298 = arith.subf %294, %297 : vector<16x16xf32>
    %299 = math.exp %298 : vector<16x16xf32>
    %cst_114 = arith.constant dense<0.000000e+00> : vector<16xf32>
    %300 = vector.multi_reduction <add>, %299, %cst_114 [1] : vector<16x16xf32> to vector<16xf32>
    %301 = vector.shape_cast %300 : vector<16xf32> to vector<16x1xf32>
    %302 = tpu.reciprocal %301 {approx = true} : vector<16x1xf32> -> vector<16x1xf32>
    %303 = vector.broadcast %302 : vector<16x1xf32> to vector<16x16xf32>
    %304 = arith.mulf %299, %303 : vector<16x16xf32>
    %305 = arith.truncf %304 : vector<16x16xf32> to vector<16x16xbf16>
    %cst_115 = arith.constant dense<0.000000e+00> : vector<16x16xf32>
    %306 = tpu.matmul %305, %291, %cst_115 {dimension_numbers = #tpu.dot_dimension_numbers<[1], [0], [0], [1], [0, 0, 1, 1], [], []>} : vector<16x16xbf16>, vector<16x16xbf16>, vector<16x16xf32> -> vector<16x16xf32>
    %307 = vector.extract_strided_slice %288 {offsets = [0, 16], sizes = [16, 16], strides = [1, 1]} : vector<16x192xbf16> to vector<16x16xbf16>
    %308 = vector.extract_strided_slice %288 {offsets = [0, 80], sizes = [16, 16], strides = [1, 1]} : vector<16x192xbf16> to vector<16x16xbf16>
    %309 = vector.extract_strided_slice %288 {offsets = [0, 144], sizes = [16, 16], strides = [1, 1]} : vector<16x192xbf16> to vector<16x16xbf16>
    %cst_116 = arith.constant dense<0.000000e+00> : vector<16x16xf32>
    %310 = tpu.matmul %307, %308, %cst_116 {dimension_numbers = #tpu.dot_dimension_numbers<[1], [1], [0], [0], [0, 0, 1, 0], [], []>} : vector<16x16xbf16>, vector<16x16xbf16>, vector<16x16xf32> -> vector<16x16xf32>
    %cst_117 = arith.constant 2.500000e-01 : f32
    %311 = vector.broadcast %cst_117 : f32 to vector<16x16xf32>
    %312 = arith.mulf %310, %311 : vector<16x16xf32>
    %cst_118 = arith.constant dense<0xFF800000> : vector<16xf32>
    %313 = vector.multi_reduction <maximumf>, %312, %cst_118 [1] : vector<16x16xf32> to vector<16xf32>
    %314 = vector.shape_cast %313 : vector<16xf32> to vector<16x1xf32>
    %315 = vector.broadcast %314 : vector<16x1xf32> to vector<16x16xf32>
    %316 = arith.subf %312, %315 : vector<16x16xf32>
    %317 = math.exp %316 : vector<16x16xf32>
    %cst_119 = arith.constant dense<0.000000e+00> : vector<16xf32>
    %318 = vector.multi_reduction <add>, %317, %cst_119 [1] : vector<16x16xf32> to vector<16xf32>
    %319 = vector.shape_cast %318 : vector<16xf32> to vector<16x1xf32>
    %320 = tpu.reciprocal %319 {approx = true} : vector<16x1xf32> -> vector<16x1xf32>
    %321 = vector.broadcast %320 : vector<16x1xf32> to vector<16x16xf32>
    %322 = arith.mulf %317, %321 : vector<16x16xf32>
    %323 = arith.truncf %322 : vector<16x16xf32> to vector<16x16xbf16>
    %cst_120 = arith.constant dense<0.000000e+00> : vector<16x16xf32>
    %324 = tpu.matmul %323, %309, %cst_120 {dimension_numbers = #tpu.dot_dimension_numbers<[1], [0], [0], [1], [0, 0, 1, 1], [], []>} : vector<16x16xbf16>, vector<16x16xbf16>, vector<16x16xf32> -> vector<16x16xf32>
    %325 = vector.extract_strided_slice %288 {offsets = [0, 32], sizes = [16, 16], strides = [1, 1]} : vector<16x192xbf16> to vector<16x16xbf16>
    %326 = vector.extract_strided_slice %288 {offsets = [0, 96], sizes = [16, 16], strides = [1, 1]} : vector<16x192xbf16> to vector<16x16xbf16>
    %327 = vector.extract_strided_slice %288 {offsets = [0, 160], sizes = [16, 16], strides = [1, 1]} : vector<16x192xbf16> to vector<16x16xbf16>
    %cst_121 = arith.constant dense<0.000000e+00> : vector<16x16xf32>
    %328 = tpu.matmul %325, %326, %cst_121 {dimension_numbers = #tpu.dot_dimension_numbers<[1], [1], [0], [0], [0, 0, 1, 0], [], []>} : vector<16x16xbf16>, vector<16x16xbf16>, vector<16x16xf32> -> vector<16x16xf32>
    %cst_122 = arith.constant 2.500000e-01 : f32
    %329 = vector.broadcast %cst_122 : f32 to vector<16x16xf32>
    %330 = arith.mulf %328, %329 : vector<16x16xf32>
    %cst_123 = arith.constant dense<0xFF800000> : vector<16xf32>
    %331 = vector.multi_reduction <maximumf>, %330, %cst_123 [1] : vector<16x16xf32> to vector<16xf32>
    %332 = vector.shape_cast %331 : vector<16xf32> to vector<16x1xf32>
    %333 = vector.broadcast %332 : vector<16x1xf32> to vector<16x16xf32>
    %334 = arith.subf %330, %333 : vector<16x16xf32>
    %335 = math.exp %334 : vector<16x16xf32>
    %cst_124 = arith.constant dense<0.000000e+00> : vector<16xf32>
    %336 = vector.multi_reduction <add>, %335, %cst_124 [1] : vector<16x16xf32> to vector<16xf32>
    %337 = vector.shape_cast %336 : vector<16xf32> to vector<16x1xf32>
    %338 = tpu.reciprocal %337 {approx = true} : vector<16x1xf32> -> vector<16x1xf32>
    %339 = vector.broadcast %338 : vector<16x1xf32> to vector<16x16xf32>
    %340 = arith.mulf %335, %339 : vector<16x16xf32>
    %341 = arith.truncf %340 : vector<16x16xf32> to vector<16x16xbf16>
    %cst_125 = arith.constant dense<0.000000e+00> : vector<16x16xf32>
    %342 = tpu.matmul %341, %327, %cst_125 {dimension_numbers = #tpu.dot_dimension_numbers<[1], [0], [0], [1], [0, 0, 1, 1], [], []>} : vector<16x16xbf16>, vector<16x16xbf16>, vector<16x16xf32> -> vector<16x16xf32>
    %343 = vector.extract_strided_slice %288 {offsets = [0, 48], sizes = [16, 16], strides = [1, 1]} : vector<16x192xbf16> to vector<16x16xbf16>
    %344 = vector.extract_strided_slice %288 {offsets = [0, 112], sizes = [16, 16], strides = [1, 1]} : vector<16x192xbf16> to vector<16x16xbf16>
    %345 = vector.extract_strided_slice %288 {offsets = [0, 176], sizes = [16, 16], strides = [1, 1]} : vector<16x192xbf16> to vector<16x16xbf16>
    %cst_126 = arith.constant dense<0.000000e+00> : vector<16x16xf32>
    %346 = tpu.matmul %343, %344, %cst_126 {dimension_numbers = #tpu.dot_dimension_numbers<[1], [1], [0], [0], [0, 0, 1, 0], [], []>} : vector<16x16xbf16>, vector<16x16xbf16>, vector<16x16xf32> -> vector<16x16xf32>
    %cst_127 = arith.constant 2.500000e-01 : f32
    %347 = vector.broadcast %cst_127 : f32 to vector<16x16xf32>
    %348 = arith.mulf %346, %347 : vector<16x16xf32>
    %cst_128 = arith.constant dense<0xFF800000> : vector<16xf32>
    %349 = vector.multi_reduction <maximumf>, %348, %cst_128 [1] : vector<16x16xf32> to vector<16xf32>
    %350 = vector.shape_cast %349 : vector<16xf32> to vector<16x1xf32>
    %351 = vector.broadcast %350 : vector<16x1xf32> to vector<16x16xf32>
    %352 = arith.subf %348, %351 : vector<16x16xf32>
    %353 = math.exp %352 : vector<16x16xf32>
    %cst_129 = arith.constant dense<0.000000e+00> : vector<16xf32>
    %354 = vector.multi_reduction <add>, %353, %cst_129 [1] : vector<16x16xf32> to vector<16xf32>
    %355 = vector.shape_cast %354 : vector<16xf32> to vector<16x1xf32>
    %356 = tpu.reciprocal %355 {approx = true} : vector<16x1xf32> -> vector<16x1xf32>
    %357 = vector.broadcast %356 : vector<16x1xf32> to vector<16x16xf32>
    %358 = arith.mulf %353, %357 : vector<16x16xf32>
    %359 = arith.truncf %358 : vector<16x16xf32> to vector<16x16xbf16>
    %cst_130 = arith.constant dense<0.000000e+00> : vector<16x16xf32>
    %360 = tpu.matmul %359, %345, %cst_130 {dimension_numbers = #tpu.dot_dimension_numbers<[1], [0], [0], [1], [0, 0, 1, 1], [], []>} : vector<16x16xbf16>, vector<16x16xbf16>, vector<16x16xf32> -> vector<16x16xf32>
    %361 = tpu.concatenate %306, %324, %342, %360 in 1 : vector<16x16xf32>, vector<16x16xf32>, vector<16x16xf32>, vector<16x16xf32> -> vector<16x64xf32>
    %362 = arith.truncf %361 : vector<16x64xf32> to vector<16x64xbf16>
    %cst_131 = arith.constant dense<0.000000e+00> : vector<16x64xf32>
    %363 = tpu.matmul %362, %254, %cst_131 {dimension_numbers = #tpu.dot_dimension_numbers<[1], [0], [0], [1], [0, 0, 1, 1], [], []>} : vector<16x64xbf16>, vector<64x64xbf16>, vector<16x64xf32> -> vector<16x64xf32>
    %364 = arith.addf %249, %363 : vector<16x64xf32>
    %365 = vector.broadcast %255 : vector<1x64xf32> to vector<16x64xf32>
    %366 = arith.addf %364, %365 : vector<16x64xf32>
    %cst_132 = arith.constant dense<0.000000e+00> : vector<16xf32>
    %367 = vector.multi_reduction <add>, %366, %cst_132 [1] : vector<16x64xf32> to vector<16xf32>
    %368 = vector.shape_cast %367 : vector<16xf32> to vector<16x1xf32>
    %cst_133 = arith.constant 6.400000e+01 : f32
    %369 = vector.broadcast %cst_133 : f32 to vector<16x1xf32>
    %370 = arith.divf %368, %369 : vector<16x1xf32>
    %371 = vector.broadcast %370 : vector<16x1xf32> to vector<16x64xf32>
    %372 = arith.subf %366, %371 : vector<16x64xf32>
    %373 = arith.mulf %372, %372 : vector<16x64xf32>
    %cst_134 = arith.constant dense<0.000000e+00> : vector<16xf32>
    %374 = vector.multi_reduction <add>, %373, %cst_134 [1] : vector<16x64xf32> to vector<16xf32>
    %375 = vector.shape_cast %374 : vector<16xf32> to vector<16x1xf32>
    %cst_135 = arith.constant 6.400000e+01 : f32
    %376 = vector.broadcast %cst_135 : f32 to vector<16x1xf32>
    %377 = arith.divf %375, %376 : vector<16x1xf32>
    %378 = vector.broadcast %370 : vector<16x1xf32> to vector<16x64xf32>
    %379 = arith.subf %366, %378 : vector<16x64xf32>
    %cst_136 = arith.constant 9.99999997E-7 : f32
    %380 = vector.broadcast %cst_136 : f32 to vector<16x1xf32>
    %381 = arith.addf %377, %380 : vector<16x1xf32>
    %382 = math.rsqrt %381 : vector<16x1xf32>
    %383 = vector.broadcast %382 : vector<16x1xf32> to vector<16x64xf32>
    %384 = arith.mulf %379, %383 : vector<16x64xf32>
    %385 = vector.broadcast %256 : vector<1x64xf32> to vector<16x64xf32>
    %386 = arith.mulf %384, %385 : vector<16x64xf32>
    %387 = vector.broadcast %257 : vector<1x64xf32> to vector<16x64xf32>
    %388 = arith.addf %386, %387 : vector<16x64xf32>
    %389 = arith.truncf %388 : vector<16x64xf32> to vector<16x64xbf16>
    %cst_137 = arith.constant dense<0.000000e+00> : vector<16x256xf32>
    %390 = tpu.matmul %389, %258, %cst_137 {dimension_numbers = #tpu.dot_dimension_numbers<[1], [0], [0], [1], [0, 0, 1, 1], [], []>} : vector<16x64xbf16>, vector<64x256xbf16>, vector<16x256xf32> -> vector<16x256xf32>
    %391 = vector.broadcast %259 : vector<1x256xf32> to vector<16x256xf32>
    %392 = arith.addf %390, %391 : vector<16x256xf32>
    %393 = arith.mulf %392, %392 : vector<16x256xf32>
    %394 = arith.mulf %392, %393 : vector<16x256xf32>
    %cst_138 = arith.constant 4.471500e-02 : f32
    %395 = vector.broadcast %cst_138 : f32 to vector<16x256xf32>
    %396 = arith.mulf %395, %394 : vector<16x256xf32>
    %397 = arith.addf %392, %396 : vector<16x256xf32>
    %cst_139 = arith.constant 0.797884583 : f32
    %398 = vector.broadcast %cst_139 : f32 to vector<16x256xf32>
    %399 = arith.mulf %398, %397 : vector<16x256xf32>
    %400 = math.tanh %399 : vector<16x256xf32>
    %cst_140 = arith.constant 1.000000e+00 : f32
    %401 = vector.broadcast %cst_140 : f32 to vector<16x256xf32>
    %402 = arith.addf %401, %400 : vector<16x256xf32>
    %cst_141 = arith.constant 5.000000e-01 : f32
    %403 = vector.broadcast %cst_141 : f32 to vector<16x256xf32>
    %404 = arith.mulf %403, %402 : vector<16x256xf32>
    %405 = arith.mulf %392, %404 : vector<16x256xf32>
    %406 = arith.truncf %405 : vector<16x256xf32> to vector<16x256xbf16>
    %cst_142 = arith.constant dense<0.000000e+00> : vector<16x64xf32>
    %407 = tpu.matmul %406, %260, %cst_142 {dimension_numbers = #tpu.dot_dimension_numbers<[1], [0], [0], [1], [0, 0, 1, 1], [], []>} : vector<16x256xbf16>, vector<256x64xbf16>, vector<16x64xf32> -> vector<16x64xf32>
    %408 = arith.addf %366, %407 : vector<16x64xf32>
    %409 = vector.broadcast %261 : vector<1x64xf32> to vector<16x64xf32>
    %410 = arith.addf %408, %409 : vector<16x64xf32>
    %c0_143 = arith.constant 0 : index
    %c0_144 = arith.constant 0 : index
    %c0_145 = arith.constant 0 : index
    %411 = vector.load %arg31[%c0_143, %c0_144, %c0_145] : memref<9x64x96xbf16, #tpu.memory_space<vmem>>, vector<9x64x96xbf16>
    %c0_146 = arith.constant 0 : index
    %c0_147 = arith.constant 0 : index
    %412 = vector.load %arg32[%c0_146, %c0_147] : memref<1x96xf32, #tpu.memory_space<vmem>>, vector<1x96xf32>
    %c0_148 = arith.constant 0 : index
    %c0_149 = arith.constant 0 : index
    %413 = vector.load %arg33[%c0_148, %c0_149] : memref<1x96xf32, #tpu.memory_space<vmem>>, vector<1x96xf32>
    %c0_150 = arith.constant 0 : index
    %c0_151 = arith.constant 0 : index
    %414 = vector.load %arg34[%c0_150, %c0_151] : memref<1x96xf32, #tpu.memory_space<vmem>>, vector<1x96xf32>
    %cst_152 = arith.constant 0.000000e+00 : f32
    %415 = vector.broadcast %cst_152 : f32 to vector<1x64xf32>
    %cst_153 = arith.constant 0.000000e+00 : f32
    %416 = vector.broadcast %cst_153 : f32 to vector<8x96xf32>
    %417 = vector.extract_strided_slice %410 {offsets = [0, 0], sizes = [8, 64], strides = [1, 1]} : vector<16x64xf32> to vector<8x64xf32>
    %418 = vector.extract_strided_slice %417 {offsets = [0, 0], sizes = [7, 64], strides = [1, 1]} : vector<8x64xf32> to vector<7x64xf32>
    %419 = tpu.concatenate %415, %418 in 0 : vector<1x64xf32>, vector<7x64xf32> -> vector<8x64xf32>
    %420 = vector.extract_strided_slice %411 {offsets = [3, 0, 0], sizes = [1, 64, 96], strides = [1, 1, 1]} : vector<9x64x96xbf16> to vector<1x64x96xbf16>
    %421 = vector.shape_cast %420 : vector<1x64x96xbf16> to vector<64x96xbf16>
    %422 = arith.truncf %419 : vector<8x64xf32> to vector<8x64xbf16>
    %cst_154 = arith.constant dense<0.000000e+00> : vector<8x96xf32>
    %423 = tpu.matmul %422, %421, %cst_154 {dimension_numbers = #tpu.dot_dimension_numbers<[1], [0], [0], [1], [0, 0, 1, 1], [], []>} : vector<8x64xbf16>, vector<64x96xbf16>, vector<8x96xf32> -> vector<8x96xf32>
    %424 = arith.addf %416, %423 : vector<8x96xf32>
    %425 = vector.extract_strided_slice %410 {offsets = [0, 0], sizes = [8, 64], strides = [1, 1]} : vector<16x64xf32> to vector<8x64xf32>
    %426 = vector.extract_strided_slice %411 {offsets = [4, 0, 0], sizes = [1, 64, 96], strides = [1, 1, 1]} : vector<9x64x96xbf16> to vector<1x64x96xbf16>
    %427 = vector.shape_cast %426 : vector<1x64x96xbf16> to vector<64x96xbf16>
    %428 = arith.truncf %425 : vector<8x64xf32> to vector<8x64xbf16>
    %cst_155 = arith.constant dense<0.000000e+00> : vector<8x96xf32>
    %429 = tpu.matmul %428, %427, %cst_155 {dimension_numbers = #tpu.dot_dimension_numbers<[1], [0], [0], [1], [0, 0, 1, 1], [], []>} : vector<8x64xbf16>, vector<64x96xbf16>, vector<8x96xf32> -> vector<8x96xf32>
    %430 = arith.addf %424, %429 : vector<8x96xf32>
    %431 = vector.extract_strided_slice %410 {offsets = [0, 0], sizes = [8, 64], strides = [1, 1]} : vector<16x64xf32> to vector<8x64xf32>
    %432 = vector.extract_strided_slice %431 {offsets = [1, 0], sizes = [7, 64], strides = [1, 1]} : vector<8x64xf32> to vector<7x64xf32>
    %433 = tpu.concatenate %432, %415 in 0 : vector<7x64xf32>, vector<1x64xf32> -> vector<8x64xf32>
    %434 = vector.extract_strided_slice %411 {offsets = [5, 0, 0], sizes = [1, 64, 96], strides = [1, 1, 1]} : vector<9x64x96xbf16> to vector<1x64x96xbf16>
    %435 = vector.shape_cast %434 : vector<1x64x96xbf16> to vector<64x96xbf16>
    %436 = arith.truncf %433 : vector<8x64xf32> to vector<8x64xbf16>
    %cst_156 = arith.constant dense<0.000000e+00> : vector<8x96xf32>
    %437 = tpu.matmul %436, %435, %cst_156 {dimension_numbers = #tpu.dot_dimension_numbers<[1], [0], [0], [1], [0, 0, 1, 1], [], []>} : vector<8x64xbf16>, vector<64x96xbf16>, vector<8x96xf32> -> vector<8x96xf32>
    %438 = arith.addf %430, %437 : vector<8x96xf32>
    %439 = vector.extract_strided_slice %410 {offsets = [8, 0], sizes = [8, 64], strides = [1, 1]} : vector<16x64xf32> to vector<8x64xf32>
    %440 = vector.extract_strided_slice %439 {offsets = [0, 0], sizes = [7, 64], strides = [1, 1]} : vector<8x64xf32> to vector<7x64xf32>
    %441 = tpu.concatenate %415, %440 in 0 : vector<1x64xf32>, vector<7x64xf32> -> vector<8x64xf32>
    %442 = vector.extract_strided_slice %411 {offsets = [6, 0, 0], sizes = [1, 64, 96], strides = [1, 1, 1]} : vector<9x64x96xbf16> to vector<1x64x96xbf16>
    %443 = vector.shape_cast %442 : vector<1x64x96xbf16> to vector<64x96xbf16>
    %444 = arith.truncf %441 : vector<8x64xf32> to vector<8x64xbf16>
    %cst_157 = arith.constant dense<0.000000e+00> : vector<8x96xf32>
    %445 = tpu.matmul %444, %443, %cst_157 {dimension_numbers = #tpu.dot_dimension_numbers<[1], [0], [0], [1], [0, 0, 1, 1], [], []>} : vector<8x64xbf16>, vector<64x96xbf16>, vector<8x96xf32> -> vector<8x96xf32>
    %446 = arith.addf %438, %445 : vector<8x96xf32>
    %447 = vector.extract_strided_slice %410 {offsets = [8, 0], sizes = [8, 64], strides = [1, 1]} : vector<16x64xf32> to vector<8x64xf32>
    %448 = vector.extract_strided_slice %411 {offsets = [7, 0, 0], sizes = [1, 64, 96], strides = [1, 1, 1]} : vector<9x64x96xbf16> to vector<1x64x96xbf16>
    %449 = vector.shape_cast %448 : vector<1x64x96xbf16> to vector<64x96xbf16>
    %450 = arith.truncf %447 : vector<8x64xf32> to vector<8x64xbf16>
    %cst_158 = arith.constant dense<0.000000e+00> : vector<8x96xf32>
    %451 = tpu.matmul %450, %449, %cst_158 {dimension_numbers = #tpu.dot_dimension_numbers<[1], [0], [0], [1], [0, 0, 1, 1], [], []>} : vector<8x64xbf16>, vector<64x96xbf16>, vector<8x96xf32> -> vector<8x96xf32>
    %452 = arith.addf %446, %451 : vector<8x96xf32>
    %453 = vector.extract_strided_slice %410 {offsets = [8, 0], sizes = [8, 64], strides = [1, 1]} : vector<16x64xf32> to vector<8x64xf32>
    %454 = vector.extract_strided_slice %453 {offsets = [1, 0], sizes = [7, 64], strides = [1, 1]} : vector<8x64xf32> to vector<7x64xf32>
    %455 = tpu.concatenate %454, %415 in 0 : vector<7x64xf32>, vector<1x64xf32> -> vector<8x64xf32>
    %456 = vector.extract_strided_slice %411 {offsets = [8, 0, 0], sizes = [1, 64, 96], strides = [1, 1, 1]} : vector<9x64x96xbf16> to vector<1x64x96xbf16>
    %457 = vector.shape_cast %456 : vector<1x64x96xbf16> to vector<64x96xbf16>
    %458 = arith.truncf %455 : vector<8x64xf32> to vector<8x64xbf16>
    %cst_159 = arith.constant dense<0.000000e+00> : vector<8x96xf32>
    %459 = tpu.matmul %458, %457, %cst_159 {dimension_numbers = #tpu.dot_dimension_numbers<[1], [0], [0], [1], [0, 0, 1, 1], [], []>} : vector<8x64xbf16>, vector<64x96xbf16>, vector<8x96xf32> -> vector<8x96xf32>
    %460 = arith.addf %452, %459 : vector<8x96xf32>
    %461 = vector.broadcast %412 : vector<1x96xf32> to vector<8x96xf32>
    %462 = arith.addf %460, %461 : vector<8x96xf32>
    %cst_160 = arith.constant dense<0.000000e+00> : vector<8xf32>
    %463 = vector.multi_reduction <add>, %462, %cst_160 [1] : vector<8x96xf32> to vector<8xf32>
    %464 = vector.shape_cast %463 : vector<8xf32> to vector<8x1xf32>
    %cst_161 = arith.constant 9.600000e+01 : f32
    %465 = vector.broadcast %cst_161 : f32 to vector<8x1xf32>
    %466 = arith.divf %464, %465 : vector<8x1xf32>
    %467 = vector.broadcast %466 : vector<8x1xf32> to vector<8x96xf32>
    %468 = arith.subf %462, %467 : vector<8x96xf32>
    %469 = arith.mulf %468, %468 : vector<8x96xf32>
    %cst_162 = arith.constant dense<0.000000e+00> : vector<8xf32>
    %470 = vector.multi_reduction <add>, %469, %cst_162 [1] : vector<8x96xf32> to vector<8xf32>
    %471 = vector.shape_cast %470 : vector<8xf32> to vector<8x1xf32>
    %cst_163 = arith.constant 9.600000e+01 : f32
    %472 = vector.broadcast %cst_163 : f32 to vector<8x1xf32>
    %473 = arith.divf %471, %472 : vector<8x1xf32>
    %474 = vector.broadcast %466 : vector<8x1xf32> to vector<8x96xf32>
    %475 = arith.subf %462, %474 : vector<8x96xf32>
    %cst_164 = arith.constant 9.99999997E-7 : f32
    %476 = vector.broadcast %cst_164 : f32 to vector<8x1xf32>
    %477 = arith.addf %473, %476 : vector<8x1xf32>
    %478 = math.rsqrt %477 : vector<8x1xf32>
    %479 = vector.broadcast %478 : vector<8x1xf32> to vector<8x96xf32>
    %480 = arith.mulf %475, %479 : vector<8x96xf32>
    %481 = vector.broadcast %413 : vector<1x96xf32> to vector<8x96xf32>
    %482 = arith.mulf %480, %481 : vector<8x96xf32>
    %483 = vector.broadcast %414 : vector<1x96xf32> to vector<8x96xf32>
    %484 = arith.addf %482, %483 : vector<8x96xf32>
    %c0_165 = arith.constant 0 : index
    %c0_166 = arith.constant 0 : index
    %485 = vector.load %arg35[%c0_165, %c0_166] : memref<1x96xf32, #tpu.memory_space<vmem>>, vector<1x96xf32>
    %c0_167 = arith.constant 0 : index
    %c0_168 = arith.constant 0 : index
    %486 = vector.load %arg36[%c0_167, %c0_168] : memref<1x96xf32, #tpu.memory_space<vmem>>, vector<1x96xf32>
    %c0_169 = arith.constant 0 : index
    %c0_170 = arith.constant 0 : index
    %487 = vector.load %arg37[%c0_169, %c0_170] : memref<96x288xbf16, #tpu.memory_space<vmem>>, vector<96x288xbf16>
    %c0_171 = arith.constant 0 : index
    %c0_172 = arith.constant 0 : index
    %488 = vector.load %arg38[%c0_171, %c0_172] : memref<1x288xf32, #tpu.memory_space<vmem>>, vector<1x288xf32>
    %c0_173 = arith.constant 0 : index
    %c0_174 = arith.constant 0 : index
    %489 = vector.load %arg39[%c0_173, %c0_174] : memref<96x96xbf16, #tpu.memory_space<vmem>>, vector<96x96xbf16>
    %c0_175 = arith.constant 0 : index
    %c0_176 = arith.constant 0 : index
    %490 = vector.load %arg40[%c0_175, %c0_176] : memref<1x96xf32, #tpu.memory_space<vmem>>, vector<1x96xf32>
    %c0_177 = arith.constant 0 : index
    %c0_178 = arith.constant 0 : index
    %491 = vector.load %arg41[%c0_177, %c0_178] : memref<1x96xf32, #tpu.memory_space<vmem>>, vector<1x96xf32>
    %c0_179 = arith.constant 0 : index
    %c0_180 = arith.constant 0 : index
    %492 = vector.load %arg42[%c0_179, %c0_180] : memref<1x96xf32, #tpu.memory_space<vmem>>, vector<1x96xf32>
    %c0_181 = arith.constant 0 : index
    %c0_182 = arith.constant 0 : index
    %493 = vector.load %arg43[%c0_181, %c0_182] : memref<96x384xbf16, #tpu.memory_space<vmem>>, vector<96x384xbf16>
    %c0_183 = arith.constant 0 : index
    %c0_184 = arith.constant 0 : index
    %494 = vector.load %arg44[%c0_183, %c0_184] : memref<1x384xf32, #tpu.memory_space<vmem>>, vector<1x384xf32>
    %c0_185 = arith.constant 0 : index
    %c0_186 = arith.constant 0 : index
    %495 = vector.load %arg45[%c0_185, %c0_186] : memref<384x96xbf16, #tpu.memory_space<vmem>>, vector<384x96xbf16>
    %c0_187 = arith.constant 0 : index
    %c0_188 = arith.constant 0 : index
    %496 = vector.load %arg46[%c0_187, %c0_188] : memref<1x96xf32, #tpu.memory_space<vmem>>, vector<1x96xf32>
    %cst_189 = arith.constant dense<0.000000e+00> : vector<8xf32>
    %497 = vector.multi_reduction <add>, %484, %cst_189 [1] : vector<8x96xf32> to vector<8xf32>
    %498 = vector.shape_cast %497 : vector<8xf32> to vector<8x1xf32>
    %cst_190 = arith.constant 9.600000e+01 : f32
    %499 = vector.broadcast %cst_190 : f32 to vector<8x1xf32>
    %500 = arith.divf %498, %499 : vector<8x1xf32>
    %501 = vector.broadcast %500 : vector<8x1xf32> to vector<8x96xf32>
    %502 = arith.subf %484, %501 : vector<8x96xf32>
    %503 = arith.mulf %502, %502 : vector<8x96xf32>
    %cst_191 = arith.constant dense<0.000000e+00> : vector<8xf32>
    %504 = vector.multi_reduction <add>, %503, %cst_191 [1] : vector<8x96xf32> to vector<8xf32>
    %505 = vector.shape_cast %504 : vector<8xf32> to vector<8x1xf32>
    %cst_192 = arith.constant 9.600000e+01 : f32
    %506 = vector.broadcast %cst_192 : f32 to vector<8x1xf32>
    %507 = arith.divf %505, %506 : vector<8x1xf32>
    %508 = vector.broadcast %500 : vector<8x1xf32> to vector<8x96xf32>
    %509 = arith.subf %484, %508 : vector<8x96xf32>
    %cst_193 = arith.constant 9.99999997E-7 : f32
    %510 = vector.broadcast %cst_193 : f32 to vector<8x1xf32>
    %511 = arith.addf %507, %510 : vector<8x1xf32>
    %512 = math.rsqrt %511 : vector<8x1xf32>
    %513 = vector.broadcast %512 : vector<8x1xf32> to vector<8x96xf32>
    %514 = arith.mulf %509, %513 : vector<8x96xf32>
    %515 = vector.broadcast %485 : vector<1x96xf32> to vector<8x96xf32>
    %516 = arith.mulf %514, %515 : vector<8x96xf32>
    %517 = vector.broadcast %486 : vector<1x96xf32> to vector<8x96xf32>
    %518 = arith.addf %516, %517 : vector<8x96xf32>
    %519 = arith.truncf %518 : vector<8x96xf32> to vector<8x96xbf16>
    %cst_194 = arith.constant dense<0.000000e+00> : vector<8x288xf32>
    %520 = tpu.matmul %519, %487, %cst_194 {dimension_numbers = #tpu.dot_dimension_numbers<[1], [0], [0], [1], [0, 0, 1, 1], [], []>} : vector<8x96xbf16>, vector<96x288xbf16>, vector<8x288xf32> -> vector<8x288xf32>
    %521 = vector.broadcast %488 : vector<1x288xf32> to vector<8x288xf32>
    %522 = arith.addf %520, %521 : vector<8x288xf32>
    %523 = arith.truncf %522 : vector<8x288xf32> to vector<8x288xbf16>
    %524 = vector.extract_strided_slice %523 {offsets = [0, 0], sizes = [8, 16], strides = [1, 1]} : vector<8x288xbf16> to vector<8x16xbf16>
    %525 = vector.extract_strided_slice %523 {offsets = [0, 96], sizes = [8, 16], strides = [1, 1]} : vector<8x288xbf16> to vector<8x16xbf16>
    %526 = vector.extract_strided_slice %523 {offsets = [0, 192], sizes = [8, 16], strides = [1, 1]} : vector<8x288xbf16> to vector<8x16xbf16>
    %cst_195 = arith.constant dense<0.000000e+00> : vector<8x8xf32>
    %527 = tpu.matmul %524, %525, %cst_195 {dimension_numbers = #tpu.dot_dimension_numbers<[1], [1], [0], [0], [0, 0, 1, 0], [], []>} : vector<8x16xbf16>, vector<8x16xbf16>, vector<8x8xf32> -> vector<8x8xf32>
    %cst_196 = arith.constant 2.500000e-01 : f32
    %528 = vector.broadcast %cst_196 : f32 to vector<8x8xf32>
    %529 = arith.mulf %527, %528 : vector<8x8xf32>
    %cst_197 = arith.constant dense<0xFF800000> : vector<8xf32>
    %530 = vector.multi_reduction <maximumf>, %529, %cst_197 [1] : vector<8x8xf32> to vector<8xf32>
    %531 = vector.shape_cast %530 : vector<8xf32> to vector<8x1xf32>
    %532 = vector.broadcast %531 : vector<8x1xf32> to vector<8x8xf32>
    %533 = arith.subf %529, %532 : vector<8x8xf32>
    %534 = math.exp %533 : vector<8x8xf32>
    %cst_198 = arith.constant dense<0.000000e+00> : vector<8xf32>
    %535 = vector.multi_reduction <add>, %534, %cst_198 [1] : vector<8x8xf32> to vector<8xf32>
    %536 = vector.shape_cast %535 : vector<8xf32> to vector<8x1xf32>
    %537 = tpu.reciprocal %536 {approx = true} : vector<8x1xf32> -> vector<8x1xf32>
    %538 = vector.broadcast %537 : vector<8x1xf32> to vector<8x8xf32>
    %539 = arith.mulf %534, %538 : vector<8x8xf32>
    %540 = arith.truncf %539 : vector<8x8xf32> to vector<8x8xbf16>
    %cst_199 = arith.constant dense<0.000000e+00> : vector<8x16xf32>
    %541 = tpu.matmul %540, %526, %cst_199 {dimension_numbers = #tpu.dot_dimension_numbers<[1], [0], [0], [1], [0, 0, 1, 1], [], []>} : vector<8x8xbf16>, vector<8x16xbf16>, vector<8x16xf32> -> vector<8x16xf32>
    %542 = vector.extract_strided_slice %523 {offsets = [0, 16], sizes = [8, 16], strides = [1, 1]} : vector<8x288xbf16> to vector<8x16xbf16>
    %543 = vector.extract_strided_slice %523 {offsets = [0, 112], sizes = [8, 16], strides = [1, 1]} : vector<8x288xbf16> to vector<8x16xbf16>
    %544 = vector.extract_strided_slice %523 {offsets = [0, 208], sizes = [8, 16], strides = [1, 1]} : vector<8x288xbf16> to vector<8x16xbf16>
    %cst_200 = arith.constant dense<0.000000e+00> : vector<8x8xf32>
    %545 = tpu.matmul %542, %543, %cst_200 {dimension_numbers = #tpu.dot_dimension_numbers<[1], [1], [0], [0], [0, 0, 1, 0], [], []>} : vector<8x16xbf16>, vector<8x16xbf16>, vector<8x8xf32> -> vector<8x8xf32>
    %cst_201 = arith.constant 2.500000e-01 : f32
    %546 = vector.broadcast %cst_201 : f32 to vector<8x8xf32>
    %547 = arith.mulf %545, %546 : vector<8x8xf32>
    %cst_202 = arith.constant dense<0xFF800000> : vector<8xf32>
    %548 = vector.multi_reduction <maximumf>, %547, %cst_202 [1] : vector<8x8xf32> to vector<8xf32>
    %549 = vector.shape_cast %548 : vector<8xf32> to vector<8x1xf32>
    %550 = vector.broadcast %549 : vector<8x1xf32> to vector<8x8xf32>
    %551 = arith.subf %547, %550 : vector<8x8xf32>
    %552 = math.exp %551 : vector<8x8xf32>
    %cst_203 = arith.constant dense<0.000000e+00> : vector<8xf32>
    %553 = vector.multi_reduction <add>, %552, %cst_203 [1] : vector<8x8xf32> to vector<8xf32>
    %554 = vector.shape_cast %553 : vector<8xf32> to vector<8x1xf32>
    %555 = tpu.reciprocal %554 {approx = true} : vector<8x1xf32> -> vector<8x1xf32>
    %556 = vector.broadcast %555 : vector<8x1xf32> to vector<8x8xf32>
    %557 = arith.mulf %552, %556 : vector<8x8xf32>
    %558 = arith.truncf %557 : vector<8x8xf32> to vector<8x8xbf16>
    %cst_204 = arith.constant dense<0.000000e+00> : vector<8x16xf32>
    %559 = tpu.matmul %558, %544, %cst_204 {dimension_numbers = #tpu.dot_dimension_numbers<[1], [0], [0], [1], [0, 0, 1, 1], [], []>} : vector<8x8xbf16>, vector<8x16xbf16>, vector<8x16xf32> -> vector<8x16xf32>
    %560 = vector.extract_strided_slice %523 {offsets = [0, 32], sizes = [8, 16], strides = [1, 1]} : vector<8x288xbf16> to vector<8x16xbf16>
    %561 = vector.extract_strided_slice %523 {offsets = [0, 128], sizes = [8, 16], strides = [1, 1]} : vector<8x288xbf16> to vector<8x16xbf16>
    %562 = vector.extract_strided_slice %523 {offsets = [0, 224], sizes = [8, 16], strides = [1, 1]} : vector<8x288xbf16> to vector<8x16xbf16>
    %cst_205 = arith.constant dense<0.000000e+00> : vector<8x8xf32>
    %563 = tpu.matmul %560, %561, %cst_205 {dimension_numbers = #tpu.dot_dimension_numbers<[1], [1], [0], [0], [0, 0, 1, 0], [], []>} : vector<8x16xbf16>, vector<8x16xbf16>, vector<8x8xf32> -> vector<8x8xf32>
    %cst_206 = arith.constant 2.500000e-01 : f32
    %564 = vector.broadcast %cst_206 : f32 to vector<8x8xf32>
    %565 = arith.mulf %563, %564 : vector<8x8xf32>
    %cst_207 = arith.constant dense<0xFF800000> : vector<8xf32>
    %566 = vector.multi_reduction <maximumf>, %565, %cst_207 [1] : vector<8x8xf32> to vector<8xf32>
    %567 = vector.shape_cast %566 : vector<8xf32> to vector<8x1xf32>
    %568 = vector.broadcast %567 : vector<8x1xf32> to vector<8x8xf32>
    %569 = arith.subf %565, %568 : vector<8x8xf32>
    %570 = math.exp %569 : vector<8x8xf32>
    %cst_208 = arith.constant dense<0.000000e+00> : vector<8xf32>
    %571 = vector.multi_reduction <add>, %570, %cst_208 [1] : vector<8x8xf32> to vector<8xf32>
    %572 = vector.shape_cast %571 : vector<8xf32> to vector<8x1xf32>
    %573 = tpu.reciprocal %572 {approx = true} : vector<8x1xf32> -> vector<8x1xf32>
    %574 = vector.broadcast %573 : vector<8x1xf32> to vector<8x8xf32>
    %575 = arith.mulf %570, %574 : vector<8x8xf32>
    %576 = arith.truncf %575 : vector<8x8xf32> to vector<8x8xbf16>
    %cst_209 = arith.constant dense<0.000000e+00> : vector<8x16xf32>
    %577 = tpu.matmul %576, %562, %cst_209 {dimension_numbers = #tpu.dot_dimension_numbers<[1], [0], [0], [1], [0, 0, 1, 1], [], []>} : vector<8x8xbf16>, vector<8x16xbf16>, vector<8x16xf32> -> vector<8x16xf32>
    %578 = vector.extract_strided_slice %523 {offsets = [0, 48], sizes = [8, 16], strides = [1, 1]} : vector<8x288xbf16> to vector<8x16xbf16>
    %579 = vector.extract_strided_slice %523 {offsets = [0, 144], sizes = [8, 16], strides = [1, 1]} : vector<8x288xbf16> to vector<8x16xbf16>
    %580 = vector.extract_strided_slice %523 {offsets = [0, 240], sizes = [8, 16], strides = [1, 1]} : vector<8x288xbf16> to vector<8x16xbf16>
    %cst_210 = arith.constant dense<0.000000e+00> : vector<8x8xf32>
    %581 = tpu.matmul %578, %579, %cst_210 {dimension_numbers = #tpu.dot_dimension_numbers<[1], [1], [0], [0], [0, 0, 1, 0], [], []>} : vector<8x16xbf16>, vector<8x16xbf16>, vector<8x8xf32> -> vector<8x8xf32>
    %cst_211 = arith.constant 2.500000e-01 : f32
    %582 = vector.broadcast %cst_211 : f32 to vector<8x8xf32>
    %583 = arith.mulf %581, %582 : vector<8x8xf32>
    %cst_212 = arith.constant dense<0xFF800000> : vector<8xf32>
    %584 = vector.multi_reduction <maximumf>, %583, %cst_212 [1] : vector<8x8xf32> to vector<8xf32>
    %585 = vector.shape_cast %584 : vector<8xf32> to vector<8x1xf32>
    %586 = vector.broadcast %585 : vector<8x1xf32> to vector<8x8xf32>
    %587 = arith.subf %583, %586 : vector<8x8xf32>
    %588 = math.exp %587 : vector<8x8xf32>
    %cst_213 = arith.constant dense<0.000000e+00> : vector<8xf32>
    %589 = vector.multi_reduction <add>, %588, %cst_213 [1] : vector<8x8xf32> to vector<8xf32>
    %590 = vector.shape_cast %589 : vector<8xf32> to vector<8x1xf32>
    %591 = tpu.reciprocal %590 {approx = true} : vector<8x1xf32> -> vector<8x1xf32>
    %592 = vector.broadcast %591 : vector<8x1xf32> to vector<8x8xf32>
    %593 = arith.mulf %588, %592 : vector<8x8xf32>
    %594 = arith.truncf %593 : vector<8x8xf32> to vector<8x8xbf16>
    %cst_214 = arith.constant dense<0.000000e+00> : vector<8x16xf32>
    %595 = tpu.matmul %594, %580, %cst_214 {dimension_numbers = #tpu.dot_dimension_numbers<[1], [0], [0], [1], [0, 0, 1, 1], [], []>} : vector<8x8xbf16>, vector<8x16xbf16>, vector<8x16xf32> -> vector<8x16xf32>
    %596 = vector.extract_strided_slice %523 {offsets = [0, 64], sizes = [8, 16], strides = [1, 1]} : vector<8x288xbf16> to vector<8x16xbf16>
    %597 = vector.extract_strided_slice %523 {offsets = [0, 160], sizes = [8, 16], strides = [1, 1]} : vector<8x288xbf16> to vector<8x16xbf16>
    %598 = vector.extract_strided_slice %523 {offsets = [0, 256], sizes = [8, 16], strides = [1, 1]} : vector<8x288xbf16> to vector<8x16xbf16>
    %cst_215 = arith.constant dense<0.000000e+00> : vector<8x8xf32>
    %599 = tpu.matmul %596, %597, %cst_215 {dimension_numbers = #tpu.dot_dimension_numbers<[1], [1], [0], [0], [0, 0, 1, 0], [], []>} : vector<8x16xbf16>, vector<8x16xbf16>, vector<8x8xf32> -> vector<8x8xf32>
    %cst_216 = arith.constant 2.500000e-01 : f32
    %600 = vector.broadcast %cst_216 : f32 to vector<8x8xf32>
    %601 = arith.mulf %599, %600 : vector<8x8xf32>
    %cst_217 = arith.constant dense<0xFF800000> : vector<8xf32>
    %602 = vector.multi_reduction <maximumf>, %601, %cst_217 [1] : vector<8x8xf32> to vector<8xf32>
    %603 = vector.shape_cast %602 : vector<8xf32> to vector<8x1xf32>
    %604 = vector.broadcast %603 : vector<8x1xf32> to vector<8x8xf32>
    %605 = arith.subf %601, %604 : vector<8x8xf32>
    %606 = math.exp %605 : vector<8x8xf32>
    %cst_218 = arith.constant dense<0.000000e+00> : vector<8xf32>
    %607 = vector.multi_reduction <add>, %606, %cst_218 [1] : vector<8x8xf32> to vector<8xf32>
    %608 = vector.shape_cast %607 : vector<8xf32> to vector<8x1xf32>
    %609 = tpu.reciprocal %608 {approx = true} : vector<8x1xf32> -> vector<8x1xf32>
    %610 = vector.broadcast %609 : vector<8x1xf32> to vector<8x8xf32>
    %611 = arith.mulf %606, %610 : vector<8x8xf32>
    %612 = arith.truncf %611 : vector<8x8xf32> to vector<8x8xbf16>
    %cst_219 = arith.constant dense<0.000000e+00> : vector<8x16xf32>
    %613 = tpu.matmul %612, %598, %cst_219 {dimension_numbers = #tpu.dot_dimension_numbers<[1], [0], [0], [1], [0, 0, 1, 1], [], []>} : vector<8x8xbf16>, vector<8x16xbf16>, vector<8x16xf32> -> vector<8x16xf32>
    %614 = vector.extract_strided_slice %523 {offsets = [0, 80], sizes = [8, 16], strides = [1, 1]} : vector<8x288xbf16> to vector<8x16xbf16>
    %615 = vector.extract_strided_slice %523 {offsets = [0, 176], sizes = [8, 16], strides = [1, 1]} : vector<8x288xbf16> to vector<8x16xbf16>
    %616 = vector.extract_strided_slice %523 {offsets = [0, 272], sizes = [8, 16], strides = [1, 1]} : vector<8x288xbf16> to vector<8x16xbf16>
    %cst_220 = arith.constant dense<0.000000e+00> : vector<8x8xf32>
    %617 = tpu.matmul %614, %615, %cst_220 {dimension_numbers = #tpu.dot_dimension_numbers<[1], [1], [0], [0], [0, 0, 1, 0], [], []>} : vector<8x16xbf16>, vector<8x16xbf16>, vector<8x8xf32> -> vector<8x8xf32>
    %cst_221 = arith.constant 2.500000e-01 : f32
    %618 = vector.broadcast %cst_221 : f32 to vector<8x8xf32>
    %619 = arith.mulf %617, %618 : vector<8x8xf32>
    %cst_222 = arith.constant dense<0xFF800000> : vector<8xf32>
    %620 = vector.multi_reduction <maximumf>, %619, %cst_222 [1] : vector<8x8xf32> to vector<8xf32>
    %621 = vector.shape_cast %620 : vector<8xf32> to vector<8x1xf32>
    %622 = vector.broadcast %621 : vector<8x1xf32> to vector<8x8xf32>
    %623 = arith.subf %619, %622 : vector<8x8xf32>
    %624 = math.exp %623 : vector<8x8xf32>
    %cst_223 = arith.constant dense<0.000000e+00> : vector<8xf32>
    %625 = vector.multi_reduction <add>, %624, %cst_223 [1] : vector<8x8xf32> to vector<8xf32>
    %626 = vector.shape_cast %625 : vector<8xf32> to vector<8x1xf32>
    %627 = tpu.reciprocal %626 {approx = true} : vector<8x1xf32> -> vector<8x1xf32>
    %628 = vector.broadcast %627 : vector<8x1xf32> to vector<8x8xf32>
    %629 = arith.mulf %624, %628 : vector<8x8xf32>
    %630 = arith.truncf %629 : vector<8x8xf32> to vector<8x8xbf16>
    %cst_224 = arith.constant dense<0.000000e+00> : vector<8x16xf32>
    %631 = tpu.matmul %630, %616, %cst_224 {dimension_numbers = #tpu.dot_dimension_numbers<[1], [0], [0], [1], [0, 0, 1, 1], [], []>} : vector<8x8xbf16>, vector<8x16xbf16>, vector<8x16xf32> -> vector<8x16xf32>
    %632 = tpu.concatenate %541, %559, %577, %595, %613, %631 in 1 : vector<8x16xf32>, vector<8x16xf32>, vector<8x16xf32>, vector<8x16xf32>, vector<8x16xf32>, vector<8x16xf32> -> vector<8x96xf32>
    %633 = arith.truncf %632 : vector<8x96xf32> to vector<8x96xbf16>
    %cst_225 = arith.constant dense<0.000000e+00> : vector<8x96xf32>
    %634 = tpu.matmul %633, %489, %cst_225 {dimension_numbers = #tpu.dot_dimension_numbers<[1], [0], [0], [1], [0, 0, 1, 1], [], []>} : vector<8x96xbf16>, vector<96x96xbf16>, vector<8x96xf32> -> vector<8x96xf32>
    %635 = arith.addf %484, %634 : vector<8x96xf32>
    %636 = vector.broadcast %490 : vector<1x96xf32> to vector<8x96xf32>
    %637 = arith.addf %635, %636 : vector<8x96xf32>
    %cst_226 = arith.constant dense<0.000000e+00> : vector<8xf32>
    %638 = vector.multi_reduction <add>, %637, %cst_226 [1] : vector<8x96xf32> to vector<8xf32>
    %639 = vector.shape_cast %638 : vector<8xf32> to vector<8x1xf32>
    %cst_227 = arith.constant 9.600000e+01 : f32
    %640 = vector.broadcast %cst_227 : f32 to vector<8x1xf32>
    %641 = arith.divf %639, %640 : vector<8x1xf32>
    %642 = vector.broadcast %641 : vector<8x1xf32> to vector<8x96xf32>
    %643 = arith.subf %637, %642 : vector<8x96xf32>
    %644 = arith.mulf %643, %643 : vector<8x96xf32>
    %cst_228 = arith.constant dense<0.000000e+00> : vector<8xf32>
    %645 = vector.multi_reduction <add>, %644, %cst_228 [1] : vector<8x96xf32> to vector<8xf32>
    %646 = vector.shape_cast %645 : vector<8xf32> to vector<8x1xf32>
    %cst_229 = arith.constant 9.600000e+01 : f32
    %647 = vector.broadcast %cst_229 : f32 to vector<8x1xf32>
    %648 = arith.divf %646, %647 : vector<8x1xf32>
    %649 = vector.broadcast %641 : vector<8x1xf32> to vector<8x96xf32>
    %650 = arith.subf %637, %649 : vector<8x96xf32>
    %cst_230 = arith.constant 9.99999997E-7 : f32
    %651 = vector.broadcast %cst_230 : f32 to vector<8x1xf32>
    %652 = arith.addf %648, %651 : vector<8x1xf32>
    %653 = math.rsqrt %652 : vector<8x1xf32>
    %654 = vector.broadcast %653 : vector<8x1xf32> to vector<8x96xf32>
    %655 = arith.mulf %650, %654 : vector<8x96xf32>
    %656 = vector.broadcast %491 : vector<1x96xf32> to vector<8x96xf32>
    %657 = arith.mulf %655, %656 : vector<8x96xf32>
    %658 = vector.broadcast %492 : vector<1x96xf32> to vector<8x96xf32>
    %659 = arith.addf %657, %658 : vector<8x96xf32>
    %660 = arith.truncf %659 : vector<8x96xf32> to vector<8x96xbf16>
    %cst_231 = arith.constant dense<0.000000e+00> : vector<8x384xf32>
    %661 = tpu.matmul %660, %493, %cst_231 {dimension_numbers = #tpu.dot_dimension_numbers<[1], [0], [0], [1], [0, 0, 1, 1], [], []>} : vector<8x96xbf16>, vector<96x384xbf16>, vector<8x384xf32> -> vector<8x384xf32>
    %662 = vector.broadcast %494 : vector<1x384xf32> to vector<8x384xf32>
    %663 = arith.addf %661, %662 : vector<8x384xf32>
    %664 = arith.mulf %663, %663 : vector<8x384xf32>
    %665 = arith.mulf %663, %664 : vector<8x384xf32>
    %cst_232 = arith.constant 4.471500e-02 : f32
    %666 = vector.broadcast %cst_232 : f32 to vector<8x384xf32>
    %667 = arith.mulf %666, %665 : vector<8x384xf32>
    %668 = arith.addf %663, %667 : vector<8x384xf32>
    %cst_233 = arith.constant 0.797884583 : f32
    %669 = vector.broadcast %cst_233 : f32 to vector<8x384xf32>
    %670 = arith.mulf %669, %668 : vector<8x384xf32>
    %671 = math.tanh %670 : vector<8x384xf32>
    %cst_234 = arith.constant 1.000000e+00 : f32
    %672 = vector.broadcast %cst_234 : f32 to vector<8x384xf32>
    %673 = arith.addf %672, %671 : vector<8x384xf32>
    %cst_235 = arith.constant 5.000000e-01 : f32
    %674 = vector.broadcast %cst_235 : f32 to vector<8x384xf32>
    %675 = arith.mulf %674, %673 : vector<8x384xf32>
    %676 = arith.mulf %663, %675 : vector<8x384xf32>
    %677 = arith.truncf %676 : vector<8x384xf32> to vector<8x384xbf16>
    %cst_236 = arith.constant dense<0.000000e+00> : vector<8x96xf32>
    %678 = tpu.matmul %677, %495, %cst_236 {dimension_numbers = #tpu.dot_dimension_numbers<[1], [0], [0], [1], [0, 0, 1, 1], [], []>} : vector<8x384xbf16>, vector<384x96xbf16>, vector<8x96xf32> -> vector<8x96xf32>
    %679 = arith.addf %637, %678 : vector<8x96xf32>
    %680 = vector.broadcast %496 : vector<1x96xf32> to vector<8x96xf32>
    %681 = arith.addf %679, %680 : vector<8x96xf32>
    %c0_237 = arith.constant 0 : index
    %c0_238 = arith.constant 0 : index
    %682 = vector.load %arg47[%c0_237, %c0_238] : memref<1x96xf32, #tpu.memory_space<vmem>>, vector<1x96xf32>
    %c0_239 = arith.constant 0 : index
    %c0_240 = arith.constant 0 : index
    %683 = vector.load %arg48[%c0_239, %c0_240] : memref<1x96xf32, #tpu.memory_space<vmem>>, vector<1x96xf32>
    %c0_241 = arith.constant 0 : index
    %c0_242 = arith.constant 0 : index
    %684 = vector.load %arg49[%c0_241, %c0_242] : memref<96x192xbf16, #tpu.memory_space<vmem>>, vector<96x192xbf16>
    %c0_243 = arith.constant 0 : index
    %c0_244 = arith.constant 0 : index
    %685 = vector.load %arg50[%c0_243, %c0_244] : memref<1x192xf32, #tpu.memory_space<vmem>>, vector<1x192xf32>
    %c0_245 = arith.constant 0 : index
    %c0_246 = arith.constant 0 : index
    %686 = vector.load %arg51[%c0_245, %c0_246] : memref<192x256xbf16, #tpu.memory_space<vmem>>, vector<192x256xbf16>
    %c0_247 = arith.constant 0 : index
    %c0_248 = arith.constant 0 : index
    %687 = vector.load %arg52[%c0_247, %c0_248] : memref<1x256xf32, #tpu.memory_space<vmem>>, vector<1x256xf32>
    %cst_249 = arith.constant dense<0.000000e+00> : vector<8xf32>
    %688 = vector.multi_reduction <add>, %681, %cst_249 [1] : vector<8x96xf32> to vector<8xf32>
    %689 = vector.shape_cast %688 : vector<8xf32> to vector<8x1xf32>
    %cst_250 = arith.constant 9.600000e+01 : f32
    %690 = vector.broadcast %cst_250 : f32 to vector<8x1xf32>
    %691 = arith.divf %689, %690 : vector<8x1xf32>
    %692 = vector.broadcast %691 : vector<8x1xf32> to vector<8x96xf32>
    %693 = arith.subf %681, %692 : vector<8x96xf32>
    %694 = arith.mulf %693, %693 : vector<8x96xf32>
    %cst_251 = arith.constant dense<0.000000e+00> : vector<8xf32>
    %695 = vector.multi_reduction <add>, %694, %cst_251 [1] : vector<8x96xf32> to vector<8xf32>
    %696 = vector.shape_cast %695 : vector<8xf32> to vector<8x1xf32>
    %cst_252 = arith.constant 9.600000e+01 : f32
    %697 = vector.broadcast %cst_252 : f32 to vector<8x1xf32>
    %698 = arith.divf %696, %697 : vector<8x1xf32>
    %699 = vector.broadcast %691 : vector<8x1xf32> to vector<8x96xf32>
    %700 = arith.subf %681, %699 : vector<8x96xf32>
    %cst_253 = arith.constant 9.99999997E-7 : f32
    %701 = vector.broadcast %cst_253 : f32 to vector<8x1xf32>
    %702 = arith.addf %698, %701 : vector<8x1xf32>
    %703 = math.rsqrt %702 : vector<8x1xf32>
    %704 = vector.broadcast %703 : vector<8x1xf32> to vector<8x96xf32>
    %705 = arith.mulf %700, %704 : vector<8x96xf32>
    %706 = vector.broadcast %682 : vector<1x96xf32> to vector<8x96xf32>
    %707 = arith.mulf %705, %706 : vector<8x96xf32>
    %708 = vector.broadcast %683 : vector<1x96xf32> to vector<8x96xf32>
    %709 = arith.addf %707, %708 : vector<8x96xf32>
    %cst_254 = arith.constant 0.000000e+00 : f32
    %710 = vector.broadcast %cst_254 : f32 to vector<8x96xf32>
    %711 = arith.addf %710, %709 : vector<8x96xf32>
    %cst_255 = arith.constant 1.000000e+00 : f32
    %712 = vector.broadcast %cst_255 : f32 to vector<8x96xf32>
    %713 = arith.mulf %711, %712 : vector<8x96xf32>
    %714 = arith.truncf %713 : vector<8x96xf32> to vector<8x96xbf16>
    %cst_256 = arith.constant dense<0.000000e+00> : vector<8x192xf32>
    %715 = tpu.matmul %714, %684, %cst_256 {dimension_numbers = #tpu.dot_dimension_numbers<[1], [0], [0], [1], [0, 0, 1, 1], [], []>} : vector<8x96xbf16>, vector<96x192xbf16>, vector<8x192xf32> -> vector<8x192xf32>
    %716 = vector.broadcast %685 : vector<1x192xf32> to vector<8x192xf32>
    %717 = arith.addf %715, %716 : vector<8x192xf32>
    %cst_257 = arith.constant 3.000000e+00 : f32
    %718 = vector.broadcast %cst_257 : f32 to vector<8x192xf32>
    %719 = arith.addf %717, %718 : vector<8x192xf32>
    %cst_258 = arith.constant 0.000000e+00 : f32
    %cst_259 = arith.constant 6.000000e+00 : f32
    %720 = vector.broadcast %cst_258 : f32 to vector<8x192xf32>
    %721 = arith.maximumf %720, %719 : vector<8x192xf32>
    %722 = vector.broadcast %cst_259 : f32 to vector<8x192xf32>
    %723 = arith.minimumf %722, %721 : vector<8x192xf32>
    %724 = arith.mulf %717, %723 : vector<8x192xf32>
    %cst_260 = arith.constant 0.166666672 : f32
    %725 = vector.broadcast %cst_260 : f32 to vector<8x192xf32>
    %726 = arith.mulf %724, %725 : vector<8x192xf32>
    %727 = arith.truncf %726 : vector<8x192xf32> to vector<8x192xbf16>
    %cst_261 = arith.constant dense<0.000000e+00> : vector<8x256xf32>
    %728 = tpu.matmul %727, %686, %cst_261 {dimension_numbers = #tpu.dot_dimension_numbers<[1], [0], [0], [1], [0, 0, 1, 1], [], []>} : vector<8x192xbf16>, vector<192x256xbf16>, vector<8x256xf32> -> vector<8x256xf32>
    %729 = vector.broadcast %687 : vector<1x256xf32> to vector<8x256xf32>
    %730 = arith.addf %728, %729 : vector<8x256xf32>
    %cst_262 = arith.constant dense<0xFF800000> : vector<8xf32>
    %731 = vector.multi_reduction <maximumf>, %730, %cst_262 [1] : vector<8x256xf32> to vector<8xf32>
    %732 = vector.shape_cast %731 : vector<8xf32> to vector<8x1xf32>
    %733 = vector.broadcast %732 : vector<8x1xf32> to vector<8x256xf32>
    %734 = arith.subf %730, %733 : vector<8x256xf32>
    %735 = math.exp %734 : vector<8x256xf32>
    %cst_263 = arith.constant dense<0.000000e+00> : vector<8xf32>
    %736 = vector.multi_reduction <add>, %735, %cst_263 [1] : vector<8x256xf32> to vector<8xf32>
    %737 = vector.shape_cast %736 : vector<8xf32> to vector<8x1xf32>
    %738 = vector.broadcast %737 : vector<8x1xf32> to vector<8x256xf32>
    %739 = arith.divf %735, %738 : vector<8x256xf32>
    %c0_264 = arith.constant 0 : index
    %c0_265 = arith.constant 0 : index
    %c0_266 = arith.constant 0 : index
    %740 = vector.load %arg53[%c0_264, %c0_265, %c0_266] : memref<1x8x256xf32, #tpu.memory_space<vmem>>, vector<1x8x256xf32>
    %741 = vector.shape_cast %740 : vector<1x8x256xf32> to vector<8x256xf32>
    %742 = vector.shape_cast %739 : vector<8x256xf32> to vector<1x8x256xf32>
    tpu.vector_store %arg53[%c0_264, %c0_265, %c0_266], %742 {strides = array<i32>} : memref<1x8x256xf32, #tpu.memory_space<vmem>>, vector<1x8x256xf32>,
    return
  }
  func.func @transform_0(%arg0: i32) -> (i32, i32, i32) {
    %c0_i32 = arith.constant 0 : i32
    %c0_i32_0 = arith.constant 0 : i32
    %c0_i32_1 = arith.constant 0 : i32
    return %arg0, %c0_i32, %c0_i32_0 : i32, i32, i32
  }
  func.func @transform_1(%arg0: i32) -> (i32, i32) {
    %c0_i32 = arith.constant 0 : i32
    %c0_i32_0 = arith.constant 0 : i32
    %c0_i32_1 = arith.constant 0 : i32
    return %c0_i32, %c0_i32_0 : i32, i32
  }
  func.func @transform_2(%arg0: i32) -> (i32, i32) {
    %c0_i32 = arith.constant 0 : i32
    %c0_i32_0 = arith.constant 0 : i32
    %c0_i32_1 = arith.constant 0 : i32
    return %c0_i32, %c0_i32_0 : i32, i32
  }
  func.func @transform_3(%arg0: i32) -> (i32, i32) {
    %c0_i32 = arith.constant 0 : i32
    %c0_i32_0 = arith.constant 0 : i32
    %c0_i32_1 = arith.constant 0 : i32
    return %c0_i32, %c0_i32_0 : i32, i32
  }
  func.func @transform_4(%arg0: i32) -> (i32, i32) {
    %c0_i32 = arith.constant 0 : i32
    %c0_i32_0 = arith.constant 0 : i32
    %c0_i32_1 = arith.constant 0 : i32
    return %c0_i32, %c0_i32_0 : i32, i32
  }
  func.func @transform_5(%arg0: i32) -> (i32, i32) {
    %c0_i32 = arith.constant 0 : i32
    %c0_i32_0 = arith.constant 0 : i32
    %c0_i32_1 = arith.constant 0 : i32
    return %c0_i32, %c0_i32_0 : i32, i32
  }
  func.func @transform_6(%arg0: i32) -> (i32, i32) {
    %c0_i32 = arith.constant 0 : i32
    %c0_i32_0 = arith.constant 0 : i32
    %c0_i32_1 = arith.constant 0 : i32
    return %c0_i32, %c0_i32_0 : i32, i32
  }
  func.func @transform_7(%arg0: i32) -> (i32, i32) {
    %c0_i32 = arith.constant 0 : i32
    %c0_i32_0 = arith.constant 0 : i32
    %c0_i32_1 = arith.constant 0 : i32
    return %c0_i32, %c0_i32_0 : i32, i32
  }
  func.func @transform_8(%arg0: i32) -> (i32, i32) {
    %c0_i32 = arith.constant 0 : i32
    %c0_i32_0 = arith.constant 0 : i32
    %c0_i32_1 = arith.constant 0 : i32
    return %c0_i32, %c0_i32_0 : i32, i32
  }
  func.func @transform_9(%arg0: i32) -> (i32, i32) {
    %c0_i32 = arith.constant 0 : i32
    %c0_i32_0 = arith.constant 0 : i32
    %c0_i32_1 = arith.constant 0 : i32
    return %c0_i32, %c0_i32_0 : i32, i32
  }
  func.func @transform_10(%arg0: i32) -> (i32, i32) {
    %c0_i32 = arith.constant 0 : i32
    %c0_i32_0 = arith.constant 0 : i32
    %c0_i32_1 = arith.constant 0 : i32
    return %c0_i32, %c0_i32_0 : i32, i32
  }
  func.func @transform_11(%arg0: i32) -> (i32, i32) {
    %c0_i32 = arith.constant 0 : i32
    %c0_i32_0 = arith.constant 0 : i32
    %c0_i32_1 = arith.constant 0 : i32
    return %c0_i32, %c0_i32_0 : i32, i32
  }
  func.func @transform_12(%arg0: i32) -> (i32, i32) {
    %c0_i32 = arith.constant 0 : i32
    %c0_i32_0 = arith.constant 0 : i32
    %c0_i32_1 = arith.constant 0 : i32
    return %c0_i32, %c0_i32_0 : i32, i32
  }
  func.func @transform_13(%arg0: i32) -> (i32, i32) {
    %c0_i32 = arith.constant 0 : i32
    %c0_i32_0 = arith.constant 0 : i32
    %c0_i32_1 = arith.constant 0 : i32
    return %c0_i32, %c0_i32_0 : i32, i32
  }
  func.func @transform_14(%arg0: i32) -> (i32, i32, i32) {
    %c0_i32 = arith.constant 0 : i32
    %c0_i32_0 = arith.constant 0 : i32
    %c0_i32_1 = arith.constant 0 : i32
    %c0_i32_2 = arith.constant 0 : i32
    return %c0_i32, %c0_i32_0, %c0_i32_1 : i32, i32, i32
  }
  func.func @transform_15(%arg0: i32) -> (i32, i32) {
    %c0_i32 = arith.constant 0 : i32
    %c0_i32_0 = arith.constant 0 : i32
    %c0_i32_1 = arith.constant 0 : i32
    return %c0_i32, %c0_i32_0 : i32, i32
  }
  func.func @transform_16(%arg0: i32) -> (i32, i32) {
    %c0_i32 = arith.constant 0 : i32
    %c0_i32_0 = arith.constant 0 : i32
    %c0_i32_1 = arith.constant 0 : i32
    return %c0_i32, %c0_i32_0 : i32, i32
  }
  func.func @transform_17(%arg0: i32) -> (i32, i32) {
    %c0_i32 = arith.constant 0 : i32
    %c0_i32_0 = arith.constant 0 : i32
    %c0_i32_1 = arith.constant 0 : i32
    return %c0_i32, %c0_i32_0 : i32, i32
  }
  func.func @transform_18(%arg0: i32) -> (i32, i32) {
    %c0_i32 = arith.constant 0 : i32
    %c0_i32_0 = arith.constant 0 : i32
    %c0_i32_1 = arith.constant 0 : i32
    return %c0_i32, %c0_i32_0 : i32, i32
  }
  func.func @transform_19(%arg0: i32) -> (i32, i32) {
    %c0_i32 = arith.constant 0 : i32
    %c0_i32_0 = arith.constant 0 : i32
    %c0_i32_1 = arith.constant 0 : i32
    return %c0_i32, %c0_i32_0 : i32, i32
  }
  func.func @transform_20(%arg0: i32) -> (i32, i32) {
    %c0_i32 = arith.constant 0 : i32
    %c0_i32_0 = arith.constant 0 : i32
    %c0_i32_1 = arith.constant 0 : i32
    return %c0_i32, %c0_i32_0 : i32, i32
  }
  func.func @transform_21(%arg0: i32) -> (i32, i32) {
    %c0_i32 = arith.constant 0 : i32
    %c0_i32_0 = arith.constant 0 : i32
    %c0_i32_1 = arith.constant 0 : i32
    return %c0_i32, %c0_i32_0 : i32, i32
  }
  func.func @transform_22(%arg0: i32) -> (i32, i32) {
    %c0_i32 = arith.constant 0 : i32
    %c0_i32_0 = arith.constant 0 : i32
    %c0_i32_1 = arith.constant 0 : i32
    return %c0_i32, %c0_i32_0 : i32, i32
  }
  func.func @transform_23(%arg0: i32) -> (i32, i32) {
    %c0_i32 = arith.constant 0 : i32
    %c0_i32_0 = arith.constant 0 : i32
    %c0_i32_1 = arith.constant 0 : i32
    return %c0_i32, %c0_i32_0 : i32, i32
  }
  func.func @transform_24(%arg0: i32) -> (i32, i32) {
    %c0_i32 = arith.constant 0 : i32
    %c0_i32_0 = arith.constant 0 : i32
    %c0_i32_1 = arith.constant 0 : i32
    return %c0_i32, %c0_i32_0 : i32, i32
  }
  func.func @transform_25(%arg0: i32) -> (i32, i32) {
    %c0_i32 = arith.constant 0 : i32
    %c0_i32_0 = arith.constant 0 : i32
    %c0_i32_1 = arith.constant 0 : i32
    return %c0_i32, %c0_i32_0 : i32, i32
  }
  func.func @transform_26(%arg0: i32) -> (i32, i32) {
    %c0_i32 = arith.constant 0 : i32
    %c0_i32_0 = arith.constant 0 : i32
    %c0_i32_1 = arith.constant 0 : i32
    return %c0_i32, %c0_i32_0 : i32, i32
  }
  func.func @transform_27(%arg0: i32) -> (i32, i32) {
    %c0_i32 = arith.constant 0 : i32
    %c0_i32_0 = arith.constant 0 : i32
    %c0_i32_1 = arith.constant 0 : i32
    return %c0_i32, %c0_i32_0 : i32, i32
  }
  func.func @transform_28(%arg0: i32) -> (i32, i32) {
    %c0_i32 = arith.constant 0 : i32
    %c0_i32_0 = arith.constant 0 : i32
    %c0_i32_1 = arith.constant 0 : i32
    return %c0_i32, %c0_i32_0 : i32, i32
  }
  func.func @transform_29(%arg0: i32) -> (i32, i32) {
    %c0_i32 = arith.constant 0 : i32
    %c0_i32_0 = arith.constant 0 : i32
    %c0_i32_1 = arith.constant 0 : i32
    return %c0_i32, %c0_i32_0 : i32, i32
  }
  func.func @transform_30(%arg0: i32) -> (i32, i32, i32) {
    %c0_i32 = arith.constant 0 : i32
    %c0_i32_0 = arith.constant 0 : i32
    %c0_i32_1 = arith.constant 0 : i32
    %c0_i32_2 = arith.constant 0 : i32
    return %c0_i32, %c0_i32_0, %c0_i32_1 : i32, i32, i32
  }
  func.func @transform_31(%arg0: i32) -> (i32, i32) {
    %c0_i32 = arith.constant 0 : i32
    %c0_i32_0 = arith.constant 0 : i32
    %c0_i32_1 = arith.constant 0 : i32
    return %c0_i32, %c0_i32_0 : i32, i32
  }
  func.func @transform_32(%arg0: i32) -> (i32, i32) {
    %c0_i32 = arith.constant 0 : i32
    %c0_i32_0 = arith.constant 0 : i32
    %c0_i32_1 = arith.constant 0 : i32
    return %c0_i32, %c0_i32_0 : i32, i32
  }
  func.func @transform_33(%arg0: i32) -> (i32, i32) {
    %c0_i32 = arith.constant 0 : i32
    %c0_i32_0 = arith.constant 0 : i32
    %c0_i32_1 = arith.constant 0 : i32
    return %c0_i32, %c0_i32_0 : i32, i32
  }
  func.func @transform_34(%arg0: i32) -> (i32, i32) {
    %c0_i32 = arith.constant 0 : i32
    %c0_i32_0 = arith.constant 0 : i32
    %c0_i32_1 = arith.constant 0 : i32
    return %c0_i32, %c0_i32_0 : i32, i32
  }
  func.func @transform_35(%arg0: i32) -> (i32, i32) {
    %c0_i32 = arith.constant 0 : i32
    %c0_i32_0 = arith.constant 0 : i32
    %c0_i32_1 = arith.constant 0 : i32
    return %c0_i32, %c0_i32_0 : i32, i32
  }
  func.func @transform_36(%arg0: i32) -> (i32, i32) {
    %c0_i32 = arith.constant 0 : i32
    %c0_i32_0 = arith.constant 0 : i32
    %c0_i32_1 = arith.constant 0 : i32
    return %c0_i32, %c0_i32_0 : i32, i32
  }
  func.func @transform_37(%arg0: i32) -> (i32, i32) {
    %c0_i32 = arith.constant 0 : i32
    %c0_i32_0 = arith.constant 0 : i32
    %c0_i32_1 = arith.constant 0 : i32
    return %c0_i32, %c0_i32_0 : i32, i32
  }
  func.func @transform_38(%arg0: i32) -> (i32, i32) {
    %c0_i32 = arith.constant 0 : i32
    %c0_i32_0 = arith.constant 0 : i32
    %c0_i32_1 = arith.constant 0 : i32
    return %c0_i32, %c0_i32_0 : i32, i32
  }
  func.func @transform_39(%arg0: i32) -> (i32, i32) {
    %c0_i32 = arith.constant 0 : i32
    %c0_i32_0 = arith.constant 0 : i32
    %c0_i32_1 = arith.constant 0 : i32
    return %c0_i32, %c0_i32_0 : i32, i32
  }
  func.func @transform_40(%arg0: i32) -> (i32, i32) {
    %c0_i32 = arith.constant 0 : i32
    %c0_i32_0 = arith.constant 0 : i32
    %c0_i32_1 = arith.constant 0 : i32
    return %c0_i32, %c0_i32_0 : i32, i32
  }
  func.func @transform_41(%arg0: i32) -> (i32, i32) {
    %c0_i32 = arith.constant 0 : i32
    %c0_i32_0 = arith.constant 0 : i32
    %c0_i32_1 = arith.constant 0 : i32
    return %c0_i32, %c0_i32_0 : i32, i32
  }
  func.func @transform_42(%arg0: i32) -> (i32, i32) {
    %c0_i32 = arith.constant 0 : i32
    %c0_i32_0 = arith.constant 0 : i32
    %c0_i32_1 = arith.constant 0 : i32
    return %c0_i32, %c0_i32_0 : i32, i32
  }
  func.func @transform_43(%arg0: i32) -> (i32, i32) {
    %c0_i32 = arith.constant 0 : i32
    %c0_i32_0 = arith.constant 0 : i32
    %c0_i32_1 = arith.constant 0 : i32
    return %c0_i32, %c0_i32_0 : i32, i32
  }
  func.func @transform_44(%arg0: i32) -> (i32, i32) {
    %c0_i32 = arith.constant 0 : i32
    %c0_i32_0 = arith.constant 0 : i32
    %c0_i32_1 = arith.constant 0 : i32
    return %c0_i32, %c0_i32_0 : i32, i32
  }
  func.func @transform_45(%arg0: i32) -> (i32, i32) {
    %c0_i32 = arith.constant 0 : i32
    %c0_i32_0 = arith.constant 0 : i32
    %c0_i32_1 = arith.constant 0 : i32
    return %c0_i32, %c0_i32_0 : i32, i32
  }
  func.func @transform_46(%arg0: i32) -> (i32, i32) {
    %c0_i32 = arith.constant 0 : i32
    %c0_i32_0 = arith.constant 0 : i32
    %c0_i32_1 = arith.constant 0 : i32
    return %c0_i32, %c0_i32_0 : i32, i32
  }
  func.func @transform_47(%arg0: i32) -> (i32, i32) {
    %c0_i32 = arith.constant 0 : i32
    %c0_i32_0 = arith.constant 0 : i32
    %c0_i32_1 = arith.constant 0 : i32
    return %c0_i32, %c0_i32_0 : i32, i32
  }
  func.func @transform_48(%arg0: i32) -> (i32, i32) {
    %c0_i32 = arith.constant 0 : i32
    %c0_i32_0 = arith.constant 0 : i32
    %c0_i32_1 = arith.constant 0 : i32
    return %c0_i32, %c0_i32_0 : i32, i32
  }
  func.func @transform_49(%arg0: i32) -> (i32, i32) {
    %c0_i32 = arith.constant 0 : i32
    %c0_i32_0 = arith.constant 0 : i32
    %c0_i32_1 = arith.constant 0 : i32
    return %c0_i32, %c0_i32_0 : i32, i32
  }
  func.func @transform_50(%arg0: i32) -> (i32, i32) {
    %c0_i32 = arith.constant 0 : i32
    %c0_i32_0 = arith.constant 0 : i32
    %c0_i32_1 = arith.constant 0 : i32
    return %c0_i32, %c0_i32_0 : i32, i32
  }
  func.func @transform_51(%arg0: i32) -> (i32, i32) {
    %c0_i32 = arith.constant 0 : i32
    %c0_i32_0 = arith.constant 0 : i32
    %c0_i32_1 = arith.constant 0 : i32
    return %c0_i32, %c0_i32_0 : i32, i32
  }
  func.func @transform_52(%arg0: i32) -> (i32, i32, i32) {
    %c0_i32 = arith.constant 0 : i32
    %c0_i32_0 = arith.constant 0 : i32
    %c0_i32_1 = arith.constant 0 : i32
    return %arg0, %c0_i32, %c0_i32_0 : i32, i32, i32
  }
}

</mosaic_0001>

<llo_original>
// kernel: svtr_forward.1
$region0: #{svtr_forward.1}
  #allocation0 [shape = 'u32[]', space=smem, size = 0x4, offset = 0x4, fixed_abs, tag = 'smem constant byte address 0x4 - core index']
  #allocation1 [shape = 'u32[72,128]{1,0:T(1,128)}', space=vmem, size = 0x9000, scoped, tag = 'internal scratch']
  %s0 = inlined_call_operand.smem [shape: u32[53], index: -1, kind: input, shape index: {}]
  %s1 = sld [smem:[%s0]]
  %s2 = scalar_lea.smem %s0, 1
  %s3 = sld [smem:[%s2]]
  %s4 = scalar_lea.smem %s0, 2
  %s5 = sld [smem:[%s4]]
  %s6 = scalar_lea.smem %s0, 3
  %s7 = sld [smem:[%s6]]
  %s8 = scalar_lea.smem %s0, 4
  %s9 = sld [smem:[%s8]]
  %s10 = scalar_lea.smem %s0, 5
  %s11 = sld [smem:[%s10]]
  %s12 = scalar_lea.smem %s0, 6
  %s13 = sld [smem:[%s12]]
  %s14 = scalar_lea.smem %s0, 7
  %s15 = sld [smem:[%s14]]
  %s16 = scalar_lea.smem %s0, 8
  %s17 = sld [smem:[%s16]]
  %s18 = scalar_lea.smem %s0, 9
  %s19 = sld [smem:[%s18]]
  %s20 = scalar_lea.smem %s0, 10
  %s21 = sld [smem:[%s20]]
  %s22 = scalar_lea.smem %s0, 11
  %s23 = sld [smem:[%s22]]
  %s24 = scalar_lea.smem %s0, 12
  %s25 = sld [smem:[%s24]]
  %s26 = scalar_lea.smem %s0, 13
  %s27 = sld [smem:[%s26]]
  %s28 = scalar_lea.smem %s0, 14
  %s29 = sld [smem:[%s28]]
  %s30 = scalar_lea.smem %s0, 15
  %s31 = sld [smem:[%s30]]
  %s32 = scalar_lea.smem %s0, 16
  %s33 = sld [smem:[%s32]]
  %s34 = scalar_lea.smem %s0, 17
  %s35 = sld [smem:[%s34]]
  %s36 = scalar_lea.smem %s0, 18
  %s37 = sld [smem:[%s36]]
  %s38 = scalar_lea.smem %s0, 19
  %s39 = sld [smem:[%s38]]
  %s40 = scalar_lea.smem %s0, 20
  %s41 = sld [smem:[%s40]]
  %s42 = scalar_lea.smem %s0, 21
  %s43 = sld [smem:[%s42]]
  %s44 = scalar_lea.smem %s0, 22
  %s45 = sld [smem:[%s44]]
  %s46 = scalar_lea.smem %s0, 23
  %s47 = sld [smem:[%s46]]
  %s48 = scalar_lea.smem %s0, 24
  %s49 = sld [smem:[%s48]]
  %s50 = scalar_lea.smem %s0, 25
  %s51 = sld [smem:[%s50]]
  %s52 = scalar_lea.smem %s0, 26
  %s53 = sld [smem:[%s52]]
  %s54 = scalar_lea.smem %s0, 27
  %s55 = sld [smem:[%s54]]
  %s56 = scalar_lea.smem %s0, 28
  %s57 = sld [smem:[%s56]]
  %s58 = scalar_lea.smem %s0, 29
  %s59 = sld [smem:[%s58]]
  %s60 = scalar_lea.smem %s0, 30
  %s61 = sld [smem:[%s60]]
  %s62 = scalar_lea.smem %s0, 31
  %s63 = sld [smem:[%s62]]
  %s64 = scalar_lea.smem %s0, 32
  %s65 = sld [smem:[%s64]]
  %s66 = scalar_lea.smem %s0, 33
  %s67 = sld [smem:[%s66]]
  %s68 = scalar_lea.smem %s0, 34
  %s69 = sld [smem:[%s68]]
  %s70 = scalar_lea.smem %s0, 35
  %s71 = sld [smem:[%s70]]
  %s72 = scalar_lea.smem %s0, 36
  %s73 = sld [smem:[%s72]]
  %s74 = scalar_lea.smem %s0, 37
  %s75 = sld [smem:[%s74]]
  %s76 = scalar_lea.smem %s0, 38
  %s77 = sld [smem:[%s76]]
  %s78 = scalar_lea.smem %s0, 39
  %s79 = sld [smem:[%s78]]
  %s80 = scalar_lea.smem %s0, 40
  %s81 = sld [smem:[%s80]]
  %s82 = scalar_lea.smem %s0, 41
  %s83 = sld [smem:[%s82]]
  %s84 = scalar_lea.smem %s0, 42
  %s85 = sld [smem:[%s84]]
  %s86 = scalar_lea.smem %s0, 43
  %s87 = sld [smem:[%s86]]
  %s88 = scalar_lea.smem %s0, 44
  %s89 = sld [smem:[%s88]]
  %s90 = scalar_lea.smem %s0, 45
  %s91 = sld [smem:[%s90]]
  %s92 = scalar_lea.smem %s0, 46
  %s93 = sld [smem:[%s92]]
  %s94 = scalar_lea.smem %s0, 47
  %s95 = sld [smem:[%s94]]
  %s96 = scalar_lea.smem %s0, 48
  %s97 = sld [smem:[%s96]]
  %s98 = scalar_lea.smem %s0, 49
  %s99 = sld [smem:[%s98]]
  %s100 = scalar_lea.smem %s0, 50
  %s101 = sld [smem:[%s100]]
  %s102 = scalar_lea.smem %s0, 51
  %s103 = sld [smem:[%s102]]
  %s104 = scalar_lea.smem %s0, 52
  %s105 = sld [smem:[%s104]]
  %s106 = sld [smem:[#allocation0]]
  $region293: #{svtr_forward.1} parent=0
    _
  %s108 = ssub.s32 1, %s106
  %s109 = scalar_select 0, %s108, %s106
  $region1: #{svtr_forward.1} parent=0
    #allocation2 [shape = 'u8[512]{0}', space=vmem, size = 0x400, scoped, tag = 'input window, operand 25, single buffered']
    #allocation3 [shape = 's32[2]{0}', space=sflag, size = 0x8, scoped, tag = 'scoped memory for svtr_forward.1']
    #allocation4 [shape = 's32[2]{0}', space=sflag, size = 0x8, scoped, tag = 'scoped memory for svtr_forward.1']
    #allocation5 [shape = 'u8[512]{0}', space=vmem, size = 0x400, scoped, tag = 'input window, operand 29, single buffered']
    #allocation6 [shape = 's32[1]{0}', space=sflag, size = 0x4, scoped, tag = 'scoped memory for svtr_forward.1']
    #allocation7 [shape = 'u8[512]{0}', space=vmem, size = 0x400, scoped, tag = 'input window, operand 31, single buffered']
    #allocation8 [shape = 'u8[512]{0}', space=vmem, size = 0x400, scoped, tag = 'input window, operand 32, single buffered']
    #allocation9 [shape = 's32[1]{0}', space=sflag, size = 0x4, scoped, tag = 'scoped memory for svtr_forward.1']
    #allocation10 [shape = 'u8[512]{0}', space=vmem, size = 0x400, scoped, tag = 'input window, operand 33, single buffered']
    #allocation11 [shape = 'u8[512]{0}', space=vmem, size = 0x400, scoped, tag = 'input window, operand 34, single buffered']
    #allocation12 [shape = 's32[1]{0}', space=sflag, size = 0x4, scoped, tag = 'scoped memory for svtr_forward.1']
    #allocation13 [shape = 'u8[512]{0}', space=vmem, size = 0x400, scoped, tag = 'input window, operand 35, single buffered']
    #allocation14 [shape = 'u8[512]{0}', space=vmem, size = 0x400, scoped, tag = 'input window, operand 39, single buffered']
    #allocation15 [shape = 's32[1]{0}', space=sflag, size = 0x4, scoped, tag = 'scoped memory for svtr_forward.1']
    #allocation16 [shape = 'u8[512]{0}', space=vmem, size = 0x400, scoped, tag = 'input window, operand 40, single buffered']
    #allocation17 [shape = 'u8[512]{0}', space=vmem, size = 0x400, scoped, tag = 'input window, operand 41, single buffered']
    #allocation18 [shape = 's32[1]{0}', space=sflag, size = 0x4, scoped, tag = 'scoped memory for svtr_forward.1']
    #allocation19 [shape = 'u8[512]{0}', space=vmem, size = 0x400, scoped, tag = 'input window, operand 45, single buffered']
    #allocation20 [shape = 'u8[512]{0}', space=vmem, size = 0x400, scoped, tag = 'input window, operand 46, single buffered']
    #allocation21 [shape = 's32[1]{0}', space=sflag, size = 0x4, scoped, tag = 'scoped memory for svtr_forward.1']
    #allocation22 [shape = 'u8[512]{0}', space=vmem, size = 0x400, scoped, tag = 'input window, operand 47, single buffered']
    #allocation23 [shape = 'u8[16384]{0}', space=vmem, size = 0x4000, scoped, tag = 'output window, operand 0']
    %110 = vsyncpa [#allocation3], 0
    %111 = vsyncpa [#allocation6], 0
    %112 = vsyncpa [#allocation9], 0
    %113 = vsyncpa [#allocation12], 0
    %114 = vsyncpa [#allocation15], 0
    %115 = vsyncpa [#allocation18], 0
    %116 = vsyncpa [#allocation21], 0
    %117 = vsyncpa [#allocation4], 0
    %s118 = scalar_lea.sflag [#allocation4], 1
    %119 = vsyncpa %s118, 0
    loop: start=0, step=1, limit=4
    $region2: #{svtr_forward.1} parent=1 // loop_pre_header
      _
    $region3: #{svtr_forward.1} parent=1 // loop_header
      %s121 = sphi 0, %s125
      %p122 = scmp.ge.s32.totalorder %s121, 4
      %s131 = sphi 0, %s133
      %s134 = sphi 0, %s131
      %s135 = sphi 0, %s134
      %s151 = sphi 0, %s135
      %s155 = sphi 0, %s155
      %s157 = sphi 0, %s155
      %s158 = sphi 0, %s157
      %s172 = sphi 0, %s158
      %s176 = sphi 0, %s176
      %s178 = sphi 0, %s176
      %s179 = sphi 0, %s178
      %s193 = sphi 0, %s179
      %s197 = sphi 0, %s197
      %s199 = sphi 0, %s197
      %s200 = sphi 0, %s199
      %s214 = sphi 0, %s200
      %s218 = sphi 0, %s218
      %s220 = sphi 0, %s218
      %s221 = sphi 0, %s220
      %s235 = sphi 0, %s221
      %s239 = sphi 0, %s239
      %s241 = sphi 0, %s239
      %s242 = sphi 0, %s241
      %s256 = sphi 0, %s242
      %s260 = sphi 0, %s260
      %s262 = sphi 0, %s260
      %s263 = sphi 0, %s262
      %s277 = sphi 0, %s263
      %s281 = sphi 0, %s281
      %s283 = sphi 0, %s281
      %s284 = sphi 0, %s283
      %s298 = sphi 0, %s284
      %s302 = sphi 0, %s302
      %s304 = sphi 0, %s302
      %s305 = sphi 0, %s304
      %s319 = sphi 0, %s305
      %s323 = sphi 0, %s323
      %s325 = sphi 0, %s323
      %s326 = sphi 0, %s325
      %s340 = sphi 0, %s326
      %s344 = sphi 0, %s344
      %s346 = sphi 0, %s344
      %s347 = sphi 0, %s346
      %s361 = sphi 0, %s347
      %s365 = sphi 0, %s365
      %s367 = sphi 0, %s365
      %s368 = sphi 0, %s367
      %s382 = sphi 0, %s368
      %s386 = sphi 0, %s386
      %s388 = sphi 0, %s386
      %s389 = sphi 0, %s388
      %s403 = sphi 0, %s389
      %s407 = sphi 0, %s407
      %s409 = sphi 0, %s407
      %s410 = sphi 0, %s409
      %s424 = sphi 0, %s410
      %s428 = sphi 0, %s428
      %s430 = sphi 0, %s428
      %s431 = sphi 0, %s430
      %s445 = sphi 0, %s431
      %s449 = sphi 0, %s449
      %s451 = sphi 0, %s449
      %s452 = sphi 0, %s451
      %s466 = sphi 0, %s452
      %s470 = sphi 0, %s470
      %s472 = sphi 0, %s470
      %s473 = sphi 0, %s472
      %s487 = sphi 0, %s473
      %s491 = sphi 0, %s491
      %s493 = sphi 0, %s491
      %s494 = sphi 0, %s493
      %s508 = sphi 0, %s494
      %s512 = sphi 0, %s512
      %s514 = sphi 0, %s512
      %s515 = sphi 0, %s514
      %s529 = sphi 0, %s515
      %s533 = sphi 0, %s533
      %s535 = sphi 0, %s533
      %s536 = sphi 0, %s535
      %s550 = sphi 0, %s536
      %s554 = sphi 0, %s554
      %s556 = sphi 0, %s554
      %s557 = sphi 0, %s556
      %s571 = sphi 0, %s557
      %s575 = sphi 0, %s575
      %s577 = sphi 0, %s575
      %s578 = sphi 0, %s577
      %s592 = sphi 0, %s578
      %s596 = sphi 0, %s596
      %s598 = sphi 0, %s596
      %s599 = sphi 0, %s598
      %s613 = sphi 0, %s599
      %s617 = sphi 0, %s617
      %s619 = sphi 0, %s617
      %s620 = sphi 0, %s619
      %s634 = sphi 0, %s620
      %s638 = sphi 0, %s638
      %s640 = sphi 0, %s638
      %s641 = sphi 0, %s640
      %s655 = sphi 0, %s641
      %s659 = sphi 0, %s659
      %s661 = sphi 0, %s659
      %s662 = sphi 0, %s661
      %s676 = sphi 0, %s662
      %s680 = sphi 0, %s680
      %s682 = sphi 0, %s680
      %s683 = sphi 0, %s682
      %s697 = sphi 0, %s683
      %s701 = sphi 0, %s701
      %s703 = sphi 0, %s701
      %s704 = sphi 0, %s703
      %s718 = sphi 0, %s704
      %s722 = sphi 0, %s722
      %s724 = sphi 0, %s722
      %s725 = sphi 0, %s724
      %s739 = sphi 0, %s725
      %s743 = sphi 0, %s743
      %s745 = sphi 0, %s743
      %s746 = sphi 0, %s745
      %s760 = sphi 0, %s746
      %s764 = sphi 0, %s764
      %s766 = sphi 0, %s764
      %s767 = sphi 0, %s766
      %s781 = sphi 0, %s767
      %s785 = sphi 0, %s785
      %s787 = sphi 0, %s785
      %s788 = sphi 0, %s787
      %s802 = sphi 0, %s788
      %s806 = sphi 0, %s806
      %s808 = sphi 0, %s806
      %s809 = sphi 0, %s808
      %s823 = sphi 0, %s809
      %s827 = sphi 0, %s827
      %s829 = sphi 0, %s827
      %s830 = sphi 0, %s829
      %s844 = sphi 0, %s830
      %s848 = sphi 0, %s848
      %s850 = sphi 0, %s848
      %s851 = sphi 0, %s850
      %s865 = sphi 0, %s851
      %s869 = sphi 0, %s869
      %s871 = sphi 0, %s869
      %s872 = sphi 0, %s871
      %s886 = sphi 0, %s872
      %s890 = sphi 0, %s890
      %s892 = sphi 0, %s890
      %s893 = sphi 0, %s892
      %s907 = sphi 0, %s893
      %s911 = sphi 0, %s911
      %s913 = sphi 0, %s911
      %s914 = sphi 0, %s913
      %s928 = sphi 0, %s914
      %s932 = sphi 0, %s932
      %s934 = sphi 0, %s932
      %s935 = sphi 0, %s934
      %s949 = sphi 0, %s935
      %s953 = sphi 0, %s953
      %s955 = sphi 0, %s953
      %s956 = sphi 0, %s955
      %s970 = sphi 0, %s956
      %s974 = sphi 0, %s974
      %s976 = sphi 0, %s974
      %s977 = sphi 0, %s976
      %s991 = sphi 0, %s977
      %s995 = sphi 0, %s995
      %s997 = sphi 0, %s995
      %s998 = sphi 0, %s997
      %s1012 = sphi 0, %s998
      %s1016 = sphi 0, %s1016
      %s1018 = sphi 0, %s1016
      %s1019 = sphi 0, %s1018
      %s1033 = sphi 0, %s1019
      %s1037 = sphi 0, %s1037
      %s1039 = sphi 0, %s1037
      %s1040 = sphi 0, %s1039
      %s1054 = sphi 0, %s1040
      %s1058 = sphi 0, %s1058
      %s1060 = sphi 0, %s1058
      %s1061 = sphi 0, %s1060
      %s1075 = sphi 0, %s1061
      %s1079 = sphi 0, %s1079
      %s1081 = sphi 0, %s1079
      %s1082 = sphi 0, %s1081
      %s1096 = sphi 0, %s1082
      %s1100 = sphi 0, %s1100
      %s1102 = sphi 0, %s1100
      %s1103 = sphi 0, %s1102
      %s1117 = sphi 0, %s1103
      %s1121 = sphi 0, %s1121
      %s1123 = sphi 0, %s1121
      %s1124 = sphi 0, %s1123
      %s1138 = sphi 0, %s1124
      %s1142 = sphi 0, %s1142
      %s1144 = sphi 0, %s1142
      %s1145 = sphi 0, %s1144
      %s1159 = sphi 0, %s1145
      %s1163 = sphi 0, %s1163
      %s1165 = sphi 0, %s1163
      %s1166 = sphi 0, %s1165
      %s1180 = sphi 0, %s1166
      %s1184 = sphi 0, %s1184
      %s1186 = sphi 0, %s1184
      %s1187 = sphi 0, %s1186
      %s1201 = sphi 0, %s1187
      %s1205 = sphi 0, %s1205
      %s1207 = sphi 0, %s1205
      %s1208 = sphi 0, %s1207
      %s1222 = sphi 0, %s1208
      %s1228 = sphi 0, %s1230
      %s1231 = sphi 0, %s1228
      %s1232 = sphi 0, %s1231
      %s1248 = sphi 0, %s1232
    $region4: #{svtr_forward.1} parent=1 // loop_header_branch
      %124 = sbr.rel (%p122) target = $region8
    $region5: #{svtr_forward.1} parent=1 // loop_body
      %s126 = ssub.s32 %s121, 1
      %s127 = ssub.s32 %s121, 2
      %s128 = sadd.s32 %s121, 1
      %s129 = ssub.s32 %s121, %s128
      %p130 = scmp.eq.s32.totalorder %s129, 0
      %s132 = sadd.s32 %s131, 1
      %s133 = scalar_select %p130, %s131, %s132
      %p136 = pneg %p130
      %p137 = scmp.eq.s32.totalorder %s121, 1
      %p138 = por %p136, %p137
      %p139 = scmp.ne.s32.totalorder %s131, %s134
      %p140 = scmp.eq.s32.totalorder %s121, 0
      %p141 = por %p139, %p140
      %p142 = scmp.ne.s32.totalorder %s131, %s134
      %p143 = scmp.eq.s32.totalorder %s126, 1
      %p144 = por %p142, %p143
      %p145 = scmp.ne.s32.totalorder %s134, %s135
      %p146 = scmp.eq.s32.totalorder %s126, 0
      %p147 = por %p145, %p146
      %p148 = scmp.ne.s32.totalorder %s134, %s135
      %p149 = scmp.eq.s32.totalorder %s127, 1
      %p150 = por %p148, %p149
      %p152 = scmp.ne.s32.totalorder %s135, %s151
      %p153 = scmp.eq.s32.totalorder %s127, 0
      %p154 = por %p152, %p153
      %s156 = sadd.s32 %s155, 1
      %p159 = scmp.eq.s32.totalorder %s121, 1
      %p160 = scmp.ne.s32.totalorder %s155, %s157
      %p161 = scmp.eq.s32.totalorder %s121, 0
      %p162 = por %p160, %p161
      %p163 = scmp.ne.s32.totalorder %s155, %s157
      %p164 = scmp.eq.s32.totalorder %s126, 1
      %p165 = por %p163, %p164
      %p166 = scmp.ne.s32.totalorder %s157, %s158
      %p167 = scmp.eq.s32.totalorder %s126, 0
      %p168 = por %p166, %p167
      %p169 = scmp.ne.s32.totalorder %s157, %s158
      %p170 = scmp.eq.s32.totalorder %s127, 1
      %p171 = por %p169, %p170
      %p173 = scmp.ne.s32.totalorder %s158, %s172
      %p174 = scmp.eq.s32.totalorder %s127, 0
      %p175 = por %p173, %p174
      %s177 = sadd.s32 %s176, 1
      %p180 = scmp.eq.s32.totalorder %s121, 1
      %p181 = scmp.ne.s32.totalorder %s176, %s178
      %p182 = scmp.eq.s32.totalorder %s121, 0
      %p183 = por %p181, %p182
      %p184 = scmp.ne.s32.totalorder %s176, %s178
      %p185 = scmp.eq.s32.totalorder %s126, 1
      %p186 = por %p184, %p185
      %p187 = scmp.ne.s32.totalorder %s178, %s179
      %p188 = scmp.eq.s32.totalorder %s126, 0
      %p189 = por %p187, %p188
      %p190 = scmp.ne.s32.totalorder %s178, %s179
      %p191 = scmp.eq.s32.totalorder %s127, 1
      %p192 = por %p190, %p191
      %p194 = scmp.ne.s32.totalorder %s179, %s193
      %p195 = scmp.eq.s32.totalorder %s127, 0
      %p196 = por %p194, %p195
      %s198 = sadd.s32 %s197, 1
      %p201 = scmp.eq.s32.totalorder %s121, 1
      %p202 = scmp.ne.s32.totalorder %s197, %s199
      %p203 = scmp.eq.s32.totalorder %s121, 0
      %p204 = por %p202, %p203
      %p205 = scmp.ne.s32.totalorder %s197, %s199
      %p206 = scmp.eq.s32.totalorder %s126, 1
      %p207 = por %p205, %p206
      %p208 = scmp.ne.s32.totalorder %s199, %s200
      %p209 = scmp.eq.s32.totalorder %s126, 0
      %p210 = por %p208, %p209
      %p211 = scmp.ne.s32.totalorder %s199, %s200
      %p212 = scmp.eq.s32.totalorder %s127, 1
      %p213 = por %p211, %p212
      %p215 = scmp.ne.s32.totalorder %s200, %s214
      %p216 = scmp.eq.s32.totalorder %s127, 0
      %p217 = por %p215, %p216
      %s219 = sadd.s32 %s218, 1
      %p222 = scmp.eq.s32.totalorder %s121, 1
      %p223 = scmp.ne.s32.totalorder %s218, %s220
      %p224 = scmp.eq.s32.totalorder %s121, 0
      %p225 = por %p223, %p224
      %p226 = scmp.ne.s32.totalorder %s218, %s220
      %p227 = scmp.eq.s32.totalorder %s126, 1
      %p228 = por %p226, %p227
      %p229 = scmp.ne.s32.totalorder %s220, %s221
      %p230 = scmp.eq.s32.totalorder %s126, 0
      %p231 = por %p229, %p230
      %p232 = scmp.ne.s32.totalorder %s220, %s221
      %p233 = scmp.eq.s32.totalorder %s127, 1
      %p234 = por %p232, %p233
      %p236 = scmp.ne.s32.totalorder %s221, %s235
      %p237 = scmp.eq.s32.totalorder %s127, 0
      %p238 = por %p236, %p237
      %s240 = sadd.s32 %s239, 1
      %p243 = scmp.eq.s32.totalorder %s121, 1
      %p244 = scmp.ne.s32.totalorder %s239, %s241
      %p245 = scmp.eq.s32.totalorder %s121, 0
      %p246 = por %p244, %p245
      %p247 = scmp.ne.s32.totalorder %s239, %s241
      %p248 = scmp.eq.s32.totalorder %s126, 1
      %p249 = por %p247, %p248
      %p250 = scmp.ne.s32.totalorder %s241, %s242
      %p251 = scmp.eq.s32.totalorder %s126, 0
      %p252 = por %p250, %p251
      %p253 = scmp.ne.s32.totalorder %s241, %s242
      %p254 = scmp.eq.s32.totalorder %s127, 1
      %p255 = por %p253, %p254
      %p257 = scmp.ne.s32.totalorder %s242, %s256
      %p258 = scmp.eq.s32.totalorder %s127, 0
      %p259 = por %p257, %p258
      %s261 = sadd.s32 %s260, 1
      %p264 = scmp.eq.s32.totalorder %s121, 1
      %p265 = scmp.ne.s32.totalorder %s260, %s262
      %p266 = scmp.eq.s32.totalorder %s121, 0
      %p267 = por %p265, %p266
      %p268 = scmp.ne.s32.totalorder %s260, %s262
      %p269 = scmp.eq.s32.totalorder %s126, 1
      %p270 = por %p268, %p269
      %p271 = scmp.ne.s32.totalorder %s262, %s263
      %p272 = scmp.eq.s32.totalorder %s126, 0
      %p273 = por %p271, %p272
      %p274 = scmp.ne.s32.totalorder %s262, %s263
      %p275 = scmp.eq.s32.totalorder %s127, 1
      %p276 = por %p274, %p275
      %p278 = scmp.ne.s32.totalorder %s263, %s277
      %p279 = scmp.eq.s32.totalorder %s127, 0
      %p280 = por %p278, %p279
      %s282 = sadd.s32 %s281, 1
      %p285 = scmp.eq.s32.totalorder %s121, 1
      %p286 = scmp.ne.s32.totalorder %s281, %s283
      %p287 = scmp.eq.s32.totalorder %s121, 0
      %p288 = por %p286, %p287
      %p289 = scmp.ne.s32.totalorder %s281, %s283
      %p290 = scmp.eq.s32.totalorder %s126, 1
      %p291 = por %p289, %p290
      %p292 = scmp.ne.s32.totalorder %s283, %s284
      %p293 = scmp.eq.s32.totalorder %s126, 0
      %p294 = por %p292, %p293
      %p295 = scmp.ne.s32.totalorder %s283, %s284
      %p296 = scmp.eq.s32.totalorder %s127, 1
      %p297 = por %p295, %p296
      %p299 = scmp.ne.s32.totalorder %s284, %s298
      %p300 = scmp.eq.s32.totalorder %s127, 0
      %p301 = por %p299, %p300
      %s303 = sadd.s32 %s302, 1
      %p306 = scmp.eq.s32.totalorder %s121, 1
      %p307 = scmp.ne.s32.totalorder %s302, %s304
      %p308 = scmp.eq.s32.totalorder %s121, 0
      %p309 = por %p307, %p308
      %p310 = scmp.ne.s32.totalorder %s302, %s304
      %p311 = scmp.eq.s32.totalorder %s126, 1
      %p312 = por %p310, %p311
      %p313 = scmp.ne.s32.totalorder %s304, %s305
      %p314 = scmp.eq.s32.totalorder %s126, 0
      %p315 = por %p313, %p314
      %p316 = scmp.ne.s32.totalorder %s304, %s305
      %p317 = scmp.eq.s32.totalorder %s127, 1
      %p318 = por %p316, %p317
      %p320 = scmp.ne.s32.totalorder %s305, %s319
      %p321 = scmp.eq.s32.totalorder %s127, 0
      %p322 = por %p320, %p321
      %s324 = sadd.s32 %s323, 1
      %p327 = scmp.eq.s32.totalorder %s121, 1
      %p328 = scmp.ne.s32.totalorder %s323, %s325
      %p329 = scmp.eq.s32.totalorder %s121, 0
      %p330 = por %p328, %p329
      %p331 = scmp.ne.s32.totalorder %s323, %s325
      %p332 = scmp.eq.s32.totalorder %s126, 1
      %p333 = por %p331, %p332
      %p334 = scmp.ne.s32.totalorder %s325, %s326
      %p335 = scmp.eq.s32.totalorder %s126, 0
      %p336 = por %p334, %p335
      %p337 = scmp.ne.s32.totalorder %s325, %s326
      %p338 = scmp.eq.s32.totalorder %s127, 1
      %p339 = por %p337, %p338
      %p341 = scmp.ne.s32.totalorder %s326, %s340
      %p342 = scmp.eq.s32.totalorder %s127, 0
      %p343 = por %p341, %p342
      %s345 = sadd.s32 %s344, 1
      %p348 = scmp.eq.s32.totalorder %s121, 1
      %p349 = scmp.ne.s32.totalorder %s344, %s346
      %p350 = scmp.eq.s32.totalorder %s121, 0
      %p351 = por %p349, %p350
      %p352 = scmp.ne.s32.totalorder %s344, %s346
      %p353 = scmp.eq.s32.totalorder %s126, 1
      %p354 = por %p352, %p353
      %p355 = scmp.ne.s32.totalorder %s346, %s347
      %p356 = scmp.eq.s32.totalorder %s126, 0
      %p357 = por %p355, %p356
      %p358 = scmp.ne.s32.totalorder %s346, %s347
      %p359 = scmp.eq.s32.totalorder %s127, 1
      %p360 = por %p358, %p359
      %p362 = scmp.ne.s32.totalorder %s347, %s361
      %p363 = scmp.eq.s32.totalorder %s127, 0
      %p364 = por %p362, %p363
      %s366 = sadd.s32 %s365, 1
      %p369 = scmp.eq.s32.totalorder %s121, 1
      %p370 = scmp.ne.s32.totalorder %s365, %s367
      %p371 = scmp.eq.s32.totalorder %s121, 0
      %p372 = por %p370, %p371
      %p373 = scmp.ne.s32.totalorder %s365, %s367
      %p374 = scmp.eq.s32.totalorder %s126, 1
      %p375 = por %p373, %p374
      %p376 = scmp.ne.s32.totalorder %s367, %s368
      %p377 = scmp.eq.s32.totalorder %s126, 0
      %p378 = por %p376, %p377
      %p379 = scmp.ne.s32.totalorder %s367, %s368
      %p380 = scmp.eq.s32.totalorder %s127, 1
      %p381 = por %p379, %p380
      %p383 = scmp.ne.s32.totalorder %s368, %s382
      %p384 = scmp.eq.s32.totalorder %s127, 0
      %p385 = por %p383, %p384
      %s387 = sadd.s32 %s386, 1
      %p390 = scmp.eq.s32.totalorder %s121, 1
      %p391 = scmp.ne.s32.totalorder %s386, %s388
      %p392 = scmp.eq.s32.totalorder %s121, 0
      %p393 = por %p391, %p392
      %p394 = scmp.ne.s32.totalorder %s386, %s388
      %p395 = scmp.eq.s32.totalorder %s126, 1
      %p396 = por %p394, %p395
      %p397 = scmp.ne.s32.totalorder %s388, %s389
      %p398 = scmp.eq.s32.totalorder %s126, 0
      %p399 = por %p397, %p398
      %p400 = scmp.ne.s32.totalorder %s388, %s389
      %p401 = scmp.eq.s32.totalorder %s127, 1
      %p402 = por %p400, %p401
      %p404 = scmp.ne.s32.totalorder %s389, %s403
      %p405 = scmp.eq.s32.totalorder %s127, 0
      %p406 = por %p404, %p405
      %s408 = sadd.s32 %s407, 1
      %p411 = scmp.eq.s32.totalorder %s121, 1
      %p412 = scmp.ne.s32.totalorder %s407, %s409
      %p413 = scmp.eq.s32.totalorder %s121, 0
      %p414 = por %p412, %p413
      %p415 = scmp.ne.s32.totalorder %s407, %s409
      %p416 = scmp.eq.s32.totalorder %s126, 1
      %p417 = por %p415, %p416
      %p418 = scmp.ne.s32.totalorder %s409, %s410
      %p419 = scmp.eq.s32.totalorder %s126, 0
      %p420 = por %p418, %p419
      %p421 = scmp.ne.s32.totalorder %s409, %s410
      %p422 = scmp.eq.s32.totalorder %s127, 1
      %p423 = por %p421, %p422
      %p425 = scmp.ne.s32.totalorder %s410, %s424
      %p426 = scmp.eq.s32.totalorder %s127, 0
      %p427 = por %p425, %p426
      %s429 = sadd.s32 %s428, 1
      %p432 = scmp.eq.s32.totalorder %s121, 1
      %p433 = scmp.ne.s32.totalorder %s428, %s430
      %p434 = scmp.eq.s32.totalorder %s121, 0
      %p435 = por %p433, %p434
      %p436 = scmp.ne.s32.totalorder %s428, %s430
      %p437 = scmp.eq.s32.totalorder %s126, 1
      %p438 = por %p436, %p437
      %p439 = scmp.ne.s32.totalorder %s430, %s431
      %p440 = scmp.eq.s32.totalorder %s126, 0
      %p441 = por %p439, %p440
      %p442 = scmp.ne.s32.totalorder %s430, %s431
      %p443 = scmp.eq.s32.totalorder %s127, 1
      %p444 = por %p442, %p443
      %p446 = scmp.ne.s32.totalorder %s431, %s445
      %p447 = scmp.eq.s32.totalorder %s127, 0
      %p448 = por %p446, %p447
      %s450 = sadd.s32 %s449, 1
      %p453 = scmp.eq.s32.totalorder %s121, 1
      %p454 = scmp.ne.s32.totalorder %s449, %s451
      %p455 = scmp.eq.s32.totalorder %s121, 0
      %p456 = por %p454, %p455
      %p457 = scmp.ne.s32.totalorder %s449, %s451
      %p458 = scmp.eq.s32.totalorder %s126, 1
      %p459 = por %p457, %p458
      %p460 = scmp.ne.s32.totalorder %s451, %s452
      %p461 = scmp.eq.s32.totalorder %s126, 0
      %p462 = por %p460, %p461
      %p463 = scmp.ne.s32.totalorder %s451, %s452
      %p464 = scmp.eq.s32.totalorder %s127, 1
      %p465 = por %p463, %p464
      %p467 = scmp.ne.s32.totalorder %s452, %s466
      %p468 = scmp.eq.s32.totalorder %s127, 0
      %p469 = por %p467, %p468
      %s471 = sadd.s32 %s470, 1
      %p474 = scmp.eq.s32.totalorder %s121, 1
      %p475 = scmp.ne.s32.totalorder %s470, %s472
      %p476 = scmp.eq.s32.totalorder %s121, 0
      %p477 = por %p475, %p476
      %p478 = scmp.ne.s32.totalorder %s470, %s472
      %p479 = scmp.eq.s32.totalorder %s126, 1
      %p480 = por %p478, %p479
      %p481 = scmp.ne.s32.totalorder %s472, %s473
      %p482 = scmp.eq.s32.totalorder %s126, 0
      %p483 = por %p481, %p482
      %p484 = scmp.ne.s32.totalorder %s472, %s473
      %p485 = scmp.eq.s32.totalorder %s127, 1
      %p486 = por %p484, %p485
      %p488 = scmp.ne.s32.totalorder %s473, %s487
      %p489 = scmp.eq.s32.totalorder %s127, 0
      %p490 = por %p488, %p489
      %s492 = sadd.s32 %s491, 1
      %p495 = scmp.eq.s32.totalorder %s121, 1
      %p496 = scmp.ne.s32.totalorder %s491, %s493
      %p497 = scmp.eq.s32.totalorder %s121, 0
      %p498 = por %p496, %p497
      %p499 = scmp.ne.s32.totalorder %s491, %s493
      %p500 = scmp.eq.s32.totalorder %s126, 1
      %p501 = por %p499, %p500
      %p502 = scmp.ne.s32.totalorder %s493, %s494
      %p503 = scmp.eq.s32.totalorder %s126, 0
      %p504 = por %p502, %p503
      %p505 = scmp.ne.s32.totalorder %s493, %s494
      %p506 = scmp.eq.s32.totalorder %s127, 1
      %p507 = por %p505, %p506
      %p509 = scmp.ne.s32.totalorder %s494, %s508
      %p510 = scmp.eq.s32.totalorder %s127, 0
      %p511 = por %p509, %p510
      %s513 = sadd.s32 %s512, 1
      %p516 = scmp.eq.s32.totalorder %s121, 1
      %p517 = scmp.ne.s32.totalorder %s512, %s514
      %p518 = scmp.eq.s32.totalorder %s121, 0
      %p519 = por %p517, %p518
      %p520 = scmp.ne.s32.totalorder %s512, %s514
      %p521 = scmp.eq.s32.totalorder %s126, 1
      %p522 = por %p520, %p521
      %p523 = scmp.ne.s32.totalorder %s514, %s515
      %p524 = scmp.eq.s32.totalorder %s126, 0
      %p525 = por %p523, %p524
      %p526 = scmp.ne.s32.totalorder %s514, %s515
      %p527 = scmp.eq.s32.totalorder %s127, 1
      %p528 = por %p526, %p527
      %p530 = scmp.ne.s32.totalorder %s515, %s529
      %p531 = scmp.eq.s32.totalorder %s127, 0
      %p532 = por %p530, %p531
      %s534 = sadd.s32 %s533, 1
      %p537 = scmp.eq.s32.totalorder %s121, 1
      %p538 = scmp.ne.s32.totalorder %s533, %s535
      %p539 = scmp.eq.s32.totalorder %s121, 0
      %p540 = por %p538, %p539
      %p541 = scmp.ne.s32.totalorder %s533, %s535
      %p542 = scmp.eq.s32.totalorder %s126, 1
      %p543 = por %p541, %p542
      %p544 = scmp.ne.s32.totalorder %s535, %s536
      %p545 = scmp.eq.s32.totalorder %s126, 0
      %p546 = por %p544, %p545
      %p547 = scmp.ne.s32.totalorder %s535, %s536
      %p548 = scmp.eq.s32.totalorder %s127, 1
      %p549 = por %p547, %p548
      %p551 = scmp.ne.s32.totalorder %s536, %s550
      %p552 = scmp.eq.s32.totalorder %s127, 0
      %p553 = por %p551, %p552
      %s555 = sadd.s32 %s554, 1
      %p558 = scmp.eq.s32.totalorder %s121, 1
      %p559 = scmp.ne.s32.totalorder %s554, %s556
      %p560 = scmp.eq.s32.totalorder %s121, 0
      %p561 = por %p559, %p560
      %p562 = scmp.ne.s32.totalorder %s554, %s556
      %p563 = scmp.eq.s32.totalorder %s126, 1
      %p564 = por %p562, %p563
      %p565 = scmp.ne.s32.totalorder %s556, %s557
      %p566 = scmp.eq.s32.totalorder %s126, 0
      %p567 = por %p565, %p566
      %p568 = scmp.ne.s32.totalorder %s556, %s557
      %p569 = scmp.eq.s32.totalorder %s127, 1
      %p570 = por %p568, %p569
      %p572 = scmp.ne.s32.totalorder %s557, %s571
      %p573 = scmp.eq.s32.totalorder %s127, 0
      %p574 = por %p572, %p573
      %s576 = sadd.s32 %s575, 1
      %p579 = scmp.eq.s32.totalorder %s121, 1
      %p580 = scmp.ne.s32.totalorder %s575, %s577
      %p581 = scmp.eq.s32.totalorder %s121, 0
      %p582 = por %p580, %p581
      %p583 = scmp.ne.s32.totalorder %s575, %s577
      %p584 = scmp.eq.s32.totalorder %s126, 1
      %p585 = por %p583, %p584
      %p586 = scmp.ne.s32.totalorder %s577, %s578
      %p587 = scmp.eq.s32.totalorder %s126, 0
      %p588 = por %p586, %p587
      %p589 = scmp.ne.s32.totalorder %s577, %s578
      %p590 = scmp.eq.s32.totalorder %s127, 1
      %p591 = por %p589, %p590
      %p593 = scmp.ne.s32.totalorder %s578, %s592
      %p594 = scmp.eq.s32.totalorder %s127, 0
      %p595 = por %p593, %p594
      %s597 = sadd.s32 %s596, 1
      %p600 = scmp.eq.s32.totalorder %s121, 1
      %p601 = scmp.ne.s32.totalorder %s596, %s598
      %p602 = scmp.eq.s32.totalorder %s121, 0
      %p603 = por %p601, %p602
      %p604 = scmp.ne.s32.totalorder %s596, %s598
      %p605 = scmp.eq.s32.totalorder %s126, 1
      %p606 = por %p604, %p605
      %p607 = scmp.ne.s32.totalorder %s598, %s599
      %p608 = scmp.eq.s32.totalorder %s126, 0
      %p609 = por %p607, %p608
      %p610 = scmp.ne.s32.totalorder %s598, %s599
      %p611 = scmp.eq.s32.totalorder %s127, 1
      %p612 = por %p610, %p611
      %p614 = scmp.ne.s32.totalorder %s599, %s613
      %p615 = scmp.eq.s32.totalorder %s127, 0
      %p616 = por %p614, %p615
      %s618 = sadd.s32 %s617, 1
      %p621 = scmp.eq.s32.totalorder %s121, 1
      %p622 = scmp.ne.s32.totalorder %s617, %s619
      %p623 = scmp.eq.s32.totalorder %s121, 0
      %p624 = por %p622, %p623
      %p625 = scmp.ne.s32.totalorder %s617, %s619
      %p626 = scmp.eq.s32.totalorder %s126, 1
      %p627 = por %p625, %p626
      %p628 = scmp.ne.s32.totalorder %s619, %s620
      %p629 = scmp.eq.s32.totalorder %s126, 0
      %p630 = por %p628, %p629
      %p631 = scmp.ne.s32.totalorder %s619, %s620
      %p632 = scmp.eq.s32.totalorder %s127, 1
      %p633 = por %p631, %p632
      %p635 = scmp.ne.s32.totalorder %s620, %s634
      %p636 = scmp.eq.s32.totalorder %s127, 0
      %p637 = por %p635, %p636
      %s639 = sadd.s32 %s638, 1
      %p642 = scmp.eq.s32.totalorder %s121, 1
      %p643 = scmp.ne.s32.totalorder %s638, %s640
      %p644 = scmp.eq.s32.totalorder %s121, 0
      %p645 = por %p643, %p644
      %p646 = scmp.ne.s32.totalorder %s638, %s640
      %p647 = scmp.eq.s32.totalorder %s126, 1
      %p648 = por %p646, %p647
      %p649 = scmp.ne.s32.totalorder %s640, %s641
      %p650 = scmp.eq.s32.totalorder %s126, 0
      %p651 = por %p649, %p650
      %p652 = scmp.ne.s32.totalorder %s640, %s641
      %p653 = scmp.eq.s32.totalorder %s127, 1
      %p654 = por %p652, %p653
      %p656 = scmp.ne.s32.totalorder %s641, %s655
      %p657 = scmp.eq.s32.totalorder %s127, 0
      %p658 = por %p656, %p657
      %s660 = sadd.s32 %s659, 1
      %p663 = scmp.eq.s32.totalorder %s121, 1
      %p664 = scmp.ne.s32.totalorder %s659, %s661
      %p665 = scmp.eq.s32.totalorder %s121, 0
      %p666 = por %p664, %p665
      %p667 = scmp.ne.s32.totalorder %s659, %s661
      %p668 = scmp.eq.s32.totalorder %s126, 1
      %p669 = por %p667, %p668
      %p670 = scmp.ne.s32.totalorder %s661, %s662
      %p671 = scmp.eq.s32.totalorder %s126, 0
      %p672 = por %p670, %p671
      %p673 = scmp.ne.s32.totalorder %s661, %s662
      %p674 = scmp.eq.s32.totalorder %s127, 1
      %p675 = por %p673, %p674
      %p677 = scmp.ne.s32.totalorder %s662, %s676
      %p678 = scmp.eq.s32.totalorder %s127, 0
      %p679 = por %p677, %p678
      %s681 = sadd.s32 %s680, 1
      %p684 = scmp.eq.s32.totalorder %s121, 1
      %p685 = scmp.ne.s32.totalorder %s680, %s682
      %p686 = scmp.eq.s32.totalorder %s121, 0
      %p687 = por %p685, %p686
      %p688 = scmp.ne.s32.totalorder %s680, %s682
      %p689 = scmp.eq.s32.totalorder %s126, 1
      %p690 = por %p688, %p689
      %p691 = scmp.ne.s32.totalorder %s682, %s683
      %p692 = scmp.eq.s32.totalorder %s126, 0
      %p693 = por %p691, %p692
      %p694 = scmp.ne.s32.totalorder %s682, %s683
      %p695 = scmp.eq.s32.totalorder %s127, 1
      %p696 = por %p694, %p695
      %p698 = scmp.ne.s32.totalorder %s683, %s697
      %p699 = scmp.eq.s32.totalorder %s127, 0
      %p700 = por %p698, %p699
      %s702 = sadd.s32 %s701, 1
      %p705 = scmp.eq.s32.totalorder %s121, 1
      %p706 = scmp.ne.s32.totalorder %s701, %s703
      %p707 = scmp.eq.s32.totalorder %s121, 0
      %p708 = por %p706, %p707
      %p709 = scmp.ne.s32.totalorder %s701, %s703
      %p710 = scmp.eq.s32.totalorder %s126, 1
      %p711 = por %p709, %p710
      %p712 = scmp.ne.s32.totalorder %s703, %s704
      %p713 = scmp.eq.s32.totalorder %s126, 0
      %p714 = por %p712, %p713
      %p715 = scmp.ne.s32.totalorder %s703, %s704
      %p716 = scmp.eq.s32.totalorder %s127, 1
      %p717 = por %p715, %p716
      %p719 = scmp.ne.s32.totalorder %s704, %s718
      %p720 = scmp.eq.s32.totalorder %s127, 0
      %p721 = por %p719, %p720
      %s723 = sadd.s32 %s722, 1
      %p726 = scmp.eq.s32.totalorder %s121, 1
      %p727 = scmp.ne.s32.totalorder %s722, %s724
      %p728 = scmp.eq.s32.totalorder %s121, 0
      %p729 = por %p727, %p728
      %p730 = scmp.ne.s32.totalorder %s722, %s724
      %p731 = scmp.eq.s32.totalorder %s126, 1
      %p732 = por %p730, %p731
      %p733 = scmp.ne.s32.totalorder %s724, %s725
      %p734 = scmp.eq.s32.totalorder %s126, 0
      %p735 = por %p733, %p734
      %p736 = scmp.ne.s32.totalorder %s724, %s725
      %p737 = scmp.eq.s32.totalorder %s127, 1
      %p738 = por %p736, %p737
      %p740 = scmp.ne.s32.totalorder %s725, %s739
      %p741 = scmp.eq.s32.totalorder %s127, 0
      %p742 = por %p740, %p741
      %s744 = sadd.s32 %s743, 1
      %p747 = scmp.eq.s32.totalorder %s121, 1
      %p748 = scmp.ne.s32.totalorder %s743, %s745
      %p749 = scmp.eq.s32.totalorder %s121, 0
      %p750 = por %p748, %p749
      %p751 = scmp.ne.s32.totalorder %s743, %s745
      %p752 = scmp.eq.s32.totalorder %s126, 1
      %p753 = por %p751, %p752
      %p754 = scmp.ne.s32.totalorder %s745, %s746
      %p755 = scmp.eq.s32.totalorder %s126, 0
      %p756 = por %p754, %p755
      %p757 = scmp.ne.s32.totalorder %s745, %s746
      %p758 = scmp.eq.s32.totalorder %s127, 1
      %p759 = por %p757, %p758
      %p761 = scmp.ne.s32.totalorder %s746, %s760
      %p762 = scmp.eq.s32.totalorder %s127, 0
      %p763 = por %p761, %p762
      %s765 = sadd.s32 %s764, 1
      %p768 = scmp.eq.s32.totalorder %s121, 1
      %p769 = scmp.ne.s32.totalorder %s764, %s766
      %p770 = scmp.eq.s32.totalorder %s121, 0
      %p771 = por %p769, %p770
      %p772 = scmp.ne.s32.totalorder %s764, %s766
      %p773 = scmp.eq.s32.totalorder %s126, 1
      %p774 = por %p772, %p773
      %p775 = scmp.ne.s32.totalorder %s766, %s767
      %p776 = scmp.eq.s32.totalorder %s126, 0
      %p777 = por %p775, %p776
      %p778 = scmp.ne.s32.totalorder %s766, %s767
      %p779 = scmp.eq.s32.totalorder %s127, 1
      %p780 = por %p778, %p779
      %p782 = scmp.ne.s32.totalorder %s767, %s781
      %p783 = scmp.eq.s32.totalorder %s127, 0
      %p784 = por %p782, %p783
      %s786 = sadd.s32 %s785, 1
      %p789 = scmp.eq.s32.totalorder %s121, 1
      %p790 = scmp.ne.s32.totalorder %s785, %s787
      %p791 = scmp.eq.s32.totalorder %s121, 0
      %p792 = por %p790, %p791
      %p793 = scmp.ne.s32.totalorder %s785, %s787
      %p794 = scmp.eq.s32.totalorder %s126, 1
      %p795 = por %p793, %p794
      %p796 = scmp.ne.s32.totalorder %s787, %s788
      %p797 = scmp.eq.s32.totalorder %s126, 0
      %p798 = por %p796, %p797
      %p799 = scmp.ne.s32.totalorder %s787, %s788
      %p800 = scmp.eq.s32.totalorder %s127, 1
      %p801 = por %p799, %p800
      %p803 = scmp.ne.s32.totalorder %s788, %s802
      %p804 = scmp.eq.s32.totalorder %s127, 0
      %p805 = por %p803, %p804
      %s807 = sadd.s32 %s806, 1
      %p810 = scmp.eq.s32.totalorder %s121, 1
      %p811 = scmp.ne.s32.totalorder %s806, %s808
      %p812 = scmp.eq.s32.totalorder %s121, 0
      %p813 = por %p811, %p812
      %p814 = scmp.ne.s32.totalorder %s806, %s808
      %p815 = scmp.eq.s32.totalorder %s126, 1
      %p816 = por %p814, %p815
      %p817 = scmp.ne.s32.totalorder %s808, %s809
      %p818 = scmp.eq.s32.totalorder %s126, 0
      %p819 = por %p817, %p818
      %p820 = scmp.ne.s32.totalorder %s808, %s809
      %p821 = scmp.eq.s32.totalorder %s127, 1
      %p822 = por %p820, %p821
      %p824 = scmp.ne.s32.totalorder %s809, %s823
      %p825 = scmp.eq.s32.totalorder %s127, 0
      %p826 = por %p824, %p825
      %s828 = sadd.s32 %s827, 1
      %p831 = scmp.eq.s32.totalorder %s121, 1
      %p832 = scmp.ne.s32.totalorder %s827, %s829
      %p833 = scmp.eq.s32.totalorder %s121, 0
      %p834 = por %p832, %p833
      %p835 = scmp.ne.s32.totalorder %s827, %s829
      %p836 = scmp.eq.s32.totalorder %s126, 1
      %p837 = por %p835, %p836
      %p838 = scmp.ne.s32.totalorder %s829, %s830
      %p839 = scmp.eq.s32.totalorder %s126, 0
      %p840 = por %p838, %p839
      %p841 = scmp.ne.s32.totalorder %s829, %s830
      %p842 = scmp.eq.s32.totalorder %s127, 1
      %p843 = por %p841, %p842
      %p845 = scmp.ne.s32.totalorder %s830, %s844
      %p846 = scmp.eq.s32.totalorder %s127, 0
      %p847 = por %p845, %p846
      %s849 = sadd.s32 %s848, 1
      %p852 = scmp.eq.s32.totalorder %s121, 1
      %p853 = scmp.ne.s32.totalorder %s848, %s850
      %p854 = scmp.eq.s32.totalorder %s121, 0
      %p855 = por %p853, %p854
      %p856 = scmp.ne.s32.totalorder %s848, %s850
      %p857 = scmp.eq.s32.totalorder %s126, 1
      %p858 = por %p856, %p857
      %p859 = scmp.ne.s32.totalorder %s850, %s851
      %p860 = scmp.eq.s32.totalorder %s126, 0
      %p861 = por %p859, %p860
      %p862 = scmp.ne.s32.totalorder %s850, %s851
      %p863 = scmp.eq.s32.totalorder %s127, 1
      %p864 = por %p862, %p863
      %p866 = scmp.ne.s32.totalorder %s851, %s865
      %p867 = scmp.eq.s32.totalorder %s127, 0
      %p868 = por %p866, %p867
      %s870 = sadd.s32 %s869, 1
      %p873 = scmp.eq.s32.totalorder %s121, 1
      %p874 = scmp.ne.s32.totalorder %s869, %s871
      %p875 = scmp.eq.s32.totalorder %s121, 0
      %p876 = por %p874, %p875
      %p877 = scmp.ne.s32.totalorder %s869, %s871
      %p878 = scmp.eq.s32.totalorder %s126, 1
      %p879 = por %p877, %p878
      %p880 = scmp.ne.s32.totalorder %s871, %s872
      %p881 = scmp.eq.s32.totalorder %s126, 0
      %p882 = por %p880, %p881
      %p883 = scmp.ne.s32.totalorder %s871, %s872
      %p884 = scmp.eq.s32.totalorder %s127, 1
      %p885 = por %p883, %p884
      %p887 = scmp.ne.s32.totalorder %s872, %s886
      %p888 = scmp.eq.s32.totalorder %s127, 0
      %p889 = por %p887, %p888
      %s891 = sadd.s32 %s890, 1
      %p894 = scmp.eq.s32.totalorder %s121, 1
      %p895 = scmp.ne.s32.totalorder %s890, %s892
      %p896 = scmp.eq.s32.totalorder %s121, 0
      %p897 = por %p895, %p896
      %p898 = scmp.ne.s32.totalorder %s890, %s892
      %p899 = scmp.eq.s32.totalorder %s126, 1
      %p900 = por %p898, %p899
      %p901 = scmp.ne.s32.totalorder %s892, %s893
      %p902 = scmp.eq.s32.totalorder %s126, 0
      %p903 = por %p901, %p902
      %p904 = scmp.ne.s32.totalorder %s892, %s893
      %p905 = scmp.eq.s32.totalorder %s127, 1
      %p906 = por %p904, %p905
      %p908 = scmp.ne.s32.totalorder %s893, %s907
      %p909 = scmp.eq.s32.totalorder %s127, 0
      %p910 = por %p908, %p909
      %s912 = sadd.s32 %s911, 1
      %p915 = scmp.eq.s32.totalorder %s121, 1
      %p916 = scmp.ne.s32.totalorder %s911, %s913
      %p917 = scmp.eq.s32.totalorder %s121, 0
      %p918 = por %p916, %p917
      %p919 = scmp.ne.s32.totalorder %s911, %s913
      %p920 = scmp.eq.s32.totalorder %s126, 1
      %p921 = por %p919, %p920
      %p922 = scmp.ne.s32.totalorder %s913, %s914
      %p923 = scmp.eq.s32.totalorder %s126, 0
      %p924 = por %p922, %p923
      %p925 = scmp.ne.s32.totalorder %s913, %s914
      %p926 = scmp.eq.s32.totalorder %s127, 1
      %p927 = por %p925, %p926
      %p929 = scmp.ne.s32.totalorder %s914, %s928
      %p930 = scmp.eq.s32.totalorder %s127, 0
      %p931 = por %p929, %p930
      %s933 = sadd.s32 %s932, 1
      %p936 = scmp.eq.s32.totalorder %s121, 1
      %p937 = scmp.ne.s32.totalorder %s932, %s934
      %p938 = scmp.eq.s32.totalorder %s121, 0
      %p939 = por %p937, %p938
      %p940 = scmp.ne.s32.totalorder %s932, %s934
      %p941 = scmp.eq.s32.totalorder %s126, 1
      %p942 = por %p940, %p941
      %p943 = scmp.ne.s32.totalorder %s934, %s935
      %p944 = scmp.eq.s32.totalorder %s126, 0
      %p945 = por %p943, %p944
      %p946 = scmp.ne.s32.totalorder %s934, %s935
      %p947 = scmp.eq.s32.totalorder %s127, 1
      %p948 = por %p946, %p947
      %p950 = scmp.ne.s32.totalorder %s935, %s949
      %p951 = scmp.eq.s32.totalorder %s127, 0
      %p952 = por %p950, %p951
      %s954 = sadd.s32 %s953, 1
      %p957 = scmp.eq.s32.totalorder %s121, 1
      %p958 = scmp.ne.s32.totalorder %s953, %s955
      %p959 = scmp.eq.s32.totalorder %s121, 0
      %p960 = por %p958, %p959
      %p961 = scmp.ne.s32.totalorder %s953, %s955
      %p962 = scmp.eq.s32.totalorder %s126, 1
      %p963 = por %p961, %p962
      %p964 = scmp.ne.s32.totalorder %s955, %s956
      %p965 = scmp.eq.s32.totalorder %s126, 0
      %p966 = por %p964, %p965
      %p967 = scmp.ne.s32.totalorder %s955, %s956
      %p968 = scmp.eq.s32.totalorder %s127, 1
      %p969 = por %p967, %p968
      %p971 = scmp.ne.s32.totalorder %s956, %s970
      %p972 = scmp.eq.s32.totalorder %s127, 0
      %p973 = por %p971, %p972
      %s975 = sadd.s32 %s974, 1
      %p978 = scmp.eq.s32.totalorder %s121, 1
      %p979 = scmp.ne.s32.totalorder %s974, %s976
      %p980 = scmp.eq.s32.totalorder %s121, 0
      %p981 = por %p979, %p980
      %p982 = scmp.ne.s32.totalorder %s974, %s976
      %p983 = scmp.eq.s32.totalorder %s126, 1
      %p984 = por %p982, %p983
      %p985 = scmp.ne.s32.totalorder %s976, %s977
      %p986 = scmp.eq.s32.totalorder %s126, 0
      %p987 = por %p985, %p986
      %p988 = scmp.ne.s32.totalorder %s976, %s977
      %p989 = scmp.eq.s32.totalorder %s127, 1
      %p990 = por %p988, %p989
      %p992 = scmp.ne.s32.totalorder %s977, %s991
      %p993 = scmp.eq.s32.totalorder %s127, 0
      %p994 = por %p992, %p993
      %s996 = sadd.s32 %s995, 1
      %p999 = scmp.eq.s32.totalorder %s121, 1
      %p1000 = scmp.ne.s32.totalorder %s995, %s997
      %p1001 = scmp.eq.s32.totalorder %s121, 0
      %p1002 = por %p1000, %p1001
      %p1003 = scmp.ne.s32.totalorder %s995, %s997
      %p1004 = scmp.eq.s32.totalorder %s126, 1
      %p1005 = por %p1003, %p1004
      %p1006 = scmp.ne.s32.totalorder %s997, %s998
      %p1007 = scmp.eq.s32.totalorder %s126, 0
      %p1008 = por %p1006, %p1007
      %p1009 = scmp.ne.s32.totalorder %s997, %s998
      %p1010 = scmp.eq.s32.totalorder %s127, 1
      %p1011 = por %p1009, %p1010
      %p1013 = scmp.ne.s32.totalorder %s998, %s1012
      %p1014 = scmp.eq.s32.totalorder %s127, 0
      %p1015 = por %p1013, %p1014
      %s1017 = sadd.s32 %s1016, 1
      %p1020 = scmp.eq.s32.totalorder %s121, 1
      %p1021 = scmp.ne.s32.totalorder %s1016, %s1018
      %p1022 = scmp.eq.s32.totalorder %s121, 0
      %p1023 = por %p1021, %p1022
      %p1024 = scmp.ne.s32.totalorder %s1016, %s1018
      %p1025 = scmp.eq.s32.totalorder %s126, 1
      %p1026 = por %p1024, %p1025
      %p1027 = scmp.ne.s32.totalorder %s1018, %s1019
      %p1028 = scmp.eq.s32.totalorder %s126, 0
      %p1029 = por %p1027, %p1028
      %p1030 = scmp.ne.s32.totalorder %s1018, %s1019
      %p1031 = scmp.eq.s32.totalorder %s127, 1
      %p1032 = por %p1030, %p1031
      %p1034 = scmp.ne.s32.totalorder %s1019, %s1033
      %p1035 = scmp.eq.s32.totalorder %s127, 0
      %p1036 = por %p1034, %p1035
      %s1038 = sadd.s32 %s1037, 1
      %p1041 = scmp.eq.s32.totalorder %s121, 1
      %p1042 = scmp.ne.s32.totalorder %s1037, %s1039
      %p1043 = scmp.eq.s32.totalorder %s121, 0
      %p1044 = por %p1042, %p1043
      %p1045 = scmp.ne.s32.totalorder %s1037, %s1039
      %p1046 = scmp.eq.s32.totalorder %s126, 1
      %p1047 = por %p1045, %p1046
      %p1048 = scmp.ne.s32.totalorder %s1039, %s1040
      %p1049 = scmp.eq.s32.totalorder %s126, 0
      %p1050 = por %p1048, %p1049
      %p1051 = scmp.ne.s32.totalorder %s1039, %s1040
      %p1052 = scmp.eq.s32.totalorder %s127, 1
      %p1053 = por %p1051, %p1052
      %p1055 = scmp.ne.s32.totalorder %s1040, %s1054
      %p1056 = scmp.eq.s32.totalorder %s127, 0
      %p1057 = por %p1055, %p1056
      %s1059 = sadd.s32 %s1058, 1
      %p1062 = scmp.eq.s32.totalorder %s121, 1
      %p1063 = scmp.ne.s32.totalorder %s1058, %s1060
      %p1064 = scmp.eq.s32.totalorder %s121, 0
      %p1065 = por %p1063, %p1064
      %p1066 = scmp.ne.s32.totalorder %s1058, %s1060
      %p1067 = scmp.eq.s32.totalorder %s126, 1
      %p1068 = por %p1066, %p1067
      %p1069 = scmp.ne.s32.totalorder %s1060, %s1061
      %p1070 = scmp.eq.s32.totalorder %s126, 0
      %p1071 = por %p1069, %p1070
      %p1072 = scmp.ne.s32.totalorder %s1060, %s1061
      %p1073 = scmp.eq.s32.totalorder %s127, 1
      %p1074 = por %p1072, %p1073
      %p1076 = scmp.ne.s32.totalorder %s1061, %s1075
      %p1077 = scmp.eq.s32.totalorder %s127, 0
      %p1078 = por %p1076, %p1077
      %s1080 = sadd.s32 %s1079, 1
      %p1083 = scmp.eq.s32.totalorder %s121, 1
      %p1084 = scmp.ne.s32.totalorder %s1079, %s1081
      %p1085 = scmp.eq.s32.totalorder %s121, 0
      %p1086 = por %p1084, %p1085
      %p1087 = scmp.ne.s32.totalorder %s1079, %s1081
      %p1088 = scmp.eq.s32.totalorder %s126, 1
      %p1089 = por %p1087, %p1088
      %p1090 = scmp.ne.s32.totalorder %s1081, %s1082
      %p1091 = scmp.eq.s32.totalorder %s126, 0
      %p1092 = por %p1090, %p1091
      %p1093 = scmp.ne.s32.totalorder %s1081, %s1082
      %p1094 = scmp.eq.s32.totalorder %s127, 1
      %p1095 = por %p1093, %p1094
      %p1097 = scmp.ne.s32.totalorder %s1082, %s1096
      %p1098 = scmp.eq.s32.totalorder %s127, 0
      %p1099 = por %p1097, %p1098
      %s1101 = sadd.s32 %s1100, 1
      %p1104 = scmp.eq.s32.totalorder %s121, 1
      %p1105 = scmp.ne.s32.totalorder %s1100, %s1102
      %p1106 = scmp.eq.s32.totalorder %s121, 0
      %p1107 = por %p1105, %p1106
      %p1108 = scmp.ne.s32.totalorder %s1100, %s1102
      %p1109 = scmp.eq.s32.totalorder %s126, 1
      %p1110 = por %p1108, %p1109
      %p1111 = scmp.ne.s32.totalorder %s1102, %s1103
      %p1112 = scmp.eq.s32.totalorder %s126, 0
      %p1113 = por %p1111, %p1112
      %p1114 = scmp.ne.s32.totalorder %s1102, %s1103
      %p1115 = scmp.eq.s32.totalorder %s127, 1
      %p1116 = por %p1114, %p1115
      %p1118 = scmp.ne.s32.totalorder %s1103, %s1117
      %p1119 = scmp.eq.s32.totalorder %s127, 0
      %p1120 = por %p1118, %p1119
      %s1122 = sadd.s32 %s1121, 1
      %p1125 = scmp.eq.s32.totalorder %s121, 1
      %p1126 = scmp.ne.s32.totalorder %s1121, %s1123
      %p1127 = scmp.eq.s32.totalorder %s121, 0
      %p1128 = por %p1126, %p1127
      %p1129 = scmp.ne.s32.totalorder %s1121, %s1123
      %p1130 = scmp.eq.s32.totalorder %s126, 1
      %p1131 = por %p1129, %p1130
      %p1132 = scmp.ne.s32.totalorder %s1123, %s1124
      %p1133 = scmp.eq.s32.totalorder %s126, 0
      %p1134 = por %p1132, %p1133
      %p1135 = scmp.ne.s32.totalorder %s1123, %s1124
      %p1136 = scmp.eq.s32.totalorder %s127, 1
      %p1137 = por %p1135, %p1136
      %p1139 = scmp.ne.s32.totalorder %s1124, %s1138
      %p1140 = scmp.eq.s32.totalorder %s127, 0
      %p1141 = por %p1139, %p1140
      %s1143 = sadd.s32 %s1142, 1
      %p1146 = scmp.eq.s32.totalorder %s121, 1
      %p1147 = scmp.ne.s32.totalorder %s1142, %s1144
      %p1148 = scmp.eq.s32.totalorder %s121, 0
      %p1149 = por %p1147, %p1148
      %p1150 = scmp.ne.s32.totalorder %s1142, %s1144
      %p1151 = scmp.eq.s32.totalorder %s126, 1
      %p1152 = por %p1150, %p1151
      %p1153 = scmp.ne.s32.totalorder %s1144, %s1145
      %p1154 = scmp.eq.s32.totalorder %s126, 0
      %p1155 = por %p1153, %p1154
      %p1156 = scmp.ne.s32.totalorder %s1144, %s1145
      %p1157 = scmp.eq.s32.totalorder %s127, 1
      %p1158 = por %p1156, %p1157
      %p1160 = scmp.ne.s32.totalorder %s1145, %s1159
      %p1161 = scmp.eq.s32.totalorder %s127, 0
      %p1162 = por %p1160, %p1161
      %s1164 = sadd.s32 %s1163, 1
      %p1167 = scmp.eq.s32.totalorder %s121, 1
      %p1168 = scmp.ne.s32.totalorder %s1163, %s1165
      %p1169 = scmp.eq.s32.totalorder %s121, 0
      %p1170 = por %p1168, %p1169
      %p1171 = scmp.ne.s32.totalorder %s1163, %s1165
      %p1172 = scmp.eq.s32.totalorder %s126, 1
      %p1173 = por %p1171, %p1172
      %p1174 = scmp.ne.s32.totalorder %s1165, %s1166
      %p1175 = scmp.eq.s32.totalorder %s126, 0
      %p1176 = por %p1174, %p1175
      %p1177 = scmp.ne.s32.totalorder %s1165, %s1166
      %p1178 = scmp.eq.s32.totalorder %s127, 1
      %p1179 = por %p1177, %p1178
      %p1181 = scmp.ne.s32.totalorder %s1166, %s1180
      %p1182 = scmp.eq.s32.totalorder %s127, 0
      %p1183 = por %p1181, %p1182
      %s1185 = sadd.s32 %s1184, 1
      %p1188 = scmp.eq.s32.totalorder %s121, 1
      %p1189 = scmp.ne.s32.totalorder %s1184, %s1186
      %p1190 = scmp.eq.s32.totalorder %s121, 0
      %p1191 = por %p1189, %p1190
      %p1192 = scmp.ne.s32.totalorder %s1184, %s1186
      %p1193 = scmp.eq.s32.totalorder %s126, 1
      %p1194 = por %p1192, %p1193
      %p1195 = scmp.ne.s32.totalorder %s1186, %s1187
      %p1196 = scmp.eq.s32.totalorder %s126, 0
      %p1197 = por %p1195, %p1196
      %p1198 = scmp.ne.s32.totalorder %s1186, %s1187
      %p1199 = scmp.eq.s32.totalorder %s127, 1
      %p1200 = por %p1198, %p1199
      %p1202 = scmp.ne.s32.totalorder %s1187, %s1201
      %p1203 = scmp.eq.s32.totalorder %s127, 0
      %p1204 = por %p1202, %p1203
      %s1206 = sadd.s32 %s1205, 1
      %p1209 = scmp.eq.s32.totalorder %s121, 1
      %p1210 = scmp.ne.s32.totalorder %s1205, %s1207
      %p1211 = scmp.eq.s32.totalorder %s121, 0
      %p1212 = por %p1210, %p1211
      %p1213 = scmp.ne.s32.totalorder %s1205, %s1207
      %p1214 = scmp.eq.s32.totalorder %s126, 1
      %p1215 = por %p1213, %p1214
      %p1216 = scmp.ne.s32.totalorder %s1207, %s1208
      %p1217 = scmp.eq.s32.totalorder %s126, 0
      %p1218 = por %p1216, %p1217
      %p1219 = scmp.ne.s32.totalorder %s1207, %s1208
      %p1220 = scmp.eq.s32.totalorder %s127, 1
      %p1221 = por %p1219, %p1220
      %p1223 = scmp.ne.s32.totalorder %s1208, %s1222
      %p1224 = scmp.eq.s32.totalorder %s127, 0
      %p1225 = por %p1223, %p1224
      %s1226 = ssub.s32 %s121, %s128
      %p1227 = scmp.eq.s32.totalorder %s1226, 0
      %s1229 = sadd.s32 %s1228, 1
      %s1230 = scalar_select %p1227, %s1228, %s1229
      %p1233 = pneg %p1227
      %p1234 = scmp.eq.s32.totalorder %s121, 1
      %p1235 = por %p1233, %p1234
      %p1236 = scmp.ne.s32.totalorder %s1228, %s1231
      %p1237 = scmp.eq.s32.totalorder %s121, 0
      %p1238 = por %p1236, %p1237
      %p1239 = scmp.ne.s32.totalorder %s1228, %s1231
      %p1240 = scmp.eq.s32.totalorder %s126, 1
      %p1241 = por %p1239, %p1240
      %p1242 = scmp.ne.s32.totalorder %s1231, %s1232
      %p1243 = scmp.eq.s32.totalorder %s126, 0
      %p1244 = por %p1242, %p1243
      %p1245 = scmp.ne.s32.totalorder %s1231, %s1232
      %p1246 = scmp.eq.s32.totalorder %s127, 1
      %p1247 = por %p1245, %p1246
      %p1249 = scmp.ne.s32.totalorder %s1232, %s1248
      %p1250 = scmp.eq.s32.totalorder %s127, 0
      %p1251 = por %p1249, %p1250
      %p1252 = scmp.le.s32.totalorder 1, %s121
      %p1253 = scmp.lt.s32.totalorder %s121, 3
      %p1254 = pnand %p1252, %p1253
      %p1255 = pneg %p1254
      // Predicated region
      $region9: #{svtr_forward.1} parent=5 // pred_check
        _
      $region10: #{svtr_forward.1} parent=5 // pred_check_branch
        %1257 = sbr.rel (%p1254) target = $region12
      $region11: #{svtr_forward.1} parent=5 // pred_region
        %s1258 = ssub.s32 %s121, 1
        // Predicated region
        $region13: #{svtr_forward.1} parent=11 // pred_check
          %p1259 = pneg %p168
        $region14: #{svtr_forward.1} parent=11 // pred_check_branch
          %1261 = sbr.rel (%p1259) target = $region16
        $region15: #{svtr_forward.1} parent=11 // pred_region
          _
        $region16: #{svtr_forward.1} parent=11 // pred_fallthru
          _
        // Predicated region
        $region17: #{svtr_forward.1} parent=11 // pred_check
          %p1262 = pneg %p189
        $region18: #{svtr_forward.1} parent=11 // pred_check_branch
          %1264 = sbr.rel (%p1262) target = $region20
        $region19: #{svtr_forward.1} parent=11 // pred_region
          _
        $region20: #{svtr_forward.1} parent=11 // pred_fallthru
          _
        // Predicated region
        $region21: #{svtr_forward.1} parent=11 // pred_check
          %p1265 = pneg %p210
        $region22: #{svtr_forward.1} parent=11 // pred_check_branch
          %1267 = sbr.rel (%p1265) target = $region24
        $region23: #{svtr_forward.1} parent=11 // pred_region
          _
        $region24: #{svtr_forward.1} parent=11 // pred_fallthru
          _
        // Predicated region
        $region25: #{svtr_forward.1} parent=11 // pred_check
          %p1268 = pneg %p231
        $region26: #{svtr_forward.1} parent=11 // pred_check_branch
          %1270 = sbr.rel (%p1268) target = $region28
        $region27: #{svtr_forward.1} parent=11 // pred_region
          _
        $region28: #{svtr_forward.1} parent=11 // pred_fallthru
          _
        // Predicated region
        $region29: #{svtr_forward.1} parent=11 // pred_check
          %p1271 = pneg %p252
        $region30: #{svtr_forward.1} parent=11 // pred_check_branch
          %1273 = sbr.rel (%p1271) target = $region32
        $region31: #{svtr_forward.1} parent=11 // pred_region
          _
        $region32: #{svtr_forward.1} parent=11 // pred_fallthru
          _
        // Predicated region
        $region33: #{svtr_forward.1} parent=11 // pred_check
          %p1274 = pneg %p273
        $region34: #{svtr_forward.1} parent=11 // pred_check_branch
          %1276 = sbr.rel (%p1274) target = $region36
        $region35: #{svtr_forward.1} parent=11 // pred_region
          _
        $region36: #{svtr_forward.1} parent=11 // pred_fallthru
          _
        // Predicated region
        $region37: #{svtr_forward.1} parent=11 // pred_check
          %p1277 = pneg %p294
        $region38: #{svtr_forward.1} parent=11 // pred_check_branch
          %1279 = sbr.rel (%p1277) target = $region40
        $region39: #{svtr_forward.1} parent=11 // pred_region
          _
        $region40: #{svtr_forward.1} parent=11 // pred_fallthru
          _
        // Predicated region
        $region41: #{svtr_forward.1} parent=11 // pred_check
          %p1280 = pneg %p315
        $region42: #{svtr_forward.1} parent=11 // pred_check_branch
          %1282 = sbr.rel (%p1280) target = $region44
        $region43: #{svtr_forward.1} parent=11 // pred_region
          _
        $region44: #{svtr_forward.1} parent=11 // pred_fallthru
          _
        // Predicated region
        $region45: #{svtr_forward.1} parent=11 // pred_check
          %p1283 = pneg %p336
        $region46: #{svtr_forward.1} parent=11 // pred_check_branch
          %1285 = sbr.rel (%p1283) target = $region48
        $region47: #{svtr_forward.1} parent=11 // pred_region
          _
        $region48: #{svtr_forward.1} parent=11 // pred_fallthru
          _
        // Predicated region
        $region49: #{svtr_forward.1} parent=11 // pred_check
          %p1286 = pneg %p357
        $region50: #{svtr_forward.1} parent=11 // pred_check_branch
          %1288 = sbr.rel (%p1286) target = $region52
        $region51: #{svtr_forward.1} parent=11 // pred_region
          _
        $region52: #{svtr_forward.1} parent=11 // pred_fallthru
          _
        // Predicated region
        $region53: #{svtr_forward.1} parent=11 // pred_check
          %p1289 = pneg %p378
        $region54: #{svtr_forward.1} parent=11 // pred_check_branch
          %1291 = sbr.rel (%p1289) target = $region56
        $region55: #{svtr_forward.1} parent=11 // pred_region
          _
        $region56: #{svtr_forward.1} parent=11 // pred_fallthru
          _
        // Predicated region
        $region57: #{svtr_forward.1} parent=11 // pred_check
          %p1292 = pneg %p399
        $region58: #{svtr_forward.1} parent=11 // pred_check_branch
          %1294 = sbr.rel (%p1292) target = $region60
        $region59: #{svtr_forward.1} parent=11 // pred_region
          _
        $region60: #{svtr_forward.1} parent=11 // pred_fallthru
          _
        // Predicated region
        $region61: #{svtr_forward.1} parent=11 // pred_check
          %p1295 = pneg %p420
        $region62: #{svtr_forward.1} parent=11 // pred_check_branch
          %1297 = sbr.rel (%p1295) target = $region64
        $region63: #{svtr_forward.1} parent=11 // pred_region
          _
        $region64: #{svtr_forward.1} parent=11 // pred_fallthru
          _
        // Predicated region
        $region65: #{svtr_forward.1} parent=11 // pred_check
          %p1298 = pneg %p441
        $region66: #{svtr_forward.1} parent=11 // pred_check_branch
          %1300 = sbr.rel (%p1298) target = $region68
        $region67: #{svtr_forward.1} parent=11 // pred_region
          _
        $region68: #{svtr_forward.1} parent=11 // pred_fallthru
          _
        // Predicated region
        $region69: #{svtr_forward.1} parent=11 // pred_check
          %p1301 = pneg %p462
        $region70: #{svtr_forward.1} parent=11 // pred_check_branch
          %1303 = sbr.rel (%p1301) target = $region72
        $region71: #{svtr_forward.1} parent=11 // pred_region
          _
        $region72: #{svtr_forward.1} parent=11 // pred_fallthru
          _
        // Predicated region
        $region73: #{svtr_forward.1} parent=11 // pred_check
          %p1304 = pneg %p483
        $region74: #{svtr_forward.1} parent=11 // pred_check_branch
          %1306 = sbr.rel (%p1304) target = $region76
        $region75: #{svtr_forward.1} parent=11 // pred_region
          _
        $region76: #{svtr_forward.1} parent=11 // pred_fallthru
          _
        // Predicated region
        $region77: #{svtr_forward.1} parent=11 // pred_check
          %p1307 = pneg %p504
        $region78: #{svtr_forward.1} parent=11 // pred_check_branch
          %1309 = sbr.rel (%p1307) target = $region80
        $region79: #{svtr_forward.1} parent=11 // pred_region
          _
        $region80: #{svtr_forward.1} parent=11 // pred_fallthru
          _
        // Predicated region
        $region81: #{svtr_forward.1} parent=11 // pred_check
          %p1310 = pneg %p525
        $region82: #{svtr_forward.1} parent=11 // pred_check_branch
          %1312 = sbr.rel (%p1310) target = $region84
        $region83: #{svtr_forward.1} parent=11 // pred_region
          _
        $region84: #{svtr_forward.1} parent=11 // pred_fallthru
          _
        // Predicated region
        $region85: #{svtr_forward.1} parent=11 // pred_check
          %p1313 = pneg %p546
        $region86: #{svtr_forward.1} parent=11 // pred_check_branch
          %1315 = sbr.rel (%p1313) target = $region88
        $region87: #{svtr_forward.1} parent=11 // pred_region
          _
        $region88: #{svtr_forward.1} parent=11 // pred_fallthru
          _
        // Predicated region
        $region89: #{svtr_forward.1} parent=11 // pred_check
          %p1316 = pneg %p567
        $region90: #{svtr_forward.1} parent=11 // pred_check_branch
          %1318 = sbr.rel (%p1316) target = $region92
        $region91: #{svtr_forward.1} parent=11 // pred_region
          _
        $region92: #{svtr_forward.1} parent=11 // pred_fallthru
          _
        // Predicated region
        $region93: #{svtr_forward.1} parent=11 // pred_check
          %p1319 = pneg %p588
        $region94: #{svtr_forward.1} parent=11 // pred_check_branch
          %1321 = sbr.rel (%p1319) target = $region96
        $region95: #{svtr_forward.1} parent=11 // pred_region
          _
        $region96: #{svtr_forward.1} parent=11 // pred_fallthru
          _
        // Predicated region
        $region97: #{svtr_forward.1} parent=11 // pred_check
          %p1322 = pneg %p609
        $region98: #{svtr_forward.1} parent=11 // pred_check_branch
          %1324 = sbr.rel (%p1322) target = $region100
        $region99: #{svtr_forward.1} parent=11 // pred_region
          _
        $region100: #{svtr_forward.1} parent=11 // pred_fallthru
          _
        // Predicated region
        $region101: #{svtr_forward.1} parent=11 // pred_check
          %p1325 = pneg %p630
        $region102: #{svtr_forward.1} parent=11 // pred_check_branch
          %1327 = sbr.rel (%p1325) target = $region104
        $region103: #{svtr_forward.1} parent=11 // pred_region
          _
        $region104: #{svtr_forward.1} parent=11 // pred_fallthru
          _
        // Predicated region
        $region105: #{svtr_forward.1} parent=11 // pred_check
          %p1328 = pneg %p651
        $region106: #{svtr_forward.1} parent=11 // pred_check_branch
          %1330 = sbr.rel (%p1328) target = $region108
        $region107: #{svtr_forward.1} parent=11 // pred_region
          _
        $region108: #{svtr_forward.1} parent=11 // pred_fallthru
          _
        // Predicated region
        $region109: #{svtr_forward.1} parent=11 // pred_check
          %p1331 = pneg %p672
        $region110: #{svtr_forward.1} parent=11 // pred_check_branch
          %1333 = sbr.rel (%p1331) target = $region112
        $region111: #{svtr_forward.1} parent=11 // pred_region
          %1335 = vsyncadd [#allocation3], 0
          %s1337 = sshll.u32 %s51, 4
          %s1338 = int_to_ptr.hbm [resolvable:$true] %s1337
          %s1339 = sshll.u32 [#allocation2], 4
          %s1340 = int_to_ptr.vmem [resolvable:$true] %s1339
          %1342 = dma.hbm_to_vmem [thread:$0]  %s1338, 16, %s1340, [#allocation3]
        $region112: #{svtr_forward.1} parent=11 // pred_fallthru
          _
        // Predicated region
        $region113: #{svtr_forward.1} parent=11 // pred_check
          %p1343 = pneg %p693
        $region114: #{svtr_forward.1} parent=11 // pred_check_branch
          %1345 = sbr.rel (%p1343) target = $region116
        $region115: #{svtr_forward.1} parent=11 // pred_region
          _
        $region116: #{svtr_forward.1} parent=11 // pred_fallthru
          _
        // Predicated region
        $region117: #{svtr_forward.1} parent=11 // pred_check
          %p1346 = pneg %p714
        $region118: #{svtr_forward.1} parent=11 // pred_check_branch
          %1348 = sbr.rel (%p1346) target = $region120
        $region119: #{svtr_forward.1} parent=11 // pred_region
          _
        $region120: #{svtr_forward.1} parent=11 // pred_fallthru
          _
        // Predicated region
        $region121: #{svtr_forward.1} parent=11 // pred_check
          %p1349 = pneg %p735
        $region122: #{svtr_forward.1} parent=11 // pred_check_branch
          %1351 = sbr.rel (%p1349) target = $region124
        $region123: #{svtr_forward.1} parent=11 // pred_region
          _
        $region124: #{svtr_forward.1} parent=11 // pred_fallthru
          _
        // Predicated region
        $region125: #{svtr_forward.1} parent=11 // pred_check
          %p1352 = pneg %p756
        $region126: #{svtr_forward.1} parent=11 // pred_check_branch
          %1354 = sbr.rel (%p1352) target = $region128
        $region127: #{svtr_forward.1} parent=11 // pred_region
          %1356 = vsyncadd [#allocation6], 0
          %s1358 = sshll.u32 %s59, 4
          %s1359 = int_to_ptr.hbm [resolvable:$true] %s1358
          %s1360 = sshll.u32 [#allocation5], 4
          %s1361 = int_to_ptr.vmem [resolvable:$true] %s1360
          %1363 = dma.hbm_to_vmem [thread:$0]  %s1359, 16, %s1361, [#allocation6]
        $region128: #{svtr_forward.1} parent=11 // pred_fallthru
          _
        // Predicated region
        $region129: #{svtr_forward.1} parent=11 // pred_check
          %p1364 = pneg %p777
        $region130: #{svtr_forward.1} parent=11 // pred_check_branch
          %1366 = sbr.rel (%p1364) target = $region132
        $region131: #{svtr_forward.1} parent=11 // pred_region
          _
        $region132: #{svtr_forward.1} parent=11 // pred_fallthru
          _
        // Predicated region
        $region133: #{svtr_forward.1} parent=11 // pred_check
          %p1367 = pneg %p798
        $region134: #{svtr_forward.1} parent=11 // pred_check_branch
          %1369 = sbr.rel (%p1367) target = $region136
        $region135: #{svtr_forward.1} parent=11 // pred_region
          %1371 = vsyncadd [#allocation6], 0
          %s1373 = sshll.u32 %s63, 4
          %s1374 = int_to_ptr.hbm [resolvable:$true] %s1373
          %s1375 = sshll.u32 [#allocation7], 4
          %s1376 = int_to_ptr.vmem [resolvable:$true] %s1375
          %1378 = dma.hbm_to_vmem [thread:$0]  %s1374, 16, %s1376, [#allocation6]
        $region136: #{svtr_forward.1} parent=11 // pred_fallthru
          _
        // Predicated region
        $region137: #{svtr_forward.1} parent=11 // pred_check
          %p1379 = pneg %p819
        $region138: #{svtr_forward.1} parent=11 // pred_check_branch
          %1381 = sbr.rel (%p1379) target = $region140
        $region139: #{svtr_forward.1} parent=11 // pred_region
          %1383 = vsyncadd [#allocation9], 0
          %s1385 = sshll.u32 %s65, 4
          %s1386 = int_to_ptr.hbm [resolvable:$true] %s1385
          %s1387 = sshll.u32 [#allocation8], 4
          %s1388 = int_to_ptr.vmem [resolvable:$true] %s1387
          %1390 = dma.hbm_to_vmem [thread:$0]  %s1386, 16, %s1388, [#allocation9]
        $region140: #{svtr_forward.1} parent=11 // pred_fallthru
          _
        // Predicated region
        $region141: #{svtr_forward.1} parent=11 // pred_check
          %p1391 = pneg %p840
        $region142: #{svtr_forward.1} parent=11 // pred_check_branch
          %1393 = sbr.rel (%p1391) target = $region144
        $region143: #{svtr_forward.1} parent=11 // pred_region
          %1395 = vsyncadd [#allocation9], 0
          %s1397 = sshll.u32 %s67, 4
          %s1398 = int_to_ptr.hbm [resolvable:$true] %s1397
          %s1399 = sshll.u32 [#allocation10], 4
          %s1400 = int_to_ptr.vmem [resolvable:$true] %s1399
          %1402 = dma.hbm_to_vmem [thread:$0]  %s1398, 16, %s1400, [#allocation9]
        $region144: #{svtr_forward.1} parent=11 // pred_fallthru
          _
        // Predicated region
        $region145: #{svtr_forward.1} parent=11 // pred_check
          %p1403 = pneg %p861
        $region146: #{svtr_forward.1} parent=11 // pred_check_branch
          %1405 = sbr.rel (%p1403) target = $region148
        $region147: #{svtr_forward.1} parent=11 // pred_region
          %1407 = vsyncadd [#allocation12], 0
          %s1409 = sshll.u32 %s69, 4
          %s1410 = int_to_ptr.hbm [resolvable:$true] %s1409
          %s1411 = sshll.u32 [#allocation11], 4
          %s1412 = int_to_ptr.vmem [resolvable:$true] %s1411
          %1414 = dma.hbm_to_vmem [thread:$0]  %s1410, 16, %s1412, [#allocation12]
        $region148: #{svtr_forward.1} parent=11 // pred_fallthru
          _
        // Predicated region
        $region149: #{svtr_forward.1} parent=11 // pred_check
          %p1415 = pneg %p882
        $region150: #{svtr_forward.1} parent=11 // pred_check_branch
          %1417 = sbr.rel (%p1415) target = $region152
        $region151: #{svtr_forward.1} parent=11 // pred_region
          %1419 = vsyncadd [#allocation12], 0
          %s1421 = sshll.u32 %s71, 4
          %s1422 = int_to_ptr.hbm [resolvable:$true] %s1421
          %s1423 = sshll.u32 [#allocation13], 4
          %s1424 = int_to_ptr.vmem [resolvable:$true] %s1423
          %1426 = dma.hbm_to_vmem [thread:$0]  %s1422, 16, %s1424, [#allocation12]
        $region152: #{svtr_forward.1} parent=11 // pred_fallthru
          _
        // Predicated region
        $region153: #{svtr_forward.1} parent=11 // pred_check
          %p1427 = pneg %p903
        $region154: #{svtr_forward.1} parent=11 // pred_check_branch
          %1429 = sbr.rel (%p1427) target = $region156
        $region155: #{svtr_forward.1} parent=11 // pred_region
          _
        $region156: #{svtr_forward.1} parent=11 // pred_fallthru
          _
        // Predicated region
        $region157: #{svtr_forward.1} parent=11 // pred_check
          %p1430 = pneg %p924
        $region158: #{svtr_forward.1} parent=11 // pred_check_branch
          %1432 = sbr.rel (%p1430) target = $region160
        $region159: #{svtr_forward.1} parent=11 // pred_region
          _
        $region160: #{svtr_forward.1} parent=11 // pred_fallthru
          _
        // Predicated region
        $region161: #{svtr_forward.1} parent=11 // pred_check
          %p1433 = pneg %p945
        $region162: #{svtr_forward.1} parent=11 // pred_check_branch
          %1435 = sbr.rel (%p1433) target = $region164
        $region163: #{svtr_forward.1} parent=11 // pred_region
          _
        $region164: #{svtr_forward.1} parent=11 // pred_fallthru
          _
        // Predicated region
        $region165: #{svtr_forward.1} parent=11 // pred_check
          %p1436 = pneg %p966
        $region166: #{svtr_forward.1} parent=11 // pred_check_branch
          %1438 = sbr.rel (%p1436) target = $region168
        $region167: #{svtr_forward.1} parent=11 // pred_region
          %1440 = vsyncadd [#allocation15], 0
          %s1442 = sshll.u32 %s79, 4
          %s1443 = int_to_ptr.hbm [resolvable:$true] %s1442
          %s1444 = sshll.u32 [#allocation14], 4
          %s1445 = int_to_ptr.vmem [resolvable:$true] %s1444
          %1447 = dma.hbm_to_vmem [thread:$0]  %s1443, 16, %s1445, [#allocation15]
        $region168: #{svtr_forward.1} parent=11 // pred_fallthru
          _
        // Predicated region
        $region169: #{svtr_forward.1} parent=11 // pred_check
          %p1448 = pneg %p987
        $region170: #{svtr_forward.1} parent=11 // pred_check_branch
          %1450 = sbr.rel (%p1448) target = $region172
        $region171: #{svtr_forward.1} parent=11 // pred_region
          %1452 = vsyncadd [#allocation15], 0
          %s1454 = sshll.u32 %s81, 4
          %s1455 = int_to_ptr.hbm [resolvable:$true] %s1454
          %s1456 = sshll.u32 [#allocation16], 4
          %s1457 = int_to_ptr.vmem [resolvable:$true] %s1456
          %1459 = dma.hbm_to_vmem [thread:$0]  %s1455, 16, %s1457, [#allocation15]
        $region172: #{svtr_forward.1} parent=11 // pred_fallthru
          _
        // Predicated region
        $region173: #{svtr_forward.1} parent=11 // pred_check
          %p1460 = pneg %p1008
        $region174: #{svtr_forward.1} parent=11 // pred_check_branch
          %1462 = sbr.rel (%p1460) target = $region176
        $region175: #{svtr_forward.1} parent=11 // pred_region
          %1464 = vsyncadd [#allocation18], 0
          %s1466 = sshll.u32 %s83, 4
          %s1467 = int_to_ptr.hbm [resolvable:$true] %s1466
          %s1468 = sshll.u32 [#allocation17], 4
          %s1469 = int_to_ptr.vmem [resolvable:$true] %s1468
          %1471 = dma.hbm_to_vmem [thread:$0]  %s1467, 16, %s1469, [#allocation18]
        $region176: #{svtr_forward.1} parent=11 // pred_fallthru
          _
        // Predicated region
        $region177: #{svtr_forward.1} parent=11 // pred_check
          %p1472 = pneg %p1029
        $region178: #{svtr_forward.1} parent=11 // pred_check_branch
          %1474 = sbr.rel (%p1472) target = $region180
        $region179: #{svtr_forward.1} parent=11 // pred_region
          _
        $region180: #{svtr_forward.1} parent=11 // pred_fallthru
          _
        // Predicated region
        $region181: #{svtr_forward.1} parent=11 // pred_check
          %p1475 = pneg %p1050
        $region182: #{svtr_forward.1} parent=11 // pred_check_branch
          %1477 = sbr.rel (%p1475) target = $region184
        $region183: #{svtr_forward.1} parent=11 // pred_region
          _
        $region184: #{svtr_forward.1} parent=11 // pred_fallthru
          _
        // Predicated region
        $region185: #{svtr_forward.1} parent=11 // pred_check
          %p1478 = pneg %p1071
        $region186: #{svtr_forward.1} parent=11 // pred_check_branch
          %1480 = sbr.rel (%p1478) target = $region188
        $region187: #{svtr_forward.1} parent=11 // pred_region
          _
        $region188: #{svtr_forward.1} parent=11 // pred_fallthru
          _
        // Predicated region
        $region189: #{svtr_forward.1} parent=11 // pred_check
          %p1481 = pneg %p1092
        $region190: #{svtr_forward.1} parent=11 // pred_check_branch
          %1483 = sbr.rel (%p1481) target = $region192
        $region191: #{svtr_forward.1} parent=11 // pred_region
          %1485 = vsyncadd [#allocation18], 0
          %s1487 = sshll.u32 %s91, 4
          %s1488 = int_to_ptr.hbm [resolvable:$true] %s1487
          %s1489 = sshll.u32 [#allocation19], 4
          %s1490 = int_to_ptr.vmem [resolvable:$true] %s1489
          %1492 = dma.hbm_to_vmem [thread:$0]  %s1488, 16, %s1490, [#allocation18]
        $region192: #{svtr_forward.1} parent=11 // pred_fallthru
          _
        // Predicated region
        $region193: #{svtr_forward.1} parent=11 // pred_check
          %p1493 = pneg %p1113
        $region194: #{svtr_forward.1} parent=11 // pred_check_branch
          %1495 = sbr.rel (%p1493) target = $region196
        $region195: #{svtr_forward.1} parent=11 // pred_region
          %1497 = vsyncadd [#allocation21], 0
          %s1499 = sshll.u32 %s93, 4
          %s1500 = int_to_ptr.hbm [resolvable:$true] %s1499
          %s1501 = sshll.u32 [#allocation20], 4
          %s1502 = int_to_ptr.vmem [resolvable:$true] %s1501
          %1504 = dma.hbm_to_vmem [thread:$0]  %s1500, 16, %s1502, [#allocation21]
        $region196: #{svtr_forward.1} parent=11 // pred_fallthru
          _
        // Predicated region
        $region197: #{svtr_forward.1} parent=11 // pred_check
          %p1505 = pneg %p1134
        $region198: #{svtr_forward.1} parent=11 // pred_check_branch
          %1507 = sbr.rel (%p1505) target = $region200
        $region199: #{svtr_forward.1} parent=11 // pred_region
          %1509 = vsyncadd [#allocation21], 0
          %s1511 = sshll.u32 %s95, 4
          %s1512 = int_to_ptr.hbm [resolvable:$true] %s1511
          %s1513 = sshll.u32 [#allocation22], 4
          %s1514 = int_to_ptr.vmem [resolvable:$true] %s1513
          %1516 = dma.hbm_to_vmem [thread:$0]  %s1512, 16, %s1514, [#allocation21]
        $region200: #{svtr_forward.1} parent=11 // pred_fallthru
          _
        // Predicated region
        $region201: #{svtr_forward.1} parent=11 // pred_check
          %p1517 = pneg %p1155
        $region202: #{svtr_forward.1} parent=11 // pred_check_branch
          %1519 = sbr.rel (%p1517) target = $region204
        $region203: #{svtr_forward.1} parent=11 // pred_region
          _
        $region204: #{svtr_forward.1} parent=11 // pred_fallthru
          _
        // Predicated region
        $region205: #{svtr_forward.1} parent=11 // pred_check
          %p1520 = pneg %p1176
        $region206: #{svtr_forward.1} parent=11 // pred_check_branch
          %1522 = sbr.rel (%p1520) target = $region208
        $region207: #{svtr_forward.1} parent=11 // pred_region
          _
        $region208: #{svtr_forward.1} parent=11 // pred_fallthru
          _
        // Predicated region
        $region209: #{svtr_forward.1} parent=11 // pred_check
          %p1523 = pneg %p1197
        $region210: #{svtr_forward.1} parent=11 // pred_check_branch
          %1525 = sbr.rel (%p1523) target = $region212
        $region211: #{svtr_forward.1} parent=11 // pred_region
          _
        $region212: #{svtr_forward.1} parent=11 // pred_fallthru
          _
        // Predicated region
        $region213: #{svtr_forward.1} parent=11 // pred_check
          %p1526 = pneg %p1218
        $region214: #{svtr_forward.1} parent=11 // pred_check_branch
          %1528 = sbr.rel (%p1526) target = $region216
        $region215: #{svtr_forward.1} parent=11 // pred_region
          _
        $region216: #{svtr_forward.1} parent=11 // pred_fallthru
          _
      $region12: #{svtr_forward.1} parent=5 // pred_fallthru
        _
      %p1529 = scmp.lt.s32.totalorder %s121, 2
      // Predicated region
      $region217: #{svtr_forward.1} parent=5 // pred_check
        %p1530 = pneg %p1529
      $region218: #{svtr_forward.1} parent=5 // pred_check_branch
        %1532 = sbr.rel (%p1530) target = $region220
      $region219: #{svtr_forward.1} parent=5 // pred_region
        // Predicated region
        $region221: #{svtr_forward.1} parent=219 // pred_check
          %p1533 = pneg %p141
        $region222: #{svtr_forward.1} parent=219 // pred_check_branch
          %1535 = sbr.rel (%p1533) target = $region224
        $region223: #{svtr_forward.1} parent=219 // pred_region
          %p1536 = scmp.lt.s32.totalorder %s121, 1
          %s1537 = scalar_select %p1536, %s121, 1
          %s1538 = smul.addr %s1537, 4
          %s1539 = smul.addr %s1538, 8
          %s1540 = scalar_lea.vmem %s1, %s1539
        $region224: #{svtr_forward.1} parent=219 // pred_fallthru
          _
      $region220: #{svtr_forward.1} parent=5 // pred_fallthru
        _
      %p1541 = scmp.le.s32.totalorder 1, %s121
      %p1542 = scmp.lt.s32.totalorder %s121, 3
      %p1543 = pnand %p1541, %p1542
      %p1544 = pneg %p1543
      // Predicated region
      $region225: #{svtr_forward.1} parent=5 // pred_check
        _
      $region226: #{svtr_forward.1} parent=5 // pred_check_branch
        %1546 = sbr.rel (%p1543) target = $region228
      $region227: #{svtr_forward.1} parent=5 // pred_region
        %s1547 = ssub.s32 %s121, 1
        // Predicated region
        $region229: #{svtr_forward.1} parent=227 // pred_check
          %p1548 = pneg %p672
        $region230: #{svtr_forward.1} parent=227 // pred_check_branch
          %1550 = sbr.rel (%p1548) target = $region232
        $region231: #{svtr_forward.1} parent=227 // pred_region
          %1552 = dma.done [#allocation3], 16
        $region232: #{svtr_forward.1} parent=227 // pred_fallthru
          _
        // Predicated region
        $region233: #{svtr_forward.1} parent=227 // pred_check
          %p1553 = pneg %p756
        $region234: #{svtr_forward.1} parent=227 // pred_check_branch
          %1555 = sbr.rel (%p1553) target = $region236
        $region235: #{svtr_forward.1} parent=227 // pred_region
          %1557 = dma.done [#allocation6], 16
        $region236: #{svtr_forward.1} parent=227 // pred_fallthru
          _
        // Predicated region
        $region237: #{svtr_forward.1} parent=227 // pred_check
          %p1558 = pneg %p798
        $region238: #{svtr_forward.1} parent=227 // pred_check_branch
          %1560 = sbr.rel (%p1558) target = $region240
        $region239: #{svtr_forward.1} parent=227 // pred_region
          %1562 = dma.done [#allocation6], 16
        $region240: #{svtr_forward.1} parent=227 // pred_fallthru
          _
        // Predicated region
        $region241: #{svtr_forward.1} parent=227 // pred_check
          %p1563 = pneg %p819
        $region242: #{svtr_forward.1} parent=227 // pred_check_branch
          %1565 = sbr.rel (%p1563) target = $region244
        $region243: #{svtr_forward.1} parent=227 // pred_region
          %1567 = dma.done [#allocation9], 16
        $region244: #{svtr_forward.1} parent=227 // pred_fallthru
          _
        // Predicated region
        $region245: #{svtr_forward.1} parent=227 // pred_check
          %p1568 = pneg %p840
        $region246: #{svtr_forward.1} parent=227 // pred_check_branch
          %1570 = sbr.rel (%p1568) target = $region248
        $region247: #{svtr_forward.1} parent=227 // pred_region
          %1572 = dma.done [#allocation9], 16
        $region248: #{svtr_forward.1} parent=227 // pred_fallthru
          _
        // Predicated region
        $region249: #{svtr_forward.1} parent=227 // pred_check
          %p1573 = pneg %p861
        $region250: #{svtr_forward.1} parent=227 // pred_check_branch
          %1575 = sbr.rel (%p1573) target = $region252
        $region251: #{svtr_forward.1} parent=227 // pred_region
          %1577 = dma.done [#allocation12], 16
        $region252: #{svtr_forward.1} parent=227 // pred_fallthru
          _
        // Predicated region
        $region253: #{svtr_forward.1} parent=227 // pred_check
          %p1578 = pneg %p882
        $region254: #{svtr_forward.1} parent=227 // pred_check_branch
          %1580 = sbr.rel (%p1578) target = $region256
        $region255: #{svtr_forward.1} parent=227 // pred_region
          %1582 = dma.done [#allocation12], 16
        $region256: #{svtr_forward.1} parent=227 // pred_fallthru
          _
        // Predicated region
        $region257: #{svtr_forward.1} parent=227 // pred_check
          %p1583 = pneg %p966
        $region258: #{svtr_forward.1} parent=227 // pred_check_branch
          %1585 = sbr.rel (%p1583) target = $region260
        $region259: #{svtr_forward.1} parent=227 // pred_region
          %1587 = dma.done [#allocation15], 16
        $region260: #{svtr_forward.1} parent=227 // pred_fallthru
          _
        // Predicated region
        $region261: #{svtr_forward.1} parent=227 // pred_check
          %p1588 = pneg %p987
        $region262: #{svtr_forward.1} parent=227 // pred_check_branch
          %1590 = sbr.rel (%p1588) target = $region264
        $region263: #{svtr_forward.1} parent=227 // pred_region
          %1592 = dma.done [#allocation15], 16
        $region264: #{svtr_forward.1} parent=227 // pred_fallthru
          _
        // Predicated region
        $region265: #{svtr_forward.1} parent=227 // pred_check
          %p1593 = pneg %p1008
        $region266: #{svtr_forward.1} parent=227 // pred_check_branch
          %1595 = sbr.rel (%p1593) target = $region268
        $region267: #{svtr_forward.1} parent=227 // pred_region
          %1597 = dma.done [#allocation18], 16
        $region268: #{svtr_forward.1} parent=227 // pred_fallthru
          _
        // Predicated region
        $region269: #{svtr_forward.1} parent=227 // pred_check
          %p1598 = pneg %p1092
        $region270: #{svtr_forward.1} parent=227 // pred_check_branch
          %1600 = sbr.rel (%p1598) target = $region272
        $region271: #{svtr_forward.1} parent=227 // pred_region
          %1602 = dma.done [#allocation18], 16
        $region272: #{svtr_forward.1} parent=227 // pred_fallthru
          _
        // Predicated region
        $region273: #{svtr_forward.1} parent=227 // pred_check
          %p1603 = pneg %p1113
        $region274: #{svtr_forward.1} parent=227 // pred_check_branch
          %1605 = sbr.rel (%p1603) target = $region276
        $region275: #{svtr_forward.1} parent=227 // pred_region
          %1607 = dma.done [#allocation21], 16
        $region276: #{svtr_forward.1} parent=227 // pred_fallthru
          _
        // Predicated region
        $region277: #{svtr_forward.1} parent=227 // pred_check
          %p1608 = pneg %p1134
        $region278: #{svtr_forward.1} parent=227 // pred_check_branch
          %1610 = sbr.rel (%p1608) target = $region280
        $region279: #{svtr_forward.1} parent=227 // pred_region
          %1612 = dma.done [#allocation21], 16
        $region280: #{svtr_forward.1} parent=227 // pred_fallthru
          _
        %p1613 = scmp.lt.s32.totalorder %s126, 1
        %s1614 = scalar_select %p1613, %s126, 1
        %s1615 = smul.addr %s1614, 4
        %s1616 = smul.addr %s1615, 8
        %s1617 = scalar_lea.vmem %s1, %s1616
        %p1618 = pneg %p147
        %p1619 = pneg %p144
        %p1620 = pneg %p168
        %p1621 = pneg %p165
        %p1622 = pneg %p189
        %p1623 = pneg %p186
        %p1624 = pneg %p210
        %p1625 = pneg %p207
        %p1626 = pneg %p231
        %p1627 = pneg %p228
        %p1628 = pneg %p252
        %p1629 = pneg %p249
        %p1630 = pneg %p273
        %p1631 = pneg %p270
        %p1632 = pneg %p294
        %p1633 = pneg %p291
        %p1634 = pneg %p315
        %p1635 = pneg %p312
        %p1636 = pneg %p336
        %p1637 = pneg %p333
        %p1638 = pneg %p357
        %p1639 = pneg %p354
        %p1640 = pneg %p378
        %p1641 = pneg %p375
        %p1642 = pneg %p399
        %p1643 = pneg %p396
        %p1644 = pneg %p420
        %p1645 = pneg %p417
        %p1646 = pneg %p441
        %p1647 = pneg %p438
        %p1648 = pneg %p462
        %p1649 = pneg %p459
        %p1650 = pneg %p483
        %p1651 = pneg %p480
        %p1652 = pneg %p504
        %p1653 = pneg %p501
        %p1654 = pneg %p525
        %p1655 = pneg %p522
        %p1656 = pneg %p546
        %p1657 = pneg %p543
        %p1658 = pneg %p567
        %p1659 = pneg %p564
        %p1660 = pneg %p588
        %p1661 = pneg %p585
        %p1662 = pneg %p609
        %p1663 = pneg %p606
        %p1664 = pneg %p630
        %p1665 = pneg %p627
        %p1666 = pneg %p651
        %p1667 = pneg %p648
        %p1668 = pneg %p672
        %p1669 = pneg %p669
        %p1670 = pneg %p693
        %p1671 = pneg %p690
        %p1672 = pneg %p714
        %p1673 = pneg %p711
        %p1674 = pneg %p735
        %p1675 = pneg %p732
        %p1676 = pneg %p756
        %p1677 = pneg %p753
        %p1678 = pneg %p777
        %p1679 = pneg %p774
        %p1680 = pneg %p798
        %p1681 = pneg %p795
        %p1682 = pneg %p819
        %p1683 = pneg %p816
        %p1684 = pneg %p840
        %p1685 = pneg %p837
        %p1686 = pneg %p861
        %p1687 = pneg %p858
        %p1688 = pneg %p882
        %p1689 = pneg %p879
        %p1690 = pneg %p903
        %p1691 = pneg %p900
        %p1692 = pneg %p924
        %p1693 = pneg %p921
        %p1694 = pneg %p945
        %p1695 = pneg %p942
        %p1696 = pneg %p966
        %p1697 = pneg %p963
        %p1698 = pneg %p987
        %p1699 = pneg %p984
        %p1700 = pneg %p1008
        %p1701 = pneg %p1005
        %p1702 = pneg %p1029
        %p1703 = pneg %p1026
        %p1704 = pneg %p1050
        %p1705 = pneg %p1047
        %p1706 = pneg %p1071
        %p1707 = pneg %p1068
        %p1708 = pneg %p1092
        %p1709 = pneg %p1089
        %p1710 = pneg %p1113
        %p1711 = pneg %p1110
        %p1712 = pneg %p1134
        %p1713 = pneg %p1131
        %p1714 = pneg %p1155
        %p1715 = pneg %p1152
        %p1716 = pneg %p1176
        %p1717 = pneg %p1173
        %p1718 = pneg %p1197
        %p1719 = pneg %p1194
        %p1720 = pneg %p1218
        %p1721 = pneg %p1215
        %p1722 = pneg %p1244
        %p1723 = pneg %p1241
        %s1724 = sand.u32 %s1231, 1
        %s1725 = scalar_lea.sflag [#allocation4], %s1724
        %s1726 = sand.u32 %s1231, 1
        %s1727 = smul.addr %s1726, 16
        %s1728 = scalar_lea.vmem [#allocation23], %s1727
        %p1729 = scmp.lt.s32.totalorder %s126, 1
        %s1730 = scalar_select %p1729, %s126, 1
        %s1731 = smul.addr %s1730, 4
        %s1732 = smul.addr %s1731, 8
        %s1733 = scalar_lea.vmem %s1, %s1732
        %v1735 = vld [vmem:[%s1733] sm:$0xff]
        %v1736 = vld [vmem:[%s1733 + $0x8] sm:$0xff]
        %v1737 = vld [vmem:[%s1733 + $0x10] sm:$0xff]
        %v1738 = vld [vmem:[%s1733 + $0x18] sm:$0xff]
        %v1739 = vld [vmem:[%s3] sm:$0xff]
        %v1740 = vld [vmem:[%s3 + $0x8] sm:$0xff]
        %v1741 = vld [vmem:[%s3 + $0x10] sm:$0xff]
        %v1742 = vld [vmem:[%s3 + $0x18] sm:$0xff]
        %v1743 = vld [vmem:[%s5] sm:$0x1]
        %v1744 = vld [vmem:[%s7] sm:$0x1]
        %v1745 = vld [vmem:[%s9] sm:$0xf]
        %v1746 = vld [vmem:[%s9 + $0x4] sm:$0xf]
        %v1747 = vld [vmem:[%s9 + $0x8] sm:$0xf]
        %v1748 = vld [vmem:[%s9 + $0xc] sm:$0xf]
        %v1749 = vld [vmem:[%s11] sm:$0x1]
        %v1750 = vld [vmem:[%s13] sm:$0xf]
        %v1751 = vld [vmem:[%s13 + $0x4] sm:$0xf]
        %v1752 = vld [vmem:[%s13 + $0x8] sm:$0xf]
        %v1753 = vld [vmem:[%s13 + $0xc] sm:$0xf]
        %v1754 = vld [vmem:[%s15] sm:$0x1]
        %v1755 = vld [vmem:[%s17] sm:$0x1]
        %v1756 = vld [vmem:[%s19] sm:$0x1]
        %v1757 = vld [vmem:[%s21] sm:$0xf]
        %v1758 = vld [vmem:[%s21 + $0x4] sm:$0xf]
        %v1759 = vld [vmem:[%s21 + $0x8] sm:$0xf]
        %v1760 = vld [vmem:[%s21 + $0xc] sm:$0xf]
        %v1761 = vld [vmem:[%s23] sm:$0x1]
        %v1762 = vld [vmem:[%s25] sm:$0xf]
        %v1763 = vld [vmem:[%s25 + $0x4] sm:$0xf]
        %v1764 = vld [vmem:[%s25 + $0x8] sm:$0xf]
        %v1765 = vld [vmem:[%s25 + $0xc] sm:$0xf]
        %v1766 = vld [vmem:[%s25 + $0x10] sm:$0xf]
        %v1767 = vld [vmem:[%s25 + $0x14] sm:$0xf]
        %v1768 = vld [vmem:[%s25 + $0x18] sm:$0xf]
        %v1769 = vld [vmem:[%s25 + $0x1c] sm:$0xf]
        %v1770 = vld [vmem:[%s25 + $0x20] sm:$0xf]
        %v1771 = vld [vmem:[%s25 + $0x24] sm:$0xf]
        %v1772 = vld [vmem:[%s25 + $0x28] sm:$0xf]
        %v1773 = vld [vmem:[%s25 + $0x2c] sm:$0xf]
        %v1774 = vld [vmem:[%s25 + $0x30] sm:$0xf]
        %v1775 = vld [vmem:[%s25 + $0x34] sm:$0xf]
        %v1776 = vld [vmem:[%s25 + $0x38] sm:$0xf]
        %v1777 = vld [vmem:[%s25 + $0x3c] sm:$0xf]
        %v1778 = vld [vmem:[%s27] sm:$0x1]
        %vm1779 = vcmask 261120
        %v1780 = vsel %vm1779, %v1735, 0.0
        %1781 = vadd.xlane.f32.xlu0 %v1780
        %v1782 = vpop.xlane.xlu0 %1781
        %v1783 = vsel %vm1779, %v1736, 0.0
        %1784 = vadd.xlane.f32.xlu0 %v1783
        %v1785 = vpop.xlane.xlu0 %1784
        %v1786 = vsel %vm1779, %v1737, 0.0
        %1787 = vadd.xlane.f32.xlu0 %v1786
        %v1788 = vpop.xlane.xlu0 %1787
        %v1789 = vsel %vm1779, %v1738, 0.0
        %1790 = vadd.xlane.f32.xlu0 %v1789
        %v1791 = vpop.xlane.xlu0 %1790
        %v1792 = vrcp.pop 32.0
        %v1793 = vmul.f32 32.0, %v1792
        %v1794 = vsub.f32 1.0, %v1793
        %v1795 = vmul.f32 %v1792, %v1794
        %v1796 = vadd.f32 %v1792, %v1795
        %vm1797 = vweird.f32 %v1792
        %v1798 = vsel %vm1797, %v1792, %v1796
        %v1799 = vmul.f32 %v1782, %v1798
        %v1800 = vmul.f32 %v1785, %v1798
        %v1801 = vmul.f32 %v1788, %v1798
        %v1802 = vmul.f32 %v1791, %v1798
        %v1803 = vsub.f32 %v1735, %v1799
        %v1804 = vsub.f32 %v1736, %v1800
        %v1805 = vsub.f32 %v1737, %v1801
        %v1806 = vsub.f32 %v1738, %v1802
        %v1807 = vmul.f32 %v1803, %v1803
        %v1808 = vmul.f32 %v1804, %v1804
        %v1809 = vmul.f32 %v1805, %v1805
        %v1810 = vmul.f32 %v1806, %v1806
        %v1811 = vsel %vm1779, %v1807, 0.0
        %1812 = vadd.xlane.f32.xlu0 %v1811
        %v1813 = vpop.xlane.xlu0 %1812
        %v1814 = vsel %vm1779, %v1808, 0.0
        %1815 = vadd.xlane.f32.xlu0 %v1814
        %v1816 = vpop.xlane.xlu0 %1815
        %v1817 = vsel %vm1779, %v1809, 0.0
        %1818 = vadd.xlane.f32.xlu0 %v1817
        %v1819 = vpop.xlane.xlu0 %1818
        %v1820 = vsel %vm1779, %v1810, 0.0
        %1821 = vadd.xlane.f32.xlu0 %v1820
        %v1822 = vpop.xlane.xlu0 %1821
        %v1823 = vmul.f32 %v1813, %v1798
        %v1824 = vmul.f32 %v1816, %v1798
        %v1825 = vmul.f32 %v1819, %v1798
        %v1826 = vmul.f32 %v1822, %v1798
        %v1827 = vadd.f32 %v1823, 1e-06
        %v1828 = vadd.f32 %v1824, 1e-06
        %v1829 = vadd.f32 %v1825, 1e-06
        %v1830 = vadd.f32 %v1826, 1e-06
        %v1831 = vrsqrt.pop %v1827
        %v1832 = vmul.f32 %v1831, %v1827
        %v1833 = vmul.f32 %v1832, %v1831
        %v1834 = vmul.f32 0.5, %v1833
        %v1835 = vsub.f32 1.5, %v1834
        %v1836 = vmul.f32 %v1831, %v1835
        %vm1837 = vweird.f32 %v1827
        %vm1838 = vweird.f32 %v1831
        %vm1839 = vmor %vm1837, %vm1838
        %v1840 = vsel %vm1839, %v1831, %v1836
        %v1841 = vrsqrt.pop %v1828
        %v1842 = vmul.f32 %v1841, %v1828
        %v1843 = vmul.f32 %v1842, %v1841
        %v1844 = vmul.f32 0.5, %v1843
        %v1845 = vsub.f32 1.5, %v1844
        %v1846 = vmul.f32 %v1841, %v1845
        %vm1847 = vweird.f32 %v1828
        %vm1848 = vweird.f32 %v1841
        %vm1849 = vmor %vm1847, %vm1848
        %v1850 = vsel %vm1849, %v1841, %v1846
        %v1851 = vrsqrt.pop %v1829
        %v1852 = vmul.f32 %v1851, %v1829
        %v1853 = vmul.f32 %v1852, %v1851
        %v1854 = vmul.f32 0.5, %v1853
        %v1855 = vsub.f32 1.5, %v1854
        %v1856 = vmul.f32 %v1851, %v1855
        %vm1857 = vweird.f32 %v1829
        %vm1858 = vweird.f32 %v1851
        %vm1859 = vmor %vm1857, %vm1858
        %v1860 = vsel %vm1859, %v1851, %v1856
        %v1861 = vrsqrt.pop %v1830
        %v1862 = vmul.f32 %v1861, %v1830
        %v1863 = vmul.f32 %v1862, %v1861
        %v1864 = vmul.f32 0.5, %v1863
        %v1865 = vsub.f32 1.5, %v1864
        %v1866 = vmul.f32 %v1861, %v1865
        %vm1867 = vweird.f32 %v1830
        %vm1868 = vweird.f32 %v1861
        %vm1869 = vmor %vm1867, %vm1868
        %v1870 = vsel %vm1869, %v1861, %v1866
        %v1871 = vmul.f32 %v1803, %v1840
        %v1872 = vmul.f32 %v1804, %v1850
        %v1873 = vmul.f32 %v1805, %v1860
        %v1874 = vmul.f32 %v1806, %v1870
        %v1876 = vperm.slane %v1743, 0
        %v1878 = vmul.f32 %v1871, %v1876
        %v1879 = vmul.f32 %v1872, %v1876
        %v1880 = vmul.f32 %v1873, %v1876
        %v1881 = vmul.f32 %v1874, %v1876
        %v1883 = vperm.slane %v1744, 0
        %v1885 = vadd.f32 %v1878, %v1883
        %v1886 = vadd.f32 %v1879, %v1883
        %v1887 = vadd.f32 %v1880, %v1883
        %v1888 = vadd.f32 %v1881, %v1883
        %v1889 = vpack.c.bf16 %v1886, %v1885
        %v1890 = vpack.c.bf16 %v1888, %v1887
        %v1892 = vperm.slane %v1749, 0
        %v1898 = vunpack.c.l.b16 %v1745
        %v1899 = vunpack.c.l.b16 %v1746
        %v1900 = vunpack.c.l.b16 %v1747
        %v1901 = vunpack.c.l.b16 %v1748
        %v1902 = vpack.c.b16 %v1899, %v1898
        %v1903 = vpack.c.b16 %v1901, %v1900
        %v1907 = vsel %vm1779, %v1889, 0
        %v1910 = vsel %vm1779, %v1890, 0
        %1912 = vmatpush.bf16.msra.mxu0 0
        %1913 = vmatpush.bf16.msra.mxu0 0
        %1914 = vmatpush.bf16.msra.mxu0 0
        %1915 = vmatpush.bf16.msra.mxu0 0
        %1916 = vmatpush.bf16.msra.mxu0 0
        %1917 = vmatpush.bf16.msra.mxu0 0
        %1918 = vmatpush.bf16.msra.mxu0 %v1903
        %1919 = vmatpush.bf16.msra.mxu0 %v1902
        %1920 = vmatmul.bf16.gmra.mxu0 %v1907
        %v1921 = vpop.f32.mrf.mxu0
        %v1922 = vadd.f32 %v1892, %v1921
        %v1923 = vpop.f32.mrf.mxu0
        %v1924 = vadd.f32 %v1892, %v1923
        %1925 = vmatmul.bf16.gmra.mxu0 %v1910
        %v1926 = vpop.f32.mrf.mxu0
        %v1927 = vadd.f32 %v1892, %v1926
        %v1928 = vpop.f32.mrf.mxu0
        %v1929 = vadd.f32 %v1892, %v1928
        %1930 = vdwg.mxu0
        %v1931 = vpack.c.bf16 %v1922, %v1922
        %v1932 = vpack.c.bf16 %v1924, %v1924
        %v1933 = vpack.c.bf16 %v1927, %v1927
        %v1934 = vpack.c.bf16 %v1929, %v1929
        %v1939 = vunpack.c.l.b16 %v1931
        %v1940 = vunpack.c.l.b16 %v1932
        %v1941 = vunpack.c.l.b16 %v1933
        %v1942 = vunpack.c.l.b16 %v1934
        %v1943 = vpack.c.b16 %v1940, %v1939
        %v1944 = vpack.c.b16 %v1942, %v1941
        %1945 = vrot.lane.b32.xlu0 %v1943, 96
        %v1946 = vpop.permute.xlu0 %1945
        %1947 = vrot.lane.b32.xlu0 %v1944, 96
        %v1948 = vpop.permute.xlu0 %1947
        %vm1949 = vcmask 130048
        %v1951 = vsel %vm1949, %v1943, 0
        %v1954 = vsel %vm1949, %v1944, 0
        %v1957 = vsel %vm1949, %v1946, 0
        %v1960 = vsel %vm1949, %v1948, 0
        %1962 = vmatpush.bf16.xpose.msra.mxu0 0
        %1963 = vmatpush.bf16.xpose.msra.mxu0 0
        %1964 = vmatpush.bf16.xpose.msra.mxu0 0
        %1965 = vmatpush.bf16.xpose.msra.mxu0 0
        %1966 = vmatpush.bf16.xpose.msra.mxu0 0
        %1967 = vmatpush.bf16.xpose.msra.mxu0 0
        %1968 = vmatpush.bf16.xpose.msra.mxu0 %v1960
        %1969 = vmatpush.bf16.xpose.msra.mxu0 %v1957
        %1970 = vmatmul.bf16.gmra.mxu0 %v1951
        %v1971 = vpop.f32.mrf.mxu0
        %v1972 = vadd.f32 0.0, %v1971
        %v1973 = vpop.f32.mrf.mxu0
        %v1974 = vadd.f32 0.0, %v1973
        %1975 = vmatmul.bf16.gmra.mxu0 %v1954
        %v1976 = vpop.f32.mrf.mxu0
        %v1977 = vadd.f32 0.0, %v1976
        %v1978 = vpop.f32.mrf.mxu0
        %v1979 = vadd.f32 0.0, %v1978
        %1980 = vdwg.mxu0
        %v1981 = vmul.f32 %v1972, 0.25
        %v1982 = vmul.f32 %v1974, 0.25
        %v1983 = vmul.f32 %v1977, 0.25
        %v1984 = vmul.f32 %v1979, 0.25
        %v1985 = vadd.f32 %v1981, %v1739
        %v1986 = vadd.f32 %v1982, %v1740
        %v1987 = vadd.f32 %v1983, %v1741
        %v1988 = vadd.f32 %v1984, %v1742
        %v1989 = vsel %vm1779, %v1985, -inf
        %1990 = vmax.xlane.f32.xlu0 %v1989
        %v1991 = vpop.xlane.xlu0 %1990
        %v1992 = vsel %vm1779, %v1986, -inf
        %1993 = vmax.xlane.f32.xlu0 %v1992
        %v1994 = vpop.xlane.xlu0 %1993
        %v1995 = vsel %vm1779, %v1987, -inf
        %1996 = vmax.xlane.f32.xlu0 %v1995
        %v1997 = vpop.xlane.xlu0 %1996
        %v1998 = vsel %vm1779, %v1988, -inf
        %1999 = vmax.xlane.f32.xlu0 %v1998
        %v2000 = vpop.xlane.xlu0 %1999
        %v2001 = vsub.f32 %v1985, %v1991
        %v2002 = vsub.f32 %v1986, %v1994
        %v2003 = vsub.f32 %v1987, %v1997
        %v2004 = vsub.f32 %v1988, %v2000
        %v2005 = vmul.f32 %v2001, 1.442695
        %v2006 = vpow.pop %v2005
        %v2007 = vmul.f32 %v2002, 1.442695
        %v2008 = vpow.pop %v2007
        %v2009 = vmul.f32 %v2003, 1.442695
        %v2010 = vpow.pop %v2009
        %v2011 = vmul.f32 %v2004, 1.442695
        %v2012 = vpow.pop %v2011
        %v2013 = vsel %vm1779, %v2006, 0.0
        %2014 = vadd.xlane.f32.xlu0 %v2013
        %v2015 = vpop.xlane.xlu0 %2014
        %v2016 = vsel %vm1779, %v2008, 0.0
        %2017 = vadd.xlane.f32.xlu0 %v2016
        %v2018 = vpop.xlane.xlu0 %2017
        %v2019 = vsel %vm1779, %v2010, 0.0
        %2020 = vadd.xlane.f32.xlu0 %v2019
        %v2021 = vpop.xlane.xlu0 %2020
        %v2022 = vsel %vm1779, %v2012, 0.0
        %2023 = vadd.xlane.f32.xlu0 %v2022
        %v2024 = vpop.xlane.xlu0 %2023
        %v2025 = vrcp.pop %v2015
        %v2026 = vrcp.pop %v2018
        %v2027 = vrcp.pop %v2021
        %v2028 = vrcp.pop %v2024
        %v2029 = vmul.f32 %v2006, %v2025
        %v2030 = vmul.f32 %v2008, %v2026
        %v2031 = vmul.f32 %v2010, %v2027
        %v2032 = vmul.f32 %v2012, %v2028
        %v2033 = vpack.c.bf16 %v2030, %v2029
        %v2034 = vpack.c.bf16 %v2032, %v2031
        %2035 = vrot.lane.b32.xlu0 %v1943, 64
        %v2036 = vpop.permute.xlu0 %2035
        %2037 = vrot.lane.b32.xlu0 %v1944, 64
        %v2038 = vpop.permute.xlu0 %2037
        %v2042 = vsel %vm1779, %v2033, 0
        %v2045 = vsel %vm1779, %v2034, 0
        %2047 = vmatpush.bf16.msra.mxu0 0
        %2048 = vmatpush.bf16.msra.mxu0 0
        %2049 = vmatpush.bf16.msra.mxu0 0
        %2050 = vmatpush.bf16.msra.mxu0 0
        %2051 = vmatpush.bf16.msra.mxu0 0
        %2052 = vmatpush.bf16.msra.mxu0 0
        %2053 = vmatpush.bf16.msra.mxu0 %v2038
        %2054 = vmatpush.bf16.msra.mxu0 %v2036
        %2055 = vmatmul.bf16.gmra.mxu0 %v2042
        %v2056 = vpop.f32.mrf.mxu0
        %v2057 = vadd.f32 0.0, %v2056
        %v2058 = vpop.f32.mrf.mxu0
        %v2059 = vadd.f32 0.0, %v2058
        %2060 = vmatmul.bf16.gmra.mxu0 %v2045
        %v2061 = vpop.f32.mrf.mxu0
        %v2062 = vadd.f32 0.0, %v2061
        %v2063 = vpop.f32.mrf.mxu0
        %v2064 = vadd.f32 0.0, %v2063
        %2065 = vdwg.mxu0
        %2066 = vrot.lane.b32.xlu0 %v1943, 112
        %v2067 = vpop.permute.xlu0 %2066
        %2068 = vrot.lane.b32.xlu0 %v1944, 112
        %v2069 = vpop.permute.xlu0 %2068
        %2070 = vrot.lane.b32.xlu0 %v1943, 80
        %v2071 = vpop.permute.xlu0 %2070
        %2072 = vrot.lane.b32.xlu0 %v1944, 80
        %v2073 = vpop.permute.xlu0 %2072
        %v2075 = vsel %vm1949, %v2067, 0
        %v2078 = vsel %vm1949, %v2069, 0
        %v2081 = vsel %vm1949, %v2071, 0
        %v2084 = vsel %vm1949, %v2073, 0
        %2086 = vmatpush.bf16.xpose.msra.mxu0 0
        %2087 = vmatpush.bf16.xpose.msra.mxu0 0
        %2088 = vmatpush.bf16.xpose.msra.mxu0 0
        %2089 = vmatpush.bf16.xpose.msra.mxu0 0
        %2090 = vmatpush.bf16.xpose.msra.mxu0 0
        %2091 = vmatpush.bf16.xpose.msra.mxu0 0
        %2092 = vmatpush.bf16.xpose.msra.mxu0 %v2084
        %2093 = vmatpush.bf16.xpose.msra.mxu0 %v2081
        %2094 = vmatmul.bf16.gmra.mxu0 %v2075
        %v2095 = vpop.f32.mrf.mxu0
        %v2096 = vadd.f32 0.0, %v2095
        %v2097 = vpop.f32.mrf.mxu0
        %v2098 = vadd.f32 0.0, %v2097
        %2099 = vmatmul.bf16.gmra.mxu0 %v2078
        %v2100 = vpop.f32.mrf.mxu0
        %v2101 = vadd.f32 0.0, %v2100
        %v2102 = vpop.f32.mrf.mxu0
        %v2103 = vadd.f32 0.0, %v2102
        %2104 = vdwg.mxu0
        %v2105 = vmul.f32 %v2096, 0.25
        %v2106 = vmul.f32 %v2098, 0.25
        %v2107 = vmul.f32 %v2101, 0.25
        %v2108 = vmul.f32 %v2103, 0.25
        %v2109 = vadd.f32 %v2105, %v1739
        %v2110 = vadd.f32 %v2106, %v1740
        %v2111 = vadd.f32 %v2107, %v1741
        %v2112 = vadd.f32 %v2108, %v1742
        %v2113 = vsel %vm1779, %v2109, -inf
        %2114 = vmax.xlane.f32.xlu0 %v2113
        %v2115 = vpop.xlane.xlu0 %2114
        %v2116 = vsel %vm1779, %v2110, -inf
        %2117 = vmax.xlane.f32.xlu0 %v2116
        %v2118 = vpop.xlane.xlu0 %2117
        %v2119 = vsel %vm1779, %v2111, -inf
        %2120 = vmax.xlane.f32.xlu0 %v2119
        %v2121 = vpop.xlane.xlu0 %2120
        %v2122 = vsel %vm1779, %v2112, -inf
        %2123 = vmax.xlane.f32.xlu0 %v2122
        %v2124 = vpop.xlane.xlu0 %2123
        %v2125 = vsub.f32 %v2109, %v2115
        %v2126 = vsub.f32 %v2110, %v2118
        %v2127 = vsub.f32 %v2111, %v2121
        %v2128 = vsub.f32 %v2112, %v2124
        %v2129 = vmul.f32 %v2125, 1.442695
        %v2130 = vpow.pop %v2129
        %v2131 = vmul.f32 %v2126, 1.442695
        %v2132 = vpow.pop %v2131
        %v2133 = vmul.f32 %v2127, 1.442695
        %v2134 = vpow.pop %v2133
        %v2135 = vmul.f32 %v2128, 1.442695
        %v2136 = vpow.pop %v2135
        %v2137 = vsel %vm1779, %v2130, 0.0
        %2138 = vadd.xlane.f32.xlu0 %v2137
        %v2139 = vpop.xlane.xlu0 %2138
        %v2140 = vsel %vm1779, %v2132, 0.0
        %2141 = vadd.xlane.f32.xlu0 %v2140
        %v2142 = vpop.xlane.xlu0 %2141
        %v2143 = vsel %vm1779, %v2134, 0.0
        %2144 = vadd.xlane.f32.xlu0 %v2143
        %v2145 = vpop.xlane.xlu0 %2144
        %v2146 = vsel %vm1779, %v2136, 0.0
        %2147 = vadd.xlane.f32.xlu0 %v2146
        %v2148 = vpop.xlane.xlu0 %2147
        %v2149 = vrcp.pop %v2139
        %v2150 = vrcp.pop %v2142
        %v2151 = vrcp.pop %v2145
        %v2152 = vrcp.pop %v2148
        %v2153 = vmul.f32 %v2130, %v2149
        %v2154 = vmul.f32 %v2132, %v2150
        %v2155 = vmul.f32 %v2134, %v2151
        %v2156 = vmul.f32 %v2136, %v2152
        %v2157 = vpack.c.bf16 %v2154, %v2153
        %v2158 = vpack.c.bf16 %v2156, %v2155
        %2159 = vrot.lane.b32.xlu0 %v1943, 48
        %v2160 = vpop.permute.xlu0 %2159
        %2161 = vrot.lane.b32.xlu0 %v1944, 48
        %v2162 = vpop.permute.xlu0 %2161
        %v2166 = vsel %vm1779, %v2157, 0
        %v2169 = vsel %vm1779, %v2158, 0
        %2171 = vmatpush.bf16.msra.mxu0 0
        %2172 = vmatpush.bf16.msra.mxu0 0
        %2173 = vmatpush.bf16.msra.mxu0 0
        %2174 = vmatpush.bf16.msra.mxu0 0
        %2175 = vmatpush.bf16.msra.mxu0 0
        %2176 = vmatpush.bf16.msra.mxu0 0
        %2177 = vmatpush.bf16.msra.mxu0 %v2162
        %2178 = vmatpush.bf16.msra.mxu0 %v2160
        %2179 = vmatmul.bf16.gmra.mxu0 %v2166
        %v2180 = vpop.f32.mrf.mxu0
        %v2181 = vadd.f32 0.0, %v2180
        %v2182 = vpop.f32.mrf.mxu0
        %v2183 = vadd.f32 0.0, %v2182
        %2184 = vmatmul.bf16.gmra.mxu0 %v2169
        %v2185 = vpop.f32.mrf.mxu0
        %v2186 = vadd.f32 0.0, %v2185
        %v2187 = vpop.f32.mrf.mxu0
        %v2188 = vadd.f32 0.0, %v2187
        %2189 = vdwg.mxu0
        %2194 = vrot.lane.b32.xlu0 %v2181, 16
        %v2195 = vpop.permute.xlu0 %2194
        %2196 = vrot.lane.b32.xlu0 %v2183, 16
        %v2197 = vpop.permute.xlu0 %2196
        %2198 = vrot.lane.b32.xlu0 %v2186, 16
        %v2199 = vpop.permute.xlu0 %2198
        %2200 = vrot.lane.b32.xlu0 %v2188, 16
        %v2201 = vpop.permute.xlu0 %2200
        %v2206 = vsel %vm1949, %v2057, %v2195
        %v2207 = vsel %vm1949, %v2059, %v2197
        %v2208 = vsel %vm1949, %v2062, %v2199
        %v2209 = vsel %vm1949, %v2064, %v2201
        %v2210 = vpack.c.bf16 %v2207, %v2206
        %v2211 = vpack.c.bf16 %v2209, %v2208
        %v2216 = vunpack.c.l.b16 %v1750
        %v2217 = vunpack.c.l.b16 %v1751
        %v2218 = vunpack.c.l.b16 %v1752
        %v2219 = vunpack.c.l.b16 %v1753
        %v2220 = vpack.c.b16 %v2217, %v2216
        %v2221 = vpack.c.b16 %v2219, %v2218
        %v2225 = vsel %vm1779, %v2210, 0
        %v2228 = vsel %vm1779, %v2211, 0
        %2230 = vmatpush.bf16.msra.mxu0 0
        %2231 = vmatpush.bf16.msra.mxu0 0
        %2232 = vmatpush.bf16.msra.mxu0 0
        %2233 = vmatpush.bf16.msra.mxu0 0
        %2234 = vmatpush.bf16.msra.mxu0 0
        %2235 = vmatpush.bf16.msra.mxu0 0
        %2236 = vmatpush.bf16.msra.mxu0 %v2221
        %2237 = vmatpush.bf16.msra.mxu0 %v2220
        %2238 = vmatmul.bf16.gmra.mxu0 %v2225
        %v2239 = vpop.f32.mrf.mxu0
        %v2240 = vadd.f32 0.0, %v2239
        %v2241 = vpop.f32.mrf.mxu0
        %v2242 = vadd.f32 0.0, %v2241
        %2243 = vmatmul.bf16.gmra.mxu0 %v2228
        %v2244 = vpop.f32.mrf.mxu0
        %v2245 = vadd.f32 0.0, %v2244
        %v2246 = vpop.f32.mrf.mxu0
        %v2247 = vadd.f32 0.0, %v2246
        %2248 = vdwg.mxu0
        %v2249 = vadd.f32 %v1735, %v2240
        %v2250 = vadd.f32 %v1736, %v2242
        %v2251 = vadd.f32 %v1737, %v2245
        %v2252 = vadd.f32 %v1738, %v2247
        %v2254 = vperm.slane %v1754, 0
        %v2256 = vadd.f32 %v2249, %v2254
        %v2257 = vadd.f32 %v2250, %v2254
        %v2258 = vadd.f32 %v2251, %v2254
        %v2259 = vadd.f32 %v2252, %v2254
        %v2260 = vsel %vm1779, %v2256, 0.0
        %2261 = vadd.xlane.f32.xlu0 %v2260
        %v2262 = vpop.xlane.xlu0 %2261
        %v2263 = vsel %vm1779, %v2257, 0.0
        %2264 = vadd.xlane.f32.xlu0 %v2263
        %v2265 = vpop.xlane.xlu0 %2264
        %v2266 = vsel %vm1779, %v2258, 0.0
        %2267 = vadd.xlane.f32.xlu0 %v2266
        %v2268 = vpop.xlane.xlu0 %2267
        %v2269 = vsel %vm1779, %v2259, 0.0
        %2270 = vadd.xlane.f32.xlu0 %v2269
        %v2271 = vpop.xlane.xlu0 %2270
        %v2272 = vmul.f32 %v2262, %v1798
        %v2273 = vmul.f32 %v2265, %v1798
        %v2274 = vmul.f32 %v2268, %v1798
        %v2275 = vmul.f32 %v2271, %v1798
        %v2276 = vsub.f32 %v2256, %v2272
        %v2277 = vsub.f32 %v2257, %v2273
        %v2278 = vsub.f32 %v2258, %v2274
        %v2279 = vsub.f32 %v2259, %v2275
        %v2280 = vmul.f32 %v2276, %v2276
        %v2281 = vmul.f32 %v2277, %v2277
        %v2282 = vmul.f32 %v2278, %v2278
        %v2283 = vmul.f32 %v2279, %v2279
        %v2284 = vsel %vm1779, %v2280, 0.0
        %2285 = vadd.xlane.f32.xlu0 %v2284
        %v2286 = vpop.xlane.xlu0 %2285
        %v2287 = vsel %vm1779, %v2281, 0.0
        %2288 = vadd.xlane.f32.xlu0 %v2287
        %v2289 = vpop.xlane.xlu0 %2288
        %v2290 = vsel %vm1779, %v2282, 0.0
        %2291 = vadd.xlane.f32.xlu0 %v2290
        %v2292 = vpop.xlane.xlu0 %2291
        %v2293 = vsel %vm1779, %v2283, 0.0
        %2294 = vadd.xlane.f32.xlu0 %v2293
        %v2295 = vpop.xlane.xlu0 %2294
        %v2296 = vmul.f32 %v2286, %v1798
        %v2297 = vmul.f32 %v2289, %v1798
        %v2298 = vmul.f32 %v2292, %v1798
        %v2299 = vmul.f32 %v2295, %v1798
        %v2300 = vadd.f32 %v2296, 1e-06
        %v2301 = vadd.f32 %v2297, 1e-06
        %v2302 = vadd.f32 %v2298, 1e-06
        %v2303 = vadd.f32 %v2299, 1e-06
        %v2304 = vrsqrt.pop %v2300
        %v2305 = vmul.f32 %v2304, %v2300
        %v2306 = vmul.f32 %v2305, %v2304
        %v2307 = vmul.f32 0.5, %v2306
        %v2308 = vsub.f32 1.5, %v2307
        %v2309 = vmul.f32 %v2304, %v2308
        %vm2310 = vweird.f32 %v2300
        %vm2311 = vweird.f32 %v2304
        %vm2312 = vmor %vm2310, %vm2311
        %v2313 = vsel %vm2312, %v2304, %v2309
        %v2314 = vrsqrt.pop %v2301
        %v2315 = vmul.f32 %v2314, %v2301
        %v2316 = vmul.f32 %v2315, %v2314
        %v2317 = vmul.f32 0.5, %v2316
        %v2318 = vsub.f32 1.5, %v2317
        %v2319 = vmul.f32 %v2314, %v2318
        %vm2320 = vweird.f32 %v2301
        %vm2321 = vweird.f32 %v2314
        %vm2322 = vmor %vm2320, %vm2321
        %v2323 = vsel %vm2322, %v2314, %v2319
        %v2324 = vrsqrt.pop %v2302
        %v2325 = vmul.f32 %v2324, %v2302
        %v2326 = vmul.f32 %v2325, %v2324
        %v2327 = vmul.f32 0.5, %v2326
        %v2328 = vsub.f32 1.5, %v2327
        %v2329 = vmul.f32 %v2324, %v2328
        %vm2330 = vweird.f32 %v2302
        %vm2331 = vweird.f32 %v2324
        %vm2332 = vmor %vm2330, %vm2331
        %v2333 = vsel %vm2332, %v2324, %v2329
        %v2334 = vrsqrt.pop %v2303
        %v2335 = vmul.f32 %v2334, %v2303
        %v2336 = vmul.f32 %v2335, %v2334
        %v2337 = vmul.f32 0.5, %v2336
        %v2338 = vsub.f32 1.5, %v2337
        %v2339 = vmul.f32 %v2334, %v2338
        %vm2340 = vweird.f32 %v2303
        %vm2341 = vweird.f32 %v2334
        %vm2342 = vmor %vm2340, %vm2341
        %v2343 = vsel %vm2342, %v2334, %v2339
        %v2344 = vmul.f32 %v2276, %v2313
        %v2345 = vmul.f32 %v2277, %v2323
        %v2346 = vmul.f32 %v2278, %v2333
        %v2347 = vmul.f32 %v2279, %v2343
        %v2349 = vperm.slane %v1755, 0
        %v2351 = vmul.f32 %v2344, %v2349
        %v2352 = vmul.f32 %v2345, %v2349
        %v2353 = vmul.f32 %v2346, %v2349
        %v2354 = vmul.f32 %v2347, %v2349
        %v2356 = vperm.slane %v1756, 0
        %v2358 = vadd.f32 %v2351, %v2356
        %v2359 = vadd.f32 %v2352, %v2356
        %v2360 = vadd.f32 %v2353, %v2356
        %v2361 = vadd.f32 %v2354, %v2356
        %v2362 = vpack.c.bf16 %v2359, %v2358
        %v2363 = vpack.c.bf16 %v2361, %v2360
        %v2365 = vperm.slane %v1761, 0
        %v2371 = vunpack.c.l.b16 %v1757
        %v2372 = vunpack.c.l.b16 %v1758
        %v2373 = vunpack.c.l.b16 %v1759
        %v2374 = vunpack.c.l.b16 %v1760
        %v2375 = vpack.c.b16 %v2372, %v2371
        %v2376 = vpack.c.b16 %v2374, %v2373
        %v2380 = vsel %vm1779, %v2362, 0
        %v2383 = vsel %vm1779, %v2363, 0
        %2385 = vmatpush.bf16.msra.mxu0 0
        %2386 = vmatpush.bf16.msra.mxu0 0
        %2387 = vmatpush.bf16.msra.mxu0 0
        %2388 = vmatpush.bf16.msra.mxu0 0
        %2389 = vmatpush.bf16.msra.mxu0 0
        %2390 = vmatpush.bf16.msra.mxu0 0
        %2391 = vmatpush.bf16.msra.mxu0 %v2376
        %2392 = vmatpush.bf16.msra.mxu0 %v2375
        %2393 = vmatmul.bf16.gmra.mxu0 %v2380
        %v2394 = vpop.f32.mrf.mxu0
        %v2395 = vadd.f32 %v2365, %v2394
        %v2396 = vpop.f32.mrf.mxu0
        %v2397 = vadd.f32 %v2365, %v2396
        %2398 = vmatmul.bf16.gmra.mxu0 %v2383
        %v2399 = vpop.f32.mrf.mxu0
        %v2400 = vadd.f32 %v2365, %v2399
        %v2401 = vpop.f32.mrf.mxu0
        %v2402 = vadd.f32 %v2365, %v2401
        %2403 = vdwg.mxu0
        %v2404 = vmul.f32 %v2395, %v2395
        %v2405 = vmul.f32 %v2397, %v2397
        %v2406 = vmul.f32 %v2400, %v2400
        %v2407 = vmul.f32 %v2402, %v2402
        %v2408 = vmul.f32 %v2395, %v2404
        %v2409 = vmul.f32 %v2397, %v2405
        %v2410 = vmul.f32 %v2400, %v2406
        %v2411 = vmul.f32 %v2402, %v2407
        %v2412 = vmul.f32 %v2408, 0.044715
        %v2413 = vmul.f32 %v2409, 0.044715
        %v2414 = vmul.f32 %v2410, 0.044715
        %v2415 = vmul.f32 %v2411, 0.044715
        %v2416 = vadd.f32 %v2395, %v2412
        %v2417 = vadd.f32 %v2397, %v2413
        %v2418 = vadd.f32 %v2400, %v2414
        %v2419 = vadd.f32 %v2402, %v2415
        %v2420 = vmul.f32 %v2416, 0.7978846
        %v2421 = vmul.f32 %v2417, 0.7978846
        %v2422 = vmul.f32 %v2418, 0.7978846
        %v2423 = vmul.f32 %v2419, 0.7978846
        %v2424 = vtanh.pop %v2420
        %v2425 = vtanh.pop %v2421
        %v2426 = vtanh.pop %v2422
        %v2427 = vtanh.pop %v2423
        %v2428 = vadd.f32 %v2424, 1.0
        %v2429 = vadd.f32 %v2425, 1.0
        %v2430 = vadd.f32 %v2426, 1.0
        %v2431 = vadd.f32 %v2427, 1.0
        %v2432 = vmul.f32 %v2428, 0.5
        %v2433 = vmul.f32 %v2429, 0.5
        %v2434 = vmul.f32 %v2430, 0.5
        %v2435 = vmul.f32 %v2431, 0.5
        %v2436 = vmul.f32 %v2395, %v2432
        %v2437 = vmul.f32 %v2397, %v2433
        %v2438 = vmul.f32 %v2400, %v2434
        %v2439 = vmul.f32 %v2402, %v2435
        %v2440 = vpack.c.bf16 %v2437, %v2436
        %v2441 = vpack.c.bf16 %v2439, %v2438
        %v2458 = vunpack.c.l.b16 %v1762
        %v2459 = vunpack.c.l.b16 %v1763
        %v2460 = vunpack.c.l.b16 %v1764
        %v2461 = vunpack.c.l.b16 %v1765
        %v2462 = vunpack.c.l.b16 %v1766
        %v2463 = vunpack.c.l.b16 %v1767
        %v2464 = vunpack.c.l.b16 %v1768
        %v2465 = vunpack.c.l.b16 %v1769
        %v2466 = vunpack.c.l.b16 %v1770
        %v2467 = vunpack.c.l.b16 %v1771
        %v2468 = vunpack.c.l.b16 %v1772
        %v2469 = vunpack.c.l.b16 %v1773
        %v2470 = vunpack.c.l.b16 %v1774
        %v2471 = vunpack.c.l.b16 %v1775
        %v2472 = vunpack.c.l.b16 %v1776
        %v2473 = vunpack.c.l.b16 %v1777
        %v2474 = vpack.c.b16 %v2459, %v2458
        %v2475 = vpack.c.b16 %v2461, %v2460
        %v2476 = vpack.c.b16 %v2463, %v2462
        %v2477 = vpack.c.b16 %v2465, %v2464
        %v2478 = vpack.c.b16 %v2467, %v2466
        %v2479 = vpack.c.b16 %v2469, %v2468
        %v2480 = vpack.c.b16 %v2471, %v2470
        %v2481 = vpack.c.b16 %v2473, %v2472
        %2490 = vmatpush.bf16.msra.mxu0 %v2481
        %2491 = vmatpush.bf16.msra.mxu0 %v2480
        %2492 = vmatpush.bf16.msra.mxu0 %v2479
        %2493 = vmatpush.bf16.msra.mxu0 %v2478
        %2494 = vmatpush.bf16.msra.mxu0 %v2477
        %2495 = vmatpush.bf16.msra.mxu0 %v2476
        %2496 = vmatpush.bf16.msra.mxu0 %v2475
        %2497 = vmatpush.bf16.msra.mxu0 %v2474
        %2498 = vmatmul.bf16.gmra.mxu0 %v2440
        %v2499 = vpop.f32.mrf.mxu0
        %v2500 = vadd.f32 0.0, %v2499
        %v2501 = vpop.f32.mrf.mxu0
        %v2502 = vadd.f32 0.0, %v2501
        %2503 = vmatmul.bf16.gmra.mxu0 %v2441
        %v2504 = vpop.f32.mrf.mxu0
        %v2505 = vadd.f32 0.0, %v2504
        %v2506 = vpop.f32.mrf.mxu0
        %v2507 = vadd.f32 0.0, %v2506
        %2508 = vdwg.mxu0
        %v2509 = vadd.f32 %v2256, %v2500
        %v2510 = vadd.f32 %v2257, %v2502
        %v2511 = vadd.f32 %v2258, %v2505
        %v2512 = vadd.f32 %v2259, %v2507
        %v2514 = vperm.slane %v1778, 0
        %v2516 = vadd.f32 %v2509, %v2514
        %v2517 = vadd.f32 %v2510, %v2514
        %v2518 = vadd.f32 %v2511, %v2514
        %v2519 = vadd.f32 %v2512, %v2514
        %v2520 = vld [vmem:[%s29] sm:$0xf]
        %v2521 = vld [vmem:[%s29 + $0x4] sm:$0xf]
        %v2522 = vld [vmem:[%s29 + $0x8] sm:$0xf]
        %v2523 = vld [vmem:[%s29 + $0xc] sm:$0xf]
        %v2524 = vld [vmem:[%s29 + $0x10] sm:$0xf]
        %v2525 = vld [vmem:[%s29 + $0x14] sm:$0xf]
        %v2526 = vld [vmem:[%s29 + $0x18] sm:$0xf]
        %v2527 = vld [vmem:[%s29 + $0x1c] sm:$0xf]
        %v2528 = vld [vmem:[%s29 + $0x20] sm:$0xf]
        %v2529 = vld [vmem:[%s29 + $0x24] sm:$0xf]
        %v2530 = vld [vmem:[%s29 + $0x28] sm:$0xf]
        %v2531 = vld [vmem:[%s29 + $0x2c] sm:$0xf]
        %v2532 = vld [vmem:[%s29 + $0x30] sm:$0xf]
        %v2533 = vld [vmem:[%s29 + $0x34] sm:$0xf]
        %v2534 = vld [vmem:[%s29 + $0x38] sm:$0xf]
        %v2535 = vld [vmem:[%s29 + $0x3c] sm:$0xf]
        %v2536 = vld [vmem:[%s29 + $0x40] sm:$0xf]
        %v2537 = vld [vmem:[%s29 + $0x44] sm:$0xf]
        %v2538 = vld [vmem:[%s29 + $0x48] sm:$0xf]
        %v2539 = vld [vmem:[%s29 + $0x4c] sm:$0xf]
        %v2540 = vld [vmem:[%s29 + $0x50] sm:$0xf]
        %v2541 = vld [vmem:[%s29 + $0x54] sm:$0xf]
        %v2542 = vld [vmem:[%s29 + $0x58] sm:$0xf]
        %v2543 = vld [vmem:[%s29 + $0x5c] sm:$0xf]
        %v2544 = vld [vmem:[%s29 + $0x60] sm:$0xf]
        %v2545 = vld [vmem:[%s29 + $0x64] sm:$0xf]
        %v2546 = vld [vmem:[%s29 + $0x68] sm:$0xf]
        %v2547 = vld [vmem:[%s29 + $0x6c] sm:$0xf]
        %v2548 = vld [vmem:[%s29 + $0x70] sm:$0xf]
        %v2549 = vld [vmem:[%s29 + $0x74] sm:$0xf]
        %v2550 = vld [vmem:[%s29 + $0x78] sm:$0xf]
        %v2551 = vld [vmem:[%s29 + $0x7c] sm:$0xf]
        %v2552 = vld [vmem:[%s29 + $0x80] sm:$0xf]
        %v2553 = vld [vmem:[%s29 + $0x84] sm:$0xf]
        %v2554 = vld [vmem:[%s29 + $0x88] sm:$0xf]
        %v2555 = vld [vmem:[%s29 + $0x8c] sm:$0xf]
        %v2556 = vld [vmem:[%s31] sm:$0x1]
        %v2557 = vld [vmem:[%s33] sm:$0x1]
        %v2558 = vld [vmem:[%s35] sm:$0x1]
        %v2560 = vrot.slane %v2517, 7
        %vm2562 = vcmask 1040384
        %v2563 = vsel %vm2562, 0.0, %v2560
        %v2564 = vpack.c.bf16 %v2563, 0.0
        %v2565 = vpack.c.bf16 %v2517, 0.0
        %v2570 = vunpack.c.l.b16 %v2524
        %v2571 = vunpack.c.l.b16 %v2525
        %v2572 = vunpack.c.l.b16 %v2526
        %v2573 = vunpack.c.l.b16 %v2527
        %v2574 = vpack.c.b16 %v2571, %v2570
        %v2575 = vpack.c.b16 %v2573, %v2572
        %v2579 = vsel %vm1779, %v2565, 0
        %2581 = vmatpush.bf16.msra.mxu0 0
        %2582 = vmatpush.bf16.msra.mxu0 0
        %2583 = vmatpush.bf16.msra.mxu0 0
        %2584 = vmatpush.bf16.msra.mxu0 0
        %2585 = vmatpush.bf16.msra.mxu0 0
        %2586 = vmatpush.bf16.msra.mxu0 0
        %2587 = vmatpush.bf16.msra.mxu0 %v2575
        %2588 = vmatpush.bf16.msra.mxu0 %v2574
        %2589 = vmatmul.bf16.gmra.mxu0 %v2579
        %v2590 = vpop.f32.mrf.mxu0
        %v2591 = vadd.f32 0.0, %v2590
        %v2592 = vpop.f32.mrf.mxu0
        %v2593 = vadd.f32 0.0, %v2592
        %2594 = vdwg.mxu0
        %v2599 = vunpack.c.l.b16 %v2520
        %v2600 = vunpack.c.l.b16 %v2521
        %v2601 = vunpack.c.l.b16 %v2522
        %v2602 = vunpack.c.l.b16 %v2523
        %v2603 = vpack.c.b16 %v2600, %v2599
        %v2604 = vpack.c.b16 %v2602, %v2601
        %v2608 = vsel %vm1779, %v2564, 0
        %2610 = vmatpush.bf16.msra.mxu0 0
        %2611 = vmatpush.bf16.msra.mxu0 0
        %2612 = vmatpush.bf16.msra.mxu0 0
        %2613 = vmatpush.bf16.msra.mxu0 0
        %2614 = vmatpush.bf16.msra.mxu0 0
        %2615 = vmatpush.bf16.msra.mxu0 0
        %2616 = vmatpush.bf16.msra.mxu0 %v2604
        %2617 = vmatpush.bf16.msra.mxu0 %v2603
        %2618 = vmatmul.bf16.gmra.mxu0 %v2608
        %v2619 = vpop.f32.mrf.mxu0
        %v2620 = vadd.f32 %v2591, %v2619
        %v2621 = vpop.f32.mrf.mxu0
        %v2622 = vadd.f32 %v2593, %v2621
        %2623 = vdwg.mxu0
        %v2624 = vrot.slane %v2517, 1
        %vm2626 = vcmask 1046528
        %v2627 = vsel %vm2626, %v2624, 0.0
        %v2628 = vpack.c.bf16 %v2627, 0.0
        %v2633 = vunpack.c.l.b16 %v2528
        %v2634 = vunpack.c.l.b16 %v2529
        %v2635 = vunpack.c.l.b16 %v2530
        %v2636 = vunpack.c.l.b16 %v2531
        %v2637 = vpack.c.b16 %v2634, %v2633
        %v2638 = vpack.c.b16 %v2636, %v2635
        %v2642 = vsel %vm1779, %v2628, 0
        %2644 = vmatpush.bf16.msra.mxu0 0
        %2645 = vmatpush.bf16.msra.mxu0 0
        %2646 = vmatpush.bf16.msra.mxu0 0
        %2647 = vmatpush.bf16.msra.mxu0 0
        %2648 = vmatpush.bf16.msra.mxu0 0
        %2649 = vmatpush.bf16.msra.mxu0 0
        %2650 = vmatpush.bf16.msra.mxu0 %v2638
        %2651 = vmatpush.bf16.msra.mxu0 %v2637
        %2652 = vmatmul.bf16.gmra.mxu0 %v2642
        %v2653 = vpop.f32.mrf.mxu0
        %v2654 = vadd.f32 0.0, %v2653
        %v2655 = vpop.f32.mrf.mxu0
        %v2656 = vadd.f32 0.0, %v2655
        %2657 = vdwg.mxu0
        %v2658 = vadd.f32 %v2620, %v2654
        %v2659 = vadd.f32 %v2622, %v2656
        %v2661 = vrot.slane %v2516, 7
        %v2663 = vsel %vm2562, 0.0, %v2661
        %v2665 = vrot.slane %v2518, 7
        %v2667 = vsel %vm2562, 0.0, %v2665
        %v2668 = vpack.c.bf16 %v2667, %v2663
        %v2673 = vunpack.c.l.b16 %v2532
        %v2674 = vunpack.c.l.b16 %v2533
        %v2675 = vunpack.c.l.b16 %v2534
        %v2676 = vunpack.c.l.b16 %v2535
        %v2677 = vpack.c.b16 %v2674, %v2673
        %v2678 = vpack.c.b16 %v2676, %v2675
        %v2682 = vsel %vm1779, %v2668, 0
        %2684 = vmatpush.bf16.msra.mxu0 0
        %2685 = vmatpush.bf16.msra.mxu0 0
        %2686 = vmatpush.bf16.msra.mxu0 0
        %2687 = vmatpush.bf16.msra.mxu0 0
        %2688 = vmatpush.bf16.msra.mxu0 0
        %2689 = vmatpush.bf16.msra.mxu0 0
        %2690 = vmatpush.bf16.msra.mxu0 %v2678
        %2691 = vmatpush.bf16.msra.mxu0 %v2677
        %2692 = vmatmul.bf16.gmra.mxu0 %v2682
        %v2693 = vpop.f32.mrf.mxu0
        %v2694 = vadd.f32 0.0, %v2693
        %v2695 = vpop.f32.mrf.mxu0
        %v2696 = vadd.f32 0.0, %v2695
        %2697 = vdwg.mxu0
        %v2698 = vadd.f32 %v2658, %v2694
        %v2699 = vadd.f32 %v2659, %v2696
        %v2700 = vpack.c.bf16 %v2518, %v2516
        %v2705 = vunpack.c.l.b16 %v2536
        %v2706 = vunpack.c.l.b16 %v2537
        %v2707 = vunpack.c.l.b16 %v2538
        %v2708 = vunpack.c.l.b16 %v2539
        %v2709 = vpack.c.b16 %v2706, %v2705
        %v2710 = vpack.c.b16 %v2708, %v2707
        %v2714 = vsel %vm1779, %v2700, 0
        %2716 = vmatpush.bf16.msra.mxu0 0
        %2717 = vmatpush.bf16.msra.mxu0 0
        %2718 = vmatpush.bf16.msra.mxu0 0
        %2719 = vmatpush.bf16.msra.mxu0 0
        %2720 = vmatpush.bf16.msra.mxu0 0
        %2721 = vmatpush.bf16.msra.mxu0 0
        %2722 = vmatpush.bf16.msra.mxu0 %v2710
        %2723 = vmatpush.bf16.msra.mxu0 %v2709
        %2724 = vmatmul.bf16.gmra.mxu0 %v2714
        %v2725 = vpop.f32.mrf.mxu0
        %v2726 = vadd.f32 0.0, %v2725
        %v2727 = vpop.f32.mrf.mxu0
        %v2728 = vadd.f32 0.0, %v2727
        %2729 = vdwg.mxu0
        %v2730 = vadd.f32 %v2698, %v2726
        %v2731 = vadd.f32 %v2699, %v2728
        %v2732 = vrot.slane %v2516, 1
        %v2734 = vsel %vm2626, %v2732, 0.0
        %v2735 = vrot.slane %v2518, 1
        %v2737 = vsel %vm2626, %v2735, 0.0
        %v2738 = vpack.c.bf16 %v2737, %v2734
        %v2743 = vunpack.c.l.b16 %v2540
        %v2744 = vunpack.c.l.b16 %v2541
        %v2745 = vunpack.c.l.b16 %v2542
        %v2746 = vunpack.c.l.b16 %v2543
        %v2747 = vpack.c.b16 %v2744, %v2743
        %v2748 = vpack.c.b16 %v2746, %v2745
        %v2752 = vsel %vm1779, %v2738, 0
        %2754 = vmatpush.bf16.msra.mxu0 0
        %2755 = vmatpush.bf16.msra.mxu0 0
        %2756 = vmatpush.bf16.msra.mxu0 0
        %2757 = vmatpush.bf16.msra.mxu0 0
        %2758 = vmatpush.bf16.msra.mxu0 0
        %2759 = vmatpush.bf16.msra.mxu0 0
        %2760 = vmatpush.bf16.msra.mxu0 %v2748
        %2761 = vmatpush.bf16.msra.mxu0 %v2747
        %2762 = vmatmul.bf16.gmra.mxu0 %v2752
        %v2763 = vpop.f32.mrf.mxu0
        %v2764 = vadd.f32 0.0, %v2763
        %v2765 = vpop.f32.mrf.mxu0
        %v2766 = vadd.f32 0.0, %v2765
        %2767 = vdwg.mxu0
        %v2768 = vadd.f32 %v2730, %v2764
        %v2769 = vadd.f32 %v2731, %v2766
        %v2771 = vrot.slane %v2519, 7
        %v2773 = vsel %vm2562, 0.0, %v2771
        %v2774 = vpack.c.bf16 %v2773, %v2563
        %v2779 = vunpack.c.l.b16 %v2544
        %v2780 = vunpack.c.l.b16 %v2545
        %v2781 = vunpack.c.l.b16 %v2546
        %v2782 = vunpack.c.l.b16 %v2547
        %v2783 = vpack.c.b16 %v2780, %v2779
        %v2784 = vpack.c.b16 %v2782, %v2781
        %v2788 = vsel %vm1779, %v2774, 0
        %2790 = vmatpush.bf16.msra.mxu0 0
        %2791 = vmatpush.bf16.msra.mxu0 0
        %2792 = vmatpush.bf16.msra.mxu0 0
        %2793 = vmatpush.bf16.msra.mxu0 0
        %2794 = vmatpush.bf16.msra.mxu0 0
        %2795 = vmatpush.bf16.msra.mxu0 0
        %2796 = vmatpush.bf16.msra.mxu0 %v2784
        %2797 = vmatpush.bf16.msra.mxu0 %v2783
        %2798 = vmatmul.bf16.gmra.mxu0 %v2788
        %v2799 = vpop.f32.mrf.mxu0
        %v2800 = vadd.f32 0.0, %v2799
        %v2801 = vpop.f32.mrf.mxu0
        %v2802 = vadd.f32 0.0, %v2801
        %2803 = vdwg.mxu0
        %v2804 = vadd.f32 %v2768, %v2800
        %v2805 = vadd.f32 %v2769, %v2802
        %v2806 = vpack.c.bf16 %v2519, %v2517
        %v2811 = vunpack.c.l.b16 %v2548
        %v2812 = vunpack.c.l.b16 %v2549
        %v2813 = vunpack.c.l.b16 %v2550
        %v2814 = vunpack.c.l.b16 %v2551
        %v2815 = vpack.c.b16 %v2812, %v2811
        %v2816 = vpack.c.b16 %v2814, %v2813
        %v2820 = vsel %vm1779, %v2806, 0
        %2822 = vmatpush.bf16.msra.mxu0 0
        %2823 = vmatpush.bf16.msra.mxu0 0
        %2824 = vmatpush.bf16.msra.mxu0 0
        %2825 = vmatpush.bf16.msra.mxu0 0
        %2826 = vmatpush.bf16.msra.mxu0 0
        %2827 = vmatpush.bf16.msra.mxu0 0
        %2828 = vmatpush.bf16.msra.mxu0 %v2816
        %2829 = vmatpush.bf16.msra.mxu0 %v2815
        %2830 = vmatmul.bf16.gmra.mxu0 %v2820
        %v2831 = vpop.f32.mrf.mxu0
        %v2832 = vadd.f32 0.0, %v2831
        %v2833 = vpop.f32.mrf.mxu0
        %v2834 = vadd.f32 0.0, %v2833
        %2835 = vdwg.mxu0
        %v2836 = vadd.f32 %v2804, %v2832
        %v2837 = vadd.f32 %v2805, %v2834
        %v2838 = vrot.slane %v2519, 1
        %v2840 = vsel %vm2626, %v2838, 0.0
        %v2841 = vpack.c.bf16 %v2840, %v2627
        %v2846 = vunpack.c.l.b16 %v2552
        %v2847 = vunpack.c.l.b16 %v2553
        %v2848 = vunpack.c.l.b16 %v2554
        %v2849 = vunpack.c.l.b16 %v2555
        %v2850 = vpack.c.b16 %v2847, %v2846
        %v2851 = vpack.c.b16 %v2849, %v2848
        %v2855 = vsel %vm1779, %v2841, 0
        %2857 = vmatpush.bf16.msra.mxu0 0
        %2858 = vmatpush.bf16.msra.mxu0 0
        %2859 = vmatpush.bf16.msra.mxu0 0
        %2860 = vmatpush.bf16.msra.mxu0 0
        %2861 = vmatpush.bf16.msra.mxu0 0
        %2862 = vmatpush.bf16.msra.mxu0 0
        %2863 = vmatpush.bf16.msra.mxu0 %v2851
        %2864 = vmatpush.bf16.msra.mxu0 %v2850
        %2865 = vmatmul.bf16.gmra.mxu0 %v2855
        %v2866 = vpop.f32.mrf.mxu0
        %v2867 = vadd.f32 0.0, %v2866
        %v2868 = vpop.f32.mrf.mxu0
        %v2869 = vadd.f32 0.0, %v2868
        %2870 = vdwg.mxu0
        %v2871 = vadd.f32 %v2836, %v2867
        %v2872 = vadd.f32 %v2837, %v2869
        %v2874 = vperm.slane %v2556, 0
        %v2876 = vadd.f32 %v2871, %v2874
        %v2877 = vadd.f32 %v2872, %v2874
        %vm2878 = vcmask 523264
        %v2879 = vsel %vm2878, %v2876, 0.0
        %2880 = vadd.xlane.f32.xlu0 %v2879
        %v2881 = vpop.xlane.xlu0 %2880
        %v2882 = vsel %vm2878, %v2877, 0.0
        %2883 = vadd.xlane.f32.xlu0 %v2882
        %v2884 = vpop.xlane.xlu0 %2883
        %v2885 = vrcp.pop 64.0
        %v2886 = vmul.f32 64.0, %v2885
        %v2887 = vsub.f32 1.0, %v2886
        %v2888 = vmul.f32 %v2885, %v2887
        %v2889 = vadd.f32 %v2885, %v2888
        %vm2890 = vweird.f32 %v2885
        %v2891 = vsel %vm2890, %v2885, %v2889
        %v2892 = vmul.f32 %v2881, %v2891
        %v2893 = vmul.f32 %v2884, %v2891
        %v2894 = vsub.f32 %v2876, %v2892
        %v2895 = vsub.f32 %v2877, %v2893
        %v2896 = vmul.f32 %v2894, %v2894
        %v2897 = vmul.f32 %v2895, %v2895
        %v2898 = vsel %vm2878, %v2896, 0.0
        %2899 = vadd.xlane.f32.xlu0 %v2898
        %v2900 = vpop.xlane.xlu0 %2899
        %v2901 = vsel %vm2878, %v2897, 0.0
        %2902 = vadd.xlane.f32.xlu0 %v2901
        %v2903 = vpop.xlane.xlu0 %2902
        %v2904 = vmul.f32 %v2900, %v2891
        %v2905 = vmul.f32 %v2903, %v2891
        %v2906 = vadd.f32 %v2904, 1e-06
        %v2907 = vadd.f32 %v2905, 1e-06
        %v2908 = vrsqrt.pop %v2906
        %v2909 = vmul.f32 %v2908, %v2906
        %v2910 = vmul.f32 %v2909, %v2908
        %v2911 = vmul.f32 0.5, %v2910
        %v2912 = vsub.f32 1.5, %v2911
        %v2913 = vmul.f32 %v2908, %v2912
        %vm2914 = vweird.f32 %v2906
        %vm2915 = vweird.f32 %v2908
        %vm2916 = vmor %vm2914, %vm2915
        %v2917 = vsel %vm2916, %v2908, %v2913
        %v2918 = vrsqrt.pop %v2907
        %v2919 = vmul.f32 %v2918, %v2907
        %v2920 = vmul.f32 %v2919, %v2918
        %v2921 = vmul.f32 0.5, %v2920
        %v2922 = vsub.f32 1.5, %v2921
        %v2923 = vmul.f32 %v2918, %v2922
        %vm2924 = vweird.f32 %v2907
        %vm2925 = vweird.f32 %v2918
        %vm2926 = vmor %vm2924, %vm2925
        %v2927 = vsel %vm2926, %v2918, %v2923
        %v2928 = vmul.f32 %v2894, %v2917
        %v2929 = vmul.f32 %v2895, %v2927
        %v2931 = vperm.slane %v2557, 0
        %v2933 = vmul.f32 %v2928, %v2931
        %v2934 = vmul.f32 %v2929, %v2931
        %v2936 = vperm.slane %v2558, 0
        %v2938 = vadd.f32 %v2933, %v2936
        %v2939 = vadd.f32 %v2934, %v2936
        %v2940 = vld [vmem:[%s37] sm:$0x1]
        %v2941 = vld [vmem:[%s39] sm:$0x1]
        %v2942 = vld [vmem:[%s41] sm:$0xff]
        %v2943 = vld [vmem:[%s41 + $0x8] sm:$0xff]
        %v2944 = vld [vmem:[%s41 + $0x10] sm:$0xff]
        %v2945 = vld [vmem:[%s41 + $0x18] sm:$0xff]
        %v2946 = vld [vmem:[%s41 + $0x20] sm:$0xff]
        %v2947 = vld [vmem:[%s41 + $0x28] sm:$0xff]
        %v2948 = vld [vmem:[%s41 + $0x30] sm:$0xff]
        %v2949 = vld [vmem:[%s41 + $0x38] sm:$0xff]
        %v2950 = vld [vmem:[%s43] sm:$0x3]
        %v2951 = vld [vmem:[%s45] sm:$0xf]
        %v2952 = vld [vmem:[%s45 + $0x4] sm:$0xf]
        %v2953 = vld [vmem:[%s45 + $0x8] sm:$0xf]
        %v2954 = vld [vmem:[%s45 + $0xc] sm:$0xf]
        %v2955 = vld [vmem:[%s45 + $0x10] sm:$0xf]
        %v2956 = vld [vmem:[%s45 + $0x14] sm:$0xf]
        %v2957 = vld [vmem:[%s45 + $0x18] sm:$0xf]
        %v2958 = vld [vmem:[%s45 + $0x1c] sm:$0xf]
        %v2959 = vld [vmem:[%s47] sm:$0x1]
        %v2960 = vld [vmem:[%s49] sm:$0x1]
        %v2961 = vld [vmem:[#allocation2] sm:$0x1]
        %v2962 = vld [vmem:[%s53] sm:$0xff]
        %v2963 = vld [vmem:[%s53 + $0x8] sm:$0xff]
        %v2964 = vld [vmem:[%s53 + $0x10] sm:$0xff]
        %v2965 = vld [vmem:[%s53 + $0x18] sm:$0xff]
        %v2966 = vld [vmem:[%s53 + $0x20] sm:$0xff]
        %v2967 = vld [vmem:[%s53 + $0x28] sm:$0xff]
        %v2968 = vld [vmem:[%s53 + $0x30] sm:$0xff]
        %v2969 = vld [vmem:[%s53 + $0x38] sm:$0xff]
        %v2970 = vld [vmem:[%s55] sm:$0x3]
        %v2971 = vld [vmem:[%s57] sm:$0xf]
        %v2972 = vld [vmem:[%s57 + $0x4] sm:$0xf]
        %v2973 = vld [vmem:[%s57 + $0x8] sm:$0xf]
        %v2974 = vld [vmem:[%s57 + $0xc] sm:$0xf]
        %v2975 = vld [vmem:[%s57 + $0x10] sm:$0xf]
        %v2976 = vld [vmem:[%s57 + $0x14] sm:$0xf]
        %v2977 = vld [vmem:[%s57 + $0x18] sm:$0xf]
        %v2978 = vld [vmem:[%s57 + $0x1c] sm:$0xf]
        %v2979 = vld [vmem:[%s57 + $0x20] sm:$0xf]
        %v2980 = vld [vmem:[%s57 + $0x24] sm:$0xf]
        %v2981 = vld [vmem:[%s57 + $0x28] sm:$0xf]
        %v2982 = vld [vmem:[%s57 + $0x2c] sm:$0xf]
        %v2983 = vld [vmem:[%s57 + $0x30] sm:$0xf]
        %v2984 = vld [vmem:[%s57 + $0x34] sm:$0xf]
        %v2985 = vld [vmem:[%s57 + $0x38] sm:$0xf]
        %v2986 = vld [vmem:[%s57 + $0x3c] sm:$0xf]
        %v2987 = vld [vmem:[%s57 + $0x40] sm:$0xf]
        %v2988 = vld [vmem:[%s57 + $0x44] sm:$0xf]
        %v2989 = vld [vmem:[%s57 + $0x48] sm:$0xf]
        %v2990 = vld [vmem:[%s57 + $0x4c] sm:$0xf]
        %v2991 = vld [vmem:[%s57 + $0x50] sm:$0xf]
        %v2992 = vld [vmem:[%s57 + $0x54] sm:$0xf]
        %v2993 = vld [vmem:[%s57 + $0x58] sm:$0xf]
        %v2994 = vld [vmem:[%s57 + $0x5c] sm:$0xf]
        %v2995 = vld [vmem:[%s57 + $0x60] sm:$0xf]
        %v2996 = vld [vmem:[%s57 + $0x64] sm:$0xf]
        %v2997 = vld [vmem:[%s57 + $0x68] sm:$0xf]
        %v2998 = vld [vmem:[%s57 + $0x6c] sm:$0xf]
        %v2999 = vld [vmem:[%s57 + $0x70] sm:$0xf]
        %v3000 = vld [vmem:[%s57 + $0x74] sm:$0xf]
        %v3001 = vld [vmem:[%s57 + $0x78] sm:$0xf]
        %v3002 = vld [vmem:[%s57 + $0x7c] sm:$0xf]
        %v3003 = vld [vmem:[#allocation5] sm:$0x1]
        %v3004 = vsel %vm2878, %v2938, 0.0
        %3005 = vadd.xlane.f32.xlu0 %v3004
        %v3006 = vpop.xlane.xlu0 %3005
        %v3007 = vsel %vm2878, %v2939, 0.0
        %3008 = vadd.xlane.f32.xlu0 %v3007
        %v3009 = vpop.xlane.xlu0 %3008
        %v3010 = vmul.f32 %v3006, %v2891
        %v3011 = vmul.f32 %v3009, %v2891
        %v3012 = vsub.f32 %v2938, %v3010
        %v3013 = vsub.f32 %v2939, %v3011
        %v3014 = vmul.f32 %v3012, %v3012
        %v3015 = vmul.f32 %v3013, %v3013
        %v3016 = vsel %vm2878, %v3014, 0.0
        %3017 = vadd.xlane.f32.xlu0 %v3016
        %v3018 = vpop.xlane.xlu0 %3017
        %v3019 = vsel %vm2878, %v3015, 0.0
        %3020 = vadd.xlane.f32.xlu0 %v3019
        %v3021 = vpop.xlane.xlu0 %3020
        %v3022 = vmul.f32 %v3018, %v2891
        %v3023 = vmul.f32 %v3021, %v2891
        %v3024 = vadd.f32 %v3022, 1e-06
        %v3025 = vadd.f32 %v3023, 1e-06
        %v3026 = vrsqrt.pop %v3024
        %v3027 = vmul.f32 %v3026, %v3024
        %v3028 = vmul.f32 %v3027, %v3026
        %v3029 = vmul.f32 0.5, %v3028
        %v3030 = vsub.f32 1.5, %v3029
        %v3031 = vmul.f32 %v3026, %v3030
        %vm3032 = vweird.f32 %v3024
        %vm3033 = vweird.f32 %v3026
        %vm3034 = vmor %vm3032, %vm3033
        %v3035 = vsel %vm3034, %v3026, %v3031
        %v3036 = vrsqrt.pop %v3025
        %v3037 = vmul.f32 %v3036, %v3025
        %v3038 = vmul.f32 %v3037, %v3036
        %v3039 = vmul.f32 0.5, %v3038
        %v3040 = vsub.f32 1.5, %v3039
        %v3041 = vmul.f32 %v3036, %v3040
        %vm3042 = vweird.f32 %v3025
        %vm3043 = vweird.f32 %v3036
        %vm3044 = vmor %vm3042, %vm3043
        %v3045 = vsel %vm3044, %v3036, %v3041
        %v3046 = vmul.f32 %v3012, %v3035
        %v3047 = vmul.f32 %v3013, %v3045
        %v3049 = vperm.slane %v2940, 0
        %v3051 = vmul.f32 %v3046, %v3049
        %v3052 = vmul.f32 %v3047, %v3049
        %v3054 = vperm.slane %v2941, 0
        %v3056 = vadd.f32 %v3051, %v3054
        %v3057 = vadd.f32 %v3052, %v3054
        %v3058 = vpack.c.bf16 %v3057, %v3056
        %v3060 = vperm.slane %v2950, 0
        %v3061 = vperm.slane %v2950, 1
        %v3072 = vunpack.c.l.b16 %v2942
        %v3073 = vunpack.c.h.b16 %v2942
        %v3074 = vunpack.c.l.b16 %v2943
        %v3075 = vunpack.c.h.b16 %v2943
        %v3076 = vunpack.c.l.b16 %v2944
        %v3077 = vunpack.c.h.b16 %v2944
        %v3078 = vunpack.c.l.b16 %v2945
        %v3079 = vunpack.c.h.b16 %v2945
        %v3080 = vunpack.c.l.b16 %v2946
        %v3081 = vunpack.c.h.b16 %v2946
        %v3082 = vunpack.c.l.b16 %v2947
        %v3083 = vunpack.c.h.b16 %v2947
        %v3084 = vunpack.c.l.b16 %v2948
        %v3085 = vunpack.c.h.b16 %v2948
        %v3086 = vunpack.c.l.b16 %v2949
        %v3087 = vunpack.c.h.b16 %v2949
        %v3088 = vpack.c.b16 %v3074, %v3072
        %v3089 = vpack.c.b16 %v3075, %v3073
        %v3090 = vpack.c.b16 %v3078, %v3076
        %v3091 = vpack.c.b16 %v3079, %v3077
        %v3092 = vpack.c.b16 %v3082, %v3080
        %v3093 = vpack.c.b16 %v3083, %v3081
        %v3094 = vpack.c.b16 %v3086, %v3084
        %v3095 = vpack.c.b16 %v3087, %v3085
        %v3105 = vsel %vm2878, %v3058, 0
        %3107 = vmatpush.bf16.msra.mxu0 0
        %3108 = vmatpush.bf16.msra.mxu0 0
        %3109 = vmatpush.bf16.msra.mxu0 0
        %3110 = vmatpush.bf16.msra.mxu0 0
        %3111 = vmatpush.bf16.msra.mxu0 %v3094
        %3112 = vmatpush.bf16.msra.mxu0 %v3092
        %3113 = vmatpush.bf16.msra.mxu0 %v3090
        %3114 = vmatpush.bf16.msra.mxu0 %v3088
        %3115 = vmatmul.bf16.gmra.mxu0 %v3105
        %v3116 = vpop.f32.mrf.mxu0
        %v3117 = vadd.f32 %v3060, %v3116
        %v3118 = vpop.f32.mrf.mxu0
        %v3119 = vadd.f32 %v3060, %v3118
        %3120 = vdwg.mxu0
        %3121 = vmatpush.bf16.msra.mxu0 0
        %3122 = vmatpush.bf16.msra.mxu0 0
        %3123 = vmatpush.bf16.msra.mxu0 0
        %3124 = vmatpush.bf16.msra.mxu0 0
        %3125 = vmatpush.bf16.msra.mxu0 %v3095
        %3126 = vmatpush.bf16.msra.mxu0 %v3093
        %3127 = vmatpush.bf16.msra.mxu0 %v3091
        %3128 = vmatpush.bf16.msra.mxu0 %v3089
        %3129 = vmatmul.bf16.gmra.mxu0 %v3105
        %v3130 = vpop.f32.mrf.mxu0
        %v3131 = vadd.f32 %v3061, %v3130
        %v3132 = vpop.f32.mrf.mxu0
        %v3133 = vadd.f32 %v3061, %v3132
        %3134 = vdwg.mxu0
        %v3135 = vpack.c.bf16 %v3131, %v3117
        %v3136 = vpack.c.bf16 %v3133, %v3119
        %v3139 = vunpack.c.l.b16 %v3135
        %v3140 = vunpack.c.l.b16 %v3136
        %v3141 = vpack.c.b16 %v3140, %v3139
        %3142 = vrot.lane.b32.xlu0 %v3141, 64
        %v3143 = vpop.permute.xlu0 %3142
        %v3145 = vsel %vm1949, %v3141, 0
        %v3148 = vsel %vm1949, %v3143, 0
        %3150 = vmatpush.bf16.xpose.msra.mxu0 0
        %3151 = vmatpush.bf16.xpose.msra.mxu0 0
        %3152 = vmatpush.bf16.xpose.msra.mxu0 0
        %3153 = vmatpush.bf16.xpose.msra.mxu0 0
        %3154 = vmatpush.bf16.xpose.msra.mxu0 0
        %3155 = vmatpush.bf16.xpose.msra.mxu0 0
        %3156 = vmatpush.bf16.xpose.msra.mxu0 0
        %3157 = vmatpush.bf16.xpose.msra.mxu0 %v3148
        %3158 = vmatmul.bf16.gmra.mxu0 %v3145
        %v3159 = vpop.f32.mrf.mxu0
        %v3160 = vadd.f32 0.0, %v3159
        %v3161 = vpop.f32.mrf.mxu0
        %v3162 = vadd.f32 0.0, %v3161
        %3163 = vdwg.mxu0
        %v3164 = vmul.f32 %v3160, 0.25
        %v3165 = vmul.f32 %v3162, 0.25
        %v3166 = vsel %vm1949, %v3164, -inf
        %3167 = vmax.xlane.f32.xlu0 %v3166
        %v3168 = vpop.xlane.xlu0 %3167
        %v3169 = vsel %vm1949, %v3165, -inf
        %3170 = vmax.xlane.f32.xlu0 %v3169
        %v3171 = vpop.xlane.xlu0 %3170
        %v3172 = vsub.f32 %v3164, %v3168
        %v3173 = vsub.f32 %v3165, %v3171
        %v3174 = vmul.f32 %v3172, 1.442695
        %v3175 = vpow.pop %v3174
        %v3176 = vmul.f32 %v3173, 1.442695
        %v3177 = vpow.pop %v3176
        %v3178 = vsel %vm1949, %v3175, 0.0
        %3179 = vadd.xlane.f32.xlu0 %v3178
        %v3180 = vpop.xlane.xlu0 %3179
        %v3181 = vsel %vm1949, %v3177, 0.0
        %3182 = vadd.xlane.f32.xlu0 %v3181
        %v3183 = vpop.xlane.xlu0 %3182
        %v3184 = vrcp.pop %v3180
        %v3185 = vrcp.pop %v3183
        %v3186 = vmul.f32 %v3175, %v3184
        %v3187 = vmul.f32 %v3177, %v3185
        %v3188 = vpack.c.bf16 %v3187, %v3186
        %v3189 = vunpack.c.h.b16 %v3135
        %v3190 = vunpack.c.h.b16 %v3136
        %v3191 = vpack.c.b16 %v3190, %v3189
        %v3194 = vsel %vm1949, %v3188, 0
        %3196 = vmatpush.bf16.msra.mxu0 0
        %3197 = vmatpush.bf16.msra.mxu0 0
        %3198 = vmatpush.bf16.msra.mxu0 0
        %3199 = vmatpush.bf16.msra.mxu0 0
        %3200 = vmatpush.bf16.msra.mxu0 0
        %3201 = vmatpush.bf16.msra.mxu0 0
        %3202 = vmatpush.bf16.msra.mxu0 0
        %3203 = vmatpush.bf16.msra.mxu0 %v3191
        %3204 = vmatmul.bf16.gmra.mxu0 %v3194
        %v3205 = vpop.f32.mrf.mxu0
        %v3206 = vadd.f32 0.0, %v3205
        %v3207 = vpop.f32.mrf.mxu0
        %v3208 = vadd.f32 0.0, %v3207
        %3209 = vdwg.mxu0
        %3210 = vrot.lane.b32.xlu0 %v3141, 112
        %v3211 = vpop.permute.xlu0 %3210
        %3212 = vrot.lane.b32.xlu0 %v3141, 48
        %v3213 = vpop.permute.xlu0 %3212
        %v3215 = vsel %vm1949, %v3211, 0
        %v3218 = vsel %vm1949, %v3213, 0
        %3220 = vmatpush.bf16.xpose.msra.mxu0 0
        %3221 = vmatpush.bf16.xpose.msra.mxu0 0
        %3222 = vmatpush.bf16.xpose.msra.mxu0 0
        %3223 = vmatpush.bf16.xpose.msra.mxu0 0
        %3224 = vmatpush.bf16.xpose.msra.mxu0 0
        %3225 = vmatpush.bf16.xpose.msra.mxu0 0
        %3226 = vmatpush.bf16.xpose.msra.mxu0 0
        %3227 = vmatpush.bf16.xpose.msra.mxu0 %v3218
        %3228 = vmatmul.bf16.gmra.mxu0 %v3215
        %v3229 = vpop.f32.mrf.mxu0
        %v3230 = vadd.f32 0.0, %v3229
        %v3231 = vpop.f32.mrf.mxu0
        %v3232 = vadd.f32 0.0, %v3231
        %3233 = vdwg.mxu0
        %v3234 = vmul.f32 %v3230, 0.25
        %v3235 = vmul.f32 %v3232, 0.25
        %v3236 = vsel %vm1949, %v3234, -inf
        %3237 = vmax.xlane.f32.xlu0 %v3236
        %v3238 = vpop.xlane.xlu0 %3237
        %v3239 = vsel %vm1949, %v3235, -inf
        %3240 = vmax.xlane.f32.xlu0 %v3239
        %v3241 = vpop.xlane.xlu0 %3240
        %v3242 = vsub.f32 %v3234, %v3238
        %v3243 = vsub.f32 %v3235, %v3241
        %v3244 = vmul.f32 %v3242, 1.442695
        %v3245 = vpow.pop %v3244
        %v3246 = vmul.f32 %v3243, 1.442695
        %v3247 = vpow.pop %v3246
        %v3248 = vsel %vm1949, %v3245, 0.0
        %3249 = vadd.xlane.f32.xlu0 %v3248
        %v3250 = vpop.xlane.xlu0 %3249
        %v3251 = vsel %vm1949, %v3247, 0.0
        %3252 = vadd.xlane.f32.xlu0 %v3251
        %v3253 = vpop.xlane.xlu0 %3252
        %v3254 = vrcp.pop %v3250
        %v3255 = vrcp.pop %v3253
        %v3256 = vmul.f32 %v3245, %v3254
        %v3257 = vmul.f32 %v3247, %v3255
        %v3258 = vpack.c.bf16 %v3257, %v3256
        %3259 = vrot.lane.b32.xlu0 %v3191, 112
        %v3260 = vpop.permute.xlu0 %3259
        %v3263 = vsel %vm1949, %v3258, 0
        %3265 = vmatpush.bf16.msra.mxu0 0
        %3266 = vmatpush.bf16.msra.mxu0 0
        %3267 = vmatpush.bf16.msra.mxu0 0
        %3268 = vmatpush.bf16.msra.mxu0 0
        %3269 = vmatpush.bf16.msra.mxu0 0
        %3270 = vmatpush.bf16.msra.mxu0 0
        %3271 = vmatpush.bf16.msra.mxu0 0
        %3272 = vmatpush.bf16.msra.mxu0 %v3260
        %3273 = vmatmul.bf16.gmra.mxu0 %v3263
        %v3274 = vpop.f32.mrf.mxu0
        %v3275 = vadd.f32 0.0, %v3274
        %v3276 = vpop.f32.mrf.mxu0
        %v3277 = vadd.f32 0.0, %v3276
        %3278 = vdwg.mxu0
        %3279 = vrot.lane.b32.xlu0 %v3141, 96
        %v3280 = vpop.permute.xlu0 %3279
        %3281 = vrot.lane.b32.xlu0 %v3141, 32
        %v3282 = vpop.permute.xlu0 %3281
        %v3284 = vsel %vm1949, %v3280, 0
        %v3287 = vsel %vm1949, %v3282, 0
        %3289 = vmatpush.bf16.xpose.msra.mxu0 0
        %3290 = vmatpush.bf16.xpose.msra.mxu0 0
        %3291 = vmatpush.bf16.xpose.msra.mxu0 0
        %3292 = vmatpush.bf16.xpose.msra.mxu0 0
        %3293 = vmatpush.bf16.xpose.msra.mxu0 0
        %3294 = vmatpush.bf16.xpose.msra.mxu0 0
        %3295 = vmatpush.bf16.xpose.msra.mxu0 0
        %3296 = vmatpush.bf16.xpose.msra.mxu0 %v3287
        %3297 = vmatmul.bf16.gmra.mxu0 %v3284
        %v3298 = vpop.f32.mrf.mxu0
        %v3299 = vadd.f32 0.0, %v3298
        %v3300 = vpop.f32.mrf.mxu0
        %v3301 = vadd.f32 0.0, %v3300
        %3302 = vdwg.mxu0
        %v3303 = vmul.f32 %v3299, 0.25
        %v3304 = vmul.f32 %v3301, 0.25
        %v3305 = vsel %vm1949, %v3303, -inf
        %3306 = vmax.xlane.f32.xlu0 %v3305
        %v3307 = vpop.xlane.xlu0 %3306
        %v3308 = vsel %vm1949, %v3304, -inf
        %3309 = vmax.xlane.f32.xlu0 %v3308
        %v3310 = vpop.xlane.xlu0 %3309
        %v3311 = vsub.f32 %v3303, %v3307
        %v3312 = vsub.f32 %v3304, %v3310
        %v3313 = vmul.f32 %v3311, 1.442695
        %v3314 = vpow.pop %v3313
        %v3315 = vmul.f32 %v3312, 1.442695
        %v3316 = vpow.pop %v3315
        %v3317 = vsel %vm1949, %v3314, 0.0
        %3318 = vadd.xlane.f32.xlu0 %v3317
        %v3319 = vpop.xlane.xlu0 %3318
        %v3320 = vsel %vm1949, %v3316, 0.0
        %3321 = vadd.xlane.f32.xlu0 %v3320
        %v3322 = vpop.xlane.xlu0 %3321
        %v3323 = vrcp.pop %v3319
        %v3324 = vrcp.pop %v3322
        %v3325 = vmul.f32 %v3314, %v3323
        %v3326 = vmul.f32 %v3316, %v3324
        %v3327 = vpack.c.bf16 %v3326, %v3325
        %3328 = vrot.lane.b32.xlu0 %v3191, 96
        %v3329 = vpop.permute.xlu0 %3328
        %v3332 = vsel %vm1949, %v3327, 0
        %3334 = vmatpush.bf16.msra.mxu0 0
        %3335 = vmatpush.bf16.msra.mxu0 0
        %3336 = vmatpush.bf16.msra.mxu0 0
        %3337 = vmatpush.bf16.msra.mxu0 0
        %3338 = vmatpush.bf16.msra.mxu0 0
        %3339 = vmatpush.bf16.msra.mxu0 0
        %3340 = vmatpush.bf16.msra.mxu0 0
        %3341 = vmatpush.bf16.msra.mxu0 %v3329
        %3342 = vmatmul.bf16.gmra.mxu0 %v3332
        %v3343 = vpop.f32.mrf.mxu0
        %v3344 = vadd.f32 0.0, %v3343
        %v3345 = vpop.f32.mrf.mxu0
        %v3346 = vadd.f32 0.0, %v3345
        %3347 = vdwg.mxu0
        %3348 = vrot.lane.b32.xlu0 %v3141, 80
        %v3349 = vpop.permute.xlu0 %3348
        %3350 = vrot.lane.b32.xlu0 %v3141, 16
        %v3351 = vpop.permute.xlu0 %3350
        %v3353 = vsel %vm1949, %v3349, 0
        %v3356 = vsel %vm1949, %v3351, 0
        %3358 = vmatpush.bf16.xpose.msra.mxu0 0
        %3359 = vmatpush.bf16.xpose.msra.mxu0 0
        %3360 = vmatpush.bf16.xpose.msra.mxu0 0
        %3361 = vmatpush.bf16.xpose.msra.mxu0 0
        %3362 = vmatpush.bf16.xpose.msra.mxu0 0
        %3363 = vmatpush.bf16.xpose.msra.mxu0 0
        %3364 = vmatpush.bf16.xpose.msra.mxu0 0
        %3365 = vmatpush.bf16.xpose.msra.mxu0 %v3356
        %3366 = vmatmul.bf16.gmra.mxu0 %v3353
        %v3367 = vpop.f32.mrf.mxu0
        %v3368 = vadd.f32 0.0, %v3367
        %v3369 = vpop.f32.mrf.mxu0
        %v3370 = vadd.f32 0.0, %v3369
        %3371 = vdwg.mxu0
        %v3372 = vmul.f32 %v3368, 0.25
        %v3373 = vmul.f32 %v3370, 0.25
        %v3374 = vsel %vm1949, %v3372, -inf
        %3375 = vmax.xlane.f32.xlu0 %v3374
        %v3376 = vpop.xlane.xlu0 %3375
        %v3377 = vsel %vm1949, %v3373, -inf
        %3378 = vmax.xlane.f32.xlu0 %v3377
        %v3379 = vpop.xlane.xlu0 %3378
        %v3380 = vsub.f32 %v3372, %v3376
        %v3381 = vsub.f32 %v3373, %v3379
        %v3382 = vmul.f32 %v3380, 1.442695
        %v3383 = vpow.pop %v3382
        %v3384 = vmul.f32 %v3381, 1.442695
        %v3385 = vpow.pop %v3384
        %v3386 = vsel %vm1949, %v3383, 0.0
        %3387 = vadd.xlane.f32.xlu0 %v3386
        %v3388 = vpop.xlane.xlu0 %3387
        %v3389 = vsel %vm1949, %v3385, 0.0
        %3390 = vadd.xlane.f32.xlu0 %v3389
        %v3391 = vpop.xlane.xlu0 %3390
        %v3392 = vrcp.pop %v3388
        %v3393 = vrcp.pop %v3391
        %v3394 = vmul.f32 %v3383, %v3392
        %v3395 = vmul.f32 %v3385, %v3393
        %v3396 = vpack.c.bf16 %v3395, %v3394
        %3397 = vrot.lane.b32.xlu0 %v3191, 80
        %v3398 = vpop.permute.xlu0 %3397
        %v3401 = vsel %vm1949, %v3396, 0
        %3403 = vmatpush.bf16.msra.mxu0 0
        %3404 = vmatpush.bf16.msra.mxu0 0
        %3405 = vmatpush.bf16.msra.mxu0 0
        %3406 = vmatpush.bf16.msra.mxu0 0
        %3407 = vmatpush.bf16.msra.mxu0 0
        %3408 = vmatpush.bf16.msra.mxu0 0
        %3409 = vmatpush.bf16.msra.mxu0 0
        %3410 = vmatpush.bf16.msra.mxu0 %v3398
        %3411 = vmatmul.bf16.gmra.mxu0 %v3401
        %v3412 = vpop.f32.mrf.mxu0
        %v3413 = vadd.f32 0.0, %v3412
        %v3414 = vpop.f32.mrf.mxu0
        %v3415 = vadd.f32 0.0, %v3414
        %3416 = vdwg.mxu0
        %3419 = vrot.lane.b32.xlu0 %v3275, 16
        %v3420 = vpop.permute.xlu0 %3419
        %3421 = vrot.lane.b32.xlu0 %v3277, 16
        %v3422 = vpop.permute.xlu0 %3421
        %3427 = vrot.lane.b32.xlu0 %v3344, 32
        %v3428 = vpop.permute.xlu0 %3427
        %3429 = vrot.lane.b32.xlu0 %v3346, 32
        %v3430 = vpop.permute.xlu0 %3429
        %3435 = vrot.lane.b32.xlu0 %v3413, 48
        %v3436 = vpop.permute.xlu0 %3435
        %3437 = vrot.lane.b32.xlu0 %v3415, 48
        %v3438 = vpop.permute.xlu0 %3437
        %v3441 = vsel %vm1949, %v3206, %v3420
        %v3442 = vsel %vm1949, %v3208, %v3422
        %v3443 = vsel %vm1779, %v3441, %v3428
        %v3444 = vsel %vm1779, %v3442, %v3430
        %vm3445 = vcmask 392192
        %v3446 = vsel %vm3445, %v3443, %v3436
        %v3447 = vsel %vm3445, %v3444, %v3438
        %v3448 = vpack.c.bf16 %v3447, %v3446
        %v3457 = vunpack.c.l.b16 %v2951
        %v3458 = vunpack.c.l.b16 %v2952
        %v3459 = vunpack.c.l.b16 %v2953
        %v3460 = vunpack.c.l.b16 %v2954
        %v3461 = vunpack.c.l.b16 %v2955
        %v3462 = vunpack.c.l.b16 %v2956
        %v3463 = vunpack.c.l.b16 %v2957
        %v3464 = vunpack.c.l.b16 %v2958
        %v3465 = vpack.c.b16 %v3458, %v3457
        %v3466 = vpack.c.b16 %v3460, %v3459
        %v3467 = vpack.c.b16 %v3462, %v3461
        %v3468 = vpack.c.b16 %v3464, %v3463
        %v3474 = vsel %vm2878, %v3448, 0
        %3476 = vmatpush.bf16.msra.mxu0 0
        %3477 = vmatpush.bf16.msra.mxu0 0
        %3478 = vmatpush.bf16.msra.mxu0 0
        %3479 = vmatpush.bf16.msra.mxu0 0
        %3480 = vmatpush.bf16.msra.mxu0 %v3468
        %3481 = vmatpush.bf16.msra.mxu0 %v3467
        %3482 = vmatpush.bf16.msra.mxu0 %v3466
        %3483 = vmatpush.bf16.msra.mxu0 %v3465
        %3484 = vmatmul.bf16.gmra.mxu0 %v3474
        %v3485 = vpop.f32.mrf.mxu0
        %v3486 = vadd.f32 0.0, %v3485
        %v3487 = vpop.f32.mrf.mxu0
        %v3488 = vadd.f32 0.0, %v3487
        %3489 = vdwg.mxu0
        %v3490 = vadd.f32 %v2938, %v3486
        %v3491 = vadd.f32 %v2939, %v3488
        %v3493 = vperm.slane %v2959, 0
        %v3495 = vadd.f32 %v3490, %v3493
        %v3496 = vadd.f32 %v3491, %v3493
        %v3497 = vsel %vm2878, %v3495, 0.0
        %3498 = vadd.xlane.f32.xlu0 %v3497
        %v3499 = vpop.xlane.xlu0 %3498
        %v3500 = vsel %vm2878, %v3496, 0.0
        %3501 = vadd.xlane.f32.xlu0 %v3500
        %v3502 = vpop.xlane.xlu0 %3501
        %v3503 = vmul.f32 %v3499, %v2891
        %v3504 = vmul.f32 %v3502, %v2891
        %v3505 = vsub.f32 %v3495, %v3503
        %v3506 = vsub.f32 %v3496, %v3504
        %v3507 = vmul.f32 %v3505, %v3505
        %v3508 = vmul.f32 %v3506, %v3506
        %v3509 = vsel %vm2878, %v3507, 0.0
        %3510 = vadd.xlane.f32.xlu0 %v3509
        %v3511 = vpop.xlane.xlu0 %3510
        %v3512 = vsel %vm2878, %v3508, 0.0
        %3513 = vadd.xlane.f32.xlu0 %v3512
        %v3514 = vpop.xlane.xlu0 %3513
        %v3515 = vmul.f32 %v3511, %v2891
        %v3516 = vmul.f32 %v3514, %v2891
        %v3517 = vadd.f32 %v3515, 1e-06
        %v3518 = vadd.f32 %v3516, 1e-06
        %v3519 = vrsqrt.pop %v3517
        %v3520 = vmul.f32 %v3519, %v3517
        %v3521 = vmul.f32 %v3520, %v3519
        %v3522 = vmul.f32 0.5, %v3521
        %v3523 = vsub.f32 1.5, %v3522
        %v3524 = vmul.f32 %v3519, %v3523
        %vm3525 = vweird.f32 %v3517
        %vm3526 = vweird.f32 %v3519
        %vm3527 = vmor %vm3525, %vm3526
        %v3528 = vsel %vm3527, %v3519, %v3524
        %v3529 = vrsqrt.pop %v3518
        %v3530 = vmul.f32 %v3529, %v3518
        %v3531 = vmul.f32 %v3530, %v3529
        %v3532 = vmul.f32 0.5, %v3531
        %v3533 = vsub.f32 1.5, %v3532
        %v3534 = vmul.f32 %v3529, %v3533
        %vm3535 = vweird.f32 %v3518
        %vm3536 = vweird.f32 %v3529
        %vm3537 = vmor %vm3535, %vm3536
        %v3538 = vsel %vm3537, %v3529, %v3534
        %v3539 = vmul.f32 %v3505, %v3528
        %v3540 = vmul.f32 %v3506, %v3538
        %v3542 = vperm.slane %v2960, 0
        %v3544 = vmul.f32 %v3539, %v3542
        %v3545 = vmul.f32 %v3540, %v3542
        %v3547 = vperm.slane %v2961, 0
        %v3549 = vadd.f32 %v3544, %v3547
        %v3550 = vadd.f32 %v3545, %v3547
        %v3551 = vpack.c.bf16 %v3550, %v3549
        %v3553 = vperm.slane %v2970, 0
        %v3554 = vperm.slane %v2970, 1
        %v3565 = vunpack.c.l.b16 %v2962
        %v3566 = vunpack.c.h.b16 %v2962
        %v3567 = vunpack.c.l.b16 %v2963
        %v3568 = vunpack.c.h.b16 %v2963
        %v3569 = vunpack.c.l.b16 %v2964
        %v3570 = vunpack.c.h.b16 %v2964
        %v3571 = vunpack.c.l.b16 %v2965
        %v3572 = vunpack.c.h.b16 %v2965
        %v3573 = vunpack.c.l.b16 %v2966
        %v3574 = vunpack.c.h.b16 %v2966
        %v3575 = vunpack.c.l.b16 %v2967
        %v3576 = vunpack.c.h.b16 %v2967
        %v3577 = vunpack.c.l.b16 %v2968
        %v3578 = vunpack.c.h.b16 %v2968
        %v3579 = vunpack.c.l.b16 %v2969
        %v3580 = vunpack.c.h.b16 %v2969
        %v3581 = vpack.c.b16 %v3567, %v3565
        %v3582 = vpack.c.b16 %v3568, %v3566
        %v3583 = vpack.c.b16 %v3571, %v3569
        %v3584 = vpack.c.b16 %v3572, %v3570
        %v3585 = vpack.c.b16 %v3575, %v3573
        %v3586 = vpack.c.b16 %v3576, %v3574
        %v3587 = vpack.c.b16 %v3579, %v3577
        %v3588 = vpack.c.b16 %v3580, %v3578
        %v3598 = vsel %vm2878, %v3551, 0
        %3600 = vmatpush.bf16.msra.mxu0 0
        %3601 = vmatpush.bf16.msra.mxu0 0
        %3602 = vmatpush.bf16.msra.mxu0 0
        %3603 = vmatpush.bf16.msra.mxu0 0
        %3604 = vmatpush.bf16.msra.mxu0 %v3587
        %3605 = vmatpush.bf16.msra.mxu0 %v3585
        %3606 = vmatpush.bf16.msra.mxu0 %v3583
        %3607 = vmatpush.bf16.msra.mxu0 %v3581
        %3608 = vmatmul.bf16.gmra.mxu0 %v3598
        %v3609 = vpop.f32.mrf.mxu0
        %v3610 = vadd.f32 %v3553, %v3609
        %v3611 = vpop.f32.mrf.mxu0
        %v3612 = vadd.f32 %v3553, %v3611
        %3613 = vdwg.mxu0
        %3614 = vmatpush.bf16.msra.mxu0 0
        %3615 = vmatpush.bf16.msra.mxu0 0
        %3616 = vmatpush.bf16.msra.mxu0 0
        %3617 = vmatpush.bf16.msra.mxu0 0
        %3618 = vmatpush.bf16.msra.mxu0 %v3588
        %3619 = vmatpush.bf16.msra.mxu0 %v3586
        %3620 = vmatpush.bf16.msra.mxu0 %v3584
        %3621 = vmatpush.bf16.msra.mxu0 %v3582
        %3622 = vmatmul.bf16.gmra.mxu0 %v3598
        %v3623 = vpop.f32.mrf.mxu0
        %v3624 = vadd.f32 %v3554, %v3623
        %v3625 = vpop.f32.mrf.mxu0
        %v3626 = vadd.f32 %v3554, %v3625
        %3627 = vdwg.mxu0
        %v3628 = vmul.f32 %v3610, %v3610
        %v3629 = vmul.f32 %v3624, %v3624
        %v3630 = vmul.f32 %v3612, %v3612
        %v3631 = vmul.f32 %v3626, %v3626
        %v3632 = vmul.f32 %v3610, %v3628
        %v3633 = vmul.f32 %v3624, %v3629
        %v3634 = vmul.f32 %v3612, %v3630
        %v3635 = vmul.f32 %v3626, %v3631
        %v3636 = vmul.f32 %v3632, 0.044715
        %v3637 = vmul.f32 %v3633, 0.044715
        %v3638 = vmul.f32 %v3634, 0.044715
        %v3639 = vmul.f32 %v3635, 0.044715
        %v3640 = vadd.f32 %v3610, %v3636
        %v3641 = vadd.f32 %v3624, %v3637
        %v3642 = vadd.f32 %v3612, %v3638
        %v3643 = vadd.f32 %v3626, %v3639
        %v3644 = vmul.f32 %v3640, 0.7978846
        %v3645 = vmul.f32 %v3641, 0.7978846
        %v3646 = vmul.f32 %v3642, 0.7978846
        %v3647 = vmul.f32 %v3643, 0.7978846
        %v3648 = vtanh.pop %v3644
        %v3649 = vtanh.pop %v3645
        %v3650 = vtanh.pop %v3646
        %v3651 = vtanh.pop %v3647
        %v3652 = vadd.f32 %v3648, 1.0
        %v3653 = vadd.f32 %v3649, 1.0
        %v3654 = vadd.f32 %v3650, 1.0
        %v3655 = vadd.f32 %v3651, 1.0
        %v3656 = vmul.f32 %v3652, 0.5
        %v3657 = vmul.f32 %v3653, 0.5
        %v3658 = vmul.f32 %v3654, 0.5
        %v3659 = vmul.f32 %v3655, 0.5
        %v3660 = vmul.f32 %v3610, %v3656
        %v3661 = vmul.f32 %v3624, %v3657
        %v3662 = vmul.f32 %v3612, %v3658
        %v3663 = vmul.f32 %v3626, %v3659
        %v3664 = vpack.c.bf16 %v3662, %v3660
        %v3665 = vpack.c.bf16 %v3663, %v3661
        %v3698 = vunpack.c.l.b16 %v2971
        %v3699 = vunpack.c.l.b16 %v2972
        %v3700 = vunpack.c.l.b16 %v2973
        %v3701 = vunpack.c.l.b16 %v2974
        %v3702 = vunpack.c.l.b16 %v2975
        %v3703 = vunpack.c.l.b16 %v2976
        %v3704 = vunpack.c.l.b16 %v2977
        %v3705 = vunpack.c.l.b16 %v2978
        %v3706 = vunpack.c.l.b16 %v2979
        %v3707 = vunpack.c.l.b16 %v2980
        %v3708 = vunpack.c.l.b16 %v2981
        %v3709 = vunpack.c.l.b16 %v2982
        %v3710 = vunpack.c.l.b16 %v2983
        %v3711 = vunpack.c.l.b16 %v2984
        %v3712 = vunpack.c.l.b16 %v2985
        %v3713 = vunpack.c.l.b16 %v2986
        %v3714 = vunpack.c.l.b16 %v2987
        %v3715 = vunpack.c.l.b16 %v2988
        %v3716 = vunpack.c.l.b16 %v2989
        %v3717 = vunpack.c.l.b16 %v2990
        %v3718 = vunpack.c.l.b16 %v2991
        %v3719 = vunpack.c.l.b16 %v2992
        %v3720 = vunpack.c.l.b16 %v2993
        %v3721 = vunpack.c.l.b16 %v2994
        %v3722 = vunpack.c.l.b16 %v2995
        %v3723 = vunpack.c.l.b16 %v2996
        %v3724 = vunpack.c.l.b16 %v2997
        %v3725 = vunpack.c.l.b16 %v2998
        %v3726 = vunpack.c.l.b16 %v2999
        %v3727 = vunpack.c.l.b16 %v3000
        %v3728 = vunpack.c.l.b16 %v3001
        %v3729 = vunpack.c.l.b16 %v3002
        %v3730 = vpack.c.b16 %v3699, %v3698
        %v3731 = vpack.c.b16 %v3701, %v3700
        %v3732 = vpack.c.b16 %v3703, %v3702
        %v3733 = vpack.c.b16 %v3705, %v3704
        %v3734 = vpack.c.b16 %v3707, %v3706
        %v3735 = vpack.c.b16 %v3709, %v3708
        %v3736 = vpack.c.b16 %v3711, %v3710
        %v3737 = vpack.c.b16 %v3713, %v3712
        %v3738 = vpack.c.b16 %v3715, %v3714
        %v3739 = vpack.c.b16 %v3717, %v3716
        %v3740 = vpack.c.b16 %v3719, %v3718
        %v3741 = vpack.c.b16 %v3721, %v3720
        %v3742 = vpack.c.b16 %v3723, %v3722
        %v3743 = vpack.c.b16 %v3725, %v3724
        %v3744 = vpack.c.b16 %v3727, %v3726
        %v3745 = vpack.c.b16 %v3729, %v3728
        %3762 = vmatpush.bf16.msra.mxu0 %v3737
        %3763 = vmatpush.bf16.msra.mxu0 %v3736
        %3764 = vmatpush.bf16.msra.mxu0 %v3735
        %3765 = vmatpush.bf16.msra.mxu0 %v3734
        %3766 = vmatpush.bf16.msra.mxu0 %v3733
        %3767 = vmatpush.bf16.msra.mxu0 %v3732
        %3768 = vmatpush.bf16.msra.mxu0 %v3731
        %3769 = vmatpush.bf16.msra.mxu0 %v3730
        %3770 = vmatmul.bf16.gmra.mxu0 %v3664
        %v3771 = vpop.f32.mrf.mxu0
        %v3772 = vadd.f32 0.0, %v3771
        %v3773 = vpop.f32.mrf.mxu0
        %v3774 = vadd.f32 0.0, %v3773
        %3775 = vdwg.mxu0
        %3776 = vmatpush.bf16.msra.mxu0 %v3745
        %3777 = vmatpush.bf16.msra.mxu0 %v3744
        %3778 = vmatpush.bf16.msra.mxu0 %v3743
        %3779 = vmatpush.bf16.msra.mxu0 %v3742
        %3780 = vmatpush.bf16.msra.mxu0 %v3741
        %3781 = vmatpush.bf16.msra.mxu0 %v3740
        %3782 = vmatpush.bf16.msra.mxu0 %v3739
        %3783 = vmatpush.bf16.msra.mxu0 %v3738
        %3784 = vmatmul.bf16.gmra.mxu0 %v3665
        %v3785 = vpop.f32.mrf.mxu0
        %v3786 = vadd.f32 %v3772, %v3785
        %v3787 = vpop.f32.mrf.mxu0
        %v3788 = vadd.f32 %v3774, %v3787
        %3789 = vdwg.mxu0
        %v3790 = vadd.f32 %v3495, %v3786
        %v3791 = vadd.f32 %v3496, %v3788
        %v3793 = vperm.slane %v3003, 0
        %v3795 = vadd.f32 %v3790, %v3793
        %v3796 = vadd.f32 %v3791, %v3793
        %v3797 = vld [vmem:[%s61 + $0x60] sm:$0xf]
        %v3798 = vld [vmem:[%s61 + $0x64] sm:$0xf]
        %v3799 = vld [vmem:[%s61 + $0x68] sm:$0xf]
        %v3800 = vld [vmem:[%s61 + $0x6c] sm:$0xf]
        %v3801 = vld [vmem:[%s61 + $0x70] sm:$0xf]
        %v3802 = vld [vmem:[%s61 + $0x74] sm:$0xf]
        %v3803 = vld [vmem:[%s61 + $0x78] sm:$0xf]
        %v3804 = vld [vmem:[%s61 + $0x7c] sm:$0xf]
        %v3805 = vld [vmem:[%s61 + $0x80] sm:$0xf]
        %v3806 = vld [vmem:[%s61 + $0x84] sm:$0xf]
        %v3807 = vld [vmem:[%s61 + $0x88] sm:$0xf]
        %v3808 = vld [vmem:[%s61 + $0x8c] sm:$0xf]
        %v3809 = vld [vmem:[%s61 + $0x90] sm:$0xf]
        %v3810 = vld [vmem:[%s61 + $0x94] sm:$0xf]
        %v3811 = vld [vmem:[%s61 + $0x98] sm:$0xf]
        %v3812 = vld [vmem:[%s61 + $0x9c] sm:$0xf]
        %v3813 = vld [vmem:[%s61 + $0xa0] sm:$0xf]
        %v3814 = vld [vmem:[%s61 + $0xa4] sm:$0xf]
        %v3815 = vld [vmem:[%s61 + $0xa8] sm:$0xf]
        %v3816 = vld [vmem:[%s61 + $0xac] sm:$0xf]
        %v3817 = vld [vmem:[%s61 + $0xb0] sm:$0xf]
        %v3818 = vld [vmem:[%s61 + $0xb4] sm:$0xf]
        %v3819 = vld [vmem:[%s61 + $0xb8] sm:$0xf]
        %v3820 = vld [vmem:[%s61 + $0xbc] sm:$0xf]
        %v3821 = vld [vmem:[%s61 + $0xc0] sm:$0xf]
        %v3822 = vld [vmem:[%s61 + $0xc4] sm:$0xf]
        %v3823 = vld [vmem:[%s61 + $0xc8] sm:$0xf]
        %v3824 = vld [vmem:[%s61 + $0xcc] sm:$0xf]
        %v3825 = vld [vmem:[%s61 + $0xd0] sm:$0xf]
        %v3826 = vld [vmem:[%s61 + $0xd4] sm:$0xf]
        %v3827 = vld [vmem:[%s61 + $0xd8] sm:$0xf]
        %v3828 = vld [vmem:[%s61 + $0xdc] sm:$0xf]
        %v3829 = vld [vmem:[%s61 + $0xe0] sm:$0xf]
        %v3830 = vld [vmem:[%s61 + $0xe4] sm:$0xf]
        %v3831 = vld [vmem:[%s61 + $0xe8] sm:$0xf]
        %v3832 = vld [vmem:[%s61 + $0xec] sm:$0xf]
        %v3833 = vld [vmem:[%s61 + $0xf0] sm:$0xf]
        %v3834 = vld [vmem:[%s61 + $0xf4] sm:$0xf]
        %v3835 = vld [vmem:[%s61 + $0xf8] sm:$0xf]
        %v3836 = vld [vmem:[%s61 + $0xfc] sm:$0xf]
        %v3837 = vld [vmem:[%s61 + $0x100] sm:$0xf]
        %v3838 = vld [vmem:[%s61 + $0x104] sm:$0xf]
        %v3839 = vld [vmem:[%s61 + $0x108] sm:$0xf]
        %v3840 = vld [vmem:[%s61 + $0x10c] sm:$0xf]
        %v3841 = vld [vmem:[%s61 + $0x110] sm:$0xf]
        %v3842 = vld [vmem:[%s61 + $0x114] sm:$0xf]
        %v3843 = vld [vmem:[%s61 + $0x118] sm:$0xf]
        %v3844 = vld [vmem:[%s61 + $0x11c] sm:$0xf]
        %v3845 = vld [vmem:[#allocation7] sm:$0x1]
        %v3846 = vld [vmem:[#allocation8] sm:$0x1]
        %v3847 = vld [vmem:[#allocation10] sm:$0x1]
        %v3849 = vrot.slane %v3795, 7
        %v3851 = vsel %vm2562, 0.0, %v3849
        %v3852 = vpack.c.bf16 %v3851, %v3851
        %v3853 = vpack.c.bf16 %v3795, %v3795
        %v3862 = vunpack.c.l.b16 %v3805
        %v3863 = vunpack.c.l.b16 %v3806
        %v3864 = vunpack.c.l.b16 %v3807
        %v3865 = vunpack.c.l.b16 %v3808
        %v3866 = vunpack.c.l.b16 %v3809
        %v3867 = vunpack.c.l.b16 %v3810
        %v3868 = vunpack.c.l.b16 %v3811
        %v3869 = vunpack.c.l.b16 %v3812
        %v3870 = vpack.c.b16 %v3863, %v3862
        %v3871 = vpack.c.b16 %v3865, %v3864
        %v3872 = vpack.c.b16 %v3867, %v3866
        %v3873 = vpack.c.b16 %v3869, %v3868
        %v3879 = vsel %vm2878, %v3853, 0
        %3881 = vmatpush.bf16.msra.mxu0 0
        %3882 = vmatpush.bf16.msra.mxu0 0
        %3883 = vmatpush.bf16.msra.mxu0 0
        %3884 = vmatpush.bf16.msra.mxu0 0
        %3885 = vmatpush.bf16.msra.mxu0 %v3873
        %3886 = vmatpush.bf16.msra.mxu0 %v3872
        %3887 = vmatpush.bf16.msra.mxu0 %v3871
        %3888 = vmatpush.bf16.msra.mxu0 %v3870
        %3889 = vmatmul.bf16.gmra.mxu0 %v3879
        %v3890 = vpop.f32.mrf.mxu0
        %v3891 = vadd.f32 0.0, %v3890
        %v3892 = vpop.f32.mrf.mxu0
        %3893 = vdwg.mxu0
        %v3902 = vunpack.c.l.b16 %v3797
        %v3903 = vunpack.c.l.b16 %v3798
        %v3904 = vunpack.c.l.b16 %v3799
        %v3905 = vunpack.c.l.b16 %v3800
        %v3906 = vunpack.c.l.b16 %v3801
        %v3907 = vunpack.c.l.b16 %v3802
        %v3908 = vunpack.c.l.b16 %v3803
        %v3909 = vunpack.c.l.b16 %v3804
        %v3910 = vpack.c.b16 %v3903, %v3902
        %v3911 = vpack.c.b16 %v3905, %v3904
        %v3912 = vpack.c.b16 %v3907, %v3906
        %v3913 = vpack.c.b16 %v3909, %v3908
        %v3919 = vsel %vm2878, %v3852, 0
        %3921 = vmatpush.bf16.msra.mxu0 0
        %3922 = vmatpush.bf16.msra.mxu0 0
        %3923 = vmatpush.bf16.msra.mxu0 0
        %3924 = vmatpush.bf16.msra.mxu0 0
        %3925 = vmatpush.bf16.msra.mxu0 %v3913
        %3926 = vmatpush.bf16.msra.mxu0 %v3912
        %3927 = vmatpush.bf16.msra.mxu0 %v3911
        %3928 = vmatpush.bf16.msra.mxu0 %v3910
        %3929 = vmatmul.bf16.gmra.mxu0 %v3919
        %v3930 = vpop.f32.mrf.mxu0
        %v3931 = vadd.f32 %v3891, %v3930
        %v3932 = vpop.f32.mrf.mxu0
        %3933 = vdwg.mxu0
        %v3934 = vrot.slane %v3795, 1
        %v3936 = vsel %vm2626, %v3934, 0.0
        %v3937 = vpack.c.bf16 %v3936, %v3936
        %v3946 = vunpack.c.l.b16 %v3813
        %v3947 = vunpack.c.l.b16 %v3814
        %v3948 = vunpack.c.l.b16 %v3815
        %v3949 = vunpack.c.l.b16 %v3816
        %v3950 = vunpack.c.l.b16 %v3817
        %v3951 = vunpack.c.l.b16 %v3818
        %v3952 = vunpack.c.l.b16 %v3819
        %v3953 = vunpack.c.l.b16 %v3820
        %v3954 = vpack.c.b16 %v3947, %v3946
        %v3955 = vpack.c.b16 %v3949, %v3948
        %v3956 = vpack.c.b16 %v3951, %v3950
        %v3957 = vpack.c.b16 %v3953, %v3952
        %v3963 = vsel %vm2878, %v3937, 0
        %3965 = vmatpush.bf16.msra.mxu0 0
        %3966 = vmatpush.bf16.msra.mxu0 0
        %3967 = vmatpush.bf16.msra.mxu0 0
        %3968 = vmatpush.bf16.msra.mxu0 0
        %3969 = vmatpush.bf16.msra.mxu0 %v3957
        %3970 = vmatpush.bf16.msra.mxu0 %v3956
        %3971 = vmatpush.bf16.msra.mxu0 %v3955
        %3972 = vmatpush.bf16.msra.mxu0 %v3954
        %3973 = vmatmul.bf16.gmra.mxu0 %v3963
        %v3974 = vpop.f32.mrf.mxu0
        %v3975 = vadd.f32 0.0, %v3974
        %v3976 = vpop.f32.mrf.mxu0
        %3977 = vdwg.mxu0
        %v3978 = vadd.f32 %v3931, %v3975
        %v3980 = vrot.slane %v3796, 7
        %v3982 = vsel %vm2562, 0.0, %v3980
        %v3983 = vpack.c.bf16 %v3982, %v3982
        %v3992 = vunpack.c.l.b16 %v3821
        %v3993 = vunpack.c.l.b16 %v3822
        %v3994 = vunpack.c.l.b16 %v3823
        %v3995 = vunpack.c.l.b16 %v3824
        %v3996 = vunpack.c.l.b16 %v3825
        %v3997 = vunpack.c.l.b16 %v3826
        %v3998 = vunpack.c.l.b16 %v3827
        %v3999 = vunpack.c.l.b16 %v3828
        %v4000 = vpack.c.b16 %v3993, %v3992
        %v4001 = vpack.c.b16 %v3995, %v3994
        %v4002 = vpack.c.b16 %v3997, %v3996
        %v4003 = vpack.c.b16 %v3999, %v3998
        %v4009 = vsel %vm2878, %v3983, 0
        %4011 = vmatpush.bf16.msra.mxu0 0
        %4012 = vmatpush.bf16.msra.mxu0 0
        %4013 = vmatpush.bf16.msra.mxu0 0
        %4014 = vmatpush.bf16.msra.mxu0 0
        %4015 = vmatpush.bf16.msra.mxu0 %v4003
        %4016 = vmatpush.bf16.msra.mxu0 %v4002
        %4017 = vmatpush.bf16.msra.mxu0 %v4001
        %4018 = vmatpush.bf16.msra.mxu0 %v4000
        %4019 = vmatmul.bf16.gmra.mxu0 %v4009
        %v4020 = vpop.f32.mrf.mxu0
        %v4021 = vadd.f32 0.0, %v4020
        %v4022 = vpop.f32.mrf.mxu0
        %4023 = vdwg.mxu0
        %v4024 = vadd.f32 %v3978, %v4021
        %v4025 = vpack.c.bf16 %v3796, %v3796
        %v4034 = vunpack.c.l.b16 %v3829
        %v4035 = vunpack.c.l.b16 %v3830
        %v4036 = vunpack.c.l.b16 %v3831
        %v4037 = vunpack.c.l.b16 %v3832
        %v4038 = vunpack.c.l.b16 %v3833
        %v4039 = vunpack.c.l.b16 %v3834
        %v4040 = vunpack.c.l.b16 %v3835
        %v4041 = vunpack.c.l.b16 %v3836
        %v4042 = vpack.c.b16 %v4035, %v4034
        %v4043 = vpack.c.b16 %v4037, %v4036
        %v4044 = vpack.c.b16 %v4039, %v4038
        %v4045 = vpack.c.b16 %v4041, %v4040
        %v4051 = vsel %vm2878, %v4025, 0
        %4053 = vmatpush.bf16.msra.mxu0 0
        %4054 = vmatpush.bf16.msra.mxu0 0
        %4055 = vmatpush.bf16.msra.mxu0 0
        %4056 = vmatpush.bf16.msra.mxu0 0
        %4057 = vmatpush.bf16.msra.mxu0 %v4045
        %4058 = vmatpush.bf16.msra.mxu0 %v4044
        %4059 = vmatpush.bf16.msra.mxu0 %v4043
        %4060 = vmatpush.bf16.msra.mxu0 %v4042
        %4061 = vmatmul.bf16.gmra.mxu0 %v4051
        %v4062 = vpop.f32.mrf.mxu0
        %v4063 = vadd.f32 0.0, %v4062
        %v4064 = vpop.f32.mrf.mxu0
        %4065 = vdwg.mxu0
        %v4066 = vadd.f32 %v4024, %v4063
        %v4067 = vrot.slane %v3796, 1
        %v4069 = vsel %vm2626, %v4067, 0.0
        %v4070 = vpack.c.bf16 %v4069, %v4069
        %v4079 = vunpack.c.l.b16 %v3837
        %v4080 = vunpack.c.l.b16 %v3838
        %v4081 = vunpack.c.l.b16 %v3839
        %v4082 = vunpack.c.l.b16 %v3840
        %v4083 = vunpack.c.l.b16 %v3841
        %v4084 = vunpack.c.l.b16 %v3842
        %v4085 = vunpack.c.l.b16 %v3843
        %v4086 = vunpack.c.l.b16 %v3844
        %v4087 = vpack.c.b16 %v4080, %v4079
        %v4088 = vpack.c.b16 %v4082, %v4081
        %v4089 = vpack.c.b16 %v4084, %v4083
        %v4090 = vpack.c.b16 %v4086, %v4085
        %v4096 = vsel %vm2878, %v4070, 0
        %4098 = vmatpush.bf16.msra.mxu0 0
        %4099 = vmatpush.bf16.msra.mxu0 0
        %4100 = vmatpush.bf16.msra.mxu0 0
        %4101 = vmatpush.bf16.msra.mxu0 0
        %4102 = vmatpush.bf16.msra.mxu0 %v4090
        %4103 = vmatpush.bf16.msra.mxu0 %v4089
        %4104 = vmatpush.bf16.msra.mxu0 %v4088
        %4105 = vmatpush.bf16.msra.mxu0 %v4087
        %4106 = vmatmul.bf16.gmra.mxu0 %v4096
        %v4107 = vpop.f32.mrf.mxu0
        %v4108 = vadd.f32 0.0, %v4107
        %v4109 = vpop.f32.mrf.mxu0
        %4110 = vdwg.mxu0
        %v4111 = vadd.f32 %v4066, %v4108
        %v4113 = vperm.slane %v3845, 0
        %v4115 = vadd.f32 %v4111, %v4113
        %vm4116 = vcmask 785408
        %v4117 = vsel %vm4116, %v4115, 0.0
        %4118 = vadd.xlane.f32.xlu0 %v4117
        %v4119 = vpop.xlane.xlu0 %4118
        %v4120 = vrcp.pop 96.0
        %v4121 = vmul.f32 96.0, %v4120
        %v4122 = vsub.f32 1.0, %v4121
        %v4123 = vmul.f32 %v4120, %v4122
        %v4124 = vadd.f32 %v4120, %v4123
        %vm4125 = vweird.f32 %v4120
        %v4126 = vsel %vm4125, %v4120, %v4124
        %v4127 = vmul.f32 %v4119, %v4126
        %v4128 = vsub.f32 %v4115, %v4127
        %v4129 = vmul.f32 %v4128, %v4128
        %v4130 = vsel %vm4116, %v4129, 0.0
        %4131 = vadd.xlane.f32.xlu0 %v4130
        %v4132 = vpop.xlane.xlu0 %4131
        %v4133 = vmul.f32 %v4132, %v4126
        %v4134 = vadd.f32 %v4133, 1e-06
        %v4135 = vrsqrt.pop %v4134
        %v4136 = vmul.f32 %v4135, %v4134
        %v4137 = vmul.f32 %v4136, %v4135
        %v4138 = vmul.f32 0.5, %v4137
        %v4139 = vsub.f32 1.5, %v4138
        %v4140 = vmul.f32 %v4135, %v4139
        %vm4141 = vweird.f32 %v4134
        %vm4142 = vweird.f32 %v4135
        %vm4143 = vmor %vm4141, %vm4142
        %v4144 = vsel %vm4143, %v4135, %v4140
        %v4145 = vmul.f32 %v4128, %v4144
        %v4147 = vperm.slane %v3846, 0
        %v4149 = vmul.f32 %v4145, %v4147
        %v4151 = vperm.slane %v3847, 0
        %v4153 = vadd.f32 %v4149, %v4151
        %v4154 = vld [vmem:[#allocation11] sm:$0x1]
        %v4155 = vld [vmem:[#allocation13] sm:$0x1]
        %v4156 = vld [vmem:[%s73] sm:$0xff]
        %v4157 = vld [vmem:[%s73 + $0x8] sm:$0xf]
        %v4158 = vld [vmem:[%s73 + $0xc] sm:$0xff]
        %v4159 = vld [vmem:[%s73 + $0x14] sm:$0xf]
        %v4160 = vld [vmem:[%s73 + $0x18] sm:$0xff]
        %v4161 = vld [vmem:[%s73 + $0x20] sm:$0xf]
        %v4162 = vld [vmem:[%s73 + $0x24] sm:$0xff]
        %v4163 = vld [vmem:[%s73 + $0x2c] sm:$0xf]
        %v4164 = vld [vmem:[%s73 + $0x30] sm:$0xff]
        %v4165 = vld [vmem:[%s73 + $0x38] sm:$0xf]
        %v4166 = vld [vmem:[%s73 + $0x3c] sm:$0xff]
        %v4167 = vld [vmem:[%s73 + $0x44] sm:$0xf]
        %v4168 = vld [vmem:[%s73 + $0x48] sm:$0xff]
        %v4169 = vld [vmem:[%s73 + $0x50] sm:$0xf]
        %v4170 = vld [vmem:[%s73 + $0x54] sm:$0xff]
        %v4171 = vld [vmem:[%s73 + $0x5c] sm:$0xf]
        %v4172 = vld [vmem:[%s73 + $0x60] sm:$0xff]
        %v4173 = vld [vmem:[%s73 + $0x68] sm:$0xf]
        %v4174 = vld [vmem:[%s73 + $0x6c] sm:$0xff]
        %v4175 = vld [vmem:[%s73 + $0x74] sm:$0xf]
        %v4176 = vld [vmem:[%s73 + $0x78] sm:$0xff]
        %v4177 = vld [vmem:[%s73 + $0x80] sm:$0xf]
        %v4178 = vld [vmem:[%s73 + $0x84] sm:$0xff]
        %v4179 = vld [vmem:[%s73 + $0x8c] sm:$0xf]
        %v4180 = vld [vmem:[%s75] sm:$0x7]
        %v4181 = vld [vmem:[%s77] sm:$0xf]
        %v4182 = vld [vmem:[%s77 + $0x4] sm:$0xf]
        %v4183 = vld [vmem:[%s77 + $0x8] sm:$0xf]
        %v4184 = vld [vmem:[%s77 + $0xc] sm:$0xf]
        %v4185 = vld [vmem:[%s77 + $0x10] sm:$0xf]
        %v4186 = vld [vmem:[%s77 + $0x14] sm:$0xf]
        %v4187 = vld [vmem:[%s77 + $0x18] sm:$0xf]
        %v4188 = vld [vmem:[%s77 + $0x1c] sm:$0xf]
        %v4189 = vld [vmem:[%s77 + $0x20] sm:$0xf]
        %v4190 = vld [vmem:[%s77 + $0x24] sm:$0xf]
        %v4191 = vld [vmem:[%s77 + $0x28] sm:$0xf]
        %v4192 = vld [vmem:[%s77 + $0x2c] sm:$0xf]
        %v4193 = vld [vmem:[#allocation14] sm:$0x1]
        %v4194 = vld [vmem:[#allocation16] sm:$0x1]
        %v4195 = vld [vmem:[#allocation17] sm:$0x1]
        %v4196 = vld [vmem:[%s85] sm:$0xff]
        %v4197 = vld [vmem:[%s85 + $0x8] sm:$0xf]
        %v4198 = vld [vmem:[%s85 + $0xc] sm:$0xff]
        %v4199 = vld [vmem:[%s85 + $0x14] sm:$0xf]
        %v4200 = vld [vmem:[%s85 + $0x18] sm:$0xff]
        %v4201 = vld [vmem:[%s85 + $0x20] sm:$0xf]
        %v4202 = vld [vmem:[%s85 + $0x24] sm:$0xff]
        %v4203 = vld [vmem:[%s85 + $0x2c] sm:$0xf]
        %v4204 = vld [vmem:[%s85 + $0x30] sm:$0xff]
        %v4205 = vld [vmem:[%s85 + $0x38] sm:$0xf]
        %v4206 = vld [vmem:[%s85 + $0x3c] sm:$0xff]
        %v4207 = vld [vmem:[%s85 + $0x44] sm:$0xf]
        %v4208 = vld [vmem:[%s85 + $0x48] sm:$0xff]
        %v4209 = vld [vmem:[%s85 + $0x50] sm:$0xf]
        %v4210 = vld [vmem:[%s85 + $0x54] sm:$0xff]
        %v4211 = vld [vmem:[%s85 + $0x5c] sm:$0xf]
        %v4212 = vld [vmem:[%s85 + $0x60] sm:$0xff]
        %v4213 = vld [vmem:[%s85 + $0x68] sm:$0xf]
        %v4214 = vld [vmem:[%s85 + $0x6c] sm:$0xff]
        %v4215 = vld [vmem:[%s85 + $0x74] sm:$0xf]
        %v4216 = vld [vmem:[%s85 + $0x78] sm:$0xff]
        %v4217 = vld [vmem:[%s85 + $0x80] sm:$0xf]
        %v4218 = vld [vmem:[%s85 + $0x84] sm:$0xff]
        %v4219 = vld [vmem:[%s85 + $0x8c] sm:$0xf]
        %v4220 = vld [vmem:[%s87] sm:$0x7]
        %v4221 = vld [vmem:[%s89] sm:$0xf]
        %v4222 = vld [vmem:[%s89 + $0x4] sm:$0xf]
        %v4223 = vld [vmem:[%s89 + $0x8] sm:$0xf]
        %v4224 = vld [vmem:[%s89 + $0xc] sm:$0xf]
        %v4225 = vld [vmem:[%s89 + $0x10] sm:$0xf]
        %v4226 = vld [vmem:[%s89 + $0x14] sm:$0xf]
        %v4227 = vld [vmem:[%s89 + $0x18] sm:$0xf]
        %v4228 = vld [vmem:[%s89 + $0x1c] sm:$0xf]
        %v4229 = vld [vmem:[%s89 + $0x20] sm:$0xf]
        %v4230 = vld [vmem:[%s89 + $0x24] sm:$0xf]
        %v4231 = vld [vmem:[%s89 + $0x28] sm:$0xf]
        %v4232 = vld [vmem:[%s89 + $0x2c] sm:$0xf]
        %v4233 = vld [vmem:[%s89 + $0x30] sm:$0xf]
        %v4234 = vld [vmem:[%s89 + $0x34] sm:$0xf]
        %v4235 = vld [vmem:[%s89 + $0x38] sm:$0xf]
        %v4236 = vld [vmem:[%s89 + $0x3c] sm:$0xf]
        %v4237 = vld [vmem:[%s89 + $0x40] sm:$0xf]
        %v4238 = vld [vmem:[%s89 + $0x44] sm:$0xf]
        %v4239 = vld [vmem:[%s89 + $0x48] sm:$0xf]
        %v4240 = vld [vmem:[%s89 + $0x4c] sm:$0xf]
        %v4241 = vld [vmem:[%s89 + $0x50] sm:$0xf]
        %v4242 = vld [vmem:[%s89 + $0x54] sm:$0xf]
        %v4243 = vld [vmem:[%s89 + $0x58] sm:$0xf]
        %v4244 = vld [vmem:[%s89 + $0x5c] sm:$0xf]
        %v4245 = vld [vmem:[%s89 + $0x60] sm:$0xf]
        %v4246 = vld [vmem:[%s89 + $0x64] sm:$0xf]
        %v4247 = vld [vmem:[%s89 + $0x68] sm:$0xf]
        %v4248 = vld [vmem:[%s89 + $0x6c] sm:$0xf]
        %v4249 = vld [vmem:[%s89 + $0x70] sm:$0xf]
        %v4250 = vld [vmem:[%s89 + $0x74] sm:$0xf]
        %v4251 = vld [vmem:[%s89 + $0x78] sm:$0xf]
        %v4252 = vld [vmem:[%s89 + $0x7c] sm:$0xf]
        %v4253 = vld [vmem:[%s89 + $0x80] sm:$0xf]
        %v4254 = vld [vmem:[%s89 + $0x84] sm:$0xf]
        %v4255 = vld [vmem:[%s89 + $0x88] sm:$0xf]
        %v4256 = vld [vmem:[%s89 + $0x8c] sm:$0xf]
        %v4257 = vld [vmem:[%s89 + $0x90] sm:$0xf]
        %v4258 = vld [vmem:[%s89 + $0x94] sm:$0xf]
        %v4259 = vld [vmem:[%s89 + $0x98] sm:$0xf]
        %v4260 = vld [vmem:[%s89 + $0x9c] sm:$0xf]
        %v4261 = vld [vmem:[%s89 + $0xa0] sm:$0xf]
        %v4262 = vld [vmem:[%s89 + $0xa4] sm:$0xf]
        %v4263 = vld [vmem:[%s89 + $0xa8] sm:$0xf]
        %v4264 = vld [vmem:[%s89 + $0xac] sm:$0xf]
        %v4265 = vld [vmem:[%s89 + $0xb0] sm:$0xf]
        %v4266 = vld [vmem:[%s89 + $0xb4] sm:$0xf]
        %v4267 = vld [vmem:[%s89 + $0xb8] sm:$0xf]
        %v4268 = vld [vmem:[%s89 + $0xbc] sm:$0xf]
        %v4269 = vld [vmem:[#allocation19] sm:$0x1]
        %v4270 = vsel %vm4116, %v4153, 0.0
        %4271 = vadd.xlane.f32.xlu0 %v4270
        %v4272 = vpop.xlane.xlu0 %4271
        %v4273 = vmul.f32 %v4272, %v4126
        %v4274 = vsub.f32 %v4153, %v4273
        %v4275 = vmul.f32 %v4274, %v4274
        %v4276 = vsel %vm4116, %v4275, 0.0
        %4277 = vadd.xlane.f32.xlu0 %v4276
        %v4278 = vpop.xlane.xlu0 %4277
        %v4279 = vmul.f32 %v4278, %v4126
        %v4280 = vadd.f32 %v4279, 1e-06
        %v4281 = vrsqrt.pop %v4280
        %v4282 = vmul.f32 %v4281, %v4280
        %v4283 = vmul.f32 %v4282, %v4281
        %v4284 = vmul.f32 0.5, %v4283
        %v4285 = vsub.f32 1.5, %v4284
        %v4286 = vmul.f32 %v4281, %v4285
        %vm4287 = vweird.f32 %v4280
        %vm4288 = vweird.f32 %v4281
        %vm4289 = vmor %vm4287, %vm4288
        %v4290 = vsel %vm4289, %v4281, %v4286
        %v4291 = vmul.f32 %v4274, %v4290
        %v4293 = vperm.slane %v4154, 0
        %v4295 = vmul.f32 %v4291, %v4293
        %v4297 = vperm.slane %v4155, 0
        %v4299 = vadd.f32 %v4295, %v4297
        %v4300 = vpack.c.bf16 %v4299, %v4299
        %v4302 = vperm.slane %v4180, 0
        %v4303 = vperm.slane %v4180, 1
        %v4304 = vperm.slane %v4180, 2
        %v4332 = vunpack.c.l.b16 %v4156
        %v4333 = vunpack.c.h.b16 %v4156
        %v4334 = vunpack.c.l.b16 %v4157
        %v4335 = vunpack.c.l.b16 %v4158
        %v4336 = vunpack.c.h.b16 %v4158
        %v4337 = vunpack.c.l.b16 %v4159
        %v4338 = vunpack.c.l.b16 %v4160
        %v4339 = vunpack.c.h.b16 %v4160
        %v4340 = vunpack.c.l.b16 %v4161
        %v4341 = vunpack.c.l.b16 %v4162
        %v4342 = vunpack.c.h.b16 %v4162
        %v4343 = vunpack.c.l.b16 %v4163
        %v4344 = vunpack.c.l.b16 %v4164
        %v4345 = vunpack.c.h.b16 %v4164
        %v4346 = vunpack.c.l.b16 %v4165
        %v4347 = vunpack.c.l.b16 %v4166
        %v4348 = vunpack.c.h.b16 %v4166
        %v4349 = vunpack.c.l.b16 %v4167
        %v4350 = vunpack.c.l.b16 %v4168
        %v4351 = vunpack.c.h.b16 %v4168
        %v4352 = vunpack.c.l.b16 %v4169
        %v4353 = vunpack.c.l.b16 %v4170
        %v4354 = vunpack.c.h.b16 %v4170
        %v4355 = vunpack.c.l.b16 %v4171
        %v4356 = vunpack.c.l.b16 %v4172
        %v4357 = vunpack.c.h.b16 %v4172
        %v4358 = vunpack.c.l.b16 %v4173
        %v4359 = vunpack.c.l.b16 %v4174
        %v4360 = vunpack.c.h.b16 %v4174
        %v4361 = vunpack.c.l.b16 %v4175
        %v4362 = vunpack.c.l.b16 %v4176
        %v4363 = vunpack.c.h.b16 %v4176
        %v4364 = vunpack.c.l.b16 %v4177
        %v4365 = vunpack.c.l.b16 %v4178
        %v4366 = vunpack.c.h.b16 %v4178
        %v4367 = vunpack.c.l.b16 %v4179
        %v4368 = vpack.c.b16 %v4335, %v4332
        %v4369 = vpack.c.b16 %v4336, %v4333
        %v4370 = vpack.c.b16 %v4337, %v4334
        %v4371 = vpack.c.b16 %v4341, %v4338
        %v4372 = vpack.c.b16 %v4342, %v4339
        %v4373 = vpack.c.b16 %v4343, %v4340
        %v4374 = vpack.c.b16 %v4347, %v4344
        %v4375 = vpack.c.b16 %v4348, %v4345
        %v4376 = vpack.c.b16 %v4349, %v4346
        %v4377 = vpack.c.b16 %v4353, %v4350
        %v4378 = vpack.c.b16 %v4354, %v4351
        %v4379 = vpack.c.b16 %v4355, %v4352
        %v4380 = vpack.c.b16 %v4359, %v4356
        %v4381 = vpack.c.b16 %v4360, %v4357
        %v4382 = vpack.c.b16 %v4361, %v4358
        %v4383 = vpack.c.b16 %v4365, %v4362
        %v4384 = vpack.c.b16 %v4366, %v4363
        %v4385 = vpack.c.b16 %v4367, %v4364
        %v4405 = vsel %vm4116, %v4300, 0
        %4407 = vmatpush.bf16.msra.mxu0 0
        %4408 = vmatpush.bf16.msra.mxu0 0
        %4409 = vmatpush.bf16.msra.mxu0 %v4383
        %4410 = vmatpush.bf16.msra.mxu0 %v4380
        %4411 = vmatpush.bf16.msra.mxu0 %v4377
        %4412 = vmatpush.bf16.msra.mxu0 %v4374
        %4413 = vmatpush.bf16.msra.mxu0 %v4371
        %4414 = vmatpush.bf16.msra.mxu0 %v4368
        %4415 = vmatmul.bf16.gmra.mxu0 %v4405
        %v4416 = vpop.f32.mrf.mxu0
        %v4417 = vadd.f32 %v4302, %v4416
        %v4418 = vpop.f32.mrf.mxu0
        %4419 = vdwg.mxu0
        %4420 = vmatpush.bf16.msra.mxu0 0
        %4421 = vmatpush.bf16.msra.mxu0 0
        %4422 = vmatpush.bf16.msra.mxu0 %v4384
        %4423 = vmatpush.bf16.msra.mxu0 %v4381
        %4424 = vmatpush.bf16.msra.mxu0 %v4378
        %4425 = vmatpush.bf16.msra.mxu0 %v4375
        %4426 = vmatpush.bf16.msra.mxu0 %v4372
        %4427 = vmatpush.bf16.msra.mxu0 %v4369
        %4428 = vmatmul.bf16.gmra.mxu0 %v4405
        %v4429 = vpop.f32.mrf.mxu0
        %v4430 = vadd.f32 %v4303, %v4429
        %v4431 = vpop.f32.mrf.mxu0
        %4432 = vdwg.mxu0
        %4433 = vmatpush.bf16.msra.mxu0 0
        %4434 = vmatpush.bf16.msra.mxu0 0
        %4435 = vmatpush.bf16.msra.mxu0 %v4385
        %4436 = vmatpush.bf16.msra.mxu0 %v4382
        %4437 = vmatpush.bf16.msra.mxu0 %v4379
        %4438 = vmatpush.bf16.msra.mxu0 %v4376
        %4439 = vmatpush.bf16.msra.mxu0 %v4373
        %4440 = vmatpush.bf16.msra.mxu0 %v4370
        %4441 = vmatmul.bf16.gmra.mxu0 %v4405
        %v4442 = vpop.f32.mrf.mxu0
        %v4443 = vadd.f32 %v4304, %v4442
        %v4444 = vpop.f32.mrf.mxu0
        %4445 = vdwg.mxu0
        %v4446 = vpack.c.bf16 %v4430, %v4417
        %v4447 = vpack.c.bf16 %v4443, %v4443
        %v4449 = vunpack.c.l.b16 %v4446
        %v4450 = vpack.c.b16 %v4449, %v4449
        %4451 = vrot.lane.b32.xlu0 %v4450, 32
        %v4452 = vpop.permute.xlu0 %4451
        %v4454 = vsel %vm1949, %v4446, 0
        %v4457 = vsel %vm1949, %v4452, 0
        %4459 = vmatpush.bf16.xpose.msra.mxu0 0
        %4460 = vmatpush.bf16.xpose.msra.mxu0 0
        %4461 = vmatpush.bf16.xpose.msra.mxu0 0
        %4462 = vmatpush.bf16.xpose.msra.mxu0 0
        %4463 = vmatpush.bf16.xpose.msra.mxu0 0
        %4464 = vmatpush.bf16.xpose.msra.mxu0 0
        %4465 = vmatpush.bf16.xpose.msra.mxu0 0
        %4466 = vmatpush.bf16.xpose.msra.mxu0 %v4457
        %4467 = vmatmul.bf16.gmra.mxu0 %v4454
        %v4468 = vpop.f32.mrf.mxu0
        %v4469 = vadd.f32 0.0, %v4468
        %v4470 = vpop.f32.mrf.mxu0
        %4471 = vdwg.mxu0
        %v4472 = vmul.f32 %v4469, 0.25
        %vm4473 = vcmask 64512
        %v4474 = vsel %vm4473, %v4472, -inf
        %4475 = vmax.xlane.f32.xlu0 %v4474
        %v4476 = vpop.xlane.xlu0 %4475
        %v4477 = vsub.f32 %v4472, %v4476
        %v4478 = vmul.f32 %v4477, 1.442695
        %v4479 = vpow.pop %v4478
        %v4480 = vsel %vm4473, %v4479, 0.0
        %4481 = vadd.xlane.f32.xlu0 %v4480
        %v4482 = vpop.xlane.xlu0 %4481
        %v4483 = vrcp.pop %v4482
        %v4484 = vmul.f32 %v4479, %v4483
        %v4485 = vpack.c.bf16 %v4484, %v4484
        %v4486 = vunpack.c.h.b16 %v4446
        %v4487 = vpack.c.b16 %v4486, %v4486
        %4488 = vrot.lane.b32.xlu0 %v4487, 64
        %v4489 = vpop.permute.xlu0 %4488
        %v4491 = vsel %vm4473, %v4485, 0
        %vm4493 = vcmask 1043456
        %v4495 = vsel %vm4493, %v4489, 0
        %4497 = vmatpush.bf16.msra.mxu0 0
        %4498 = vmatpush.bf16.msra.mxu0 0
        %4499 = vmatpush.bf16.msra.mxu0 0
        %4500 = vmatpush.bf16.msra.mxu0 0
        %4501 = vmatpush.bf16.msra.mxu0 0
        %4502 = vmatpush.bf16.msra.mxu0 0
        %4503 = vmatpush.bf16.msra.mxu0 0
        %4504 = vmatpush.bf16.msra.mxu0 %v4495
        %4505 = vmatmul.bf16.gmra.mxu0 %v4491
        %v4506 = vpop.f32.mrf.mxu0
        %v4507 = vadd.f32 0.0, %v4506
        %v4508 = vpop.f32.mrf.mxu0
        %4509 = vdwg.mxu0
        %4510 = vrot.lane.b32.xlu0 %v4450, 112
        %v4511 = vpop.permute.xlu0 %4510
        %4512 = vrot.lane.b32.xlu0 %v4450, 16
        %v4513 = vpop.permute.xlu0 %4512
        %v4515 = vsel %vm1949, %v4511, 0
        %v4518 = vsel %vm1949, %v4513, 0
        %4520 = vmatpush.bf16.xpose.msra.mxu0 0
        %4521 = vmatpush.bf16.xpose.msra.mxu0 0
        %4522 = vmatpush.bf16.xpose.msra.mxu0 0
        %4523 = vmatpush.bf16.xpose.msra.mxu0 0
        %4524 = vmatpush.bf16.xpose.msra.mxu0 0
        %4525 = vmatpush.bf16.xpose.msra.mxu0 0
        %4526 = vmatpush.bf16.xpose.msra.mxu0 0
        %4527 = vmatpush.bf16.xpose.msra.mxu0 %v4518
        %4528 = vmatmul.bf16.gmra.mxu0 %v4515
        %v4529 = vpop.f32.mrf.mxu0
        %v4530 = vadd.f32 0.0, %v4529
        %v4531 = vpop.f32.mrf.mxu0
        %4532 = vdwg.mxu0
        %v4533 = vmul.f32 %v4530, 0.25
        %v4534 = vsel %vm4473, %v4533, -inf
        %4535 = vmax.xlane.f32.xlu0 %v4534
        %v4536 = vpop.xlane.xlu0 %4535
        %v4537 = vsub.f32 %v4533, %v4536
        %v4538 = vmul.f32 %v4537, 1.442695
        %v4539 = vpow.pop %v4538
        %v4540 = vsel %vm4473, %v4539, 0.0
        %4541 = vadd.xlane.f32.xlu0 %v4540
        %v4542 = vpop.xlane.xlu0 %4541
        %v4543 = vrcp.pop %v4542
        %v4544 = vmul.f32 %v4539, %v4543
        %v4545 = vpack.c.bf16 %v4544, %v4544
        %4546 = vrot.lane.b32.xlu0 %v4487, 48
        %v4547 = vpop.permute.xlu0 %4546
        %v4549 = vsel %vm4473, %v4545, 0
        %v4552 = vsel %vm4493, %v4547, 0
        %4554 = vmatpush.bf16.msra.mxu0 0
        %4555 = vmatpush.bf16.msra.mxu0 0
        %4556 = vmatpush.bf16.msra.mxu0 0
        %4557 = vmatpush.bf16.msra.mxu0 0
        %4558 = vmatpush.bf16.msra.mxu0 0
        %4559 = vmatpush.bf16.msra.mxu0 0
        %4560 = vmatpush.bf16.msra.mxu0 0
        %4561 = vmatpush.bf16.msra.mxu0 %v4552
        %4562 = vmatmul.bf16.gmra.mxu0 %v4549
        %v4563 = vpop.f32.mrf.mxu0
        %v4564 = vadd.f32 0.0, %v4563
        %v4565 = vpop.f32.mrf.mxu0
        %4566 = vdwg.mxu0
        %4567 = vrot.lane.b32.xlu0 %v4450, 96
        %v4568 = vpop.permute.xlu0 %4567
        %v4570 = vsel %vm1949, %v4568, 0
        %v4573 = vsel %vm1949, %v4487, 0
        %4575 = vmatpush.bf16.xpose.msra.mxu0 0
        %4576 = vmatpush.bf16.xpose.msra.mxu0 0
        %4577 = vmatpush.bf16.xpose.msra.mxu0 0
        %4578 = vmatpush.bf16.xpose.msra.mxu0 0
        %4579 = vmatpush.bf16.xpose.msra.mxu0 0
        %4580 = vmatpush.bf16.xpose.msra.mxu0 0
        %4581 = vmatpush.bf16.xpose.msra.mxu0 0
        %4582 = vmatpush.bf16.xpose.msra.mxu0 %v4573
        %4583 = vmatmul.bf16.gmra.mxu0 %v4570
        %v4584 = vpop.f32.mrf.mxu0
        %v4585 = vadd.f32 0.0, %v4584
        %v4586 = vpop.f32.mrf.mxu0
        %4587 = vdwg.mxu0
        %v4588 = vmul.f32 %v4585, 0.25
        %v4589 = vsel %vm4473, %v4588, -inf
        %4590 = vmax.xlane.f32.xlu0 %v4589
        %v4591 = vpop.xlane.xlu0 %4590
        %v4592 = vsub.f32 %v4588, %v4591
        %v4593 = vmul.f32 %v4592, 1.442695
        %v4594 = vpow.pop %v4593
        %v4595 = vsel %vm4473, %v4594, 0.0
        %4596 = vadd.xlane.f32.xlu0 %v4595
        %v4597 = vpop.xlane.xlu0 %4596
        %v4598 = vrcp.pop %v4597
        %v4599 = vmul.f32 %v4594, %v4598
        %v4600 = vpack.c.bf16 %v4599, %v4599
        %4601 = vrot.lane.b32.xlu0 %v4487, 32
        %v4602 = vpop.permute.xlu0 %4601
        %v4604 = vsel %vm4473, %v4600, 0
        %v4607 = vsel %vm4493, %v4602, 0
        %4609 = vmatpush.bf16.msra.mxu0 0
        %4610 = vmatpush.bf16.msra.mxu0 0
        %4611 = vmatpush.bf16.msra.mxu0 0
        %4612 = vmatpush.bf16.msra.mxu0 0
        %4613 = vmatpush.bf16.msra.mxu0 0
        %4614 = vmatpush.bf16.msra.mxu0 0
        %4615 = vmatpush.bf16.msra.mxu0 0
        %4616 = vmatpush.bf16.msra.mxu0 %v4607
        %4617 = vmatmul.bf16.gmra.mxu0 %v4604
        %v4618 = vpop.f32.mrf.mxu0
        %v4619 = vadd.f32 0.0, %v4618
        %v4620 = vpop.f32.mrf.mxu0
        %4621 = vdwg.mxu0
        %4622 = vrot.lane.b32.xlu0 %v4450, 80
        %v4623 = vpop.permute.xlu0 %4622
        %4624 = vrot.lane.b32.xlu0 %v4487, 112
        %v4625 = vpop.permute.xlu0 %4624
        %v4627 = vsel %vm1949, %v4623, 0
        %v4630 = vsel %vm1949, %v4625, 0
        %4632 = vmatpush.bf16.xpose.msra.mxu0 0
        %4633 = vmatpush.bf16.xpose.msra.mxu0 0
        %4634 = vmatpush.bf16.xpose.msra.mxu0 0
        %4635 = vmatpush.bf16.xpose.msra.mxu0 0
        %4636 = vmatpush.bf16.xpose.msra.mxu0 0
        %4637 = vmatpush.bf16.xpose.msra.mxu0 0
        %4638 = vmatpush.bf16.xpose.msra.mxu0 0
        %4639 = vmatpush.bf16.xpose.msra.mxu0 %v4630
        %4640 = vmatmul.bf16.gmra.mxu0 %v4627
        %v4641 = vpop.f32.mrf.mxu0
        %v4642 = vadd.f32 0.0, %v4641
        %v4643 = vpop.f32.mrf.mxu0
        %4644 = vdwg.mxu0
        %v4645 = vmul.f32 %v4642, 0.25
        %v4646 = vsel %vm4473, %v4645, -inf
        %4647 = vmax.xlane.f32.xlu0 %v4646
        %v4648 = vpop.xlane.xlu0 %4647
        %v4649 = vsub.f32 %v4645, %v4648
        %v4650 = vmul.f32 %v4649, 1.442695
        %v4651 = vpow.pop %v4650
        %v4652 = vsel %vm4473, %v4651, 0.0
        %4653 = vadd.xlane.f32.xlu0 %v4652
        %v4654 = vpop.xlane.xlu0 %4653
        %v4655 = vrcp.pop %v4654
        %v4656 = vmul.f32 %v4651, %v4655
        %v4657 = vpack.c.bf16 %v4656, %v4656
        %4658 = vrot.lane.b32.xlu0 %v4487, 16
        %v4659 = vpop.permute.xlu0 %4658
        %v4661 = vsel %vm4473, %v4657, 0
        %v4664 = vsel %vm4493, %v4659, 0
        %4666 = vmatpush.bf16.msra.mxu0 0
        %4667 = vmatpush.bf16.msra.mxu0 0
        %4668 = vmatpush.bf16.msra.mxu0 0
        %4669 = vmatpush.bf16.msra.mxu0 0
        %4670 = vmatpush.bf16.msra.mxu0 0
        %4671 = vmatpush.bf16.msra.mxu0 0
        %4672 = vmatpush.bf16.msra.mxu0 0
        %4673 = vmatpush.bf16.msra.mxu0 %v4664
        %4674 = vmatmul.bf16.gmra.mxu0 %v4661
        %v4675 = vpop.f32.mrf.mxu0
        %v4676 = vadd.f32 0.0, %v4675
        %v4677 = vpop.f32.mrf.mxu0
        %4678 = vdwg.mxu0
        %4679 = vrot.lane.b32.xlu0 %v4450, 64
        %v4680 = vpop.permute.xlu0 %4679
        %4681 = vrot.lane.b32.xlu0 %v4487, 96
        %v4682 = vpop.permute.xlu0 %4681
        %v4684 = vsel %vm1949, %v4680, 0
        %v4687 = vsel %vm1949, %v4682, 0
        %4689 = vmatpush.bf16.xpose.msra.mxu0 0
        %4690 = vmatpush.bf16.xpose.msra.mxu0 0
        %4691 = vmatpush.bf16.xpose.msra.mxu0 0
        %4692 = vmatpush.bf16.xpose.msra.mxu0 0
        %4693 = vmatpush.bf16.xpose.msra.mxu0 0
        %4694 = vmatpush.bf16.xpose.msra.mxu0 0
        %4695 = vmatpush.bf16.xpose.msra.mxu0 0
        %4696 = vmatpush.bf16.xpose.msra.mxu0 %v4687
        %4697 = vmatmul.bf16.gmra.mxu0 %v4684
        %v4698 = vpop.f32.mrf.mxu0
        %v4699 = vadd.f32 0.0, %v4698
        %v4700 = vpop.f32.mrf.mxu0
        %4701 = vdwg.mxu0
        %v4702 = vmul.f32 %v4699, 0.25
        %v4703 = vsel %vm4473, %v4702, -inf
        %4704 = vmax.xlane.f32.xlu0 %v4703
        %v4705 = vpop.xlane.xlu0 %4704
        %v4706 = vsub.f32 %v4702, %v4705
        %v4707 = vmul.f32 %v4706, 1.442695
        %v4708 = vpow.pop %v4707
        %v4709 = vsel %vm4473, %v4708, 0.0
        %4710 = vadd.xlane.f32.xlu0 %v4709
        %v4711 = vpop.xlane.xlu0 %4710
        %v4712 = vrcp.pop %v4711
        %v4713 = vmul.f32 %v4708, %v4712
        %v4714 = vpack.c.bf16 %v4713, %v4713
        %v4716 = vsel %vm4473, %v4714, 0
        %v4719 = vsel %vm4493, %v4447, 0
        %4721 = vmatpush.bf16.msra.mxu0 0
        %4722 = vmatpush.bf16.msra.mxu0 0
        %4723 = vmatpush.bf16.msra.mxu0 0
        %4724 = vmatpush.bf16.msra.mxu0 0
        %4725 = vmatpush.bf16.msra.mxu0 0
        %4726 = vmatpush.bf16.msra.mxu0 0
        %4727 = vmatpush.bf16.msra.mxu0 0
        %4728 = vmatpush.bf16.msra.mxu0 %v4719
        %4729 = vmatmul.bf16.gmra.mxu0 %v4716
        %v4730 = vpop.f32.mrf.mxu0
        %v4731 = vadd.f32 0.0, %v4730
        %v4732 = vpop.f32.mrf.mxu0
        %4733 = vdwg.mxu0
        %4734 = vrot.lane.b32.xlu0 %v4450, 48
        %v4735 = vpop.permute.xlu0 %4734
        %4736 = vrot.lane.b32.xlu0 %v4487, 80
        %v4737 = vpop.permute.xlu0 %4736
        %v4739 = vsel %vm1949, %v4735, 0
        %v4742 = vsel %vm1949, %v4737, 0
        %4744 = vmatpush.bf16.xpose.msra.mxu0 0
        %4745 = vmatpush.bf16.xpose.msra.mxu0 0
        %4746 = vmatpush.bf16.xpose.msra.mxu0 0
        %4747 = vmatpush.bf16.xpose.msra.mxu0 0
        %4748 = vmatpush.bf16.xpose.msra.mxu0 0
        %4749 = vmatpush.bf16.xpose.msra.mxu0 0
        %4750 = vmatpush.bf16.xpose.msra.mxu0 0
        %4751 = vmatpush.bf16.xpose.msra.mxu0 %v4742
        %4752 = vmatmul.bf16.gmra.mxu0 %v4739
        %v4753 = vpop.f32.mrf.mxu0
        %v4754 = vadd.f32 0.0, %v4753
        %v4755 = vpop.f32.mrf.mxu0
        %4756 = vdwg.mxu0
        %v4757 = vmul.f32 %v4754, 0.25
        %v4758 = vsel %vm4473, %v4757, -inf
        %4759 = vmax.xlane.f32.xlu0 %v4758
        %v4760 = vpop.xlane.xlu0 %4759
        %v4761 = vsub.f32 %v4757, %v4760
        %v4762 = vmul.f32 %v4761, 1.442695
        %v4763 = vpow.pop %v4762
        %v4764 = vsel %vm4473, %v4763, 0.0
        %4765 = vadd.xlane.f32.xlu0 %v4764
        %v4766 = vpop.xlane.xlu0 %4765
        %v4767 = vrcp.pop %v4766
        %v4768 = vmul.f32 %v4763, %v4767
        %v4769 = vpack.c.bf16 %v4768, %v4768
        %v4771 = vunpack.c.l.b16 %v4447
        %v4772 = vpack.c.b16 %v4771, %v4771
        %4773 = vrot.lane.b32.xlu0 %v4772, 112
        %v4774 = vpop.permute.xlu0 %4773
        %v4776 = vsel %vm4473, %v4769, 0
        %v4779 = vsel %vm4493, %v4774, 0
        %4781 = vmatpush.bf16.msra.mxu0 0
        %4782 = vmatpush.bf16.msra.mxu0 0
        %4783 = vmatpush.bf16.msra.mxu0 0
        %4784 = vmatpush.bf16.msra.mxu0 0
        %4785 = vmatpush.bf16.msra.mxu0 0
        %4786 = vmatpush.bf16.msra.mxu0 0
        %4787 = vmatpush.bf16.msra.mxu0 0
        %4788 = vmatpush.bf16.msra.mxu0 %v4779
        %4789 = vmatmul.bf16.gmra.mxu0 %v4776
        %v4790 = vpop.f32.mrf.mxu0
        %v4791 = vadd.f32 0.0, %v4790
        %v4792 = vpop.f32.mrf.mxu0
        %4793 = vdwg.mxu0
        %4795 = vrot.lane.b32.xlu0 %v4564, 16
        %v4796 = vpop.permute.xlu0 %4795
        %4799 = vrot.lane.b32.xlu0 %v4619, 32
        %v4800 = vpop.permute.xlu0 %4799
        %4803 = vrot.lane.b32.xlu0 %v4676, 48
        %v4804 = vpop.permute.xlu0 %4803
        %4807 = vrot.lane.b32.xlu0 %v4731, 64
        %v4808 = vpop.permute.xlu0 %4807
        %4811 = vrot.lane.b32.xlu0 %v4791, 80
        %v4812 = vpop.permute.xlu0 %4811
        %v4814 = vsel %vm1949, %v4507, %v4796
        %v4815 = vsel %vm1779, %v4814, %v4800
        %v4816 = vsel %vm3445, %v4815, %v4804
        %v4817 = vsel %vm2878, %v4816, %v4808
        %vm4818 = vcmask 654336
        %v4819 = vsel %vm4818, %v4817, %v4812
        %v4820 = vpack.c.bf16 %v4819, %v4819
        %v4833 = vunpack.c.l.b16 %v4181
        %v4834 = vunpack.c.l.b16 %v4182
        %v4835 = vunpack.c.l.b16 %v4183
        %v4836 = vunpack.c.l.b16 %v4184
        %v4837 = vunpack.c.l.b16 %v4185
        %v4838 = vunpack.c.l.b16 %v4186
        %v4839 = vunpack.c.l.b16 %v4187
        %v4840 = vunpack.c.l.b16 %v4188
        %v4841 = vunpack.c.l.b16 %v4189
        %v4842 = vunpack.c.l.b16 %v4190
        %v4843 = vunpack.c.l.b16 %v4191
        %v4844 = vunpack.c.l.b16 %v4192
        %v4845 = vpack.c.b16 %v4834, %v4833
        %v4846 = vpack.c.b16 %v4836, %v4835
        %v4847 = vpack.c.b16 %v4838, %v4837
        %v4848 = vpack.c.b16 %v4840, %v4839
        %v4849 = vpack.c.b16 %v4842, %v4841
        %v4850 = vpack.c.b16 %v4844, %v4843
        %v4858 = vsel %vm4116, %v4820, 0
        %4860 = vmatpush.bf16.msra.mxu0 0
        %4861 = vmatpush.bf16.msra.mxu0 0
        %4862 = vmatpush.bf16.msra.mxu0 %v4850
        %4863 = vmatpush.bf16.msra.mxu0 %v4849
        %4864 = vmatpush.bf16.msra.mxu0 %v4848
        %4865 = vmatpush.bf16.msra.mxu0 %v4847
        %4866 = vmatpush.bf16.msra.mxu0 %v4846
        %4867 = vmatpush.bf16.msra.mxu0 %v4845
        %4868 = vmatmul.bf16.gmra.mxu0 %v4858
        %v4869 = vpop.f32.mrf.mxu0
        %v4870 = vadd.f32 0.0, %v4869
        %v4871 = vpop.f32.mrf.mxu0
        %4872 = vdwg.mxu0
        %v4873 = vadd.f32 %v4153, %v4870
        %v4875 = vperm.slane %v4193, 0
        %v4877 = vadd.f32 %v4873, %v4875
        %v4878 = vsel %vm4116, %v4877, 0.0
        %4879 = vadd.xlane.f32.xlu0 %v4878
        %v4880 = vpop.xlane.xlu0 %4879
        %v4881 = vmul.f32 %v4880, %v4126
        %v4882 = vsub.f32 %v4877, %v4881
        %v4883 = vmul.f32 %v4882, %v4882
        %v4884 = vsel %vm4116, %v4883, 0.0
        %4885 = vadd.xlane.f32.xlu0 %v4884
        %v4886 = vpop.xlane.xlu0 %4885
        %v4887 = vmul.f32 %v4886, %v4126
        %v4888 = vadd.f32 %v4887, 1e-06
        %v4889 = vrsqrt.pop %v4888
        %v4890 = vmul.f32 %v4889, %v4888
        %v4891 = vmul.f32 %v4890, %v4889
        %v4892 = vmul.f32 0.5, %v4891
        %v4893 = vsub.f32 1.5, %v4892
        %v4894 = vmul.f32 %v4889, %v4893
        %vm4895 = vweird.f32 %v4888
        %vm4896 = vweird.f32 %v4889
        %vm4897 = vmor %vm4895, %vm4896
        %v4898 = vsel %vm4897, %v4889, %v4894
        %v4899 = vmul.f32 %v4882, %v4898
        %v4901 = vperm.slane %v4194, 0
        %v4903 = vmul.f32 %v4899, %v4901
        %v4905 = vperm.slane %v4195, 0
        %v4907 = vadd.f32 %v4903, %v4905
        %v4908 = vpack.c.bf16 %v4907, %v4907
        %v4910 = vperm.slane %v4220, 0
        %v4911 = vperm.slane %v4220, 1
        %v4912 = vperm.slane %v4220, 2
        %v4940 = vunpack.c.l.b16 %v4196
        %v4941 = vunpack.c.h.b16 %v4196
        %v4942 = vunpack.c.l.b16 %v4197
        %v4943 = vunpack.c.l.b16 %v4198
        %v4944 = vunpack.c.h.b16 %v4198
        %v4945 = vunpack.c.l.b16 %v4199
        %v4946 = vunpack.c.l.b16 %v4200
        %v4947 = vunpack.c.h.b16 %v4200
        %v4948 = vunpack.c.l.b16 %v4201
        %v4949 = vunpack.c.l.b16 %v4202
        %v4950 = vunpack.c.h.b16 %v4202
        %v4951 = vunpack.c.l.b16 %v4203
        %v4952 = vunpack.c.l.b16 %v4204
        %v4953 = vunpack.c.h.b16 %v4204
        %v4954 = vunpack.c.l.b16 %v4205
        %v4955 = vunpack.c.l.b16 %v4206
        %v4956 = vunpack.c.h.b16 %v4206
        %v4957 = vunpack.c.l.b16 %v4207
        %v4958 = vunpack.c.l.b16 %v4208
        %v4959 = vunpack.c.h.b16 %v4208
        %v4960 = vunpack.c.l.b16 %v4209
        %v4961 = vunpack.c.l.b16 %v4210
        %v4962 = vunpack.c.h.b16 %v4210
        %v4963 = vunpack.c.l.b16 %v4211
        %v4964 = vunpack.c.l.b16 %v4212
        %v4965 = vunpack.c.h.b16 %v4212
        %v4966 = vunpack.c.l.b16 %v4213
        %v4967 = vunpack.c.l.b16 %v4214
        %v4968 = vunpack.c.h.b16 %v4214
        %v4969 = vunpack.c.l.b16 %v4215
        %v4970 = vunpack.c.l.b16 %v4216
        %v4971 = vunpack.c.h.b16 %v4216
        %v4972 = vunpack.c.l.b16 %v4217
        %v4973 = vunpack.c.l.b16 %v4218
        %v4974 = vunpack.c.h.b16 %v4218
        %v4975 = vunpack.c.l.b16 %v4219
        %v4976 = vpack.c.b16 %v4943, %v4940
        %v4977 = vpack.c.b16 %v4944, %v4941
        %v4978 = vpack.c.b16 %v4945, %v4942
        %v4979 = vpack.c.b16 %v4949, %v4946
        %v4980 = vpack.c.b16 %v4950, %v4947
        %v4981 = vpack.c.b16 %v4951, %v4948
        %v4982 = vpack.c.b16 %v4955, %v4952
        %v4983 = vpack.c.b16 %v4956, %v4953
        %v4984 = vpack.c.b16 %v4957, %v4954
        %v4985 = vpack.c.b16 %v4961, %v4958
        %v4986 = vpack.c.b16 %v4962, %v4959
        %v4987 = vpack.c.b16 %v4963, %v4960
        %v4988 = vpack.c.b16 %v4967, %v4964
        %v4989 = vpack.c.b16 %v4968, %v4965
        %v4990 = vpack.c.b16 %v4969, %v4966
        %v4991 = vpack.c.b16 %v4973, %v4970
        %v4992 = vpack.c.b16 %v4974, %v4971
        %v4993 = vpack.c.b16 %v4975, %v4972
        %v5013 = vsel %vm4116, %v4908, 0
        %5015 = vmatpush.bf16.msra.mxu0 0
        %5016 = vmatpush.bf16.msra.mxu0 0
        %5017 = vmatpush.bf16.msra.mxu0 %v4991
        %5018 = vmatpush.bf16.msra.mxu0 %v4988
        %5019 = vmatpush.bf16.msra.mxu0 %v4985
        %5020 = vmatpush.bf16.msra.mxu0 %v4982
        %5021 = vmatpush.bf16.msra.mxu0 %v4979
        %5022 = vmatpush.bf16.msra.mxu0 %v4976
        %5023 = vmatmul.bf16.gmra.mxu0 %v5013
        %v5024 = vpop.f32.mrf.mxu0
        %v5025 = vadd.f32 %v4910, %v5024
        %v5026 = vpop.f32.mrf.mxu0
        %5027 = vdwg.mxu0
        %5028 = vmatpush.bf16.msra.mxu0 0
        %5029 = vmatpush.bf16.msra.mxu0 0
        %5030 = vmatpush.bf16.msra.mxu0 %v4992
        %5031 = vmatpush.bf16.msra.mxu0 %v4989
        %5032 = vmatpush.bf16.msra.mxu0 %v4986
        %5033 = vmatpush.bf16.msra.mxu0 %v4983
        %5034 = vmatpush.bf16.msra.mxu0 %v4980
        %5035 = vmatpush.bf16.msra.mxu0 %v4977
        %5036 = vmatmul.bf16.gmra.mxu0 %v5013
        %v5037 = vpop.f32.mrf.mxu0
        %v5038 = vadd.f32 %v4911, %v5037
        %v5039 = vpop.f32.mrf.mxu0
        %5040 = vdwg.mxu0
        %5041 = vmatpush.bf16.msra.mxu0 0
        %5042 = vmatpush.bf16.msra.mxu0 0
        %5043 = vmatpush.bf16.msra.mxu0 %v4993
        %5044 = vmatpush.bf16.msra.mxu0 %v4990
        %5045 = vmatpush.bf16.msra.mxu0 %v4987
        %5046 = vmatpush.bf16.msra.mxu0 %v4984
        %5047 = vmatpush.bf16.msra.mxu0 %v4981
        %5048 = vmatpush.bf16.msra.mxu0 %v4978
        %5049 = vmatmul.bf16.gmra.mxu0 %v5013
        %v5050 = vpop.f32.mrf.mxu0
        %v5051 = vadd.f32 %v4912, %v5050
        %v5052 = vpop.f32.mrf.mxu0
        %5053 = vdwg.mxu0
        %v5054 = vmul.f32 %v5025, %v5025
        %v5055 = vmul.f32 %v5038, %v5038
        %v5056 = vmul.f32 %v5051, %v5051
        %v5057 = vmul.f32 %v5025, %v5054
        %v5058 = vmul.f32 %v5038, %v5055
        %v5059 = vmul.f32 %v5051, %v5056
        %v5060 = vmul.f32 %v5057, 0.044715
        %v5061 = vmul.f32 %v5058, 0.044715
        %v5062 = vmul.f32 %v5059, 0.044715
        %v5063 = vadd.f32 %v5025, %v5060
        %v5064 = vadd.f32 %v5038, %v5061
        %v5065 = vadd.f32 %v5051, %v5062
        %v5066 = vmul.f32 %v5063, 0.7978846
        %v5067 = vmul.f32 %v5064, 0.7978846
        %v5068 = vmul.f32 %v5065, 0.7978846
        %v5069 = vtanh.pop %v5066
        %v5070 = vtanh.pop %v5067
        %v5071 = vtanh.pop %v5068
        %v5072 = vadd.f32 %v5069, 1.0
        %v5073 = vadd.f32 %v5070, 1.0
        %v5074 = vadd.f32 %v5071, 1.0
        %v5075 = vmul.f32 %v5072, 0.5
        %v5076 = vmul.f32 %v5073, 0.5
        %v5077 = vmul.f32 %v5074, 0.5
        %v5078 = vmul.f32 %v5025, %v5075
        %v5079 = vmul.f32 %v5038, %v5076
        %v5080 = vmul.f32 %v5051, %v5077
        %v5081 = vpack.c.bf16 %v5078, %v5078
        %v5082 = vpack.c.bf16 %v5079, %v5079
        %v5083 = vpack.c.bf16 %v5080, %v5080
        %v5132 = vunpack.c.l.b16 %v4221
        %v5133 = vunpack.c.l.b16 %v4222
        %v5134 = vunpack.c.l.b16 %v4223
        %v5135 = vunpack.c.l.b16 %v4224
        %v5136 = vunpack.c.l.b16 %v4225
        %v5137 = vunpack.c.l.b16 %v4226
        %v5138 = vunpack.c.l.b16 %v4227
        %v5139 = vunpack.c.l.b16 %v4228
        %v5140 = vunpack.c.l.b16 %v4229
        %v5141 = vunpack.c.l.b16 %v4230
        %v5142 = vunpack.c.l.b16 %v4231
        %v5143 = vunpack.c.l.b16 %v4232
        %v5144 = vunpack.c.l.b16 %v4233
        %v5145 = vunpack.c.l.b16 %v4234
        %v5146 = vunpack.c.l.b16 %v4235
        %v5147 = vunpack.c.l.b16 %v4236
        %v5148 = vunpack.c.l.b16 %v4237
        %v5149 = vunpack.c.l.b16 %v4238
        %v5150 = vunpack.c.l.b16 %v4239
        %v5151 = vunpack.c.l.b16 %v4240
        %v5152 = vunpack.c.l.b16 %v4241
        %v5153 = vunpack.c.l.b16 %v4242
        %v5154 = vunpack.c.l.b16 %v4243
        %v5155 = vunpack.c.l.b16 %v4244
        %v5156 = vunpack.c.l.b16 %v4245
        %v5157 = vunpack.c.l.b16 %v4246
        %v5158 = vunpack.c.l.b16 %v4247
        %v5159 = vunpack.c.l.b16 %v4248
        %v5160 = vunpack.c.l.b16 %v4249
        %v5161 = vunpack.c.l.b16 %v4250
        %v5162 = vunpack.c.l.b16 %v4251
        %v5163 = vunpack.c.l.b16 %v4252
        %v5164 = vunpack.c.l.b16 %v4253
        %v5165 = vunpack.c.l.b16 %v4254
        %v5166 = vunpack.c.l.b16 %v4255
        %v5167 = vunpack.c.l.b16 %v4256
        %v5168 = vunpack.c.l.b16 %v4257
        %v5169 = vunpack.c.l.b16 %v4258
        %v5170 = vunpack.c.l.b16 %v4259
        %v5171 = vunpack.c.l.b16 %v4260
        %v5172 = vunpack.c.l.b16 %v4261
        %v5173 = vunpack.c.l.b16 %v4262
        %v5174 = vunpack.c.l.b16 %v4263
        %v5175 = vunpack.c.l.b16 %v4264
        %v5176 = vunpack.c.l.b16 %v4265
        %v5177 = vunpack.c.l.b16 %v4266
        %v5178 = vunpack.c.l.b16 %v4267
        %v5179 = vunpack.c.l.b16 %v4268
        %v5180 = vpack.c.b16 %v5133, %v5132
        %v5181 = vpack.c.b16 %v5135, %v5134
        %v5182 = vpack.c.b16 %v5137, %v5136
        %v5183 = vpack.c.b16 %v5139, %v5138
        %v5184 = vpack.c.b16 %v5141, %v5140
        %v5185 = vpack.c.b16 %v5143, %v5142
        %v5186 = vpack.c.b16 %v5145, %v5144
        %v5187 = vpack.c.b16 %v5147, %v5146
        %v5188 = vpack.c.b16 %v5149, %v5148
        %v5189 = vpack.c.b16 %v5151, %v5150
        %v5190 = vpack.c.b16 %v5153, %v5152
        %v5191 = vpack.c.b16 %v5155, %v5154
        %v5192 = vpack.c.b16 %v5157, %v5156
        %v5193 = vpack.c.b16 %v5159, %v5158
        %v5194 = vpack.c.b16 %v5161, %v5160
        %v5195 = vpack.c.b16 %v5163, %v5162
        %v5196 = vpack.c.b16 %v5165, %v5164
        %v5197 = vpack.c.b16 %v5167, %v5166
        %v5198 = vpack.c.b16 %v5169, %v5168
        %v5199 = vpack.c.b16 %v5171, %v5170
        %v5200 = vpack.c.b16 %v5173, %v5172
        %v5201 = vpack.c.b16 %v5175, %v5174
        %v5202 = vpack.c.b16 %v5177, %v5176
        %v5203 = vpack.c.b16 %v5179, %v5178
        %5228 = vmatpush.bf16.msra.mxu0 %v5187
        %5229 = vmatpush.bf16.msra.mxu0 %v5186
        %5230 = vmatpush.bf16.msra.mxu0 %v5185
        %5231 = vmatpush.bf16.msra.mxu0 %v5184
        %5232 = vmatpush.bf16.msra.mxu0 %v5183
        %5233 = vmatpush.bf16.msra.mxu0 %v5182
        %5234 = vmatpush.bf16.msra.mxu0 %v5181
        %5235 = vmatpush.bf16.msra.mxu0 %v5180
        %5236 = vmatmul.bf16.gmra.mxu0 %v5081
        %v5237 = vpop.f32.mrf.mxu0
        %v5238 = vadd.f32 0.0, %v5237
        %v5239 = vpop.f32.mrf.mxu0
        %5240 = vdwg.mxu0
        %5241 = vmatpush.bf16.msra.mxu0 %v5195
        %5242 = vmatpush.bf16.msra.mxu0 %v5194
        %5243 = vmatpush.bf16.msra.mxu0 %v5193
        %5244 = vmatpush.bf16.msra.mxu0 %v5192
        %5245 = vmatpush.bf16.msra.mxu0 %v5191
        %5246 = vmatpush.bf16.msra.mxu0 %v5190
        %5247 = vmatpush.bf16.msra.mxu0 %v5189
        %5248 = vmatpush.bf16.msra.mxu0 %v5188
        %5249 = vmatmul.bf16.gmra.mxu0 %v5082
        %v5250 = vpop.f32.mrf.mxu0
        %v5251 = vadd.f32 %v5238, %v5250
        %v5252 = vpop.f32.mrf.mxu0
        %5253 = vdwg.mxu0
        %5254 = vmatpush.bf16.msra.mxu0 %v5203
        %5255 = vmatpush.bf16.msra.mxu0 %v5202
        %5256 = vmatpush.bf16.msra.mxu0 %v5201
        %5257 = vmatpush.bf16.msra.mxu0 %v5200
        %5258 = vmatpush.bf16.msra.mxu0 %v5199
        %5259 = vmatpush.bf16.msra.mxu0 %v5198
        %5260 = vmatpush.bf16.msra.mxu0 %v5197
        %5261 = vmatpush.bf16.msra.mxu0 %v5196
        %5262 = vmatmul.bf16.gmra.mxu0 %v5083
        %v5263 = vpop.f32.mrf.mxu0
        %v5264 = vadd.f32 %v5251, %v5263
        %v5265 = vpop.f32.mrf.mxu0
        %5266 = vdwg.mxu0
        %v5267 = vadd.f32 %v4877, %v5264
        %v5269 = vperm.slane %v4269, 0
        %v5271 = vadd.f32 %v5267, %v5269
        %v5272 = vld [vmem:[#allocation20] sm:$0x1]
        %v5273 = vld [vmem:[#allocation22] sm:$0x1]
        %v5274 = vld [vmem:[%s97] sm:$0xff]
        %v5275 = vld [vmem:[%s97 + $0x8] sm:$0xff]
        %v5276 = vld [vmem:[%s97 + $0x10] sm:$0xff]
        %v5277 = vld [vmem:[%s97 + $0x18] sm:$0xff]
        %v5278 = vld [vmem:[%s97 + $0x20] sm:$0xff]
        %v5279 = vld [vmem:[%s97 + $0x28] sm:$0xff]
        %v5280 = vld [vmem:[%s97 + $0x30] sm:$0xff]
        %v5281 = vld [vmem:[%s97 + $0x38] sm:$0xff]
        %v5282 = vld [vmem:[%s97 + $0x40] sm:$0xff]
        %v5283 = vld [vmem:[%s97 + $0x48] sm:$0xff]
        %v5284 = vld [vmem:[%s97 + $0x50] sm:$0xff]
        %v5285 = vld [vmem:[%s97 + $0x58] sm:$0xff]
        %v5286 = vld [vmem:[%s99] sm:$0x3]
        %v5287 = vld [vmem:[%s101] sm:$0xff]
        %v5288 = vld [vmem:[%s101 + $0x8] sm:$0xff]
        %v5289 = vld [vmem:[%s101 + $0x10] sm:$0xff]
        %v5290 = vld [vmem:[%s101 + $0x18] sm:$0xff]
        %v5291 = vld [vmem:[%s101 + $0x20] sm:$0xff]
        %v5292 = vld [vmem:[%s101 + $0x28] sm:$0xff]
        %v5293 = vld [vmem:[%s101 + $0x30] sm:$0xff]
        %v5294 = vld [vmem:[%s101 + $0x38] sm:$0xff]
        %v5295 = vld [vmem:[%s101 + $0x40] sm:$0xff]
        %v5296 = vld [vmem:[%s101 + $0x48] sm:$0xff]
        %v5297 = vld [vmem:[%s101 + $0x50] sm:$0xff]
        %v5298 = vld [vmem:[%s101 + $0x58] sm:$0xff]
        %v5299 = vld [vmem:[%s101 + $0x60] sm:$0xff]
        %v5300 = vld [vmem:[%s101 + $0x68] sm:$0xff]
        %v5301 = vld [vmem:[%s101 + $0x70] sm:$0xff]
        %v5302 = vld [vmem:[%s101 + $0x78] sm:$0xff]
        %v5303 = vld [vmem:[%s101 + $0x80] sm:$0xff]
        %v5304 = vld [vmem:[%s101 + $0x88] sm:$0xff]
        %v5305 = vld [vmem:[%s101 + $0x90] sm:$0xff]
        %v5306 = vld [vmem:[%s101 + $0x98] sm:$0xff]
        %v5307 = vld [vmem:[%s101 + $0xa0] sm:$0xff]
        %v5308 = vld [vmem:[%s101 + $0xa8] sm:$0xff]
        %v5309 = vld [vmem:[%s101 + $0xb0] sm:$0xff]
        %v5310 = vld [vmem:[%s101 + $0xb8] sm:$0xff]
        %v5311 = vld [vmem:[%s103] sm:$0x3]
        %v5312 = vsel %vm4116, %v5271, 0.0
        %5313 = vadd.xlane.f32.xlu0 %v5312
        %v5314 = vpop.xlane.xlu0 %5313
        %v5315 = vmul.f32 %v5314, %v4126
        %v5316 = vsub.f32 %v5271, %v5315
        %v5317 = vmul.f32 %v5316, %v5316
        %v5318 = vsel %vm4116, %v5317, 0.0
        %5319 = vadd.xlane.f32.xlu0 %v5318
        %v5320 = vpop.xlane.xlu0 %5319
        %v5321 = vmul.f32 %v5320, %v4126
        %v5322 = vadd.f32 %v5321, 1e-06
        %v5323 = vrsqrt.pop %v5322
        %v5324 = vmul.f32 %v5323, %v5322
        %v5325 = vmul.f32 %v5324, %v5323
        %v5326 = vmul.f32 0.5, %v5325
        %v5327 = vsub.f32 1.5, %v5326
        %v5328 = vmul.f32 %v5323, %v5327
        %vm5329 = vweird.f32 %v5322
        %vm5330 = vweird.f32 %v5323
        %vm5331 = vmor %vm5329, %vm5330
        %v5332 = vsel %vm5331, %v5323, %v5328
        %v5333 = vmul.f32 %v5316, %v5332
        %v5335 = vperm.slane %v5272, 0
        %v5337 = vmul.f32 %v5333, %v5335
        %v5339 = vperm.slane %v5273, 0
        %v5341 = vadd.f32 %v5337, %v5339
        %v5342 = vadd.f32 %v5341, 0.0
        %v5343 = vpack.c.bf16 %v5342, %v5342
        %v5345 = vperm.slane %v5286, 0
        %v5346 = vperm.slane %v5286, 1
        %v5361 = vunpack.c.l.b16 %v5274
        %v5362 = vunpack.c.h.b16 %v5274
        %v5363 = vunpack.c.l.b16 %v5275
        %v5364 = vunpack.c.h.b16 %v5275
        %v5365 = vunpack.c.l.b16 %v5276
        %v5366 = vunpack.c.h.b16 %v5276
        %v5367 = vunpack.c.l.b16 %v5277
        %v5368 = vunpack.c.h.b16 %v5277
        %v5369 = vunpack.c.l.b16 %v5278
        %v5370 = vunpack.c.h.b16 %v5278
        %v5371 = vunpack.c.l.b16 %v5279
        %v5372 = vunpack.c.h.b16 %v5279
        %v5373 = vunpack.c.l.b16 %v5280
        %v5374 = vunpack.c.h.b16 %v5280
        %v5375 = vunpack.c.l.b16 %v5281
        %v5376 = vunpack.c.h.b16 %v5281
        %v5377 = vunpack.c.l.b16 %v5282
        %v5378 = vunpack.c.h.b16 %v5282
        %v5379 = vunpack.c.l.b16 %v5283
        %v5380 = vunpack.c.h.b16 %v5283
        %v5381 = vunpack.c.l.b16 %v5284
        %v5382 = vunpack.c.h.b16 %v5284
        %v5383 = vunpack.c.l.b16 %v5285
        %v5384 = vunpack.c.h.b16 %v5285
        %v5385 = vpack.c.b16 %v5363, %v5361
        %v5386 = vpack.c.b16 %v5364, %v5362
        %v5387 = vpack.c.b16 %v5367, %v5365
        %v5388 = vpack.c.b16 %v5368, %v5366
        %v5389 = vpack.c.b16 %v5371, %v5369
        %v5390 = vpack.c.b16 %v5372, %v5370
        %v5391 = vpack.c.b16 %v5375, %v5373
        %v5392 = vpack.c.b16 %v5376, %v5374
        %v5393 = vpack.c.b16 %v5379, %v5377
        %v5394 = vpack.c.b16 %v5380, %v5378
        %v5395 = vpack.c.b16 %v5383, %v5381
        %v5396 = vpack.c.b16 %v5384, %v5382
        %v5410 = vsel %vm4116, %v5343, 0
        %5412 = vmatpush.bf16.msra.mxu0 0
        %5413 = vmatpush.bf16.msra.mxu0 0
        %5414 = vmatpush.bf16.msra.mxu0 %v5395
        %5415 = vmatpush.bf16.msra.mxu0 %v5393
        %5416 = vmatpush.bf16.msra.mxu0 %v5391
        %5417 = vmatpush.bf16.msra.mxu0 %v5389
        %5418 = vmatpush.bf16.msra.mxu0 %v5387
        %5419 = vmatpush.bf16.msra.mxu0 %v5385
        %5420 = vmatmul.bf16.gmra.mxu0 %v5410
        %v5421 = vpop.f32.mrf.mxu0
        %v5422 = vadd.f32 %v5345, %v5421
        %v5423 = vpop.f32.mrf.mxu0
        %5424 = vdwg.mxu0
        %5425 = vmatpush.bf16.msra.mxu0 0
        %5426 = vmatpush.bf16.msra.mxu0 0
        %5427 = vmatpush.bf16.msra.mxu0 %v5396
        %5428 = vmatpush.bf16.msra.mxu0 %v5394
        %5429 = vmatpush.bf16.msra.mxu0 %v5392
        %5430 = vmatpush.bf16.msra.mxu0 %v5390
        %5431 = vmatpush.bf16.msra.mxu0 %v5388
        %5432 = vmatpush.bf16.msra.mxu0 %v5386
        %5433 = vmatmul.bf16.gmra.mxu0 %v5410
        %v5434 = vpop.f32.mrf.mxu0
        %v5435 = vadd.f32 %v5346, %v5434
        %v5436 = vpop.f32.mrf.mxu0
        %5437 = vdwg.mxu0
        %v5438 = vadd.f32 %v5422, 3.0
        %v5439 = vadd.f32 %v5435, 3.0
        %v5440 = vmax.f32 %v5438, 0.0
        %v5441 = vmax.f32 %v5439, 0.0
        %v5442 = vmin.f32 %v5440, 6.0
        %v5443 = vmin.f32 %v5441, 6.0
        %v5444 = vmul.f32 %v5422, %v5442
        %v5445 = vmul.f32 %v5435, %v5443
        %v5446 = vmul.f32 %v5444, 0.16666667
        %v5447 = vmul.f32 %v5445, 0.16666667
        %v5448 = vpack.c.bf16 %v5446, %v5446
        %v5449 = vpack.c.bf16 %v5447, %v5447
        %v5451 = vperm.slane %v5311, 0
        %v5452 = vperm.slane %v5311, 1
        %v5479 = vunpack.c.l.b16 %v5287
        %v5480 = vunpack.c.h.b16 %v5287
        %v5481 = vunpack.c.l.b16 %v5288
        %v5482 = vunpack.c.h.b16 %v5288
        %v5483 = vunpack.c.l.b16 %v5289
        %v5484 = vunpack.c.h.b16 %v5289
        %v5485 = vunpack.c.l.b16 %v5290
        %v5486 = vunpack.c.h.b16 %v5290
        %v5487 = vunpack.c.l.b16 %v5291
        %v5488 = vunpack.c.h.b16 %v5291
        %v5489 = vunpack.c.l.b16 %v5292
        %v5490 = vunpack.c.h.b16 %v5292
        %v5491 = vunpack.c.l.b16 %v5293
        %v5492 = vunpack.c.h.b16 %v5293
        %v5493 = vunpack.c.l.b16 %v5294
        %v5494 = vunpack.c.h.b16 %v5294
        %v5495 = vunpack.c.l.b16 %v5295
        %v5496 = vunpack.c.h.b16 %v5295
        %v5497 = vunpack.c.l.b16 %v5296
        %v5498 = vunpack.c.h.b16 %v5296
        %v5499 = vunpack.c.l.b16 %v5297
        %v5500 = vunpack.c.h.b16 %v5297
        %v5501 = vunpack.c.l.b16 %v5298
        %v5502 = vunpack.c.h.b16 %v5298
        %v5503 = vunpack.c.l.b16 %v5299
        %v5504 = vunpack.c.h.b16 %v5299
        %v5505 = vunpack.c.l.b16 %v5300
        %v5506 = vunpack.c.h.b16 %v5300
        %v5507 = vunpack.c.l.b16 %v5301
        %v5508 = vunpack.c.h.b16 %v5301
        %v5509 = vunpack.c.l.b16 %v5302
        %v5510 = vunpack.c.h.b16 %v5302
        %v5511 = vunpack.c.l.b16 %v5303
        %v5512 = vunpack.c.h.b16 %v5303
        %v5513 = vunpack.c.l.b16 %v5304
        %v5514 = vunpack.c.h.b16 %v5304
        %v5515 = vunpack.c.l.b16 %v5305
        %v5516 = vunpack.c.h.b16 %v5305
        %v5517 = vunpack.c.l.b16 %v5306
        %v5518 = vunpack.c.h.b16 %v5306
        %v5519 = vunpack.c.l.b16 %v5307
        %v5520 = vunpack.c.h.b16 %v5307
        %v5521 = vunpack.c.l.b16 %v5308
        %v5522 = vunpack.c.h.b16 %v5308
        %v5523 = vunpack.c.l.b16 %v5309
        %v5524 = vunpack.c.h.b16 %v5309
        %v5525 = vunpack.c.l.b16 %v5310
        %v5526 = vunpack.c.h.b16 %v5310
        %v5527 = vpack.c.b16 %v5481, %v5479
        %v5528 = vpack.c.b16 %v5482, %v5480
        %v5529 = vpack.c.b16 %v5485, %v5483
        %v5530 = vpack.c.b16 %v5486, %v5484
        %v5531 = vpack.c.b16 %v5489, %v5487
        %v5532 = vpack.c.b16 %v5490, %v5488
        %v5533 = vpack.c.b16 %v5493, %v5491
        %v5534 = vpack.c.b16 %v5494, %v5492
        %v5535 = vpack.c.b16 %v5497, %v5495
        %v5536 = vpack.c.b16 %v5498, %v5496
        %v5537 = vpack.c.b16 %v5501, %v5499
        %v5538 = vpack.c.b16 %v5502, %v5500
        %v5539 = vpack.c.b16 %v5505, %v5503
        %v5540 = vpack.c.b16 %v5506, %v5504
        %v5541 = vpack.c.b16 %v5509, %v5507
        %v5542 = vpack.c.b16 %v5510, %v5508
        %v5543 = vpack.c.b16 %v5513, %v5511
        %v5544 = vpack.c.b16 %v5514, %v5512
        %v5545 = vpack.c.b16 %v5517, %v5515
        %v5546 = vpack.c.b16 %v5518, %v5516
        %v5547 = vpack.c.b16 %v5521, %v5519
        %v5548 = vpack.c.b16 %v5522, %v5520
        %v5549 = vpack.c.b16 %v5525, %v5523
        %v5550 = vpack.c.b16 %v5526, %v5524
        %v5576 = vsel %vm2878, %v5449, 0
        %5578 = vmatpush.bf16.msra.mxu0 %v5541
        %5579 = vmatpush.bf16.msra.mxu0 %v5539
        %5580 = vmatpush.bf16.msra.mxu0 %v5537
        %5581 = vmatpush.bf16.msra.mxu0 %v5535
        %5582 = vmatpush.bf16.msra.mxu0 %v5533
        %5583 = vmatpush.bf16.msra.mxu0 %v5531
        %5584 = vmatpush.bf16.msra.mxu0 %v5529
        %5585 = vmatpush.bf16.msra.mxu0 %v5527
        %5586 = vmatmul.bf16.gmra.mxu0 %v5448
        %v5587 = vpop.f32.mrf.mxu0
        %v5588 = vadd.f32 %v5451, %v5587
        %v5589 = vpop.f32.mrf.mxu0
        %5590 = vdwg.mxu0
        %5591 = vmatpush.bf16.msra.mxu0 0
        %5592 = vmatpush.bf16.msra.mxu0 0
        %5593 = vmatpush.bf16.msra.mxu0 0
        %5594 = vmatpush.bf16.msra.mxu0 0
        %5595 = vmatpush.bf16.msra.mxu0 %v5549
        %5596 = vmatpush.bf16.msra.mxu0 %v5547
        %5597 = vmatpush.bf16.msra.mxu0 %v5545
        %5598 = vmatpush.bf16.msra.mxu0 %v5543
        %5599 = vmatmul.bf16.gmra.mxu0 %v5576
        %v5600 = vpop.f32.mrf.mxu0
        %v5601 = vadd.f32 %v5588, %v5600
        %v5602 = vpop.f32.mrf.mxu0
        %5603 = vdwg.mxu0
        %5604 = vmatpush.bf16.msra.mxu0 %v5542
        %5605 = vmatpush.bf16.msra.mxu0 %v5540
        %5606 = vmatpush.bf16.msra.mxu0 %v5538
        %5607 = vmatpush.bf16.msra.mxu0 %v5536
        %5608 = vmatpush.bf16.msra.mxu0 %v5534
        %5609 = vmatpush.bf16.msra.mxu0 %v5532
        %5610 = vmatpush.bf16.msra.mxu0 %v5530
        %5611 = vmatpush.bf16.msra.mxu0 %v5528
        %5612 = vmatmul.bf16.gmra.mxu0 %v5448
        %v5613 = vpop.f32.mrf.mxu0
        %v5614 = vadd.f32 %v5452, %v5613
        %v5615 = vpop.f32.mrf.mxu0
        %5616 = vdwg.mxu0
        %5617 = vmatpush.bf16.msra.mxu0 0
        %5618 = vmatpush.bf16.msra.mxu0 0
        %5619 = vmatpush.bf16.msra.mxu0 0
        %5620 = vmatpush.bf16.msra.mxu0 0
        %5621 = vmatpush.bf16.msra.mxu0 %v5550
        %5622 = vmatpush.bf16.msra.mxu0 %v5548
        %5623 = vmatpush.bf16.msra.mxu0 %v5546
        %5624 = vmatpush.bf16.msra.mxu0 %v5544
        %5625 = vmatmul.bf16.gmra.mxu0 %v5576
        %v5626 = vpop.f32.mrf.mxu0
        %v5627 = vadd.f32 %v5614, %v5626
        %v5628 = vpop.f32.mrf.mxu0
        %5629 = vdwg.mxu0
        %v5630 = vmax.f32 %v5601, %v5627
        %5631 = vmax.xlane.f32.xlu0 %v5630
        %v5632 = vpop.xlane.xlu0 %5631
        %v5633 = vsub.f32 %v5601, %v5632
        %v5634 = vsub.f32 %v5627, %v5632
        %v5635 = vmul.f32 %v5633, 1.442695
        %v5636 = vpow.pop %v5635
        %v5637 = vmul.f32 %v5634, 1.442695
        %v5638 = vpow.pop %v5637
        %v5639 = vadd.f32 %v5636, %v5638
        %5640 = vadd.xlane.f32.xlu0 %v5639
        %v5641 = vpop.xlane.xlu0 %5640
        %v5642 = vrcp.pop %v5641
        %v5643 = vmul.f32 %v5641, %v5642
        %v5644 = vsub.f32 1.0, %v5643
        %v5645 = vmul.f32 %v5642, %v5644
        %v5646 = vadd.f32 %v5642, %v5645
        %vm5647 = vweird.f32 %v5641
        %vm5648 = vweird.f32 %v5642
        %vm5649 = vmor %vm5647, %vm5648
        %v5650 = vsel %vm5649, %v5642, %v5646
        %v5651 = vand.u32 2147483647, %v5641
        %vm5652 = vcmp.eq.f32.partialorder %v5651, 8.507059e+37
        %v5653 = vand.u32 %v5641, 2147483648
        %v5654 = vor.u32 1.1754944e-38, %v5653
        %v5655 = vsel %vm5652, %v5654, %v5650
        %v5656 = vmul.f32 %v5636, %v5655
        %v5657 = vmul.f32 %v5638, %v5655
        %5658 = vst [vmem:[%s1728] sm:$0xff] %v5656
        %5659 = vst [vmem:[%s1728 + $0x8] sm:$0xff] %v5657
        %s5660 = sand.u32 %s1231, 1
        %s5661 = scalar_lea.sflag [#allocation4], %s5660
        %s5662 = sand.u32 %s1231, 1
        %s5663 = smul.addr %s5662, 16
        %s5664 = scalar_lea.vmem [#allocation23], %s5663
        // Predicated region
        $region281: #{svtr_forward.1} parent=227 // pred_check
          %p5665 = pneg %p1241
        $region282: #{svtr_forward.1} parent=227 // pred_check_branch
          %5667 = sbr.rel (%p5665) target = $region284
        $region283: #{svtr_forward.1} parent=227 // pred_region
          %5669 = vsyncadd %s5661, 0
          %s5670 = smul.addr %s126, 2
          %s5671 = smul.addr %s5670, 8
          %s5672 = scalar_lea.hbm %s105, %s5671
          %s5674 = sshll.u32 %s5664, 4
          %s5675 = int_to_ptr.vmem [resolvable:$true] %s5674
          %s5676 = sshll.u32 %s5672, 4
          %s5677 = int_to_ptr.hbm [resolvable:$true] %s5676
          %5679 = dma.vmem_to_hbm [thread:$0]  %s5675, 256, %s5677, %s5661
        $region284: #{svtr_forward.1} parent=227 // pred_fallthru
          _
      $region228: #{svtr_forward.1} parent=5 // pred_fallthru
        _
      %p5680 = scmp.le.s32.totalorder 2, %s121
      // Predicated region
      $region285: #{svtr_forward.1} parent=5 // pred_check
        %p5681 = pneg %p5680
      $region286: #{svtr_forward.1} parent=5 // pred_check_branch
        %5683 = sbr.rel (%p5681) target = $region288
      $region287: #{svtr_forward.1} parent=5 // pred_region
        %s5684 = ssub.s32 %s121, 2
        // Predicated region
        $region289: #{svtr_forward.1} parent=287 // pred_check
          %p5685 = pneg %p1247
        $region290: #{svtr_forward.1} parent=287 // pred_check_branch
          %5687 = sbr.rel (%p5685) target = $region292
        $region291: #{svtr_forward.1} parent=287 // pred_region
          %s5688 = sand.u32 %s1232, 1
          %s5689 = scalar_lea.sflag [#allocation4], %s5688
          %s5690 = sand.u32 %s1232, 1
          %s5691 = smul.addr %s5690, 16
          %s5692 = scalar_lea.vmem [#allocation23], %s5691
          %5694 = dma.done %s5689, 256
        $region292: #{svtr_forward.1} parent=287 // pred_fallthru
          _
      $region288: #{svtr_forward.1} parent=5 // pred_fallthru
        _
    $region6: #{svtr_forward.1} parent=1 // loop_footer
      %s125 = sadd.s32 1, %s121
    $region7: #{svtr_forward.1} parent=1 // loop_footer_branch
      %120 = sbr.rel target = $region3
    $region8: #{svtr_forward.1} parent=1 // loop_exit
      _
    %5695 = vsyncpa [#allocation3], 1
    %s5696 = scalar_lea.sflag [#allocation3], 1
    %5697 = vsyncpa %s5696, 1
    %5698 = vsyncpa [#allocation6], 1
    %5699 = vsyncpa [#allocation9], 1
    %5700 = vsyncpa [#allocation12], 1
    %5701 = vsyncpa [#allocation15], 1
    %5702 = vsyncpa [#allocation18], 1
    %5703 = vsyncpa [#allocation21], 1
    %5704 = vsyncpa [#allocation4], 1
    %s5705 = scalar_lea.sflag [#allocation4], 1
    %5706 = vsyncpa %s5705, 1

</llo_original>
